<compile_context>
chip_gen: v6e
topology: v6e:2x2x1
jax: 0.10.0
libtpu: 0.0.40
codegen_flags: <defaults>
</compile_context>

<pallas_src>
import functools

import jax
import jax.numpy as jnp
from jax.experimental import pallas as pl
from jax.experimental.pallas import tpu as pltpu


# ------------------------------ fused kernel ---------------------------------
def _encoder_kernel(img_ref, app_ref, masks_ref, posd_ref,
                    w1c_ref, w2c_ref, slab1_ref, slab2_ref, slabo_ref,
                    out_ref, scr_ref, *,
                    H, W, K1, P1, K2, P2, B, n1, n_bias):
    # img_ref  : (1, C_in, L)  L = B*H*W, B samples packed along the lane axis
    # app_ref  : (1, B, d_app+1)  mlp_append rows with a trailing ones column
    # masks_ref: (K1^2+K2^2, L)   0/1 border masks per conv tap
    # posd_ref : (L, 3B)          block-diag [pos_x | pos_y | ones]
    # w1c/w2c  : (Cout, n_scr)    im2col weights, bias in column n_bias
    # slab*    : transposed MLP weights with bias as last row
    # out_ref  : (1, B, d_out)
    # scr_ref  : (n_scr, L) f32   im2col staging scratch
    f32 = jnp.float32
    L = img_ref.shape[-1]
    n_scr = scr_ref.shape[0]
    C2 = w2c_ref.shape[0]
    d_hid = slab1_ref.shape[1]

    # Scratch tail init (every step, so it is safe under any core splitting of the
    # grid axis): rows [n1, n_scr) zero so zero-padded weight columns never meet
    # NaN garbage; row n_bias all-ones so the conv bias is folded into the matmul.
    scr_ref[n1:n_scr, :] = jnp.zeros((n_scr - n1, L), f32)
    scr_ref[n_bias:n_bias + 1, :] = jnp.ones((1, L), f32)

    def conv_relu(x, w_ref, K, pad, mask_base):
        # x: (Cin, L) f32.  One XLU roll + one mask multiply + one scratch store per
        # tap, then a single MXU matmul (Cout, n_scr) @ (n_scr, L).
        Cin = x.shape[0]
        t = 0
        for kh in range(K):
            dy = kh - pad
            for kw in range(K):
                dx = kw - pad
                s = dy * W + dx                      # source offset on the lane axis
                if s == 0:
                    shifted = x
                else:
                    # want tap[i] = x[(i + s) mod L]  ==  jnp.roll(x, -s)
                    shifted = pltpu.roll(x, shift=(-s) % L, axis=1)
                tap = shifted * masks_ref[mask_base + t:mask_base + t + 1, :]
                scr_ref[t * Cin:(t + 1) * Cin, :] = tap
                t += 1
        acc = jnp.dot(w_ref[...], scr_ref[...],
                      preferred_element_type=f32)    # (Cout, L), bias included
        return jnp.maximum(acc, 0.0)

    x0 = img_ref[0].astype(f32)                                  # (C_in, L)
    a1 = conv_relu(x0, w1c_ref, K1, P1, 0)                       # (C1, L)
    a2 = conv_relu(a1, w2c_ref, K2, P2, K1 * K1)                 # (C2, L)

    # Spatial softmax + keypoint expectations with one MXU matmul.
    # Shift by the per-channel max over the whole lane axis: softmax is
    # shift-invariant per (channel, sample) segment, so this is exact math
    # (only an exp-underflow concern if activations span > ~88 across samples).
    m = jnp.max(a2, axis=-1, keepdims=True)                      # (C2, 1)
    e = jnp.exp(a2 - m)                                          # (C2, L)
    kpd = jnp.dot(e, posd_ref[...], preferred_element_type=f32)  # (C2, 3B)
    inv_den = 1.0 / kpd[:, 2 * B:3 * B]                          # exact divide
    ex_t = (kpd[:, 0:B] * inv_den).T                             # (B, C2)
    ey_t = (kpd[:, B:2 * B] * inv_den).T                         # (B, C2)

    # 3-layer MLP, row-oriented: B on sublanes, features on lanes.
    app1 = app_ref[0]                                            # (B, d_app+1)
    h = (jnp.dot(ex_t, slab1_ref[0:C2, :], preferred_element_type=f32)
         + jnp.dot(ey_t, slab1_ref[C2:2 * C2, :], preferred_element_type=f32)
         + jnp.dot(app1, slab1_ref[2 * C2:, :], preferred_element_type=f32))
    h = jnp.maximum(h, 0.0)                                      # (B, d_hid)
    h = jnp.maximum(
        jnp.dot(h, slab2_ref[0:d_hid, :], preferred_element_type=f32)
        + slab2_ref[d_hid:d_hid + 1, :], 0.0)                    # (B, d_hid)
    out_ref[0] = (jnp.dot(h, slabo_ref[0:d_hid, :], preferred_element_type=f32)
                  + slabo_ref[d_hid:d_hid + 1, :])               # (B, d_out)


# -------------------------------- wrapper -------------------------------------
def encoder_forward(params, img, mlp_append, *, samples_per_step=8):
    """img: (N, Cin, H, W) or (N, H, W); mlp_append: (N, dim_mlp_append).
    Returns (out[:, :z_total], out[:, z_total:]) like the PyTorch Encoder."""
    if img.ndim == 3:
        img = img[:, None]
    img = img.astype(jnp.float32)
    mlp_append = mlp_append.astype(jnp.float32)
    N, C_in, H, W = img.shape
    HW = H * W
    B = samples_per_step
    NB = -(-N // B)
    N_pad = NB * B
    L = B * HW

    w_c1, b_c1 = params["w_conv1"], params["b_conv1"]   # (C1, Cin, 5, 5), (C1,)
    w_c2, b_c2 = params["w_conv2"], params["b_conv2"]   # (C2, C1, 3, 3), (C2,)
    w_l1, b_l1 = params["w_lin1"], params["b_lin1"]     # (d_hid, d_in), (d_hid,)
    w_l2, b_l2 = params["w_lin2"], params["b_lin2"]
    w_lo, b_lo = params["w_out"], params["b_out"]       # (2*z_total, d_hid)

    C1, K1 = w_c1.shape[0], w_c1.shape[2]
    C2, K2 = w_c2.shape[0], w_c2.shape[2]
    P1, P2 = K1 // 2, K2 // 2
    # Lane-wrap safety for the in-kernel rolls: every wrapped element is border-masked.
    assert P1 < H and P1 < W and P2 < H and P2 < W
    d_hid, d_in = w_l1.shape
    d_out = w_lo.shape[0]
    d_app = d_in - 2 * C2
    z_total = d_out // 2

    n1 = K1 * K1 * C_in
    n2 = K2 * K2 * C1
    n_bias = max(n1, n2)                       # shared all-ones bias row index
    n_scr = ((n_bias + 1 + 7) // 8) * 8        # sublane-padded im2col row count

    # ---- one-time weight packing (XLA glue on weights only) ----
    # torch OIHW -> (Cout, K*K*Cin) matching the in-kernel im2col row order,
    # zero-padded to n_scr columns, conv bias placed in column n_bias.
    w1_mat = jnp.transpose(w_c1, (0, 2, 3, 1)).reshape(C1, n1)
    w2_mat = jnp.transpose(w_c2, (0, 2, 3, 1)).reshape(C2, n2)
    w1c = (jnp.zeros((C1, n_scr), jnp.float32)
           .at[:, :n1].set(w1_mat).at[:, n_bias].set(b_c1))
    w2c = (jnp.zeros((C2, n_scr), jnp.float32)
           .at[:, :n2].set(w2_mat).at[:, n_bias].set(b_c2))

    # MLP slabs: transposed weights for row-oriented matmuls, bias as last row.
    # torch SpatialSoftmax emits [ex_0, ey_0, ex_1, ...] — de-interleave w_lin1 here.
    w1x_T = w_l1[:, 0:2 * C2:2].T                         # (C2, d_hid)
    w1y_T = w_l1[:, 1:2 * C2:2].T                         # (C2, d_hid)
    w1a_T = w_l1[:, 2 * C2:].T                            # (d_app, d_hid)
    slab1 = jnp.concatenate([w1x_T, w1y_T, w1a_T, b_l1.reshape(1, d_hid)], axis=0)
    slab2 = jnp.concatenate([w_l2.T, b_l2.reshape(1, d_hid)], axis=0)
    slabo = jnp.concatenate([w_lo.T, b_lo.reshape(1, d_out)], axis=0)

    # Border-mask table: one 0/1 row per conv tap, tiled across the B lane segments.
    r = jnp.arange(HW, dtype=jnp.int32) // W
    c = jnp.arange(HW, dtype=jnp.int32) % W
    rows = []
    for K, pad in ((K1, P1), (K2, P2)):
        for kh in range(K):
            for kw in range(K):
                dy, dx = kh - pad, kw - pad
                valid = ((r + dy >= 0) & (r + dy < H) &
                         (c + dx >= 0) & (c + dx < W)).astype(jnp.float32)
                rows.append(jnp.tile(valid, B))
    masks = jnp.stack(rows)                                # (K1^2+K2^2, L)

    # Block-diagonal [pos_x | pos_y | ones] selector: columns [kB+b] pick sample b.
    ys = jnp.linspace(-1.0, 1.0, H, dtype=jnp.float32)
    xs = jnp.linspace(-1.0, 1.0, W, dtype=jnp.float32)
    px = jnp.tile(xs, H)                                   # x varies along width
    py = jnp.repeat(ys, W)                                 # y varies along height
    blocks = jnp.stack([px, py, jnp.ones((HW,), jnp.float32)], axis=1)   # (HW, 3)
    posd = (jnp.eye(B, dtype=jnp.float32)[:, None, None, :] *
            blocks[None, :, :, None]).reshape(L, 3 * B)    # (L, 3B)

    # Batch packing: pad N to a multiple of B, pack B samples along the lane axis.
    img_f = img.reshape(N, C_in, HW)
    app1 = jnp.concatenate([mlp_append, jnp.ones((N, 1), jnp.float32)], axis=1)
    if N_pad != N:
        img_f = jnp.concatenate(
            [img_f, jnp.zeros((N_pad - N, C_in, HW), jnp.float32)], axis=0)
        app1 = jnp.concatenate(
            [app1, jnp.zeros((N_pad - N, d_app + 1), jnp.float32)], axis=0)
    img_p = img_f.reshape(NB, B, C_in, HW).transpose(0, 2, 1, 3).reshape(NB, C_in, L)
    app_p = app1.reshape(NB, B, d_app + 1)

    kern = functools.partial(_encoder_kernel, H=H, W=W, K1=K1, P1=P1, K2=K2, P2=P2,
                             B=B, n1=n1, n_bias=n_bias)

    out = pl.pallas_call(
        kern,
        out_shape=jax.ShapeDtypeStruct((NB, B, d_out), jnp.float32),
        grid=(NB,),
        in_specs=[
            pl.BlockSpec((1, C_in, L), lambda n: (n, 0, 0)),
            pl.BlockSpec((1, B, d_app + 1), lambda n: (n, 0, 0)),
            pl.BlockSpec((K1 * K1 + K2 * K2, L), lambda n: (0, 0)),
            pl.BlockSpec((L, 3 * B), lambda n: (0, 0)),
            pl.BlockSpec((C1, n_scr), lambda n: (0, 0)),
            pl.BlockSpec((C2, n_scr), lambda n: (0, 0)),
            pl.BlockSpec((2 * C2 + d_app + 1, d_hid), lambda n: (0, 0)),
            pl.BlockSpec((d_hid + 1, d_hid), lambda n: (0, 0)),
            pl.BlockSpec((d_hid + 1, d_out), lambda n: (0, 0)),
        ],
        out_specs=pl.BlockSpec((1, B, d_out), lambda n: (n, 0, 0)),
        scratch_shapes=[pltpu.VMEM((n_scr, L), jnp.float32)],
        compiler_params=pltpu.CompilerParams(
            dimension_semantics=("parallel",),
            vmem_limit_bytes=16 * 1024 * 1024),
    )(img_p, app_p, masks, posd, w1c, w2c, slab1, slab2, slabo)

    out = out.reshape(N_pad, d_out)[:N]                    # (N, 2*z_total)
    return out[:, :z_total], out[:, z_total:]


# ----------------------------- parameter init ---------------------------------
def init_encoder_params(key, *, input_num_chann=1, dim_mlp_append=5,
                        out_cnn_dim=16, z_total_dim=6):
    """Parameters in PyTorch conventions (Conv2d OIHW, Linear (out, in))."""
    C1 = out_cnn_dim // 4
    C2 = out_cnn_dim // 2
    d_in = out_cnn_dim + dim_mlp_append          # = 2*C2 + dim_mlp_append
    d_hid = out_cnn_dim * 2
    d_out = z_total_dim * 2
    ks = jax.random.split(key, 5)

    def winit(k, shape, fan_in):
        return jax.random.normal(k, shape, jnp.float32) / jnp.sqrt(jnp.float32(fan_in))

    return dict(
        w_conv1=winit(ks[0], (C1, input_num_chann, 5, 5), 25 * input_num_chann),
        b_conv1=jnp.full((C1,), 0.01, jnp.float32),
        w_conv2=winit(ks[1], (C2, C1, 3, 3), 9 * C1),
        b_conv2=jnp.full((C2,), 0.01, jnp.float32),
        w_lin1=winit(ks[2], (d_hid, d_in), d_in),
        b_lin1=jnp.full((d_hid,), 0.01, jnp.float32),
        w_lin2=winit(ks[3], (d_hid, d_hid), d_hid),
        b_lin2=jnp.full((d_hid,), 0.01, jnp.float32),
        w_out=winit(ks[4], (d_out, d_hid), d_hid),
        b_out=jnp.zeros((d_out,), jnp.float32),
    )


if __name__ == "__main__":
    key = jax.random.PRNGKey(0)
    k_param, k_img, k_app = jax.random.split(key, 3)

    # Small shapes consistent with the module: batch=2, 1 input channel,
    # img_size=16, out_cnn_dim=16 (conv1->4 ch, conv2->8 ch, keypoints->16),
    # dim_mlp_append=5, z_total_dim=6 (output = 12 = two 6-dim heads).
    N, C_in, H, W = 2, 1, 16, 16
    dim_mlp_append, z_total_dim = 5, 6

    params = init_encoder_params(
        k_param, input_num_chann=C_in, dim_mlp_append=dim_mlp_append,
        out_cnn_dim=16, z_total_dim=z_total_dim)

    img = jax.random.normal(k_img, (N, C_in, H, W), dtype=jnp.float32)
    mlp_append = jax.random.normal(k_app, (N, dim_mlp_append), dtype=jnp.float32)

    fwd = jax.jit(encoder_forward)
    mu, logvar = fwd(params, img, mlp_append)
    jax.block_until_ready((mu, logvar))
    assert mu.shape == (N, z_total_dim), mu.shape
    assert logvar.shape == (N, z_total_dim), logvar.shape
    print("KERNEL_OK")
</pallas_src>

<mosaic_0001>
module attributes {stable_mosaic.version = 11 : i64} {
  func.func @_encoder_kernel(%arg0: i32, %arg1: memref<1x1x2048xf32, #tpu.memory_space<vmem>>, %arg2: memref<1x8x6xf32, #tpu.memory_space<vmem>>, %arg3: memref<34x2048xf32, #tpu.memory_space<vmem>>, %arg4: memref<2048x24xf32, #tpu.memory_space<vmem>>, %arg5: memref<4x40xf32, #tpu.memory_space<vmem>>, %arg6: memref<8x40xf32, #tpu.memory_space<vmem>>, %arg7: memref<22x32xf32, #tpu.memory_space<vmem>>, %arg8: memref<33x32xf32, #tpu.memory_space<vmem>>, %arg9: memref<33x12xf32, #tpu.memory_space<vmem>>, %arg10: memref<1x8x12xf32, #tpu.memory_space<vmem>>, %arg11: memref<40x2048xf32, #tpu.memory_space<vmem>>) attributes {dimension_semantics = [#tpu.dimension_semantics<parallel>], iteration_bounds = array<i64: 1>, scalar_prefetch = 0 : i64, scratch_operands = 1 : i64, tpu.core_type = #tpu.core_type<tc>, window_params = [{transform_indices = @transform_0, window_bounds = array<i64: 1, 1, 2048>}, {transform_indices = @transform_1, window_bounds = array<i64: 1, 8, 6>}, {pipeline_mode = #tpu.pipeline_mode<synchronous>, transform_indices = @transform_2, window_bounds = array<i64: 34, 2048>}, {pipeline_mode = #tpu.pipeline_mode<synchronous>, transform_indices = @transform_3, window_bounds = array<i64: 2048, 24>}, {pipeline_mode = #tpu.pipeline_mode<synchronous>, transform_indices = @transform_4, window_bounds = array<i64: 4, 40>}, {pipeline_mode = #tpu.pipeline_mode<synchronous>, transform_indices = @transform_5, window_bounds = array<i64: 8, 40>}, {pipeline_mode = #tpu.pipeline_mode<synchronous>, transform_indices = @transform_6, window_bounds = array<i64: 22, 32>}, {pipeline_mode = #tpu.pipeline_mode<synchronous>, transform_indices = @transform_7, window_bounds = array<i64: 33, 32>}, {pipeline_mode = #tpu.pipeline_mode<synchronous>, transform_indices = @transform_8, window_bounds = array<i64: 33, 12>}, {transform_indices = @transform_9, window_bounds = array<i64: 1, 8, 12>}]} {
    %cst = arith.constant 0.000000e+00 : f32
    %0 = vector.broadcast %cst : f32 to vector<15x2048xf32>
    %c25 = arith.constant 25 : index
    %c0 = arith.constant 0 : index
    %1 = vector.load %arg11[%c25, %c0] : memref<40x2048xf32, #tpu.memory_space<vmem>>, vector<15x2048xf32>
    tpu.vector_store %arg11[%c25, %c0], %0 {strides = array<i32>} : memref<40x2048xf32, #tpu.memory_space<vmem>>, vector<15x2048xf32>,
    %cst_0 = arith.constant 1.000000e+00 : f32
    %2 = vector.broadcast %cst_0 : f32 to vector<1x2048xf32>
    %c36 = arith.constant 36 : index
    %c0_1 = arith.constant 0 : index
    %3 = vector.load %arg11[%c36, %c0_1] : memref<40x2048xf32, #tpu.memory_space<vmem>>, vector<1x2048xf32>
    tpu.vector_store %arg11[%c36, %c0_1], %2 {strides = array<i32>} : memref<40x2048xf32, #tpu.memory_space<vmem>>, vector<1x2048xf32>,
    %c0_2 = arith.constant 0 : index
    %c0_3 = arith.constant 0 : index
    %c0_4 = arith.constant 0 : index
    %4 = vector.load %arg1[%c0_2, %c0_3, %c0_4] : memref<1x1x2048xf32, #tpu.memory_space<vmem>>, vector<1x1x2048xf32>
    %5 = vector.shape_cast %4 : vector<1x1x2048xf32> to vector<1x2048xf32>
    %c34_i32 = arith.constant 34 : i32
    %6 = tpu.dynamic_rotate %5 by %c34_i32 dim 1 : vector<1x2048xf32>, i32 -> vector<1x2048xf32>
    %c0_5 = arith.constant 0 : index
    %c0_6 = arith.constant 0 : index
    %7 = vector.load %arg3[%c0_5, %c0_6] : memref<34x2048xf32, #tpu.memory_space<vmem>>, vector<1x2048xf32>
    %8 = arith.mulf %6, %7 : vector<1x2048xf32>
    %c0_7 = arith.constant 0 : index
    %c0_8 = arith.constant 0 : index
    %9 = vector.load %arg11[%c0_7, %c0_8] : memref<40x2048xf32, #tpu.memory_space<vmem>>, vector<1x2048xf32>
    tpu.vector_store %arg11[%c0_7, %c0_8], %8 {strides = array<i32>} : memref<40x2048xf32, #tpu.memory_space<vmem>>, vector<1x2048xf32>,
    %c33_i32 = arith.constant 33 : i32
    %10 = tpu.dynamic_rotate %5 by %c33_i32 dim 1 : vector<1x2048xf32>, i32 -> vector<1x2048xf32>
    %c1 = arith.constant 1 : index
    %c0_9 = arith.constant 0 : index
    %11 = vector.load %arg3[%c1, %c0_9] : memref<34x2048xf32, #tpu.memory_space<vmem>>, vector<1x2048xf32>
    %12 = arith.mulf %10, %11 : vector<1x2048xf32>
    %c1_10 = arith.constant 1 : index
    %c0_11 = arith.constant 0 : index
    %13 = vector.load %arg11[%c1_10, %c0_11] : memref<40x2048xf32, #tpu.memory_space<vmem>>, vector<1x2048xf32>
    tpu.vector_store %arg11[%c1_10, %c0_11], %12 {strides = array<i32>} : memref<40x2048xf32, #tpu.memory_space<vmem>>, vector<1x2048xf32>,
    %c32_i32 = arith.constant 32 : i32
    %14 = tpu.dynamic_rotate %5 by %c32_i32 dim 1 : vector<1x2048xf32>, i32 -> vector<1x2048xf32>
    %c2 = arith.constant 2 : index
    %c0_12 = arith.constant 0 : index
    %15 = vector.load %arg3[%c2, %c0_12] : memref<34x2048xf32, #tpu.memory_space<vmem>>, vector<1x2048xf32>
    %16 = arith.mulf %14, %15 : vector<1x2048xf32>
    %c2_13 = arith.constant 2 : index
    %c0_14 = arith.constant 0 : index
    %17 = vector.load %arg11[%c2_13, %c0_14] : memref<40x2048xf32, #tpu.memory_space<vmem>>, vector<1x2048xf32>
    tpu.vector_store %arg11[%c2_13, %c0_14], %16 {strides = array<i32>} : memref<40x2048xf32, #tpu.memory_space<vmem>>, vector<1x2048xf32>,
    %c31_i32 = arith.constant 31 : i32
    %18 = tpu.dynamic_rotate %5 by %c31_i32 dim 1 : vector<1x2048xf32>, i32 -> vector<1x2048xf32>
    %c3 = arith.constant 3 : index
    %c0_15 = arith.constant 0 : index
    %19 = vector.load %arg3[%c3, %c0_15] : memref<34x2048xf32, #tpu.memory_space<vmem>>, vector<1x2048xf32>
    %20 = arith.mulf %18, %19 : vector<1x2048xf32>
    %c3_16 = arith.constant 3 : index
    %c0_17 = arith.constant 0 : index
    %21 = vector.load %arg11[%c3_16, %c0_17] : memref<40x2048xf32, #tpu.memory_space<vmem>>, vector<1x2048xf32>
    tpu.vector_store %arg11[%c3_16, %c0_17], %20 {strides = array<i32>} : memref<40x2048xf32, #tpu.memory_space<vmem>>, vector<1x2048xf32>,
    %c30_i32 = arith.constant 30 : i32
    %22 = tpu.dynamic_rotate %5 by %c30_i32 dim 1 : vector<1x2048xf32>, i32 -> vector<1x2048xf32>
    %c4 = arith.constant 4 : index
    %c0_18 = arith.constant 0 : index
    %23 = vector.load %arg3[%c4, %c0_18] : memref<34x2048xf32, #tpu.memory_space<vmem>>, vector<1x2048xf32>
    %24 = arith.mulf %22, %23 : vector<1x2048xf32>
    %c4_19 = arith.constant 4 : index
    %c0_20 = arith.constant 0 : index
    %25 = vector.load %arg11[%c4_19, %c0_20] : memref<40x2048xf32, #tpu.memory_space<vmem>>, vector<1x2048xf32>
    tpu.vector_store %arg11[%c4_19, %c0_20], %24 {strides = array<i32>} : memref<40x2048xf32, #tpu.memory_space<vmem>>, vector<1x2048xf32>,
    %c18_i32 = arith.constant 18 : i32
    %26 = tpu.dynamic_rotate %5 by %c18_i32 dim 1 : vector<1x2048xf32>, i32 -> vector<1x2048xf32>
    %c5 = arith.constant 5 : index
    %c0_21 = arith.constant 0 : index
    %27 = vector.load %arg3[%c5, %c0_21] : memref<34x2048xf32, #tpu.memory_space<vmem>>, vector<1x2048xf32>
    %28 = arith.mulf %26, %27 : vector<1x2048xf32>
    %c5_22 = arith.constant 5 : index
    %c0_23 = arith.constant 0 : index
    %29 = vector.load %arg11[%c5_22, %c0_23] : memref<40x2048xf32, #tpu.memory_space<vmem>>, vector<1x2048xf32>
    tpu.vector_store %arg11[%c5_22, %c0_23], %28 {strides = array<i32>} : memref<40x2048xf32, #tpu.memory_space<vmem>>, vector<1x2048xf32>,
    %c17_i32 = arith.constant 17 : i32
    %30 = tpu.dynamic_rotate %5 by %c17_i32 dim 1 : vector<1x2048xf32>, i32 -> vector<1x2048xf32>
    %c6 = arith.constant 6 : index
    %c0_24 = arith.constant 0 : index
    %31 = vector.load %arg3[%c6, %c0_24] : memref<34x2048xf32, #tpu.memory_space<vmem>>, vector<1x2048xf32>
    %32 = arith.mulf %30, %31 : vector<1x2048xf32>
    %c6_25 = arith.constant 6 : index
    %c0_26 = arith.constant 0 : index
    %33 = vector.load %arg11[%c6_25, %c0_26] : memref<40x2048xf32, #tpu.memory_space<vmem>>, vector<1x2048xf32>
    tpu.vector_store %arg11[%c6_25, %c0_26], %32 {strides = array<i32>} : memref<40x2048xf32, #tpu.memory_space<vmem>>, vector<1x2048xf32>,
    %c16_i32 = arith.constant 16 : i32
    %34 = tpu.dynamic_rotate %5 by %c16_i32 dim 1 : vector<1x2048xf32>, i32 -> vector<1x2048xf32>
    %c7 = arith.constant 7 : index
    %c0_27 = arith.constant 0 : index
    %35 = vector.load %arg3[%c7, %c0_27] : memref<34x2048xf32, #tpu.memory_space<vmem>>, vector<1x2048xf32>
    %36 = arith.mulf %34, %35 : vector<1x2048xf32>
    %c7_28 = arith.constant 7 : index
    %c0_29 = arith.constant 0 : index
    %37 = vector.load %arg11[%c7_28, %c0_29] : memref<40x2048xf32, #tpu.memory_space<vmem>>, vector<1x2048xf32>
    tpu.vector_store %arg11[%c7_28, %c0_29], %36 {strides = array<i32>} : memref<40x2048xf32, #tpu.memory_space<vmem>>, vector<1x2048xf32>,
    %c15_i32 = arith.constant 15 : i32
    %38 = tpu.dynamic_rotate %5 by %c15_i32 dim 1 : vector<1x2048xf32>, i32 -> vector<1x2048xf32>
    %c8 = arith.constant 8 : index
    %c0_30 = arith.constant 0 : index
    %39 = vector.load %arg3[%c8, %c0_30] : memref<34x2048xf32, #tpu.memory_space<vmem>>, vector<1x2048xf32>
    %40 = arith.mulf %38, %39 : vector<1x2048xf32>
    %c8_31 = arith.constant 8 : index
    %c0_32 = arith.constant 0 : index
    %41 = vector.load %arg11[%c8_31, %c0_32] : memref<40x2048xf32, #tpu.memory_space<vmem>>, vector<1x2048xf32>
    tpu.vector_store %arg11[%c8_31, %c0_32], %40 {strides = array<i32>} : memref<40x2048xf32, #tpu.memory_space<vmem>>, vector<1x2048xf32>,
    %c14_i32 = arith.constant 14 : i32
    %42 = tpu.dynamic_rotate %5 by %c14_i32 dim 1 : vector<1x2048xf32>, i32 -> vector<1x2048xf32>
    %c9 = arith.constant 9 : index
    %c0_33 = arith.constant 0 : index
    %43 = vector.load %arg3[%c9, %c0_33] : memref<34x2048xf32, #tpu.memory_space<vmem>>, vector<1x2048xf32>
    %44 = arith.mulf %42, %43 : vector<1x2048xf32>
    %c9_34 = arith.constant 9 : index
    %c0_35 = arith.constant 0 : index
    %45 = vector.load %arg11[%c9_34, %c0_35] : memref<40x2048xf32, #tpu.memory_space<vmem>>, vector<1x2048xf32>
    tpu.vector_store %arg11[%c9_34, %c0_35], %44 {strides = array<i32>} : memref<40x2048xf32, #tpu.memory_space<vmem>>, vector<1x2048xf32>,
    %c2_i32 = arith.constant 2 : i32
    %46 = tpu.dynamic_rotate %5 by %c2_i32 dim 1 : vector<1x2048xf32>, i32 -> vector<1x2048xf32>
    %c10 = arith.constant 10 : index
    %c0_36 = arith.constant 0 : index
    %47 = vector.load %arg3[%c10, %c0_36] : memref<34x2048xf32, #tpu.memory_space<vmem>>, vector<1x2048xf32>
    %48 = arith.mulf %46, %47 : vector<1x2048xf32>
    %c10_37 = arith.constant 10 : index
    %c0_38 = arith.constant 0 : index
    %49 = vector.load %arg11[%c10_37, %c0_38] : memref<40x2048xf32, #tpu.memory_space<vmem>>, vector<1x2048xf32>
    tpu.vector_store %arg11[%c10_37, %c0_38], %48 {strides = array<i32>} : memref<40x2048xf32, #tpu.memory_space<vmem>>, vector<1x2048xf32>,
    %c1_i32 = arith.constant 1 : i32
    %50 = tpu.dynamic_rotate %5 by %c1_i32 dim 1 : vector<1x2048xf32>, i32 -> vector<1x2048xf32>
    %c11 = arith.constant 11 : index
    %c0_39 = arith.constant 0 : index
    %51 = vector.load %arg3[%c11, %c0_39] : memref<34x2048xf32, #tpu.memory_space<vmem>>, vector<1x2048xf32>
    %52 = arith.mulf %50, %51 : vector<1x2048xf32>
    %c11_40 = arith.constant 11 : index
    %c0_41 = arith.constant 0 : index
    %53 = vector.load %arg11[%c11_40, %c0_41] : memref<40x2048xf32, #tpu.memory_space<vmem>>, vector<1x2048xf32>
    tpu.vector_store %arg11[%c11_40, %c0_41], %52 {strides = array<i32>} : memref<40x2048xf32, #tpu.memory_space<vmem>>, vector<1x2048xf32>,
    %c12 = arith.constant 12 : index
    %c0_42 = arith.constant 0 : index
    %54 = vector.load %arg3[%c12, %c0_42] : memref<34x2048xf32, #tpu.memory_space<vmem>>, vector<1x2048xf32>
    %55 = arith.mulf %5, %54 : vector<1x2048xf32>
    %c12_43 = arith.constant 12 : index
    %c0_44 = arith.constant 0 : index
    %56 = vector.load %arg11[%c12_43, %c0_44] : memref<40x2048xf32, #tpu.memory_space<vmem>>, vector<1x2048xf32>
    tpu.vector_store %arg11[%c12_43, %c0_44], %55 {strides = array<i32>} : memref<40x2048xf32, #tpu.memory_space<vmem>>, vector<1x2048xf32>,
    %c2047_i32 = arith.constant 2047 : i32
    %57 = tpu.dynamic_rotate %5 by %c2047_i32 dim 1 : vector<1x2048xf32>, i32 -> vector<1x2048xf32>
    %c13 = arith.constant 13 : index
    %c0_45 = arith.constant 0 : index
    %58 = vector.load %arg3[%c13, %c0_45] : memref<34x2048xf32, #tpu.memory_space<vmem>>, vector<1x2048xf32>
    %59 = arith.mulf %57, %58 : vector<1x2048xf32>
    %c13_46 = arith.constant 13 : index
    %c0_47 = arith.constant 0 : index
    %60 = vector.load %arg11[%c13_46, %c0_47] : memref<40x2048xf32, #tpu.memory_space<vmem>>, vector<1x2048xf32>
    tpu.vector_store %arg11[%c13_46, %c0_47], %59 {strides = array<i32>} : memref<40x2048xf32, #tpu.memory_space<vmem>>, vector<1x2048xf32>,
    %c2046_i32 = arith.constant 2046 : i32
    %61 = tpu.dynamic_rotate %5 by %c2046_i32 dim 1 : vector<1x2048xf32>, i32 -> vector<1x2048xf32>
    %c14 = arith.constant 14 : index
    %c0_48 = arith.constant 0 : index
    %62 = vector.load %arg3[%c14, %c0_48] : memref<34x2048xf32, #tpu.memory_space<vmem>>, vector<1x2048xf32>
    %63 = arith.mulf %61, %62 : vector<1x2048xf32>
    %c14_49 = arith.constant 14 : index
    %c0_50 = arith.constant 0 : index
    %64 = vector.load %arg11[%c14_49, %c0_50] : memref<40x2048xf32, #tpu.memory_space<vmem>>, vector<1x2048xf32>
    tpu.vector_store %arg11[%c14_49, %c0_50], %63 {strides = array<i32>} : memref<40x2048xf32, #tpu.memory_space<vmem>>, vector<1x2048xf32>,
    %c2034_i32 = arith.constant 2034 : i32
    %65 = tpu.dynamic_rotate %5 by %c2034_i32 dim 1 : vector<1x2048xf32>, i32 -> vector<1x2048xf32>
    %c15 = arith.constant 15 : index
    %c0_51 = arith.constant 0 : index
    %66 = vector.load %arg3[%c15, %c0_51] : memref<34x2048xf32, #tpu.memory_space<vmem>>, vector<1x2048xf32>
    %67 = arith.mulf %65, %66 : vector<1x2048xf32>
    %c15_52 = arith.constant 15 : index
    %c0_53 = arith.constant 0 : index
    %68 = vector.load %arg11[%c15_52, %c0_53] : memref<40x2048xf32, #tpu.memory_space<vmem>>, vector<1x2048xf32>
    tpu.vector_store %arg11[%c15_52, %c0_53], %67 {strides = array<i32>} : memref<40x2048xf32, #tpu.memory_space<vmem>>, vector<1x2048xf32>,
    %c2033_i32 = arith.constant 2033 : i32
    %69 = tpu.dynamic_rotate %5 by %c2033_i32 dim 1 : vector<1x2048xf32>, i32 -> vector<1x2048xf32>
    %c16 = arith.constant 16 : index
    %c0_54 = arith.constant 0 : index
    %70 = vector.load %arg3[%c16, %c0_54] : memref<34x2048xf32, #tpu.memory_space<vmem>>, vector<1x2048xf32>
    %71 = arith.mulf %69, %70 : vector<1x2048xf32>
    %c16_55 = arith.constant 16 : index
    %c0_56 = arith.constant 0 : index
    %72 = vector.load %arg11[%c16_55, %c0_56] : memref<40x2048xf32, #tpu.memory_space<vmem>>, vector<1x2048xf32>
    tpu.vector_store %arg11[%c16_55, %c0_56], %71 {strides = array<i32>} : memref<40x2048xf32, #tpu.memory_space<vmem>>, vector<1x2048xf32>,
    %c2032_i32 = arith.constant 2032 : i32
    %73 = tpu.dynamic_rotate %5 by %c2032_i32 dim 1 : vector<1x2048xf32>, i32 -> vector<1x2048xf32>
    %c17 = arith.constant 17 : index
    %c0_57 = arith.constant 0 : index
    %74 = vector.load %arg3[%c17, %c0_57] : memref<34x2048xf32, #tpu.memory_space<vmem>>, vector<1x2048xf32>
    %75 = arith.mulf %73, %74 : vector<1x2048xf32>
    %c17_58 = arith.constant 17 : index
    %c0_59 = arith.constant 0 : index
    %76 = vector.load %arg11[%c17_58, %c0_59] : memref<40x2048xf32, #tpu.memory_space<vmem>>, vector<1x2048xf32>
    tpu.vector_store %arg11[%c17_58, %c0_59], %75 {strides = array<i32>} : memref<40x2048xf32, #tpu.memory_space<vmem>>, vector<1x2048xf32>,
    %c2031_i32 = arith.constant 2031 : i32
    %77 = tpu.dynamic_rotate %5 by %c2031_i32 dim 1 : vector<1x2048xf32>, i32 -> vector<1x2048xf32>
    %c18 = arith.constant 18 : index
    %c0_60 = arith.constant 0 : index
    %78 = vector.load %arg3[%c18, %c0_60] : memref<34x2048xf32, #tpu.memory_space<vmem>>, vector<1x2048xf32>
    %79 = arith.mulf %77, %78 : vector<1x2048xf32>
    %c18_61 = arith.constant 18 : index
    %c0_62 = arith.constant 0 : index
    %80 = vector.load %arg11[%c18_61, %c0_62] : memref<40x2048xf32, #tpu.memory_space<vmem>>, vector<1x2048xf32>
    tpu.vector_store %arg11[%c18_61, %c0_62], %79 {strides = array<i32>} : memref<40x2048xf32, #tpu.memory_space<vmem>>, vector<1x2048xf32>,
    %c2030_i32 = arith.constant 2030 : i32
    %81 = tpu.dynamic_rotate %5 by %c2030_i32 dim 1 : vector<1x2048xf32>, i32 -> vector<1x2048xf32>
    %c19 = arith.constant 19 : index
    %c0_63 = arith.constant 0 : index
    %82 = vector.load %arg3[%c19, %c0_63] : memref<34x2048xf32, #tpu.memory_space<vmem>>, vector<1x2048xf32>
    %83 = arith.mulf %81, %82 : vector<1x2048xf32>
    %c19_64 = arith.constant 19 : index
    %c0_65 = arith.constant 0 : index
    %84 = vector.load %arg11[%c19_64, %c0_65] : memref<40x2048xf32, #tpu.memory_space<vmem>>, vector<1x2048xf32>
    tpu.vector_store %arg11[%c19_64, %c0_65], %83 {strides = array<i32>} : memref<40x2048xf32, #tpu.memory_space<vmem>>, vector<1x2048xf32>,
    %c2018_i32 = arith.constant 2018 : i32
    %85 = tpu.dynamic_rotate %5 by %c2018_i32 dim 1 : vector<1x2048xf32>, i32 -> vector<1x2048xf32>
    %c20 = arith.constant 20 : index
    %c0_66 = arith.constant 0 : index
    %86 = vector.load %arg3[%c20, %c0_66] : memref<34x2048xf32, #tpu.memory_space<vmem>>, vector<1x2048xf32>
    %87 = arith.mulf %85, %86 : vector<1x2048xf32>
    %c20_67 = arith.constant 20 : index
    %c0_68 = arith.constant 0 : index
    %88 = vector.load %arg11[%c20_67, %c0_68] : memref<40x2048xf32, #tpu.memory_space<vmem>>, vector<1x2048xf32>
    tpu.vector_store %arg11[%c20_67, %c0_68], %87 {strides = array<i32>} : memref<40x2048xf32, #tpu.memory_space<vmem>>, vector<1x2048xf32>,
    %c2017_i32 = arith.constant 2017 : i32
    %89 = tpu.dynamic_rotate %5 by %c2017_i32 dim 1 : vector<1x2048xf32>, i32 -> vector<1x2048xf32>
    %c21 = arith.constant 21 : index
    %c0_69 = arith.constant 0 : index
    %90 = vector.load %arg3[%c21, %c0_69] : memref<34x2048xf32, #tpu.memory_space<vmem>>, vector<1x2048xf32>
    %91 = arith.mulf %89, %90 : vector<1x2048xf32>
    %c21_70 = arith.constant 21 : index
    %c0_71 = arith.constant 0 : index
    %92 = vector.load %arg11[%c21_70, %c0_71] : memref<40x2048xf32, #tpu.memory_space<vmem>>, vector<1x2048xf32>
    tpu.vector_store %arg11[%c21_70, %c0_71], %91 {strides = array<i32>} : memref<40x2048xf32, #tpu.memory_space<vmem>>, vector<1x2048xf32>,
    %c2016_i32 = arith.constant 2016 : i32
    %93 = tpu.dynamic_rotate %5 by %c2016_i32 dim 1 : vector<1x2048xf32>, i32 -> vector<1x2048xf32>
    %c22 = arith.constant 22 : index
    %c0_72 = arith.constant 0 : index
    %94 = vector.load %arg3[%c22, %c0_72] : memref<34x2048xf32, #tpu.memory_space<vmem>>, vector<1x2048xf32>
    %95 = arith.mulf %93, %94 : vector<1x2048xf32>
    %c22_73 = arith.constant 22 : index
    %c0_74 = arith.constant 0 : index
    %96 = vector.load %arg11[%c22_73, %c0_74] : memref<40x2048xf32, #tpu.memory_space<vmem>>, vector<1x2048xf32>
    tpu.vector_store %arg11[%c22_73, %c0_74], %95 {strides = array<i32>} : memref<40x2048xf32, #tpu.memory_space<vmem>>, vector<1x2048xf32>,
    %c2015_i32 = arith.constant 2015 : i32
    %97 = tpu.dynamic_rotate %5 by %c2015_i32 dim 1 : vector<1x2048xf32>, i32 -> vector<1x2048xf32>
    %c23 = arith.constant 23 : index
    %c0_75 = arith.constant 0 : index
    %98 = vector.load %arg3[%c23, %c0_75] : memref<34x2048xf32, #tpu.memory_space<vmem>>, vector<1x2048xf32>
    %99 = arith.mulf %97, %98 : vector<1x2048xf32>
    %c23_76 = arith.constant 23 : index
    %c0_77 = arith.constant 0 : index
    %100 = vector.load %arg11[%c23_76, %c0_77] : memref<40x2048xf32, #tpu.memory_space<vmem>>, vector<1x2048xf32>
    tpu.vector_store %arg11[%c23_76, %c0_77], %99 {strides = array<i32>} : memref<40x2048xf32, #tpu.memory_space<vmem>>, vector<1x2048xf32>,
    %c2014_i32 = arith.constant 2014 : i32
    %101 = tpu.dynamic_rotate %5 by %c2014_i32 dim 1 : vector<1x2048xf32>, i32 -> vector<1x2048xf32>
    %c24 = arith.constant 24 : index
    %c0_78 = arith.constant 0 : index
    %102 = vector.load %arg3[%c24, %c0_78] : memref<34x2048xf32, #tpu.memory_space<vmem>>, vector<1x2048xf32>
    %103 = arith.mulf %101, %102 : vector<1x2048xf32>
    %c24_79 = arith.constant 24 : index
    %c0_80 = arith.constant 0 : index
    %104 = vector.load %arg11[%c24_79, %c0_80] : memref<40x2048xf32, #tpu.memory_space<vmem>>, vector<1x2048xf32>
    tpu.vector_store %arg11[%c24_79, %c0_80], %103 {strides = array<i32>} : memref<40x2048xf32, #tpu.memory_space<vmem>>, vector<1x2048xf32>,
    %c0_81 = arith.constant 0 : index
    %c0_82 = arith.constant 0 : index
    %105 = vector.load %arg5[%c0_81, %c0_82] : memref<4x40xf32, #tpu.memory_space<vmem>>, vector<4x40xf32>
    %c0_83 = arith.constant 0 : index
    %c0_84 = arith.constant 0 : index
    %106 = vector.load %arg11[%c0_83, %c0_84] : memref<40x2048xf32, #tpu.memory_space<vmem>>, vector<40x2048xf32>
    %cst_85 = arith.constant dense<0.000000e+00> : vector<4x2048xf32>
    %107 = tpu.matmul %105, %106, %cst_85 {dimension_numbers = #tpu.dot_dimension_numbers<[1], [0], [0], [1], [0, 0, 1, 1], [], []>} : vector<4x40xf32>, vector<40x2048xf32>, vector<4x2048xf32> -> vector<4x2048xf32>
    %cst_86 = arith.constant 0.000000e+00 : f32
    %108 = vector.broadcast %cst_86 : f32 to vector<4x2048xf32>
    %109 = arith.maximumf %107, %108 : vector<4x2048xf32>
    %c17_i32_87 = arith.constant 17 : i32
    %110 = tpu.dynamic_rotate %109 by %c17_i32_87 dim 1 : vector<4x2048xf32>, i32 -> vector<4x2048xf32>
    %c25_88 = arith.constant 25 : index
    %c0_89 = arith.constant 0 : index
    %111 = vector.load %arg3[%c25_88, %c0_89] : memref<34x2048xf32, #tpu.memory_space<vmem>>, vector<1x2048xf32>
    %112 = vector.broadcast %111 : vector<1x2048xf32> to vector<4x2048xf32>
    %113 = arith.mulf %110, %112 : vector<4x2048xf32>
    %c0_90 = arith.constant 0 : index
    %c0_91 = arith.constant 0 : index
    %114 = vector.load %arg11[%c0_90, %c0_91] : memref<40x2048xf32, #tpu.memory_space<vmem>>, vector<4x2048xf32>
    tpu.vector_store %arg11[%c0_90, %c0_91], %113 {strides = array<i32>} : memref<40x2048xf32, #tpu.memory_space<vmem>>, vector<4x2048xf32>,
    %c16_i32_92 = arith.constant 16 : i32
    %115 = tpu.dynamic_rotate %109 by %c16_i32_92 dim 1 : vector<4x2048xf32>, i32 -> vector<4x2048xf32>
    %c26 = arith.constant 26 : index
    %c0_93 = arith.constant 0 : index
    %116 = vector.load %arg3[%c26, %c0_93] : memref<34x2048xf32, #tpu.memory_space<vmem>>, vector<1x2048xf32>
    %117 = vector.broadcast %116 : vector<1x2048xf32> to vector<4x2048xf32>
    %118 = arith.mulf %115, %117 : vector<4x2048xf32>
    %c4_94 = arith.constant 4 : index
    %c0_95 = arith.constant 0 : index
    %119 = vector.load %arg11[%c4_94, %c0_95] : memref<40x2048xf32, #tpu.memory_space<vmem>>, vector<4x2048xf32>
    tpu.vector_store %arg11[%c4_94, %c0_95], %118 {strides = array<i32>} : memref<40x2048xf32, #tpu.memory_space<vmem>>, vector<4x2048xf32>,
    %c15_i32_96 = arith.constant 15 : i32
    %120 = tpu.dynamic_rotate %109 by %c15_i32_96 dim 1 : vector<4x2048xf32>, i32 -> vector<4x2048xf32>
    %c27 = arith.constant 27 : index
    %c0_97 = arith.constant 0 : index
    %121 = vector.load %arg3[%c27, %c0_97] : memref<34x2048xf32, #tpu.memory_space<vmem>>, vector<1x2048xf32>
    %122 = vector.broadcast %121 : vector<1x2048xf32> to vector<4x2048xf32>
    %123 = arith.mulf %120, %122 : vector<4x2048xf32>
    %c8_98 = arith.constant 8 : index
    %c0_99 = arith.constant 0 : index
    %124 = vector.load %arg11[%c8_98, %c0_99] : memref<40x2048xf32, #tpu.memory_space<vmem>>, vector<4x2048xf32>
    tpu.vector_store %arg11[%c8_98, %c0_99], %123 {strides = array<i32>} : memref<40x2048xf32, #tpu.memory_space<vmem>>, vector<4x2048xf32>,
    %c1_i32_100 = arith.constant 1 : i32
    %125 = tpu.dynamic_rotate %109 by %c1_i32_100 dim 1 : vector<4x2048xf32>, i32 -> vector<4x2048xf32>
    %c28 = arith.constant 28 : index
    %c0_101 = arith.constant 0 : index
    %126 = vector.load %arg3[%c28, %c0_101] : memref<34x2048xf32, #tpu.memory_space<vmem>>, vector<1x2048xf32>
    %127 = vector.broadcast %126 : vector<1x2048xf32> to vector<4x2048xf32>
    %128 = arith.mulf %125, %127 : vector<4x2048xf32>
    %c12_102 = arith.constant 12 : index
    %c0_103 = arith.constant 0 : index
    %129 = vector.load %arg11[%c12_102, %c0_103] : memref<40x2048xf32, #tpu.memory_space<vmem>>, vector<4x2048xf32>
    tpu.vector_store %arg11[%c12_102, %c0_103], %128 {strides = array<i32>} : memref<40x2048xf32, #tpu.memory_space<vmem>>, vector<4x2048xf32>,
    %c29 = arith.constant 29 : index
    %c0_104 = arith.constant 0 : index
    %130 = vector.load %arg3[%c29, %c0_104] : memref<34x2048xf32, #tpu.memory_space<vmem>>, vector<1x2048xf32>
    %131 = vector.broadcast %130 : vector<1x2048xf32> to vector<4x2048xf32>
    %132 = arith.mulf %109, %131 : vector<4x2048xf32>
    %c16_105 = arith.constant 16 : index
    %c0_106 = arith.constant 0 : index
    %133 = vector.load %arg11[%c16_105, %c0_106] : memref<40x2048xf32, #tpu.memory_space<vmem>>, vector<4x2048xf32>
    tpu.vector_store %arg11[%c16_105, %c0_106], %132 {strides = array<i32>} : memref<40x2048xf32, #tpu.memory_space<vmem>>, vector<4x2048xf32>,
    %c2047_i32_107 = arith.constant 2047 : i32
    %134 = tpu.dynamic_rotate %109 by %c2047_i32_107 dim 1 : vector<4x2048xf32>, i32 -> vector<4x2048xf32>
    %c30 = arith.constant 30 : index
    %c0_108 = arith.constant 0 : index
    %135 = vector.load %arg3[%c30, %c0_108] : memref<34x2048xf32, #tpu.memory_space<vmem>>, vector<1x2048xf32>
    %136 = vector.broadcast %135 : vector<1x2048xf32> to vector<4x2048xf32>
    %137 = arith.mulf %134, %136 : vector<4x2048xf32>
    %c20_109 = arith.constant 20 : index
    %c0_110 = arith.constant 0 : index
    %138 = vector.load %arg11[%c20_109, %c0_110] : memref<40x2048xf32, #tpu.memory_space<vmem>>, vector<4x2048xf32>
    tpu.vector_store %arg11[%c20_109, %c0_110], %137 {strides = array<i32>} : memref<40x2048xf32, #tpu.memory_space<vmem>>, vector<4x2048xf32>,
    %c2033_i32_111 = arith.constant 2033 : i32
    %139 = tpu.dynamic_rotate %109 by %c2033_i32_111 dim 1 : vector<4x2048xf32>, i32 -> vector<4x2048xf32>
    %c31 = arith.constant 31 : index
    %c0_112 = arith.constant 0 : index
    %140 = vector.load %arg3[%c31, %c0_112] : memref<34x2048xf32, #tpu.memory_space<vmem>>, vector<1x2048xf32>
    %141 = vector.broadcast %140 : vector<1x2048xf32> to vector<4x2048xf32>
    %142 = arith.mulf %139, %141 : vector<4x2048xf32>
    %c24_113 = arith.constant 24 : index
    %c0_114 = arith.constant 0 : index
    %143 = vector.load %arg11[%c24_113, %c0_114] : memref<40x2048xf32, #tpu.memory_space<vmem>>, vector<4x2048xf32>
    tpu.vector_store %arg11[%c24_113, %c0_114], %142 {strides = array<i32>} : memref<40x2048xf32, #tpu.memory_space<vmem>>, vector<4x2048xf32>,
    %c2032_i32_115 = arith.constant 2032 : i32
    %144 = tpu.dynamic_rotate %109 by %c2032_i32_115 dim 1 : vector<4x2048xf32>, i32 -> vector<4x2048xf32>
    %c32 = arith.constant 32 : index
    %c0_116 = arith.constant 0 : index
    %145 = vector.load %arg3[%c32, %c0_116] : memref<34x2048xf32, #tpu.memory_space<vmem>>, vector<1x2048xf32>
    %146 = vector.broadcast %145 : vector<1x2048xf32> to vector<4x2048xf32>
    %147 = arith.mulf %144, %146 : vector<4x2048xf32>
    %c28_117 = arith.constant 28 : index
    %c0_118 = arith.constant 0 : index
    %148 = vector.load %arg11[%c28_117, %c0_118] : memref<40x2048xf32, #tpu.memory_space<vmem>>, vector<4x2048xf32>
    tpu.vector_store %arg11[%c28_117, %c0_118], %147 {strides = array<i32>} : memref<40x2048xf32, #tpu.memory_space<vmem>>, vector<4x2048xf32>,
    %c2031_i32_119 = arith.constant 2031 : i32
    %149 = tpu.dynamic_rotate %109 by %c2031_i32_119 dim 1 : vector<4x2048xf32>, i32 -> vector<4x2048xf32>
    %c33 = arith.constant 33 : index
    %c0_120 = arith.constant 0 : index
    %150 = vector.load %arg3[%c33, %c0_120] : memref<34x2048xf32, #tpu.memory_space<vmem>>, vector<1x2048xf32>
    %151 = vector.broadcast %150 : vector<1x2048xf32> to vector<4x2048xf32>
    %152 = arith.mulf %149, %151 : vector<4x2048xf32>
    %c32_121 = arith.constant 32 : index
    %c0_122 = arith.constant 0 : index
    %153 = vector.load %arg11[%c32_121, %c0_122] : memref<40x2048xf32, #tpu.memory_space<vmem>>, vector<4x2048xf32>
    tpu.vector_store %arg11[%c32_121, %c0_122], %152 {strides = array<i32>} : memref<40x2048xf32, #tpu.memory_space<vmem>>, vector<4x2048xf32>,
    %c0_123 = arith.constant 0 : index
    %c0_124 = arith.constant 0 : index
    %154 = vector.load %arg6[%c0_123, %c0_124] : memref<8x40xf32, #tpu.memory_space<vmem>>, vector<8x40xf32>
    %c0_125 = arith.constant 0 : index
    %c0_126 = arith.constant 0 : index
    %155 = vector.load %arg11[%c0_125, %c0_126] : memref<40x2048xf32, #tpu.memory_space<vmem>>, vector<40x2048xf32>
    %cst_127 = arith.constant dense<0.000000e+00> : vector<8x2048xf32>
    %156 = tpu.matmul %154, %155, %cst_127 {dimension_numbers = #tpu.dot_dimension_numbers<[1], [0], [0], [1], [0, 0, 1, 1], [], []>} : vector<8x40xf32>, vector<40x2048xf32>, vector<8x2048xf32> -> vector<8x2048xf32>
    %cst_128 = arith.constant 0.000000e+00 : f32
    %157 = vector.broadcast %cst_128 : f32 to vector<8x2048xf32>
    %158 = arith.maximumf %156, %157 : vector<8x2048xf32>
    %cst_129 = arith.constant dense<0xFF800000> : vector<8xf32>
    %159 = vector.multi_reduction <maximumf>, %158, %cst_129 [1] : vector<8x2048xf32> to vector<8xf32>
    %160 = vector.shape_cast %159 : vector<8xf32> to vector<8x1xf32>
    %161 = vector.broadcast %160 : vector<8x1xf32> to vector<8x2048xf32>
    %162 = arith.subf %158, %161 : vector<8x2048xf32>
    %163 = math.exp %162 : vector<8x2048xf32>
    %c0_130 = arith.constant 0 : index
    %c0_131 = arith.constant 0 : index
    %164 = vector.load %arg4[%c0_130, %c0_131] : memref<2048x24xf32, #tpu.memory_space<vmem>>, vector<2048x24xf32>
    %cst_132 = arith.constant dense<0.000000e+00> : vector<8x24xf32>
    %165 = tpu.matmul %163, %164, %cst_132 {dimension_numbers = #tpu.dot_dimension_numbers<[1], [0], [0], [1], [0, 0, 1, 1], [], []>} : vector<8x2048xf32>, vector<2048x24xf32>, vector<8x24xf32> -> vector<8x24xf32>
    %166 = vector.extract_strided_slice %165 {offsets = [0, 16], sizes = [8, 8], strides = [1, 1]} : vector<8x24xf32> to vector<8x8xf32>
    %cst_133 = arith.constant 1.000000e+00 : f32
    %167 = vector.broadcast %cst_133 : f32 to vector<8x8xf32>
    %168 = arith.divf %167, %166 : vector<8x8xf32>
    %169 = vector.extract_strided_slice %165 {offsets = [0, 0], sizes = [8, 8], strides = [1, 1]} : vector<8x24xf32> to vector<8x8xf32>
    %170 = arith.mulf %169, %168 : vector<8x8xf32>
    %171 = tpu.transpose %170, [1, 0] : vector<8x8xf32> -> vector<8x8xf32>
    %172 = vector.extract_strided_slice %165 {offsets = [0, 8], sizes = [8, 8], strides = [1, 1]} : vector<8x24xf32> to vector<8x8xf32>
    %173 = arith.mulf %172, %168 : vector<8x8xf32>
    %174 = tpu.transpose %173, [1, 0] : vector<8x8xf32> -> vector<8x8xf32>
    %c0_134 = arith.constant 0 : index
    %c0_135 = arith.constant 0 : index
    %c0_136 = arith.constant 0 : index
    %175 = vector.load %arg2[%c0_134, %c0_135, %c0_136] : memref<1x8x6xf32, #tpu.memory_space<vmem>>, vector<1x8x6xf32>
    %176 = vector.shape_cast %175 : vector<1x8x6xf32> to vector<8x6xf32>
    %c0_137 = arith.constant 0 : index
    %c0_138 = arith.constant 0 : index
    %177 = vector.load %arg7[%c0_137, %c0_138] : memref<22x32xf32, #tpu.memory_space<vmem>>, vector<8x32xf32>
    %cst_139 = arith.constant dense<0.000000e+00> : vector<8x32xf32>
    %178 = tpu.matmul %171, %177, %cst_139 {dimension_numbers = #tpu.dot_dimension_numbers<[1], [0], [0], [1], [0, 0, 1, 1], [], []>} : vector<8x8xf32>, vector<8x32xf32>, vector<8x32xf32> -> vector<8x32xf32>
    %c8_140 = arith.constant 8 : index
    %c0_141 = arith.constant 0 : index
    %179 = vector.load %arg7[%c8_140, %c0_141] : memref<22x32xf32, #tpu.memory_space<vmem>>, vector<8x32xf32>
    %cst_142 = arith.constant dense<0.000000e+00> : vector<8x32xf32>
    %180 = tpu.matmul %174, %179, %cst_142 {dimension_numbers = #tpu.dot_dimension_numbers<[1], [0], [0], [1], [0, 0, 1, 1], [], []>} : vector<8x8xf32>, vector<8x32xf32>, vector<8x32xf32> -> vector<8x32xf32>
    %181 = arith.addf %178, %180 : vector<8x32xf32>
    %c16_143 = arith.constant 16 : index
    %c0_144 = arith.constant 0 : index
    %182 = vector.load %arg7[%c16_143, %c0_144] : memref<22x32xf32, #tpu.memory_space<vmem>>, vector<6x32xf32>
    %cst_145 = arith.constant dense<0.000000e+00> : vector<8x32xf32>
    %183 = tpu.matmul %176, %182, %cst_145 {dimension_numbers = #tpu.dot_dimension_numbers<[1], [0], [0], [1], [0, 0, 1, 1], [], []>} : vector<8x6xf32>, vector<6x32xf32>, vector<8x32xf32> -> vector<8x32xf32>
    %184 = arith.addf %181, %183 : vector<8x32xf32>
    %cst_146 = arith.constant 0.000000e+00 : f32
    %185 = vector.broadcast %cst_146 : f32 to vector<8x32xf32>
    %186 = arith.maximumf %184, %185 : vector<8x32xf32>
    %c0_147 = arith.constant 0 : index
    %c0_148 = arith.constant 0 : index
    %187 = vector.load %arg8[%c0_147, %c0_148] : memref<33x32xf32, #tpu.memory_space<vmem>>, vector<32x32xf32>
    %cst_149 = arith.constant dense<0.000000e+00> : vector<8x32xf32>
    %188 = tpu.matmul %186, %187, %cst_149 {dimension_numbers = #tpu.dot_dimension_numbers<[1], [0], [0], [1], [0, 0, 1, 1], [], []>} : vector<8x32xf32>, vector<32x32xf32>, vector<8x32xf32> -> vector<8x32xf32>
    %c32_150 = arith.constant 32 : index
    %c0_151 = arith.constant 0 : index
    %189 = vector.load %arg8[%c32_150, %c0_151] : memref<33x32xf32, #tpu.memory_space<vmem>>, vector<1x32xf32>
    %190 = vector.broadcast %189 : vector<1x32xf32> to vector<8x32xf32>
    %191 = arith.addf %188, %190 : vector<8x32xf32>
    %cst_152 = arith.constant 0.000000e+00 : f32
    %192 = vector.broadcast %cst_152 : f32 to vector<8x32xf32>
    %193 = arith.maximumf %191, %192 : vector<8x32xf32>
    %c0_153 = arith.constant 0 : index
    %c0_154 = arith.constant 0 : index
    %194 = vector.load %arg9[%c0_153, %c0_154] : memref<33x12xf32, #tpu.memory_space<vmem>>, vector<32x12xf32>
    %cst_155 = arith.constant dense<0.000000e+00> : vector<8x12xf32>
    %195 = tpu.matmul %193, %194, %cst_155 {dimension_numbers = #tpu.dot_dimension_numbers<[1], [0], [0], [1], [0, 0, 1, 1], [], []>} : vector<8x32xf32>, vector<32x12xf32>, vector<8x12xf32> -> vector<8x12xf32>
    %c32_156 = arith.constant 32 : index
    %c0_157 = arith.constant 0 : index
    %196 = vector.load %arg9[%c32_156, %c0_157] : memref<33x12xf32, #tpu.memory_space<vmem>>, vector<1x12xf32>
    %197 = vector.broadcast %196 : vector<1x12xf32> to vector<8x12xf32>
    %198 = arith.addf %195, %197 : vector<8x12xf32>
    %c0_158 = arith.constant 0 : index
    %c0_159 = arith.constant 0 : index
    %c0_160 = arith.constant 0 : index
    %199 = vector.load %arg10[%c0_158, %c0_159, %c0_160] : memref<1x8x12xf32, #tpu.memory_space<vmem>>, vector<1x8x12xf32>
    %200 = vector.shape_cast %199 : vector<1x8x12xf32> to vector<8x12xf32>
    %201 = vector.shape_cast %198 : vector<8x12xf32> to vector<1x8x12xf32>
    tpu.vector_store %arg10[%c0_158, %c0_159, %c0_160], %201 {strides = array<i32>} : memref<1x8x12xf32, #tpu.memory_space<vmem>>, vector<1x8x12xf32>,
    return
  }
  func.func @transform_0(%arg0: i32) -> (i32, i32, i32) {
    %c0_i32 = arith.constant 0 : i32
    %c0_i32_0 = arith.constant 0 : i32
    %c0_i32_1 = arith.constant 0 : i32
    return %arg0, %c0_i32, %c0_i32_0 : i32, i32, i32
  }
  func.func @transform_1(%arg0: i32) -> (i32, i32, i32) {
    %c0_i32 = arith.constant 0 : i32
    %c0_i32_0 = arith.constant 0 : i32
    %c0_i32_1 = arith.constant 0 : i32
    return %arg0, %c0_i32, %c0_i32_0 : i32, i32, i32
  }
  func.func @transform_2(%arg0: i32) -> (i32, i32) {
    %c0_i32 = arith.constant 0 : i32
    %c0_i32_0 = arith.constant 0 : i32
    %c0_i32_1 = arith.constant 0 : i32
    return %c0_i32, %c0_i32_0 : i32, i32
  }
  func.func @transform_3(%arg0: i32) -> (i32, i32) {
    %c0_i32 = arith.constant 0 : i32
    %c0_i32_0 = arith.constant 0 : i32
    %c0_i32_1 = arith.constant 0 : i32
    return %c0_i32, %c0_i32_0 : i32, i32
  }
  func.func @transform_4(%arg0: i32) -> (i32, i32) {
    %c0_i32 = arith.constant 0 : i32
    %c0_i32_0 = arith.constant 0 : i32
    %c0_i32_1 = arith.constant 0 : i32
    return %c0_i32, %c0_i32_0 : i32, i32
  }
  func.func @transform_5(%arg0: i32) -> (i32, i32) {
    %c0_i32 = arith.constant 0 : i32
    %c0_i32_0 = arith.constant 0 : i32
    %c0_i32_1 = arith.constant 0 : i32
    return %c0_i32, %c0_i32_0 : i32, i32
  }
  func.func @transform_6(%arg0: i32) -> (i32, i32) {
    %c0_i32 = arith.constant 0 : i32
    %c0_i32_0 = arith.constant 0 : i32
    %c0_i32_1 = arith.constant 0 : i32
    return %c0_i32, %c0_i32_0 : i32, i32
  }
  func.func @transform_7(%arg0: i32) -> (i32, i32) {
    %c0_i32 = arith.constant 0 : i32
    %c0_i32_0 = arith.constant 0 : i32
    %c0_i32_1 = arith.constant 0 : i32
    return %c0_i32, %c0_i32_0 : i32, i32
  }
  func.func @transform_8(%arg0: i32) -> (i32, i32) {
    %c0_i32 = arith.constant 0 : i32
    %c0_i32_0 = arith.constant 0 : i32
    %c0_i32_1 = arith.constant 0 : i32
    return %c0_i32, %c0_i32_0 : i32, i32
  }
  func.func @transform_9(%arg0: i32) -> (i32, i32, i32) {
    %c0_i32 = arith.constant 0 : i32
    %c0_i32_0 = arith.constant 0 : i32
    %c0_i32_1 = arith.constant 0 : i32
    return %arg0, %c0_i32, %c0_i32_0 : i32, i32, i32
  }
}

</mosaic_0001>

<llo_original>
// kernel: tile.348
$region0: #{tile.348}
  #allocation0 [shape = 's32[1]{0}', space=sflag, size = 0x4, scoped, tag = 'scoped memory for tile.348']
  %s0 = inlined_call_operand.vmem [shape: f32[16], index: 0, kind: input, shape index: {}]
  %s1 = inlined_call_operand.vmem [shape: f32[16,16], index: 1, kind: output, shape index: {}]
  // Predicated region
  $region2: #{tile.348} parent=0 // pred_check
    _
  $region3: #{tile.348} parent=0 // pred_check_branch
    %3 = sbr.rel (0) target = $region5
  $region4: #{tile.348} parent=0 // pred_region
    _
  $region5: #{tile.348} parent=0 // pred_fallthru
    _
  %v4 = vld [vmem:[%s0] ss:$0 sm:$0xff]
  %5 = vst [vmem:[%s1] sm:$0xff] %v4
  %s6 = scalar_lea.vmem %s1, 8
  %7 = vst [vmem:[%s6] sm:$0xff] %v4

// kernel: encoder_forward.1
$region0: #{encoder_forward.1}
  #allocation0 [shape = 'u32[]', space=smem, size = 0x4, offset = 0x4, fixed_abs, tag = 'smem constant byte address 0x4 - core index']
  #allocation1 [shape = 'u32[144,128]{1,0:T(1,128)}', space=vmem, size = 0x12000, scoped, tag = 'internal scratch']
  #allocation2 [shape = 'f32[40,2048]{1,0:T(8,128)}', space=vmem, size = 0x50000, scoped, tag = 'scratch operand']
  %s0 = inlined_call_operand.vmem [shape: f32[1,1,2048], index: 0, kind: input, shape index: {}]
  %s1 = inlined_call_operand.vmem [shape: f32[1,8,6], index: 1, kind: input, shape index: {}]
  %s2 = inlined_call_operand.vmem [shape: f32[34,2048], index: 2, kind: input, shape index: {}]
  %s3 = inlined_call_operand.vmem [shape: f32[2048,24], index: 3, kind: input, shape index: {}]
  %s4 = inlined_call_operand.vmem [shape: f32[4,40], index: 4, kind: input, shape index: {}]
  %s5 = inlined_call_operand.vmem [shape: f32[8,40], index: 5, kind: input, shape index: {}]
  %s6 = inlined_call_operand.vmem [shape: f32[22,32], index: 6, kind: input, shape index: {}]
  %s7 = inlined_call_operand.vmem [shape: f32[33,32], index: 7, kind: input, shape index: {}]
  %s8 = inlined_call_operand.vmem [shape: f32[33,12], index: 8, kind: input, shape index: {}]
  %s9 = inlined_call_operand.vmem [shape: f32[1,8,12], index: 9, kind: output, shape index: {}]
  %s10 = sld [smem:[#allocation0]]
  $region46: #{encoder_forward.1} parent=0
    _
  %s12 = ssub.s32 1, %s10
  %s13 = scalar_select 0, %s12, %s10
  // Predicated region
  $region2: #{encoder_forward.1} parent=0 // pred_check
    _
  $region3: #{encoder_forward.1} parent=0 // pred_check_branch
    %15 = sbr.rel (0) target = $region5
  $region4: #{encoder_forward.1} parent=0 // pred_region
    _
  $region5: #{encoder_forward.1} parent=0 // pred_fallthru
    _
  // Predicated region
  $region6: #{encoder_forward.1} parent=0 // pred_check
    _
  $region7: #{encoder_forward.1} parent=0 // pred_check_branch
    %17 = sbr.rel (0) target = $region9
  $region8: #{encoder_forward.1} parent=0 // pred_region
    _
  $region9: #{encoder_forward.1} parent=0 // pred_fallthru
    _
  // Predicated region
  $region10: #{encoder_forward.1} parent=0 // pred_check
    _
  $region11: #{encoder_forward.1} parent=0 // pred_check_branch
    %19 = sbr.rel (0) target = $region13
  $region12: #{encoder_forward.1} parent=0 // pred_region
    _
  $region13: #{encoder_forward.1} parent=0 // pred_fallthru
    _
  // Predicated region
  $region14: #{encoder_forward.1} parent=0 // pred_check
    _
  $region15: #{encoder_forward.1} parent=0 // pred_check_branch
    %21 = sbr.rel (0) target = $region17
  $region16: #{encoder_forward.1} parent=0 // pred_region
    _
  $region17: #{encoder_forward.1} parent=0 // pred_fallthru
    _
  // Predicated region
  $region18: #{encoder_forward.1} parent=0 // pred_check
    _
  $region19: #{encoder_forward.1} parent=0 // pred_check_branch
    %23 = sbr.rel (0) target = $region21
  $region20: #{encoder_forward.1} parent=0 // pred_region
    _
  $region21: #{encoder_forward.1} parent=0 // pred_fallthru
    _
  // Predicated region
  $region22: #{encoder_forward.1} parent=0 // pred_check
    _
  $region23: #{encoder_forward.1} parent=0 // pred_check_branch
    %25 = sbr.rel (0) target = $region25
  $region24: #{encoder_forward.1} parent=0 // pred_region
    _
  $region25: #{encoder_forward.1} parent=0 // pred_fallthru
    _
  // Predicated region
  $region26: #{encoder_forward.1} parent=0 // pred_check
    _
  $region27: #{encoder_forward.1} parent=0 // pred_check_branch
    %27 = sbr.rel (0) target = $region29
  $region28: #{encoder_forward.1} parent=0 // pred_region
    _
  $region29: #{encoder_forward.1} parent=0 // pred_fallthru
    _
  // Predicated region
  $region30: #{encoder_forward.1} parent=0 // pred_check
    _
  $region31: #{encoder_forward.1} parent=0 // pred_check_branch
    %29 = sbr.rel (0) target = $region33
  $region32: #{encoder_forward.1} parent=0 // pred_region
    _
  $region33: #{encoder_forward.1} parent=0 // pred_fallthru
    _
  // Predicated region
  $region34: #{encoder_forward.1} parent=0 // pred_check
    _
  $region35: #{encoder_forward.1} parent=0 // pred_check_branch
    %31 = sbr.rel (0) target = $region37
  $region36: #{encoder_forward.1} parent=0 // pred_region
    _
  $region37: #{encoder_forward.1} parent=0 // pred_fallthru
    _
  %32 = vst [vmem:[#allocation2 + $0x180] sm:$0xfe] 0.0
  %33 = vst [vmem:[#allocation2 + $0x188] sm:$0xfe] 0.0
  %34 = vst [vmem:[#allocation2 + $0x190] sm:$0xfe] 0.0
  %35 = vst [vmem:[#allocation2 + $0x198] sm:$0xfe] 0.0
  %36 = vst [vmem:[#allocation2 + $0x1a0] sm:$0xfe] 0.0
  %37 = vst [vmem:[#allocation2 + $0x1a8] sm:$0xfe] 0.0
  %38 = vst [vmem:[#allocation2 + $0x1b0] sm:$0xfe] 0.0
  %39 = vst [vmem:[#allocation2 + $0x1b8] sm:$0xfe] 0.0
  %40 = vst [vmem:[#allocation2 + $0x1c0] sm:$0xfe] 0.0
  %41 = vst [vmem:[#allocation2 + $0x1c8] sm:$0xfe] 0.0
  %42 = vst [vmem:[#allocation2 + $0x1d0] sm:$0xfe] 0.0
  %43 = vst [vmem:[#allocation2 + $0x1d8] sm:$0xfe] 0.0
  %44 = vst [vmem:[#allocation2 + $0x1e0] sm:$0xfe] 0.0
  %45 = vst [vmem:[#allocation2 + $0x1e8] sm:$0xfe] 0.0
  %46 = vst [vmem:[#allocation2 + $0x1f0] sm:$0xfe] 0.0
  %47 = vst [vmem:[#allocation2 + $0x1f8] sm:$0xfe] 0.0
  %48 = vst [vmem:[#allocation2 + $0x200] sm:$0xff] 0.0
  %49 = vst [vmem:[#allocation2 + $0x208] sm:$0xff] 0.0
  %50 = vst [vmem:[#allocation2 + $0x210] sm:$0xff] 0.0
  %51 = vst [vmem:[#allocation2 + $0x218] sm:$0xff] 0.0
  %52 = vst [vmem:[#allocation2 + $0x220] sm:$0xff] 0.0
  %53 = vst [vmem:[#allocation2 + $0x228] sm:$0xff] 0.0
  %54 = vst [vmem:[#allocation2 + $0x230] sm:$0xff] 0.0
  %55 = vst [vmem:[#allocation2 + $0x238] sm:$0xff] 0.0
  %56 = vst [vmem:[#allocation2 + $0x240] sm:$0xff] 0.0
  %57 = vst [vmem:[#allocation2 + $0x248] sm:$0xff] 0.0
  %58 = vst [vmem:[#allocation2 + $0x250] sm:$0xff] 0.0
  %59 = vst [vmem:[#allocation2 + $0x258] sm:$0xff] 0.0
  %60 = vst [vmem:[#allocation2 + $0x260] sm:$0xff] 0.0
  %61 = vst [vmem:[#allocation2 + $0x268] sm:$0xff] 0.0
  %62 = vst [vmem:[#allocation2 + $0x270] sm:$0xff] 0.0
  %63 = vst [vmem:[#allocation2 + $0x278] sm:$0xff] 0.0
  %s64 = scalar_lea.vmem [#allocation2], 516
  %65 = vst [vmem:[%s64] ss:$8 sm:$0xf] 1.0
  %66 = vst [vmem:[%s64] ss:$8 sm:$0xf0] 1.0
  %s67 = scalar_lea.vmem [#allocation2], 580
  %68 = vst [vmem:[%s67] ss:$8 sm:$0xf] 1.0
  %69 = vst [vmem:[%s67] ss:$8 sm:$0xf0] 1.0
  %v70 = vld [vmem:[%s0] sm:$0xff]
  %v71 = vld [vmem:[%s0 + $0x8] sm:$0xff]
  %v74 = vlaneseq
  %v75 = vshrl.u32 %v74, 7
  %v76 = vsub.s32 0, %v75
  %v77 = vrot.slane %v70, %v76
  %v78 = vlaneseq
  %v79 = vshrl.u32 %v78, 7
  %v80 = vsub.s32 1, %v79
  %v81 = vrot.slane %v70, %v80
  %v82 = vlaneseq
  %v83 = vshrl.u32 %v82, 7
  %v84 = vsub.s32 2, %v83
  %v85 = vrot.slane %v70, %v84
  %v86 = vlaneseq
  %v87 = vshrl.u32 %v86, 7
  %v88 = vsub.s32 3, %v87
  %v89 = vrot.slane %v70, %v88
  %v90 = vlaneseq
  %v91 = vshrl.u32 %v90, 7
  %v92 = vsub.s32 4, %v91
  %v93 = vrot.slane %v70, %v92
  %v94 = vlaneseq
  %v95 = vshrl.u32 %v94, 7
  %v96 = vsub.s32 5, %v95
  %v97 = vrot.slane %v70, %v96
  %v98 = vlaneseq
  %v99 = vshrl.u32 %v98, 7
  %v100 = vsub.s32 6, %v99
  %v101 = vrot.slane %v70, %v100
  %v102 = vlaneseq
  %v103 = vshrl.u32 %v102, 7
  %v104 = vsub.s32 7, %v103
  %v105 = vrot.slane %v70, %v104
  %v106 = vlaneseq
  %v107 = vshrl.u32 %v106, 7
  %v108 = vsub.s32 0, %v107
  %v109 = vrot.slane %v71, %v108
  %v110 = vlaneseq
  %v111 = vshrl.u32 %v110, 7
  %v112 = vsub.s32 1, %v111
  %v113 = vrot.slane %v71, %v112
  %v114 = vlaneseq
  %v115 = vshrl.u32 %v114, 7
  %v116 = vsub.s32 2, %v115
  %v117 = vrot.slane %v71, %v116
  %v118 = vlaneseq
  %v119 = vshrl.u32 %v118, 7
  %v120 = vsub.s32 3, %v119
  %v121 = vrot.slane %v71, %v120
  %v122 = vlaneseq
  %v123 = vshrl.u32 %v122, 7
  %v124 = vsub.s32 4, %v123
  %v125 = vrot.slane %v71, %v124
  %v126 = vlaneseq
  %v127 = vshrl.u32 %v126, 7
  %v128 = vsub.s32 5, %v127
  %v129 = vrot.slane %v71, %v128
  %v130 = vlaneseq
  %v131 = vshrl.u32 %v130, 7
  %v132 = vsub.s32 6, %v131
  %v133 = vrot.slane %v71, %v132
  %v134 = vlaneseq
  %v135 = vshrl.u32 %v134, 7
  %v136 = vsub.s32 7, %v135
  %v137 = vrot.slane %v71, %v136
  %154 = vrot.lane.b32.xlu0 %v77, 34
  %v155 = vpop.permute.xlu0 %154
  %156 = vrot.lane.b32.xlu0 %v81, 34
  %v157 = vpop.permute.xlu0 %156
  %158 = vrot.lane.b32.xlu0 %v85, 34
  %v159 = vpop.permute.xlu0 %158
  %160 = vrot.lane.b32.xlu0 %v89, 34
  %v161 = vpop.permute.xlu0 %160
  %162 = vrot.lane.b32.xlu0 %v93, 34
  %v163 = vpop.permute.xlu0 %162
  %164 = vrot.lane.b32.xlu0 %v97, 34
  %v165 = vpop.permute.xlu0 %164
  %166 = vrot.lane.b32.xlu0 %v101, 34
  %v167 = vpop.permute.xlu0 %166
  %168 = vrot.lane.b32.xlu0 %v105, 34
  %v169 = vpop.permute.xlu0 %168
  %170 = vrot.lane.b32.xlu0 %v109, 34
  %v171 = vpop.permute.xlu0 %170
  %172 = vrot.lane.b32.xlu0 %v113, 34
  %v173 = vpop.permute.xlu0 %172
  %174 = vrot.lane.b32.xlu0 %v117, 34
  %v175 = vpop.permute.xlu0 %174
  %176 = vrot.lane.b32.xlu0 %v121, 34
  %v177 = vpop.permute.xlu0 %176
  %178 = vrot.lane.b32.xlu0 %v125, 34
  %v179 = vpop.permute.xlu0 %178
  %180 = vrot.lane.b32.xlu0 %v129, 34
  %v181 = vpop.permute.xlu0 %180
  %182 = vrot.lane.b32.xlu0 %v133, 34
  %v183 = vpop.permute.xlu0 %182
  %184 = vrot.lane.b32.xlu0 %v137, 34
  %v185 = vpop.permute.xlu0 %184
  %v186 = vlaneseq
  %v187 = vand.u32 %v186, 127
  %vm188 = vcmp.lt.s32.totalorder %v187, 34
  %v189 = vsel %vm188, %v183, %v185
  %v190 = vsel %vm188, %v181, %v183
  %v191 = vsel %vm188, %v179, %v181
  %v192 = vsel %vm188, %v177, %v179
  %v193 = vsel %vm188, %v175, %v177
  %v194 = vsel %vm188, %v173, %v175
  %v195 = vsel %vm188, %v171, %v173
  %v196 = vsel %vm188, %v169, %v171
  %v197 = vsel %vm188, %v167, %v169
  %v198 = vsel %vm188, %v165, %v167
  %v199 = vsel %vm188, %v163, %v165
  %v200 = vsel %vm188, %v161, %v163
  %v201 = vsel %vm188, %v159, %v161
  %v202 = vsel %vm188, %v157, %v159
  %v203 = vsel %vm188, %v155, %v157
  %v204 = vsel %vm188, %v185, %v155
  %v205 = vld [vmem:[%s2] ss:$8 sm:$0xf]
  %v206 = vld [vmem:[%s2] ss:$8 sm:$0xf0]
  %v207 = vor.u32 %v205, %v206
  %s208 = scalar_lea.vmem %s2, 64
  %v209 = vld [vmem:[%s208] ss:$8 sm:$0xf]
  %v210 = vld [vmem:[%s208] ss:$8 sm:$0xf0]
  %v211 = vor.u32 %v209, %v210
  %v214 = vlaneseq
  %v215 = vshrl.u32 %v214, 7
  %v216 = vsub.s32 0, %v215
  %v217 = vrot.slane %v207, %v216
  %v218 = vlaneseq
  %v219 = vshrl.u32 %v218, 7
  %v220 = vsub.s32 1, %v219
  %v221 = vrot.slane %v207, %v220
  %v222 = vlaneseq
  %v223 = vshrl.u32 %v222, 7
  %v224 = vsub.s32 2, %v223
  %v225 = vrot.slane %v207, %v224
  %v226 = vlaneseq
  %v227 = vshrl.u32 %v226, 7
  %v228 = vsub.s32 3, %v227
  %v229 = vrot.slane %v207, %v228
  %v230 = vlaneseq
  %v231 = vshrl.u32 %v230, 7
  %v232 = vsub.s32 4, %v231
  %v233 = vrot.slane %v207, %v232
  %v234 = vlaneseq
  %v235 = vshrl.u32 %v234, 7
  %v236 = vsub.s32 5, %v235
  %v237 = vrot.slane %v207, %v236
  %v238 = vlaneseq
  %v239 = vshrl.u32 %v238, 7
  %v240 = vsub.s32 6, %v239
  %v241 = vrot.slane %v207, %v240
  %v242 = vlaneseq
  %v243 = vshrl.u32 %v242, 7
  %v244 = vsub.s32 7, %v243
  %v245 = vrot.slane %v207, %v244
  %v246 = vlaneseq
  %v247 = vshrl.u32 %v246, 7
  %v248 = vsub.s32 0, %v247
  %v249 = vrot.slane %v211, %v248
  %v250 = vlaneseq
  %v251 = vshrl.u32 %v250, 7
  %v252 = vsub.s32 1, %v251
  %v253 = vrot.slane %v211, %v252
  %v254 = vlaneseq
  %v255 = vshrl.u32 %v254, 7
  %v256 = vsub.s32 2, %v255
  %v257 = vrot.slane %v211, %v256
  %v258 = vlaneseq
  %v259 = vshrl.u32 %v258, 7
  %v260 = vsub.s32 3, %v259
  %v261 = vrot.slane %v211, %v260
  %v262 = vlaneseq
  %v263 = vshrl.u32 %v262, 7
  %v264 = vsub.s32 4, %v263
  %v265 = vrot.slane %v211, %v264
  %v266 = vlaneseq
  %v267 = vshrl.u32 %v266, 7
  %v268 = vsub.s32 5, %v267
  %v269 = vrot.slane %v211, %v268
  %v270 = vlaneseq
  %v271 = vshrl.u32 %v270, 7
  %v272 = vsub.s32 6, %v271
  %v273 = vrot.slane %v211, %v272
  %v274 = vlaneseq
  %v275 = vshrl.u32 %v274, 7
  %v276 = vsub.s32 7, %v275
  %v277 = vrot.slane %v211, %v276
  %v294 = vmul.f32 %v204, %v217
  %v295 = vmul.f32 %v203, %v221
  %v296 = vmul.f32 %v202, %v225
  %v297 = vmul.f32 %v201, %v229
  %v298 = vmul.f32 %v200, %v233
  %v299 = vmul.f32 %v199, %v237
  %v300 = vmul.f32 %v198, %v241
  %v301 = vmul.f32 %v197, %v245
  %v302 = vmul.f32 %v196, %v249
  %v303 = vmul.f32 %v195, %v253
  %v304 = vmul.f32 %v194, %v257
  %v305 = vmul.f32 %v193, %v261
  %v306 = vmul.f32 %v192, %v265
  %v307 = vmul.f32 %v191, %v269
  %v308 = vmul.f32 %v190, %v273
  %v309 = vmul.f32 %v189, %v277
  %v326 = vcombine.low %v294, %v295
  %v327 = vcombine.low %v296, %v297
  %v328 = vcombine.low %v298, %v299
  %v329 = vcombine.low %v300, %v301
  %v331 = vunpack.c.l.s4 1966171168
  %v332 = vunpack.c.0.s8 %v331
  %v333 = vlaneseq
  %v334 = vshrl.u32 %v333, 7
  %v335 = vsub.s32 %v332, %v334
  %v336 = vrot.slane %v326, %v335
  %v338 = vunpack.c.l.s4 1966171168
  %v339 = vunpack.c.0.s8 %v338
  %v340 = vlaneseq
  %v341 = vshrl.u32 %v340, 7
  %v342 = vsub.s32 %v339, %v341
  %v343 = vrot.slane %v327, %v342
  %v345 = vunpack.c.l.s4 1966171168
  %v346 = vunpack.c.0.s8 %v345
  %v347 = vlaneseq
  %v348 = vshrl.u32 %v347, 7
  %v349 = vsub.s32 %v346, %v348
  %v350 = vrot.slane %v328, %v349
  %v352 = vunpack.c.l.s4 1966171168
  %v353 = vunpack.c.0.s8 %v352
  %v354 = vlaneseq
  %v355 = vshrl.u32 %v354, 7
  %v356 = vsub.s32 %v353, %v355
  %v357 = vrot.slane %v329, %v356
  %v358 = vcombine.low %v336, %v343
  %v359 = vcombine.low %v350, %v357
  %v361 = vunpack.c.l.s4 1966171168
  %v362 = vunpack.c.0.s8 %v361
  %v363 = vlaneseq
  %v364 = vshrl.u32 %v363, 7
  %v365 = vsub.s32 %v362, %v364
  %v366 = vrot.slane %v358, %v365
  %v368 = vunpack.c.l.s4 1966171168
  %v369 = vunpack.c.0.s8 %v368
  %v370 = vlaneseq
  %v371 = vshrl.u32 %v370, 7
  %v372 = vsub.s32 %v369, %v371
  %v373 = vrot.slane %v359, %v372
  %v374 = vcombine.low %v366, %v373
  %v375 = vcombine.low %v302, %v303
  %v376 = vcombine.low %v304, %v305
  %v377 = vcombine.low %v306, %v307
  %v378 = vcombine.low %v308, %v309
  %v380 = vunpack.c.l.s4 1966171168
  %v381 = vunpack.c.0.s8 %v380
  %v382 = vlaneseq
  %v383 = vshrl.u32 %v382, 7
  %v384 = vsub.s32 %v381, %v383
  %v385 = vrot.slane %v375, %v384
  %v387 = vunpack.c.l.s4 1966171168
  %v388 = vunpack.c.0.s8 %v387
  %v389 = vlaneseq
  %v390 = vshrl.u32 %v389, 7
  %v391 = vsub.s32 %v388, %v390
  %v392 = vrot.slane %v376, %v391
  %v394 = vunpack.c.l.s4 1966171168
  %v395 = vunpack.c.0.s8 %v394
  %v396 = vlaneseq
  %v397 = vshrl.u32 %v396, 7
  %v398 = vsub.s32 %v395, %v397
  %v399 = vrot.slane %v377, %v398
  %v401 = vunpack.c.l.s4 1966171168
  %v402 = vunpack.c.0.s8 %v401
  %v403 = vlaneseq
  %v404 = vshrl.u32 %v403, 7
  %v405 = vsub.s32 %v402, %v404
  %v406 = vrot.slane %v378, %v405
  %v407 = vcombine.low %v385, %v392
  %v408 = vcombine.low %v399, %v406
  %v410 = vunpack.c.l.s4 1966171168
  %v411 = vunpack.c.0.s8 %v410
  %v412 = vlaneseq
  %v413 = vshrl.u32 %v412, 7
  %v414 = vsub.s32 %v411, %v413
  %v415 = vrot.slane %v407, %v414
  %v417 = vunpack.c.l.s4 1966171168
  %v418 = vunpack.c.0.s8 %v417
  %v419 = vlaneseq
  %v420 = vshrl.u32 %v419, 7
  %v421 = vsub.s32 %v418, %v420
  %v422 = vrot.slane %v408, %v421
  %v423 = vcombine.low %v415, %v422
  %426 = vst [vmem:[#allocation2] ss:$8 sm:$0xf] %v374
  %427 = vst [vmem:[#allocation2] ss:$8 sm:$0xf0] %v374
  %s428 = scalar_lea.vmem [#allocation2], 64
  %429 = vst [vmem:[%s428] ss:$8 sm:$0xf] %v423
  %430 = vst [vmem:[%s428] ss:$8 sm:$0xf0] %v423
  %431 = vrot.lane.b32.xlu0 %v77, 33
  %v432 = vpop.permute.xlu0 %431
  %433 = vrot.lane.b32.xlu0 %v81, 33
  %v434 = vpop.permute.xlu0 %433
  %435 = vrot.lane.b32.xlu0 %v85, 33
  %v436 = vpop.permute.xlu0 %435
  %437 = vrot.lane.b32.xlu0 %v89, 33
  %v438 = vpop.permute.xlu0 %437
  %439 = vrot.lane.b32.xlu0 %v93, 33
  %v440 = vpop.permute.xlu0 %439
  %441 = vrot.lane.b32.xlu0 %v97, 33
  %v442 = vpop.permute.xlu0 %441
  %443 = vrot.lane.b32.xlu0 %v101, 33
  %v444 = vpop.permute.xlu0 %443
  %445 = vrot.lane.b32.xlu0 %v105, 33
  %v446 = vpop.permute.xlu0 %445
  %447 = vrot.lane.b32.xlu0 %v109, 33
  %v448 = vpop.permute.xlu0 %447
  %449 = vrot.lane.b32.xlu0 %v113, 33
  %v450 = vpop.permute.xlu0 %449
  %451 = vrot.lane.b32.xlu0 %v117, 33
  %v452 = vpop.permute.xlu0 %451
  %453 = vrot.lane.b32.xlu0 %v121, 33
  %v454 = vpop.permute.xlu0 %453
  %455 = vrot.lane.b32.xlu0 %v125, 33
  %v456 = vpop.permute.xlu0 %455
  %457 = vrot.lane.b32.xlu0 %v129, 33
  %v458 = vpop.permute.xlu0 %457
  %459 = vrot.lane.b32.xlu0 %v133, 33
  %v460 = vpop.permute.xlu0 %459
  %461 = vrot.lane.b32.xlu0 %v137, 33
  %v462 = vpop.permute.xlu0 %461
  %vm463 = vcmp.lt.s32.totalorder %v187, 33
  %v464 = vsel %vm463, %v460, %v462
  %v465 = vsel %vm463, %v458, %v460
  %v466 = vsel %vm463, %v456, %v458
  %v467 = vsel %vm463, %v454, %v456
  %v468 = vsel %vm463, %v452, %v454
  %v469 = vsel %vm463, %v450, %v452
  %v470 = vsel %vm463, %v448, %v450
  %v471 = vsel %vm463, %v446, %v448
  %v472 = vsel %vm463, %v444, %v446
  %v473 = vsel %vm463, %v442, %v444
  %v474 = vsel %vm463, %v440, %v442
  %v475 = vsel %vm463, %v438, %v440
  %v476 = vsel %vm463, %v436, %v438
  %v477 = vsel %vm463, %v434, %v436
  %v478 = vsel %vm463, %v432, %v434
  %v479 = vsel %vm463, %v462, %v432
  %s480 = scalar_lea.vmem %s2, 1
  %v481 = vld [vmem:[%s480] ss:$8 sm:$0xf]
  %v482 = vld [vmem:[%s480] ss:$8 sm:$0xf0]
  %v483 = vor.u32 %v481, %v482
  %s484 = scalar_lea.vmem %s2, 65
  %v485 = vld [vmem:[%s484] ss:$8 sm:$0xf]
  %v486 = vld [vmem:[%s484] ss:$8 sm:$0xf0]
  %v487 = vor.u32 %v485, %v486
  %v490 = vlaneseq
  %v491 = vshrl.u32 %v490, 7
  %v492 = vsub.s32 0, %v491
  %v493 = vrot.slane %v483, %v492
  %v494 = vlaneseq
  %v495 = vshrl.u32 %v494, 7
  %v496 = vsub.s32 1, %v495
  %v497 = vrot.slane %v483, %v496
  %v498 = vlaneseq
  %v499 = vshrl.u32 %v498, 7
  %v500 = vsub.s32 2, %v499
  %v501 = vrot.slane %v483, %v500
  %v502 = vlaneseq
  %v503 = vshrl.u32 %v502, 7
  %v504 = vsub.s32 3, %v503
  %v505 = vrot.slane %v483, %v504
  %v506 = vlaneseq
  %v507 = vshrl.u32 %v506, 7
  %v508 = vsub.s32 4, %v507
  %v509 = vrot.slane %v483, %v508
  %v510 = vlaneseq
  %v511 = vshrl.u32 %v510, 7
  %v512 = vsub.s32 5, %v511
  %v513 = vrot.slane %v483, %v512
  %v514 = vlaneseq
  %v515 = vshrl.u32 %v514, 7
  %v516 = vsub.s32 6, %v515
  %v517 = vrot.slane %v483, %v516
  %v518 = vlaneseq
  %v519 = vshrl.u32 %v518, 7
  %v520 = vsub.s32 7, %v519
  %v521 = vrot.slane %v483, %v520
  %v522 = vlaneseq
  %v523 = vshrl.u32 %v522, 7
  %v524 = vsub.s32 0, %v523
  %v525 = vrot.slane %v487, %v524
  %v526 = vlaneseq
  %v527 = vshrl.u32 %v526, 7
  %v528 = vsub.s32 1, %v527
  %v529 = vrot.slane %v487, %v528
  %v530 = vlaneseq
  %v531 = vshrl.u32 %v530, 7
  %v532 = vsub.s32 2, %v531
  %v533 = vrot.slane %v487, %v532
  %v534 = vlaneseq
  %v535 = vshrl.u32 %v534, 7
  %v536 = vsub.s32 3, %v535
  %v537 = vrot.slane %v487, %v536
  %v538 = vlaneseq
  %v539 = vshrl.u32 %v538, 7
  %v540 = vsub.s32 4, %v539
  %v541 = vrot.slane %v487, %v540
  %v542 = vlaneseq
  %v543 = vshrl.u32 %v542, 7
  %v544 = vsub.s32 5, %v543
  %v545 = vrot.slane %v487, %v544
  %v546 = vlaneseq
  %v547 = vshrl.u32 %v546, 7
  %v548 = vsub.s32 6, %v547
  %v549 = vrot.slane %v487, %v548
  %v550 = vlaneseq
  %v551 = vshrl.u32 %v550, 7
  %v552 = vsub.s32 7, %v551
  %v553 = vrot.slane %v487, %v552
  %v570 = vmul.f32 %v479, %v493
  %v571 = vmul.f32 %v478, %v497
  %v572 = vmul.f32 %v477, %v501
  %v573 = vmul.f32 %v476, %v505
  %v574 = vmul.f32 %v475, %v509
  %v575 = vmul.f32 %v474, %v513
  %v576 = vmul.f32 %v473, %v517
  %v577 = vmul.f32 %v472, %v521
  %v578 = vmul.f32 %v471, %v525
  %v579 = vmul.f32 %v470, %v529
  %v580 = vmul.f32 %v469, %v533
  %v581 = vmul.f32 %v468, %v537
  %v582 = vmul.f32 %v467, %v541
  %v583 = vmul.f32 %v466, %v545
  %v584 = vmul.f32 %v465, %v549
  %v585 = vmul.f32 %v464, %v553
  %v602 = vcombine.low %v570, %v571
  %v603 = vcombine.low %v572, %v573
  %v604 = vcombine.low %v574, %v575
  %v605 = vcombine.low %v576, %v577
  %v607 = vunpack.c.l.s4 1966171168
  %v608 = vunpack.c.0.s8 %v607
  %v609 = vlaneseq
  %v610 = vshrl.u32 %v609, 7
  %v611 = vsub.s32 %v608, %v610
  %v612 = vrot.slane %v602, %v611
  %v614 = vunpack.c.l.s4 1966171168
  %v615 = vunpack.c.0.s8 %v614
  %v616 = vlaneseq
  %v617 = vshrl.u32 %v616, 7
  %v618 = vsub.s32 %v615, %v617
  %v619 = vrot.slane %v603, %v618
  %v621 = vunpack.c.l.s4 1966171168
  %v622 = vunpack.c.0.s8 %v621
  %v623 = vlaneseq
  %v624 = vshrl.u32 %v623, 7
  %v625 = vsub.s32 %v622, %v624
  %v626 = vrot.slane %v604, %v625
  %v628 = vunpack.c.l.s4 1966171168
  %v629 = vunpack.c.0.s8 %v628
  %v630 = vlaneseq
  %v631 = vshrl.u32 %v630, 7
  %v632 = vsub.s32 %v629, %v631
  %v633 = vrot.slane %v605, %v632
  %v634 = vcombine.low %v612, %v619
  %v635 = vcombine.low %v626, %v633
  %v637 = vunpack.c.l.s4 1966171168
  %v638 = vunpack.c.0.s8 %v637
  %v639 = vlaneseq
  %v640 = vshrl.u32 %v639, 7
  %v641 = vsub.s32 %v638, %v640
  %v642 = vrot.slane %v634, %v641
  %v644 = vunpack.c.l.s4 1966171168
  %v645 = vunpack.c.0.s8 %v644
  %v646 = vlaneseq
  %v647 = vshrl.u32 %v646, 7
  %v648 = vsub.s32 %v645, %v647
  %v649 = vrot.slane %v635, %v648
  %v650 = vcombine.low %v642, %v649
  %v651 = vcombine.low %v578, %v579
  %v652 = vcombine.low %v580, %v581
  %v653 = vcombine.low %v582, %v583
  %v654 = vcombine.low %v584, %v585
  %v656 = vunpack.c.l.s4 1966171168
  %v657 = vunpack.c.0.s8 %v656
  %v658 = vlaneseq
  %v659 = vshrl.u32 %v658, 7
  %v660 = vsub.s32 %v657, %v659
  %v661 = vrot.slane %v651, %v660
  %v663 = vunpack.c.l.s4 1966171168
  %v664 = vunpack.c.0.s8 %v663
  %v665 = vlaneseq
  %v666 = vshrl.u32 %v665, 7
  %v667 = vsub.s32 %v664, %v666
  %v668 = vrot.slane %v652, %v667
  %v670 = vunpack.c.l.s4 1966171168
  %v671 = vunpack.c.0.s8 %v670
  %v672 = vlaneseq
  %v673 = vshrl.u32 %v672, 7
  %v674 = vsub.s32 %v671, %v673
  %v675 = vrot.slane %v653, %v674
  %v677 = vunpack.c.l.s4 1966171168
  %v678 = vunpack.c.0.s8 %v677
  %v679 = vlaneseq
  %v680 = vshrl.u32 %v679, 7
  %v681 = vsub.s32 %v678, %v680
  %v682 = vrot.slane %v654, %v681
  %v683 = vcombine.low %v661, %v668
  %v684 = vcombine.low %v675, %v682
  %v686 = vunpack.c.l.s4 1966171168
  %v687 = vunpack.c.0.s8 %v686
  %v688 = vlaneseq
  %v689 = vshrl.u32 %v688, 7
  %v690 = vsub.s32 %v687, %v689
  %v691 = vrot.slane %v683, %v690
  %v693 = vunpack.c.l.s4 1966171168
  %v694 = vunpack.c.0.s8 %v693
  %v695 = vlaneseq
  %v696 = vshrl.u32 %v695, 7
  %v697 = vsub.s32 %v694, %v696
  %v698 = vrot.slane %v684, %v697
  %v699 = vcombine.low %v691, %v698
  %s702 = scalar_lea.vmem [#allocation2], 1
  %703 = vst [vmem:[%s702] ss:$8 sm:$0xf] %v650
  %704 = vst [vmem:[%s702] ss:$8 sm:$0xf0] %v650
  %s705 = scalar_lea.vmem [#allocation2], 65
  %706 = vst [vmem:[%s705] ss:$8 sm:$0xf] %v699
  %707 = vst [vmem:[%s705] ss:$8 sm:$0xf0] %v699
  %708 = vrot.lane.b32.xlu0 %v77, 32
  %v709 = vpop.permute.xlu0 %708
  %710 = vrot.lane.b32.xlu0 %v81, 32
  %v711 = vpop.permute.xlu0 %710
  %712 = vrot.lane.b32.xlu0 %v85, 32
  %v713 = vpop.permute.xlu0 %712
  %714 = vrot.lane.b32.xlu0 %v89, 32
  %v715 = vpop.permute.xlu0 %714
  %716 = vrot.lane.b32.xlu0 %v93, 32
  %v717 = vpop.permute.xlu0 %716
  %718 = vrot.lane.b32.xlu0 %v97, 32
  %v719 = vpop.permute.xlu0 %718
  %720 = vrot.lane.b32.xlu0 %v101, 32
  %v721 = vpop.permute.xlu0 %720
  %722 = vrot.lane.b32.xlu0 %v105, 32
  %v723 = vpop.permute.xlu0 %722
  %724 = vrot.lane.b32.xlu0 %v109, 32
  %v725 = vpop.permute.xlu0 %724
  %726 = vrot.lane.b32.xlu0 %v113, 32
  %v727 = vpop.permute.xlu0 %726
  %728 = vrot.lane.b32.xlu0 %v117, 32
  %v729 = vpop.permute.xlu0 %728
  %730 = vrot.lane.b32.xlu0 %v121, 32
  %v731 = vpop.permute.xlu0 %730
  %732 = vrot.lane.b32.xlu0 %v125, 32
  %v733 = vpop.permute.xlu0 %732
  %734 = vrot.lane.b32.xlu0 %v129, 32
  %v735 = vpop.permute.xlu0 %734
  %736 = vrot.lane.b32.xlu0 %v133, 32
  %v737 = vpop.permute.xlu0 %736
  %738 = vrot.lane.b32.xlu0 %v137, 32
  %v739 = vpop.permute.xlu0 %738
  %vm740 = vcmp.lt.s32.totalorder %v187, 32
  %v741 = vsel %vm740, %v737, %v739
  %v742 = vsel %vm740, %v735, %v737
  %v743 = vsel %vm740, %v733, %v735
  %v744 = vsel %vm740, %v731, %v733
  %v745 = vsel %vm740, %v729, %v731
  %v746 = vsel %vm740, %v727, %v729
  %v747 = vsel %vm740, %v725, %v727
  %v748 = vsel %vm740, %v723, %v725
  %v749 = vsel %vm740, %v721, %v723
  %v750 = vsel %vm740, %v719, %v721
  %v751 = vsel %vm740, %v717, %v719
  %v752 = vsel %vm740, %v715, %v717
  %v753 = vsel %vm740, %v713, %v715
  %v754 = vsel %vm740, %v711, %v713
  %v755 = vsel %vm740, %v709, %v711
  %v756 = vsel %vm740, %v739, %v709
  %s757 = scalar_lea.vmem %s2, 2
  %v758 = vld [vmem:[%s757] ss:$8 sm:$0xf]
  %v759 = vld [vmem:[%s757] ss:$8 sm:$0xf0]
  %v760 = vor.u32 %v758, %v759
  %s761 = scalar_lea.vmem %s2, 66
  %v762 = vld [vmem:[%s761] ss:$8 sm:$0xf]
  %v763 = vld [vmem:[%s761] ss:$8 sm:$0xf0]
  %v764 = vor.u32 %v762, %v763
  %v767 = vlaneseq
  %v768 = vshrl.u32 %v767, 7
  %v769 = vsub.s32 0, %v768
  %v770 = vrot.slane %v760, %v769
  %v771 = vlaneseq
  %v772 = vshrl.u32 %v771, 7
  %v773 = vsub.s32 1, %v772
  %v774 = vrot.slane %v760, %v773
  %v775 = vlaneseq
  %v776 = vshrl.u32 %v775, 7
  %v777 = vsub.s32 2, %v776
  %v778 = vrot.slane %v760, %v777
  %v779 = vlaneseq
  %v780 = vshrl.u32 %v779, 7
  %v781 = vsub.s32 3, %v780
  %v782 = vrot.slane %v760, %v781
  %v783 = vlaneseq
  %v784 = vshrl.u32 %v783, 7
  %v785 = vsub.s32 4, %v784
  %v786 = vrot.slane %v760, %v785
  %v787 = vlaneseq
  %v788 = vshrl.u32 %v787, 7
  %v789 = vsub.s32 5, %v788
  %v790 = vrot.slane %v760, %v789
  %v791 = vlaneseq
  %v792 = vshrl.u32 %v791, 7
  %v793 = vsub.s32 6, %v792
  %v794 = vrot.slane %v760, %v793
  %v795 = vlaneseq
  %v796 = vshrl.u32 %v795, 7
  %v797 = vsub.s32 7, %v796
  %v798 = vrot.slane %v760, %v797
  %v799 = vlaneseq
  %v800 = vshrl.u32 %v799, 7
  %v801 = vsub.s32 0, %v800
  %v802 = vrot.slane %v764, %v801
  %v803 = vlaneseq
  %v804 = vshrl.u32 %v803, 7
  %v805 = vsub.s32 1, %v804
  %v806 = vrot.slane %v764, %v805
  %v807 = vlaneseq
  %v808 = vshrl.u32 %v807, 7
  %v809 = vsub.s32 2, %v808
  %v810 = vrot.slane %v764, %v809
  %v811 = vlaneseq
  %v812 = vshrl.u32 %v811, 7
  %v813 = vsub.s32 3, %v812
  %v814 = vrot.slane %v764, %v813
  %v815 = vlaneseq
  %v816 = vshrl.u32 %v815, 7
  %v817 = vsub.s32 4, %v816
  %v818 = vrot.slane %v764, %v817
  %v819 = vlaneseq
  %v820 = vshrl.u32 %v819, 7
  %v821 = vsub.s32 5, %v820
  %v822 = vrot.slane %v764, %v821
  %v823 = vlaneseq
  %v824 = vshrl.u32 %v823, 7
  %v825 = vsub.s32 6, %v824
  %v826 = vrot.slane %v764, %v825
  %v827 = vlaneseq
  %v828 = vshrl.u32 %v827, 7
  %v829 = vsub.s32 7, %v828
  %v830 = vrot.slane %v764, %v829
  %v847 = vmul.f32 %v756, %v770
  %v848 = vmul.f32 %v755, %v774
  %v849 = vmul.f32 %v754, %v778
  %v850 = vmul.f32 %v753, %v782
  %v851 = vmul.f32 %v752, %v786
  %v852 = vmul.f32 %v751, %v790
  %v853 = vmul.f32 %v750, %v794
  %v854 = vmul.f32 %v749, %v798
  %v855 = vmul.f32 %v748, %v802
  %v856 = vmul.f32 %v747, %v806
  %v857 = vmul.f32 %v746, %v810
  %v858 = vmul.f32 %v745, %v814
  %v859 = vmul.f32 %v744, %v818
  %v860 = vmul.f32 %v743, %v822
  %v861 = vmul.f32 %v742, %v826
  %v862 = vmul.f32 %v741, %v830
  %v879 = vcombine.low %v847, %v848
  %v880 = vcombine.low %v849, %v850
  %v881 = vcombine.low %v851, %v852
  %v882 = vcombine.low %v853, %v854
  %v884 = vunpack.c.l.s4 1966171168
  %v885 = vunpack.c.0.s8 %v884
  %v886 = vlaneseq
  %v887 = vshrl.u32 %v886, 7
  %v888 = vsub.s32 %v885, %v887
  %v889 = vrot.slane %v879, %v888
  %v891 = vunpack.c.l.s4 1966171168
  %v892 = vunpack.c.0.s8 %v891
  %v893 = vlaneseq
  %v894 = vshrl.u32 %v893, 7
  %v895 = vsub.s32 %v892, %v894
  %v896 = vrot.slane %v880, %v895
  %v898 = vunpack.c.l.s4 1966171168
  %v899 = vunpack.c.0.s8 %v898
  %v900 = vlaneseq
  %v901 = vshrl.u32 %v900, 7
  %v902 = vsub.s32 %v899, %v901
  %v903 = vrot.slane %v881, %v902
  %v905 = vunpack.c.l.s4 1966171168
  %v906 = vunpack.c.0.s8 %v905
  %v907 = vlaneseq
  %v908 = vshrl.u32 %v907, 7
  %v909 = vsub.s32 %v906, %v908
  %v910 = vrot.slane %v882, %v909
  %v911 = vcombine.low %v889, %v896
  %v912 = vcombine.low %v903, %v910
  %v914 = vunpack.c.l.s4 1966171168
  %v915 = vunpack.c.0.s8 %v914
  %v916 = vlaneseq
  %v917 = vshrl.u32 %v916, 7
  %v918 = vsub.s32 %v915, %v917
  %v919 = vrot.slane %v911, %v918
  %v921 = vunpack.c.l.s4 1966171168
  %v922 = vunpack.c.0.s8 %v921
  %v923 = vlaneseq
  %v924 = vshrl.u32 %v923, 7
  %v925 = vsub.s32 %v922, %v924
  %v926 = vrot.slane %v912, %v925
  %v927 = vcombine.low %v919, %v926
  %v928 = vcombine.low %v855, %v856
  %v929 = vcombine.low %v857, %v858
  %v930 = vcombine.low %v859, %v860
  %v931 = vcombine.low %v861, %v862
  %v933 = vunpack.c.l.s4 1966171168
  %v934 = vunpack.c.0.s8 %v933
  %v935 = vlaneseq
  %v936 = vshrl.u32 %v935, 7
  %v937 = vsub.s32 %v934, %v936
  %v938 = vrot.slane %v928, %v937
  %v940 = vunpack.c.l.s4 1966171168
  %v941 = vunpack.c.0.s8 %v940
  %v942 = vlaneseq
  %v943 = vshrl.u32 %v942, 7
  %v944 = vsub.s32 %v941, %v943
  %v945 = vrot.slane %v929, %v944
  %v947 = vunpack.c.l.s4 1966171168
  %v948 = vunpack.c.0.s8 %v947
  %v949 = vlaneseq
  %v950 = vshrl.u32 %v949, 7
  %v951 = vsub.s32 %v948, %v950
  %v952 = vrot.slane %v930, %v951
  %v954 = vunpack.c.l.s4 1966171168
  %v955 = vunpack.c.0.s8 %v954
  %v956 = vlaneseq
  %v957 = vshrl.u32 %v956, 7
  %v958 = vsub.s32 %v955, %v957
  %v959 = vrot.slane %v931, %v958
  %v960 = vcombine.low %v938, %v945
  %v961 = vcombine.low %v952, %v959
  %v963 = vunpack.c.l.s4 1966171168
  %v964 = vunpack.c.0.s8 %v963
  %v965 = vlaneseq
  %v966 = vshrl.u32 %v965, 7
  %v967 = vsub.s32 %v964, %v966
  %v968 = vrot.slane %v960, %v967
  %v970 = vunpack.c.l.s4 1966171168
  %v971 = vunpack.c.0.s8 %v970
  %v972 = vlaneseq
  %v973 = vshrl.u32 %v972, 7
  %v974 = vsub.s32 %v971, %v973
  %v975 = vrot.slane %v961, %v974
  %v976 = vcombine.low %v968, %v975
  %s979 = scalar_lea.vmem [#allocation2], 2
  %980 = vst [vmem:[%s979] ss:$8 sm:$0xf] %v927
  %981 = vst [vmem:[%s979] ss:$8 sm:$0xf0] %v927
  %s982 = scalar_lea.vmem [#allocation2], 66
  %983 = vst [vmem:[%s982] ss:$8 sm:$0xf] %v976
  %984 = vst [vmem:[%s982] ss:$8 sm:$0xf0] %v976
  %985 = vrot.lane.b32.xlu0 %v77, 31
  %v986 = vpop.permute.xlu0 %985
  %987 = vrot.lane.b32.xlu0 %v81, 31
  %v988 = vpop.permute.xlu0 %987
  %989 = vrot.lane.b32.xlu0 %v85, 31
  %v990 = vpop.permute.xlu0 %989
  %991 = vrot.lane.b32.xlu0 %v89, 31
  %v992 = vpop.permute.xlu0 %991
  %993 = vrot.lane.b32.xlu0 %v93, 31
  %v994 = vpop.permute.xlu0 %993
  %995 = vrot.lane.b32.xlu0 %v97, 31
  %v996 = vpop.permute.xlu0 %995
  %997 = vrot.lane.b32.xlu0 %v101, 31
  %v998 = vpop.permute.xlu0 %997
  %999 = vrot.lane.b32.xlu0 %v105, 31
  %v1000 = vpop.permute.xlu0 %999
  %1001 = vrot.lane.b32.xlu0 %v109, 31
  %v1002 = vpop.permute.xlu0 %1001
  %1003 = vrot.lane.b32.xlu0 %v113, 31
  %v1004 = vpop.permute.xlu0 %1003
  %1005 = vrot.lane.b32.xlu0 %v117, 31
  %v1006 = vpop.permute.xlu0 %1005
  %1007 = vrot.lane.b32.xlu0 %v121, 31
  %v1008 = vpop.permute.xlu0 %1007
  %1009 = vrot.lane.b32.xlu0 %v125, 31
  %v1010 = vpop.permute.xlu0 %1009
  %1011 = vrot.lane.b32.xlu0 %v129, 31
  %v1012 = vpop.permute.xlu0 %1011
  %1013 = vrot.lane.b32.xlu0 %v133, 31
  %v1014 = vpop.permute.xlu0 %1013
  %1015 = vrot.lane.b32.xlu0 %v137, 31
  %v1016 = vpop.permute.xlu0 %1015
  %vm1017 = vcmp.lt.s32.totalorder %v187, 31
  %v1018 = vsel %vm1017, %v1014, %v1016
  %v1019 = vsel %vm1017, %v1012, %v1014
  %v1020 = vsel %vm1017, %v1010, %v1012
  %v1021 = vsel %vm1017, %v1008, %v1010
  %v1022 = vsel %vm1017, %v1006, %v1008
  %v1023 = vsel %vm1017, %v1004, %v1006
  %v1024 = vsel %vm1017, %v1002, %v1004
  %v1025 = vsel %vm1017, %v1000, %v1002
  %v1026 = vsel %vm1017, %v998, %v1000
  %v1027 = vsel %vm1017, %v996, %v998
  %v1028 = vsel %vm1017, %v994, %v996
  %v1029 = vsel %vm1017, %v992, %v994
  %v1030 = vsel %vm1017, %v990, %v992
  %v1031 = vsel %vm1017, %v988, %v990
  %v1032 = vsel %vm1017, %v986, %v988
  %v1033 = vsel %vm1017, %v1016, %v986
  %s1034 = scalar_lea.vmem %s2, 3
  %v1035 = vld [vmem:[%s1034] ss:$8 sm:$0xf]
  %v1036 = vld [vmem:[%s1034] ss:$8 sm:$0xf0]
  %v1037 = vor.u32 %v1035, %v1036
  %s1038 = scalar_lea.vmem %s2, 67
  %v1039 = vld [vmem:[%s1038] ss:$8 sm:$0xf]
  %v1040 = vld [vmem:[%s1038] ss:$8 sm:$0xf0]
  %v1041 = vor.u32 %v1039, %v1040
  %v1044 = vlaneseq
  %v1045 = vshrl.u32 %v1044, 7
  %v1046 = vsub.s32 0, %v1045
  %v1047 = vrot.slane %v1037, %v1046
  %v1048 = vlaneseq
  %v1049 = vshrl.u32 %v1048, 7
  %v1050 = vsub.s32 1, %v1049
  %v1051 = vrot.slane %v1037, %v1050
  %v1052 = vlaneseq
  %v1053 = vshrl.u32 %v1052, 7
  %v1054 = vsub.s32 2, %v1053
  %v1055 = vrot.slane %v1037, %v1054
  %v1056 = vlaneseq
  %v1057 = vshrl.u32 %v1056, 7
  %v1058 = vsub.s32 3, %v1057
  %v1059 = vrot.slane %v1037, %v1058
  %v1060 = vlaneseq
  %v1061 = vshrl.u32 %v1060, 7
  %v1062 = vsub.s32 4, %v1061
  %v1063 = vrot.slane %v1037, %v1062
  %v1064 = vlaneseq
  %v1065 = vshrl.u32 %v1064, 7
  %v1066 = vsub.s32 5, %v1065
  %v1067 = vrot.slane %v1037, %v1066
  %v1068 = vlaneseq
  %v1069 = vshrl.u32 %v1068, 7
  %v1070 = vsub.s32 6, %v1069
  %v1071 = vrot.slane %v1037, %v1070
  %v1072 = vlaneseq
  %v1073 = vshrl.u32 %v1072, 7
  %v1074 = vsub.s32 7, %v1073
  %v1075 = vrot.slane %v1037, %v1074
  %v1076 = vlaneseq
  %v1077 = vshrl.u32 %v1076, 7
  %v1078 = vsub.s32 0, %v1077
  %v1079 = vrot.slane %v1041, %v1078
  %v1080 = vlaneseq
  %v1081 = vshrl.u32 %v1080, 7
  %v1082 = vsub.s32 1, %v1081
  %v1083 = vrot.slane %v1041, %v1082
  %v1084 = vlaneseq
  %v1085 = vshrl.u32 %v1084, 7
  %v1086 = vsub.s32 2, %v1085
  %v1087 = vrot.slane %v1041, %v1086
  %v1088 = vlaneseq
  %v1089 = vshrl.u32 %v1088, 7
  %v1090 = vsub.s32 3, %v1089
  %v1091 = vrot.slane %v1041, %v1090
  %v1092 = vlaneseq
  %v1093 = vshrl.u32 %v1092, 7
  %v1094 = vsub.s32 4, %v1093
  %v1095 = vrot.slane %v1041, %v1094
  %v1096 = vlaneseq
  %v1097 = vshrl.u32 %v1096, 7
  %v1098 = vsub.s32 5, %v1097
  %v1099 = vrot.slane %v1041, %v1098
  %v1100 = vlaneseq
  %v1101 = vshrl.u32 %v1100, 7
  %v1102 = vsub.s32 6, %v1101
  %v1103 = vrot.slane %v1041, %v1102
  %v1104 = vlaneseq
  %v1105 = vshrl.u32 %v1104, 7
  %v1106 = vsub.s32 7, %v1105
  %v1107 = vrot.slane %v1041, %v1106
  %v1124 = vmul.f32 %v1033, %v1047
  %v1125 = vmul.f32 %v1032, %v1051
  %v1126 = vmul.f32 %v1031, %v1055
  %v1127 = vmul.f32 %v1030, %v1059
  %v1128 = vmul.f32 %v1029, %v1063
  %v1129 = vmul.f32 %v1028, %v1067
  %v1130 = vmul.f32 %v1027, %v1071
  %v1131 = vmul.f32 %v1026, %v1075
  %v1132 = vmul.f32 %v1025, %v1079
  %v1133 = vmul.f32 %v1024, %v1083
  %v1134 = vmul.f32 %v1023, %v1087
  %v1135 = vmul.f32 %v1022, %v1091
  %v1136 = vmul.f32 %v1021, %v1095
  %v1137 = vmul.f32 %v1020, %v1099
  %v1138 = vmul.f32 %v1019, %v1103
  %v1139 = vmul.f32 %v1018, %v1107
  %v1156 = vcombine.low %v1124, %v1125
  %v1157 = vcombine.low %v1126, %v1127
  %v1158 = vcombine.low %v1128, %v1129
  %v1159 = vcombine.low %v1130, %v1131
  %v1161 = vunpack.c.l.s4 1966171168
  %v1162 = vunpack.c.0.s8 %v1161
  %v1163 = vlaneseq
  %v1164 = vshrl.u32 %v1163, 7
  %v1165 = vsub.s32 %v1162, %v1164
  %v1166 = vrot.slane %v1156, %v1165
  %v1168 = vunpack.c.l.s4 1966171168
  %v1169 = vunpack.c.0.s8 %v1168
  %v1170 = vlaneseq
  %v1171 = vshrl.u32 %v1170, 7
  %v1172 = vsub.s32 %v1169, %v1171
  %v1173 = vrot.slane %v1157, %v1172
  %v1175 = vunpack.c.l.s4 1966171168
  %v1176 = vunpack.c.0.s8 %v1175
  %v1177 = vlaneseq
  %v1178 = vshrl.u32 %v1177, 7
  %v1179 = vsub.s32 %v1176, %v1178
  %v1180 = vrot.slane %v1158, %v1179
  %v1182 = vunpack.c.l.s4 1966171168
  %v1183 = vunpack.c.0.s8 %v1182
  %v1184 = vlaneseq
  %v1185 = vshrl.u32 %v1184, 7
  %v1186 = vsub.s32 %v1183, %v1185
  %v1187 = vrot.slane %v1159, %v1186
  %v1188 = vcombine.low %v1166, %v1173
  %v1189 = vcombine.low %v1180, %v1187
  %v1191 = vunpack.c.l.s4 1966171168
  %v1192 = vunpack.c.0.s8 %v1191
  %v1193 = vlaneseq
  %v1194 = vshrl.u32 %v1193, 7
  %v1195 = vsub.s32 %v1192, %v1194
  %v1196 = vrot.slane %v1188, %v1195
  %v1198 = vunpack.c.l.s4 1966171168
  %v1199 = vunpack.c.0.s8 %v1198
  %v1200 = vlaneseq
  %v1201 = vshrl.u32 %v1200, 7
  %v1202 = vsub.s32 %v1199, %v1201
  %v1203 = vrot.slane %v1189, %v1202
  %v1204 = vcombine.low %v1196, %v1203
  %v1205 = vcombine.low %v1132, %v1133
  %v1206 = vcombine.low %v1134, %v1135
  %v1207 = vcombine.low %v1136, %v1137
  %v1208 = vcombine.low %v1138, %v1139
  %v1210 = vunpack.c.l.s4 1966171168
  %v1211 = vunpack.c.0.s8 %v1210
  %v1212 = vlaneseq
  %v1213 = vshrl.u32 %v1212, 7
  %v1214 = vsub.s32 %v1211, %v1213
  %v1215 = vrot.slane %v1205, %v1214
  %v1217 = vunpack.c.l.s4 1966171168
  %v1218 = vunpack.c.0.s8 %v1217
  %v1219 = vlaneseq
  %v1220 = vshrl.u32 %v1219, 7
  %v1221 = vsub.s32 %v1218, %v1220
  %v1222 = vrot.slane %v1206, %v1221
  %v1224 = vunpack.c.l.s4 1966171168
  %v1225 = vunpack.c.0.s8 %v1224
  %v1226 = vlaneseq
  %v1227 = vshrl.u32 %v1226, 7
  %v1228 = vsub.s32 %v1225, %v1227
  %v1229 = vrot.slane %v1207, %v1228
  %v1231 = vunpack.c.l.s4 1966171168
  %v1232 = vunpack.c.0.s8 %v1231
  %v1233 = vlaneseq
  %v1234 = vshrl.u32 %v1233, 7
  %v1235 = vsub.s32 %v1232, %v1234
  %v1236 = vrot.slane %v1208, %v1235
  %v1237 = vcombine.low %v1215, %v1222
  %v1238 = vcombine.low %v1229, %v1236
  %v1240 = vunpack.c.l.s4 1966171168
  %v1241 = vunpack.c.0.s8 %v1240
  %v1242 = vlaneseq
  %v1243 = vshrl.u32 %v1242, 7
  %v1244 = vsub.s32 %v1241, %v1243
  %v1245 = vrot.slane %v1237, %v1244
  %v1247 = vunpack.c.l.s4 1966171168
  %v1248 = vunpack.c.0.s8 %v1247
  %v1249 = vlaneseq
  %v1250 = vshrl.u32 %v1249, 7
  %v1251 = vsub.s32 %v1248, %v1250
  %v1252 = vrot.slane %v1238, %v1251
  %v1253 = vcombine.low %v1245, %v1252
  %s1256 = scalar_lea.vmem [#allocation2], 3
  %1257 = vst [vmem:[%s1256] ss:$8 sm:$0xf] %v1204
  %1258 = vst [vmem:[%s1256] ss:$8 sm:$0xf0] %v1204
  %s1259 = scalar_lea.vmem [#allocation2], 67
  %1260 = vst [vmem:[%s1259] ss:$8 sm:$0xf] %v1253
  %1261 = vst [vmem:[%s1259] ss:$8 sm:$0xf0] %v1253
  %1262 = vrot.lane.b32.xlu0 %v77, 30
  %v1263 = vpop.permute.xlu0 %1262
  %1264 = vrot.lane.b32.xlu0 %v81, 30
  %v1265 = vpop.permute.xlu0 %1264
  %1266 = vrot.lane.b32.xlu0 %v85, 30
  %v1267 = vpop.permute.xlu0 %1266
  %1268 = vrot.lane.b32.xlu0 %v89, 30
  %v1269 = vpop.permute.xlu0 %1268
  %1270 = vrot.lane.b32.xlu0 %v93, 30
  %v1271 = vpop.permute.xlu0 %1270
  %1272 = vrot.lane.b32.xlu0 %v97, 30
  %v1273 = vpop.permute.xlu0 %1272
  %1274 = vrot.lane.b32.xlu0 %v101, 30
  %v1275 = vpop.permute.xlu0 %1274
  %1276 = vrot.lane.b32.xlu0 %v105, 30
  %v1277 = vpop.permute.xlu0 %1276
  %1278 = vrot.lane.b32.xlu0 %v109, 30
  %v1279 = vpop.permute.xlu0 %1278
  %1280 = vrot.lane.b32.xlu0 %v113, 30
  %v1281 = vpop.permute.xlu0 %1280
  %1282 = vrot.lane.b32.xlu0 %v117, 30
  %v1283 = vpop.permute.xlu0 %1282
  %1284 = vrot.lane.b32.xlu0 %v121, 30
  %v1285 = vpop.permute.xlu0 %1284
  %1286 = vrot.lane.b32.xlu0 %v125, 30
  %v1287 = vpop.permute.xlu0 %1286
  %1288 = vrot.lane.b32.xlu0 %v129, 30
  %v1289 = vpop.permute.xlu0 %1288
  %1290 = vrot.lane.b32.xlu0 %v133, 30
  %v1291 = vpop.permute.xlu0 %1290
  %1292 = vrot.lane.b32.xlu0 %v137, 30
  %v1293 = vpop.permute.xlu0 %1292
  %vm1294 = vcmp.lt.s32.totalorder %v187, 30
  %v1295 = vsel %vm1294, %v1291, %v1293
  %v1296 = vsel %vm1294, %v1289, %v1291
  %v1297 = vsel %vm1294, %v1287, %v1289
  %v1298 = vsel %vm1294, %v1285, %v1287
  %v1299 = vsel %vm1294, %v1283, %v1285
  %v1300 = vsel %vm1294, %v1281, %v1283
  %v1301 = vsel %vm1294, %v1279, %v1281
  %v1302 = vsel %vm1294, %v1277, %v1279
  %v1303 = vsel %vm1294, %v1275, %v1277
  %v1304 = vsel %vm1294, %v1273, %v1275
  %v1305 = vsel %vm1294, %v1271, %v1273
  %v1306 = vsel %vm1294, %v1269, %v1271
  %v1307 = vsel %vm1294, %v1267, %v1269
  %v1308 = vsel %vm1294, %v1265, %v1267
  %v1309 = vsel %vm1294, %v1263, %v1265
  %v1310 = vsel %vm1294, %v1293, %v1263
  %s1311 = scalar_lea.vmem %s2, 4
  %v1312 = vld [vmem:[%s1311] ss:$8 sm:$0xf]
  %v1313 = vld [vmem:[%s1311] ss:$8 sm:$0xf0]
  %v1314 = vor.u32 %v1312, %v1313
  %s1315 = scalar_lea.vmem %s2, 68
  %v1316 = vld [vmem:[%s1315] ss:$8 sm:$0xf]
  %v1317 = vld [vmem:[%s1315] ss:$8 sm:$0xf0]
  %v1318 = vor.u32 %v1316, %v1317
  %v1321 = vlaneseq
  %v1322 = vshrl.u32 %v1321, 7
  %v1323 = vsub.s32 0, %v1322
  %v1324 = vrot.slane %v1314, %v1323
  %v1325 = vlaneseq
  %v1326 = vshrl.u32 %v1325, 7
  %v1327 = vsub.s32 1, %v1326
  %v1328 = vrot.slane %v1314, %v1327
  %v1329 = vlaneseq
  %v1330 = vshrl.u32 %v1329, 7
  %v1331 = vsub.s32 2, %v1330
  %v1332 = vrot.slane %v1314, %v1331
  %v1333 = vlaneseq
  %v1334 = vshrl.u32 %v1333, 7
  %v1335 = vsub.s32 3, %v1334
  %v1336 = vrot.slane %v1314, %v1335
  %v1337 = vlaneseq
  %v1338 = vshrl.u32 %v1337, 7
  %v1339 = vsub.s32 4, %v1338
  %v1340 = vrot.slane %v1314, %v1339
  %v1341 = vlaneseq
  %v1342 = vshrl.u32 %v1341, 7
  %v1343 = vsub.s32 5, %v1342
  %v1344 = vrot.slane %v1314, %v1343
  %v1345 = vlaneseq
  %v1346 = vshrl.u32 %v1345, 7
  %v1347 = vsub.s32 6, %v1346
  %v1348 = vrot.slane %v1314, %v1347
  %v1349 = vlaneseq
  %v1350 = vshrl.u32 %v1349, 7
  %v1351 = vsub.s32 7, %v1350
  %v1352 = vrot.slane %v1314, %v1351
  %v1353 = vlaneseq
  %v1354 = vshrl.u32 %v1353, 7
  %v1355 = vsub.s32 0, %v1354
  %v1356 = vrot.slane %v1318, %v1355
  %v1357 = vlaneseq
  %v1358 = vshrl.u32 %v1357, 7
  %v1359 = vsub.s32 1, %v1358
  %v1360 = vrot.slane %v1318, %v1359
  %v1361 = vlaneseq
  %v1362 = vshrl.u32 %v1361, 7
  %v1363 = vsub.s32 2, %v1362
  %v1364 = vrot.slane %v1318, %v1363
  %v1365 = vlaneseq
  %v1366 = vshrl.u32 %v1365, 7
  %v1367 = vsub.s32 3, %v1366
  %v1368 = vrot.slane %v1318, %v1367
  %v1369 = vlaneseq
  %v1370 = vshrl.u32 %v1369, 7
  %v1371 = vsub.s32 4, %v1370
  %v1372 = vrot.slane %v1318, %v1371
  %v1373 = vlaneseq
  %v1374 = vshrl.u32 %v1373, 7
  %v1375 = vsub.s32 5, %v1374
  %v1376 = vrot.slane %v1318, %v1375
  %v1377 = vlaneseq
  %v1378 = vshrl.u32 %v1377, 7
  %v1379 = vsub.s32 6, %v1378
  %v1380 = vrot.slane %v1318, %v1379
  %v1381 = vlaneseq
  %v1382 = vshrl.u32 %v1381, 7
  %v1383 = vsub.s32 7, %v1382
  %v1384 = vrot.slane %v1318, %v1383
  %v1401 = vmul.f32 %v1310, %v1324
  %v1402 = vmul.f32 %v1309, %v1328
  %v1403 = vmul.f32 %v1308, %v1332
  %v1404 = vmul.f32 %v1307, %v1336
  %v1405 = vmul.f32 %v1306, %v1340
  %v1406 = vmul.f32 %v1305, %v1344
  %v1407 = vmul.f32 %v1304, %v1348
  %v1408 = vmul.f32 %v1303, %v1352
  %v1409 = vmul.f32 %v1302, %v1356
  %v1410 = vmul.f32 %v1301, %v1360
  %v1411 = vmul.f32 %v1300, %v1364
  %v1412 = vmul.f32 %v1299, %v1368
  %v1413 = vmul.f32 %v1298, %v1372
  %v1414 = vmul.f32 %v1297, %v1376
  %v1415 = vmul.f32 %v1296, %v1380
  %v1416 = vmul.f32 %v1295, %v1384
  %v1433 = vcombine.low %v1401, %v1402
  %v1434 = vcombine.low %v1403, %v1404
  %v1435 = vcombine.low %v1405, %v1406
  %v1436 = vcombine.low %v1407, %v1408
  %v1438 = vunpack.c.l.s4 1966171168
  %v1439 = vunpack.c.0.s8 %v1438
  %v1440 = vlaneseq
  %v1441 = vshrl.u32 %v1440, 7
  %v1442 = vsub.s32 %v1439, %v1441
  %v1443 = vrot.slane %v1433, %v1442
  %v1445 = vunpack.c.l.s4 1966171168
  %v1446 = vunpack.c.0.s8 %v1445
  %v1447 = vlaneseq
  %v1448 = vshrl.u32 %v1447, 7
  %v1449 = vsub.s32 %v1446, %v1448
  %v1450 = vrot.slane %v1434, %v1449
  %v1452 = vunpack.c.l.s4 1966171168
  %v1453 = vunpack.c.0.s8 %v1452
  %v1454 = vlaneseq
  %v1455 = vshrl.u32 %v1454, 7
  %v1456 = vsub.s32 %v1453, %v1455
  %v1457 = vrot.slane %v1435, %v1456
  %v1459 = vunpack.c.l.s4 1966171168
  %v1460 = vunpack.c.0.s8 %v1459
  %v1461 = vlaneseq
  %v1462 = vshrl.u32 %v1461, 7
  %v1463 = vsub.s32 %v1460, %v1462
  %v1464 = vrot.slane %v1436, %v1463
  %v1465 = vcombine.low %v1443, %v1450
  %v1466 = vcombine.low %v1457, %v1464
  %v1468 = vunpack.c.l.s4 1966171168
  %v1469 = vunpack.c.0.s8 %v1468
  %v1470 = vlaneseq
  %v1471 = vshrl.u32 %v1470, 7
  %v1472 = vsub.s32 %v1469, %v1471
  %v1473 = vrot.slane %v1465, %v1472
  %v1475 = vunpack.c.l.s4 1966171168
  %v1476 = vunpack.c.0.s8 %v1475
  %v1477 = vlaneseq
  %v1478 = vshrl.u32 %v1477, 7
  %v1479 = vsub.s32 %v1476, %v1478
  %v1480 = vrot.slane %v1466, %v1479
  %v1481 = vcombine.low %v1473, %v1480
  %v1482 = vcombine.low %v1409, %v1410
  %v1483 = vcombine.low %v1411, %v1412
  %v1484 = vcombine.low %v1413, %v1414
  %v1485 = vcombine.low %v1415, %v1416
  %v1487 = vunpack.c.l.s4 1966171168
  %v1488 = vunpack.c.0.s8 %v1487
  %v1489 = vlaneseq
  %v1490 = vshrl.u32 %v1489, 7
  %v1491 = vsub.s32 %v1488, %v1490
  %v1492 = vrot.slane %v1482, %v1491
  %v1494 = vunpack.c.l.s4 1966171168
  %v1495 = vunpack.c.0.s8 %v1494
  %v1496 = vlaneseq
  %v1497 = vshrl.u32 %v1496, 7
  %v1498 = vsub.s32 %v1495, %v1497
  %v1499 = vrot.slane %v1483, %v1498
  %v1501 = vunpack.c.l.s4 1966171168
  %v1502 = vunpack.c.0.s8 %v1501
  %v1503 = vlaneseq
  %v1504 = vshrl.u32 %v1503, 7
  %v1505 = vsub.s32 %v1502, %v1504
  %v1506 = vrot.slane %v1484, %v1505
  %v1508 = vunpack.c.l.s4 1966171168
  %v1509 = vunpack.c.0.s8 %v1508
  %v1510 = vlaneseq
  %v1511 = vshrl.u32 %v1510, 7
  %v1512 = vsub.s32 %v1509, %v1511
  %v1513 = vrot.slane %v1485, %v1512
  %v1514 = vcombine.low %v1492, %v1499
  %v1515 = vcombine.low %v1506, %v1513
  %v1517 = vunpack.c.l.s4 1966171168
  %v1518 = vunpack.c.0.s8 %v1517
  %v1519 = vlaneseq
  %v1520 = vshrl.u32 %v1519, 7
  %v1521 = vsub.s32 %v1518, %v1520
  %v1522 = vrot.slane %v1514, %v1521
  %v1524 = vunpack.c.l.s4 1966171168
  %v1525 = vunpack.c.0.s8 %v1524
  %v1526 = vlaneseq
  %v1527 = vshrl.u32 %v1526, 7
  %v1528 = vsub.s32 %v1525, %v1527
  %v1529 = vrot.slane %v1515, %v1528
  %v1530 = vcombine.low %v1522, %v1529
  %s1533 = scalar_lea.vmem [#allocation2], 4
  %1534 = vst [vmem:[%s1533] ss:$8 sm:$0xf] %v1481
  %1535 = vst [vmem:[%s1533] ss:$8 sm:$0xf0] %v1481
  %s1536 = scalar_lea.vmem [#allocation2], 68
  %1537 = vst [vmem:[%s1536] ss:$8 sm:$0xf] %v1530
  %1538 = vst [vmem:[%s1536] ss:$8 sm:$0xf0] %v1530
  %1539 = vrot.lane.b32.xlu0 %v77, 18
  %v1540 = vpop.permute.xlu0 %1539
  %1541 = vrot.lane.b32.xlu0 %v81, 18
  %v1542 = vpop.permute.xlu0 %1541
  %1543 = vrot.lane.b32.xlu0 %v85, 18
  %v1544 = vpop.permute.xlu0 %1543
  %1545 = vrot.lane.b32.xlu0 %v89, 18
  %v1546 = vpop.permute.xlu0 %1545
  %1547 = vrot.lane.b32.xlu0 %v93, 18
  %v1548 = vpop.permute.xlu0 %1547
  %1549 = vrot.lane.b32.xlu0 %v97, 18
  %v1550 = vpop.permute.xlu0 %1549
  %1551 = vrot.lane.b32.xlu0 %v101, 18
  %v1552 = vpop.permute.xlu0 %1551
  %1553 = vrot.lane.b32.xlu0 %v105, 18
  %v1554 = vpop.permute.xlu0 %1553
  %1555 = vrot.lane.b32.xlu0 %v109, 18
  %v1556 = vpop.permute.xlu0 %1555
  %1557 = vrot.lane.b32.xlu0 %v113, 18
  %v1558 = vpop.permute.xlu0 %1557
  %1559 = vrot.lane.b32.xlu0 %v117, 18
  %v1560 = vpop.permute.xlu0 %1559
  %1561 = vrot.lane.b32.xlu0 %v121, 18
  %v1562 = vpop.permute.xlu0 %1561
  %1563 = vrot.lane.b32.xlu0 %v125, 18
  %v1564 = vpop.permute.xlu0 %1563
  %1565 = vrot.lane.b32.xlu0 %v129, 18
  %v1566 = vpop.permute.xlu0 %1565
  %1567 = vrot.lane.b32.xlu0 %v133, 18
  %v1568 = vpop.permute.xlu0 %1567
  %1569 = vrot.lane.b32.xlu0 %v137, 18
  %v1570 = vpop.permute.xlu0 %1569
  %vm1571 = vcmp.lt.s32.totalorder %v187, 18
  %v1572 = vsel %vm1571, %v1568, %v1570
  %v1573 = vsel %vm1571, %v1566, %v1568
  %v1574 = vsel %vm1571, %v1564, %v1566
  %v1575 = vsel %vm1571, %v1562, %v1564
  %v1576 = vsel %vm1571, %v1560, %v1562
  %v1577 = vsel %vm1571, %v1558, %v1560
  %v1578 = vsel %vm1571, %v1556, %v1558
  %v1579 = vsel %vm1571, %v1554, %v1556
  %v1580 = vsel %vm1571, %v1552, %v1554
  %v1581 = vsel %vm1571, %v1550, %v1552
  %v1582 = vsel %vm1571, %v1548, %v1550
  %v1583 = vsel %vm1571, %v1546, %v1548
  %v1584 = vsel %vm1571, %v1544, %v1546
  %v1585 = vsel %vm1571, %v1542, %v1544
  %v1586 = vsel %vm1571, %v1540, %v1542
  %v1587 = vsel %vm1571, %v1570, %v1540
  %s1588 = scalar_lea.vmem %s2, 5
  %v1589 = vld [vmem:[%s1588] ss:$8 sm:$0xf]
  %v1590 = vld [vmem:[%s1588] ss:$8 sm:$0xf0]
  %v1591 = vor.u32 %v1589, %v1590
  %s1592 = scalar_lea.vmem %s2, 69
  %v1593 = vld [vmem:[%s1592] ss:$8 sm:$0xf]
  %v1594 = vld [vmem:[%s1592] ss:$8 sm:$0xf0]
  %v1595 = vor.u32 %v1593, %v1594
  %v1598 = vlaneseq
  %v1599 = vshrl.u32 %v1598, 7
  %v1600 = vsub.s32 0, %v1599
  %v1601 = vrot.slane %v1591, %v1600
  %v1602 = vlaneseq
  %v1603 = vshrl.u32 %v1602, 7
  %v1604 = vsub.s32 1, %v1603
  %v1605 = vrot.slane %v1591, %v1604
  %v1606 = vlaneseq
  %v1607 = vshrl.u32 %v1606, 7
  %v1608 = vsub.s32 2, %v1607
  %v1609 = vrot.slane %v1591, %v1608
  %v1610 = vlaneseq
  %v1611 = vshrl.u32 %v1610, 7
  %v1612 = vsub.s32 3, %v1611
  %v1613 = vrot.slane %v1591, %v1612
  %v1614 = vlaneseq
  %v1615 = vshrl.u32 %v1614, 7
  %v1616 = vsub.s32 4, %v1615
  %v1617 = vrot.slane %v1591, %v1616
  %v1618 = vlaneseq
  %v1619 = vshrl.u32 %v1618, 7
  %v1620 = vsub.s32 5, %v1619
  %v1621 = vrot.slane %v1591, %v1620
  %v1622 = vlaneseq
  %v1623 = vshrl.u32 %v1622, 7
  %v1624 = vsub.s32 6, %v1623
  %v1625 = vrot.slane %v1591, %v1624
  %v1626 = vlaneseq
  %v1627 = vshrl.u32 %v1626, 7
  %v1628 = vsub.s32 7, %v1627
  %v1629 = vrot.slane %v1591, %v1628
  %v1630 = vlaneseq
  %v1631 = vshrl.u32 %v1630, 7
  %v1632 = vsub.s32 0, %v1631
  %v1633 = vrot.slane %v1595, %v1632
  %v1634 = vlaneseq
  %v1635 = vshrl.u32 %v1634, 7
  %v1636 = vsub.s32 1, %v1635
  %v1637 = vrot.slane %v1595, %v1636
  %v1638 = vlaneseq
  %v1639 = vshrl.u32 %v1638, 7
  %v1640 = vsub.s32 2, %v1639
  %v1641 = vrot.slane %v1595, %v1640
  %v1642 = vlaneseq
  %v1643 = vshrl.u32 %v1642, 7
  %v1644 = vsub.s32 3, %v1643
  %v1645 = vrot.slane %v1595, %v1644
  %v1646 = vlaneseq
  %v1647 = vshrl.u32 %v1646, 7
  %v1648 = vsub.s32 4, %v1647
  %v1649 = vrot.slane %v1595, %v1648
  %v1650 = vlaneseq
  %v1651 = vshrl.u32 %v1650, 7
  %v1652 = vsub.s32 5, %v1651
  %v1653 = vrot.slane %v1595, %v1652
  %v1654 = vlaneseq
  %v1655 = vshrl.u32 %v1654, 7
  %v1656 = vsub.s32 6, %v1655
  %v1657 = vrot.slane %v1595, %v1656
  %v1658 = vlaneseq
  %v1659 = vshrl.u32 %v1658, 7
  %v1660 = vsub.s32 7, %v1659
  %v1661 = vrot.slane %v1595, %v1660
  %v1678 = vmul.f32 %v1587, %v1601
  %v1679 = vmul.f32 %v1586, %v1605
  %v1680 = vmul.f32 %v1585, %v1609
  %v1681 = vmul.f32 %v1584, %v1613
  %v1682 = vmul.f32 %v1583, %v1617
  %v1683 = vmul.f32 %v1582, %v1621
  %v1684 = vmul.f32 %v1581, %v1625
  %v1685 = vmul.f32 %v1580, %v1629
  %v1686 = vmul.f32 %v1579, %v1633
  %v1687 = vmul.f32 %v1578, %v1637
  %v1688 = vmul.f32 %v1577, %v1641
  %v1689 = vmul.f32 %v1576, %v1645
  %v1690 = vmul.f32 %v1575, %v1649
  %v1691 = vmul.f32 %v1574, %v1653
  %v1692 = vmul.f32 %v1573, %v1657
  %v1693 = vmul.f32 %v1572, %v1661
  %v1710 = vcombine.low %v1678, %v1679
  %v1711 = vcombine.low %v1680, %v1681
  %v1712 = vcombine.low %v1682, %v1683
  %v1713 = vcombine.low %v1684, %v1685
  %v1715 = vunpack.c.l.s4 1966171168
  %v1716 = vunpack.c.0.s8 %v1715
  %v1717 = vlaneseq
  %v1718 = vshrl.u32 %v1717, 7
  %v1719 = vsub.s32 %v1716, %v1718
  %v1720 = vrot.slane %v1710, %v1719
  %v1722 = vunpack.c.l.s4 1966171168
  %v1723 = vunpack.c.0.s8 %v1722
  %v1724 = vlaneseq
  %v1725 = vshrl.u32 %v1724, 7
  %v1726 = vsub.s32 %v1723, %v1725
  %v1727 = vrot.slane %v1711, %v1726
  %v1729 = vunpack.c.l.s4 1966171168
  %v1730 = vunpack.c.0.s8 %v1729
  %v1731 = vlaneseq
  %v1732 = vshrl.u32 %v1731, 7
  %v1733 = vsub.s32 %v1730, %v1732
  %v1734 = vrot.slane %v1712, %v1733
  %v1736 = vunpack.c.l.s4 1966171168
  %v1737 = vunpack.c.0.s8 %v1736
  %v1738 = vlaneseq
  %v1739 = vshrl.u32 %v1738, 7
  %v1740 = vsub.s32 %v1737, %v1739
  %v1741 = vrot.slane %v1713, %v1740
  %v1742 = vcombine.low %v1720, %v1727
  %v1743 = vcombine.low %v1734, %v1741
  %v1745 = vunpack.c.l.s4 1966171168
  %v1746 = vunpack.c.0.s8 %v1745
  %v1747 = vlaneseq
  %v1748 = vshrl.u32 %v1747, 7
  %v1749 = vsub.s32 %v1746, %v1748
  %v1750 = vrot.slane %v1742, %v1749
  %v1752 = vunpack.c.l.s4 1966171168
  %v1753 = vunpack.c.0.s8 %v1752
  %v1754 = vlaneseq
  %v1755 = vshrl.u32 %v1754, 7
  %v1756 = vsub.s32 %v1753, %v1755
  %v1757 = vrot.slane %v1743, %v1756
  %v1758 = vcombine.low %v1750, %v1757
  %v1759 = vcombine.low %v1686, %v1687
  %v1760 = vcombine.low %v1688, %v1689
  %v1761 = vcombine.low %v1690, %v1691
  %v1762 = vcombine.low %v1692, %v1693
  %v1764 = vunpack.c.l.s4 1966171168
  %v1765 = vunpack.c.0.s8 %v1764
  %v1766 = vlaneseq
  %v1767 = vshrl.u32 %v1766, 7
  %v1768 = vsub.s32 %v1765, %v1767
  %v1769 = vrot.slane %v1759, %v1768
  %v1771 = vunpack.c.l.s4 1966171168
  %v1772 = vunpack.c.0.s8 %v1771
  %v1773 = vlaneseq
  %v1774 = vshrl.u32 %v1773, 7
  %v1775 = vsub.s32 %v1772, %v1774
  %v1776 = vrot.slane %v1760, %v1775
  %v1778 = vunpack.c.l.s4 1966171168
  %v1779 = vunpack.c.0.s8 %v1778
  %v1780 = vlaneseq
  %v1781 = vshrl.u32 %v1780, 7
  %v1782 = vsub.s32 %v1779, %v1781
  %v1783 = vrot.slane %v1761, %v1782
  %v1785 = vunpack.c.l.s4 1966171168
  %v1786 = vunpack.c.0.s8 %v1785
  %v1787 = vlaneseq
  %v1788 = vshrl.u32 %v1787, 7
  %v1789 = vsub.s32 %v1786, %v1788
  %v1790 = vrot.slane %v1762, %v1789
  %v1791 = vcombine.low %v1769, %v1776
  %v1792 = vcombine.low %v1783, %v1790
  %v1794 = vunpack.c.l.s4 1966171168
  %v1795 = vunpack.c.0.s8 %v1794
  %v1796 = vlaneseq
  %v1797 = vshrl.u32 %v1796, 7
  %v1798 = vsub.s32 %v1795, %v1797
  %v1799 = vrot.slane %v1791, %v1798
  %v1801 = vunpack.c.l.s4 1966171168
  %v1802 = vunpack.c.0.s8 %v1801
  %v1803 = vlaneseq
  %v1804 = vshrl.u32 %v1803, 7
  %v1805 = vsub.s32 %v1802, %v1804
  %v1806 = vrot.slane %v1792, %v1805
  %v1807 = vcombine.low %v1799, %v1806
  %s1810 = scalar_lea.vmem [#allocation2], 5
  %1811 = vst [vmem:[%s1810] ss:$8 sm:$0xf] %v1758
  %1812 = vst [vmem:[%s1810] ss:$8 sm:$0xf0] %v1758
  %s1813 = scalar_lea.vmem [#allocation2], 69
  %1814 = vst [vmem:[%s1813] ss:$8 sm:$0xf] %v1807
  %1815 = vst [vmem:[%s1813] ss:$8 sm:$0xf0] %v1807
  %1816 = vrot.lane.b32.xlu0 %v77, 17
  %v1817 = vpop.permute.xlu0 %1816
  %1818 = vrot.lane.b32.xlu0 %v81, 17
  %v1819 = vpop.permute.xlu0 %1818
  %1820 = vrot.lane.b32.xlu0 %v85, 17
  %v1821 = vpop.permute.xlu0 %1820
  %1822 = vrot.lane.b32.xlu0 %v89, 17
  %v1823 = vpop.permute.xlu0 %1822
  %1824 = vrot.lane.b32.xlu0 %v93, 17
  %v1825 = vpop.permute.xlu0 %1824
  %1826 = vrot.lane.b32.xlu0 %v97, 17
  %v1827 = vpop.permute.xlu0 %1826
  %1828 = vrot.lane.b32.xlu0 %v101, 17
  %v1829 = vpop.permute.xlu0 %1828
  %1830 = vrot.lane.b32.xlu0 %v105, 17
  %v1831 = vpop.permute.xlu0 %1830
  %1832 = vrot.lane.b32.xlu0 %v109, 17
  %v1833 = vpop.permute.xlu0 %1832
  %1834 = vrot.lane.b32.xlu0 %v113, 17
  %v1835 = vpop.permute.xlu0 %1834
  %1836 = vrot.lane.b32.xlu0 %v117, 17
  %v1837 = vpop.permute.xlu0 %1836
  %1838 = vrot.lane.b32.xlu0 %v121, 17
  %v1839 = vpop.permute.xlu0 %1838
  %1840 = vrot.lane.b32.xlu0 %v125, 17
  %v1841 = vpop.permute.xlu0 %1840
  %1842 = vrot.lane.b32.xlu0 %v129, 17
  %v1843 = vpop.permute.xlu0 %1842
  %1844 = vrot.lane.b32.xlu0 %v133, 17
  %v1845 = vpop.permute.xlu0 %1844
  %1846 = vrot.lane.b32.xlu0 %v137, 17
  %v1847 = vpop.permute.xlu0 %1846
  %vm1848 = vcmp.lt.s32.totalorder %v187, 17
  %v1849 = vsel %vm1848, %v1845, %v1847
  %v1850 = vsel %vm1848, %v1843, %v1845
  %v1851 = vsel %vm1848, %v1841, %v1843
  %v1852 = vsel %vm1848, %v1839, %v1841
  %v1853 = vsel %vm1848, %v1837, %v1839
  %v1854 = vsel %vm1848, %v1835, %v1837
  %v1855 = vsel %vm1848, %v1833, %v1835
  %v1856 = vsel %vm1848, %v1831, %v1833
  %v1857 = vsel %vm1848, %v1829, %v1831
  %v1858 = vsel %vm1848, %v1827, %v1829
  %v1859 = vsel %vm1848, %v1825, %v1827
  %v1860 = vsel %vm1848, %v1823, %v1825
  %v1861 = vsel %vm1848, %v1821, %v1823
  %v1862 = vsel %vm1848, %v1819, %v1821
  %v1863 = vsel %vm1848, %v1817, %v1819
  %v1864 = vsel %vm1848, %v1847, %v1817
  %s1865 = scalar_lea.vmem %s2, 6
  %v1866 = vld [vmem:[%s1865] ss:$8 sm:$0xf]
  %v1867 = vld [vmem:[%s1865] ss:$8 sm:$0xf0]
  %v1868 = vor.u32 %v1866, %v1867
  %s1869 = scalar_lea.vmem %s2, 70
  %v1870 = vld [vmem:[%s1869] ss:$8 sm:$0xf]
  %v1871 = vld [vmem:[%s1869] ss:$8 sm:$0xf0]
  %v1872 = vor.u32 %v1870, %v1871
  %v1875 = vlaneseq
  %v1876 = vshrl.u32 %v1875, 7
  %v1877 = vsub.s32 0, %v1876
  %v1878 = vrot.slane %v1868, %v1877
  %v1879 = vlaneseq
  %v1880 = vshrl.u32 %v1879, 7
  %v1881 = vsub.s32 1, %v1880
  %v1882 = vrot.slane %v1868, %v1881
  %v1883 = vlaneseq
  %v1884 = vshrl.u32 %v1883, 7
  %v1885 = vsub.s32 2, %v1884
  %v1886 = vrot.slane %v1868, %v1885
  %v1887 = vlaneseq
  %v1888 = vshrl.u32 %v1887, 7
  %v1889 = vsub.s32 3, %v1888
  %v1890 = vrot.slane %v1868, %v1889
  %v1891 = vlaneseq
  %v1892 = vshrl.u32 %v1891, 7
  %v1893 = vsub.s32 4, %v1892
  %v1894 = vrot.slane %v1868, %v1893
  %v1895 = vlaneseq
  %v1896 = vshrl.u32 %v1895, 7
  %v1897 = vsub.s32 5, %v1896
  %v1898 = vrot.slane %v1868, %v1897
  %v1899 = vlaneseq
  %v1900 = vshrl.u32 %v1899, 7
  %v1901 = vsub.s32 6, %v1900
  %v1902 = vrot.slane %v1868, %v1901
  %v1903 = vlaneseq
  %v1904 = vshrl.u32 %v1903, 7
  %v1905 = vsub.s32 7, %v1904
  %v1906 = vrot.slane %v1868, %v1905
  %v1907 = vlaneseq
  %v1908 = vshrl.u32 %v1907, 7
  %v1909 = vsub.s32 0, %v1908
  %v1910 = vrot.slane %v1872, %v1909
  %v1911 = vlaneseq
  %v1912 = vshrl.u32 %v1911, 7
  %v1913 = vsub.s32 1, %v1912
  %v1914 = vrot.slane %v1872, %v1913
  %v1915 = vlaneseq
  %v1916 = vshrl.u32 %v1915, 7
  %v1917 = vsub.s32 2, %v1916
  %v1918 = vrot.slane %v1872, %v1917
  %v1919 = vlaneseq
  %v1920 = vshrl.u32 %v1919, 7
  %v1921 = vsub.s32 3, %v1920
  %v1922 = vrot.slane %v1872, %v1921
  %v1923 = vlaneseq
  %v1924 = vshrl.u32 %v1923, 7
  %v1925 = vsub.s32 4, %v1924
  %v1926 = vrot.slane %v1872, %v1925
  %v1927 = vlaneseq
  %v1928 = vshrl.u32 %v1927, 7
  %v1929 = vsub.s32 5, %v1928
  %v1930 = vrot.slane %v1872, %v1929
  %v1931 = vlaneseq
  %v1932 = vshrl.u32 %v1931, 7
  %v1933 = vsub.s32 6, %v1932
  %v1934 = vrot.slane %v1872, %v1933
  %v1935 = vlaneseq
  %v1936 = vshrl.u32 %v1935, 7
  %v1937 = vsub.s32 7, %v1936
  %v1938 = vrot.slane %v1872, %v1937
  %v1955 = vmul.f32 %v1864, %v1878
  %v1956 = vmul.f32 %v1863, %v1882
  %v1957 = vmul.f32 %v1862, %v1886
  %v1958 = vmul.f32 %v1861, %v1890
  %v1959 = vmul.f32 %v1860, %v1894
  %v1960 = vmul.f32 %v1859, %v1898
  %v1961 = vmul.f32 %v1858, %v1902
  %v1962 = vmul.f32 %v1857, %v1906
  %v1963 = vmul.f32 %v1856, %v1910
  %v1964 = vmul.f32 %v1855, %v1914
  %v1965 = vmul.f32 %v1854, %v1918
  %v1966 = vmul.f32 %v1853, %v1922
  %v1967 = vmul.f32 %v1852, %v1926
  %v1968 = vmul.f32 %v1851, %v1930
  %v1969 = vmul.f32 %v1850, %v1934
  %v1970 = vmul.f32 %v1849, %v1938
  %v1987 = vcombine.low %v1955, %v1956
  %v1988 = vcombine.low %v1957, %v1958
  %v1989 = vcombine.low %v1959, %v1960
  %v1990 = vcombine.low %v1961, %v1962
  %v1992 = vunpack.c.l.s4 1966171168
  %v1993 = vunpack.c.0.s8 %v1992
  %v1994 = vlaneseq
  %v1995 = vshrl.u32 %v1994, 7
  %v1996 = vsub.s32 %v1993, %v1995
  %v1997 = vrot.slane %v1987, %v1996
  %v1999 = vunpack.c.l.s4 1966171168
  %v2000 = vunpack.c.0.s8 %v1999
  %v2001 = vlaneseq
  %v2002 = vshrl.u32 %v2001, 7
  %v2003 = vsub.s32 %v2000, %v2002
  %v2004 = vrot.slane %v1988, %v2003
  %v2006 = vunpack.c.l.s4 1966171168
  %v2007 = vunpack.c.0.s8 %v2006
  %v2008 = vlaneseq
  %v2009 = vshrl.u32 %v2008, 7
  %v2010 = vsub.s32 %v2007, %v2009
  %v2011 = vrot.slane %v1989, %v2010
  %v2013 = vunpack.c.l.s4 1966171168
  %v2014 = vunpack.c.0.s8 %v2013
  %v2015 = vlaneseq
  %v2016 = vshrl.u32 %v2015, 7
  %v2017 = vsub.s32 %v2014, %v2016
  %v2018 = vrot.slane %v1990, %v2017
  %v2019 = vcombine.low %v1997, %v2004
  %v2020 = vcombine.low %v2011, %v2018
  %v2022 = vunpack.c.l.s4 1966171168
  %v2023 = vunpack.c.0.s8 %v2022
  %v2024 = vlaneseq
  %v2025 = vshrl.u32 %v2024, 7
  %v2026 = vsub.s32 %v2023, %v2025
  %v2027 = vrot.slane %v2019, %v2026
  %v2029 = vunpack.c.l.s4 1966171168
  %v2030 = vunpack.c.0.s8 %v2029
  %v2031 = vlaneseq
  %v2032 = vshrl.u32 %v2031, 7
  %v2033 = vsub.s32 %v2030, %v2032
  %v2034 = vrot.slane %v2020, %v2033
  %v2035 = vcombine.low %v2027, %v2034
  %v2036 = vcombine.low %v1963, %v1964
  %v2037 = vcombine.low %v1965, %v1966
  %v2038 = vcombine.low %v1967, %v1968
  %v2039 = vcombine.low %v1969, %v1970
  %v2041 = vunpack.c.l.s4 1966171168
  %v2042 = vunpack.c.0.s8 %v2041
  %v2043 = vlaneseq
  %v2044 = vshrl.u32 %v2043, 7
  %v2045 = vsub.s32 %v2042, %v2044
  %v2046 = vrot.slane %v2036, %v2045
  %v2048 = vunpack.c.l.s4 1966171168
  %v2049 = vunpack.c.0.s8 %v2048
  %v2050 = vlaneseq
  %v2051 = vshrl.u32 %v2050, 7
  %v2052 = vsub.s32 %v2049, %v2051
  %v2053 = vrot.slane %v2037, %v2052
  %v2055 = vunpack.c.l.s4 1966171168
  %v2056 = vunpack.c.0.s8 %v2055
  %v2057 = vlaneseq
  %v2058 = vshrl.u32 %v2057, 7
  %v2059 = vsub.s32 %v2056, %v2058
  %v2060 = vrot.slane %v2038, %v2059
  %v2062 = vunpack.c.l.s4 1966171168
  %v2063 = vunpack.c.0.s8 %v2062
  %v2064 = vlaneseq
  %v2065 = vshrl.u32 %v2064, 7
  %v2066 = vsub.s32 %v2063, %v2065
  %v2067 = vrot.slane %v2039, %v2066
  %v2068 = vcombine.low %v2046, %v2053
  %v2069 = vcombine.low %v2060, %v2067
  %v2071 = vunpack.c.l.s4 1966171168
  %v2072 = vunpack.c.0.s8 %v2071
  %v2073 = vlaneseq
  %v2074 = vshrl.u32 %v2073, 7
  %v2075 = vsub.s32 %v2072, %v2074
  %v2076 = vrot.slane %v2068, %v2075
  %v2078 = vunpack.c.l.s4 1966171168
  %v2079 = vunpack.c.0.s8 %v2078
  %v2080 = vlaneseq
  %v2081 = vshrl.u32 %v2080, 7
  %v2082 = vsub.s32 %v2079, %v2081
  %v2083 = vrot.slane %v2069, %v2082
  %v2084 = vcombine.low %v2076, %v2083
  %s2087 = scalar_lea.vmem [#allocation2], 6
  %2088 = vst [vmem:[%s2087] ss:$8 sm:$0xf] %v2035
  %2089 = vst [vmem:[%s2087] ss:$8 sm:$0xf0] %v2035
  %s2090 = scalar_lea.vmem [#allocation2], 70
  %2091 = vst [vmem:[%s2090] ss:$8 sm:$0xf] %v2084
  %2092 = vst [vmem:[%s2090] ss:$8 sm:$0xf0] %v2084
  %2093 = vrot.lane.b32.xlu0 %v77, 16
  %v2094 = vpop.permute.xlu0 %2093
  %2095 = vrot.lane.b32.xlu0 %v81, 16
  %v2096 = vpop.permute.xlu0 %2095
  %2097 = vrot.lane.b32.xlu0 %v85, 16
  %v2098 = vpop.permute.xlu0 %2097
  %2099 = vrot.lane.b32.xlu0 %v89, 16
  %v2100 = vpop.permute.xlu0 %2099
  %2101 = vrot.lane.b32.xlu0 %v93, 16
  %v2102 = vpop.permute.xlu0 %2101
  %2103 = vrot.lane.b32.xlu0 %v97, 16
  %v2104 = vpop.permute.xlu0 %2103
  %2105 = vrot.lane.b32.xlu0 %v101, 16
  %v2106 = vpop.permute.xlu0 %2105
  %2107 = vrot.lane.b32.xlu0 %v105, 16
  %v2108 = vpop.permute.xlu0 %2107
  %2109 = vrot.lane.b32.xlu0 %v109, 16
  %v2110 = vpop.permute.xlu0 %2109
  %2111 = vrot.lane.b32.xlu0 %v113, 16
  %v2112 = vpop.permute.xlu0 %2111
  %2113 = vrot.lane.b32.xlu0 %v117, 16
  %v2114 = vpop.permute.xlu0 %2113
  %2115 = vrot.lane.b32.xlu0 %v121, 16
  %v2116 = vpop.permute.xlu0 %2115
  %2117 = vrot.lane.b32.xlu0 %v125, 16
  %v2118 = vpop.permute.xlu0 %2117
  %2119 = vrot.lane.b32.xlu0 %v129, 16
  %v2120 = vpop.permute.xlu0 %2119
  %2121 = vrot.lane.b32.xlu0 %v133, 16
  %v2122 = vpop.permute.xlu0 %2121
  %2123 = vrot.lane.b32.xlu0 %v137, 16
  %v2124 = vpop.permute.xlu0 %2123
  %vm2125 = vcmp.lt.s32.totalorder %v187, 16
  %v2126 = vsel %vm2125, %v2122, %v2124
  %v2127 = vsel %vm2125, %v2120, %v2122
  %v2128 = vsel %vm2125, %v2118, %v2120
  %v2129 = vsel %vm2125, %v2116, %v2118
  %v2130 = vsel %vm2125, %v2114, %v2116
  %v2131 = vsel %vm2125, %v2112, %v2114
  %v2132 = vsel %vm2125, %v2110, %v2112
  %v2133 = vsel %vm2125, %v2108, %v2110
  %v2134 = vsel %vm2125, %v2106, %v2108
  %v2135 = vsel %vm2125, %v2104, %v2106
  %v2136 = vsel %vm2125, %v2102, %v2104
  %v2137 = vsel %vm2125, %v2100, %v2102
  %v2138 = vsel %vm2125, %v2098, %v2100
  %v2139 = vsel %vm2125, %v2096, %v2098
  %v2140 = vsel %vm2125, %v2094, %v2096
  %v2141 = vsel %vm2125, %v2124, %v2094
  %s2142 = scalar_lea.vmem %s2, 7
  %v2143 = vld [vmem:[%s2142] ss:$8 sm:$0xf]
  %v2144 = vld [vmem:[%s2142] ss:$8 sm:$0xf0]
  %v2145 = vor.u32 %v2143, %v2144
  %s2146 = scalar_lea.vmem %s2, 71
  %v2147 = vld [vmem:[%s2146] ss:$8 sm:$0xf]
  %v2148 = vld [vmem:[%s2146] ss:$8 sm:$0xf0]
  %v2149 = vor.u32 %v2147, %v2148
  %v2152 = vlaneseq
  %v2153 = vshrl.u32 %v2152, 7
  %v2154 = vsub.s32 0, %v2153
  %v2155 = vrot.slane %v2145, %v2154
  %v2156 = vlaneseq
  %v2157 = vshrl.u32 %v2156, 7
  %v2158 = vsub.s32 1, %v2157
  %v2159 = vrot.slane %v2145, %v2158
  %v2160 = vlaneseq
  %v2161 = vshrl.u32 %v2160, 7
  %v2162 = vsub.s32 2, %v2161
  %v2163 = vrot.slane %v2145, %v2162
  %v2164 = vlaneseq
  %v2165 = vshrl.u32 %v2164, 7
  %v2166 = vsub.s32 3, %v2165
  %v2167 = vrot.slane %v2145, %v2166
  %v2168 = vlaneseq
  %v2169 = vshrl.u32 %v2168, 7
  %v2170 = vsub.s32 4, %v2169
  %v2171 = vrot.slane %v2145, %v2170
  %v2172 = vlaneseq
  %v2173 = vshrl.u32 %v2172, 7
  %v2174 = vsub.s32 5, %v2173
  %v2175 = vrot.slane %v2145, %v2174
  %v2176 = vlaneseq
  %v2177 = vshrl.u32 %v2176, 7
  %v2178 = vsub.s32 6, %v2177
  %v2179 = vrot.slane %v2145, %v2178
  %v2180 = vlaneseq
  %v2181 = vshrl.u32 %v2180, 7
  %v2182 = vsub.s32 7, %v2181
  %v2183 = vrot.slane %v2145, %v2182
  %v2184 = vlaneseq
  %v2185 = vshrl.u32 %v2184, 7
  %v2186 = vsub.s32 0, %v2185
  %v2187 = vrot.slane %v2149, %v2186
  %v2188 = vlaneseq
  %v2189 = vshrl.u32 %v2188, 7
  %v2190 = vsub.s32 1, %v2189
  %v2191 = vrot.slane %v2149, %v2190
  %v2192 = vlaneseq
  %v2193 = vshrl.u32 %v2192, 7
  %v2194 = vsub.s32 2, %v2193
  %v2195 = vrot.slane %v2149, %v2194
  %v2196 = vlaneseq
  %v2197 = vshrl.u32 %v2196, 7
  %v2198 = vsub.s32 3, %v2197
  %v2199 = vrot.slane %v2149, %v2198
  %v2200 = vlaneseq
  %v2201 = vshrl.u32 %v2200, 7
  %v2202 = vsub.s32 4, %v2201
  %v2203 = vrot.slane %v2149, %v2202
  %v2204 = vlaneseq
  %v2205 = vshrl.u32 %v2204, 7
  %v2206 = vsub.s32 5, %v2205
  %v2207 = vrot.slane %v2149, %v2206
  %v2208 = vlaneseq
  %v2209 = vshrl.u32 %v2208, 7
  %v2210 = vsub.s32 6, %v2209
  %v2211 = vrot.slane %v2149, %v2210
  %v2212 = vlaneseq
  %v2213 = vshrl.u32 %v2212, 7
  %v2214 = vsub.s32 7, %v2213
  %v2215 = vrot.slane %v2149, %v2214
  %v2232 = vmul.f32 %v2141, %v2155
  %v2233 = vmul.f32 %v2140, %v2159
  %v2234 = vmul.f32 %v2139, %v2163
  %v2235 = vmul.f32 %v2138, %v2167
  %v2236 = vmul.f32 %v2137, %v2171
  %v2237 = vmul.f32 %v2136, %v2175
  %v2238 = vmul.f32 %v2135, %v2179
  %v2239 = vmul.f32 %v2134, %v2183
  %v2240 = vmul.f32 %v2133, %v2187
  %v2241 = vmul.f32 %v2132, %v2191
  %v2242 = vmul.f32 %v2131, %v2195
  %v2243 = vmul.f32 %v2130, %v2199
  %v2244 = vmul.f32 %v2129, %v2203
  %v2245 = vmul.f32 %v2128, %v2207
  %v2246 = vmul.f32 %v2127, %v2211
  %v2247 = vmul.f32 %v2126, %v2215
  %v2264 = vcombine.low %v2232, %v2233
  %v2265 = vcombine.low %v2234, %v2235
  %v2266 = vcombine.low %v2236, %v2237
  %v2267 = vcombine.low %v2238, %v2239
  %v2269 = vunpack.c.l.s4 1966171168
  %v2270 = vunpack.c.0.s8 %v2269
  %v2271 = vlaneseq
  %v2272 = vshrl.u32 %v2271, 7
  %v2273 = vsub.s32 %v2270, %v2272
  %v2274 = vrot.slane %v2264, %v2273
  %v2276 = vunpack.c.l.s4 1966171168
  %v2277 = vunpack.c.0.s8 %v2276
  %v2278 = vlaneseq
  %v2279 = vshrl.u32 %v2278, 7
  %v2280 = vsub.s32 %v2277, %v2279
  %v2281 = vrot.slane %v2265, %v2280
  %v2283 = vunpack.c.l.s4 1966171168
  %v2284 = vunpack.c.0.s8 %v2283
  %v2285 = vlaneseq
  %v2286 = vshrl.u32 %v2285, 7
  %v2287 = vsub.s32 %v2284, %v2286
  %v2288 = vrot.slane %v2266, %v2287
  %v2290 = vunpack.c.l.s4 1966171168
  %v2291 = vunpack.c.0.s8 %v2290
  %v2292 = vlaneseq
  %v2293 = vshrl.u32 %v2292, 7
  %v2294 = vsub.s32 %v2291, %v2293
  %v2295 = vrot.slane %v2267, %v2294
  %v2296 = vcombine.low %v2274, %v2281
  %v2297 = vcombine.low %v2288, %v2295
  %v2299 = vunpack.c.l.s4 1966171168
  %v2300 = vunpack.c.0.s8 %v2299
  %v2301 = vlaneseq
  %v2302 = vshrl.u32 %v2301, 7
  %v2303 = vsub.s32 %v2300, %v2302
  %v2304 = vrot.slane %v2296, %v2303
  %v2306 = vunpack.c.l.s4 1966171168
  %v2307 = vunpack.c.0.s8 %v2306
  %v2308 = vlaneseq
  %v2309 = vshrl.u32 %v2308, 7
  %v2310 = vsub.s32 %v2307, %v2309
  %v2311 = vrot.slane %v2297, %v2310
  %v2312 = vcombine.low %v2304, %v2311
  %v2313 = vcombine.low %v2240, %v2241
  %v2314 = vcombine.low %v2242, %v2243
  %v2315 = vcombine.low %v2244, %v2245
  %v2316 = vcombine.low %v2246, %v2247
  %v2318 = vunpack.c.l.s4 1966171168
  %v2319 = vunpack.c.0.s8 %v2318
  %v2320 = vlaneseq
  %v2321 = vshrl.u32 %v2320, 7
  %v2322 = vsub.s32 %v2319, %v2321
  %v2323 = vrot.slane %v2313, %v2322
  %v2325 = vunpack.c.l.s4 1966171168
  %v2326 = vunpack.c.0.s8 %v2325
  %v2327 = vlaneseq
  %v2328 = vshrl.u32 %v2327, 7
  %v2329 = vsub.s32 %v2326, %v2328
  %v2330 = vrot.slane %v2314, %v2329
  %v2332 = vunpack.c.l.s4 1966171168
  %v2333 = vunpack.c.0.s8 %v2332
  %v2334 = vlaneseq
  %v2335 = vshrl.u32 %v2334, 7
  %v2336 = vsub.s32 %v2333, %v2335
  %v2337 = vrot.slane %v2315, %v2336
  %v2339 = vunpack.c.l.s4 1966171168
  %v2340 = vunpack.c.0.s8 %v2339
  %v2341 = vlaneseq
  %v2342 = vshrl.u32 %v2341, 7
  %v2343 = vsub.s32 %v2340, %v2342
  %v2344 = vrot.slane %v2316, %v2343
  %v2345 = vcombine.low %v2323, %v2330
  %v2346 = vcombine.low %v2337, %v2344
  %v2348 = vunpack.c.l.s4 1966171168
  %v2349 = vunpack.c.0.s8 %v2348
  %v2350 = vlaneseq
  %v2351 = vshrl.u32 %v2350, 7
  %v2352 = vsub.s32 %v2349, %v2351
  %v2353 = vrot.slane %v2345, %v2352
  %v2355 = vunpack.c.l.s4 1966171168
  %v2356 = vunpack.c.0.s8 %v2355
  %v2357 = vlaneseq
  %v2358 = vshrl.u32 %v2357, 7
  %v2359 = vsub.s32 %v2356, %v2358
  %v2360 = vrot.slane %v2346, %v2359
  %v2361 = vcombine.low %v2353, %v2360
  %s2364 = scalar_lea.vmem [#allocation2], 7
  %2365 = vst [vmem:[%s2364] ss:$8 sm:$0xf] %v2312
  %2366 = vst [vmem:[%s2364] ss:$8 sm:$0xf0] %v2312
  %s2367 = scalar_lea.vmem [#allocation2], 71
  %2368 = vst [vmem:[%s2367] ss:$8 sm:$0xf] %v2361
  %2369 = vst [vmem:[%s2367] ss:$8 sm:$0xf0] %v2361
  %2370 = vrot.lane.b32.xlu0 %v77, 15
  %v2371 = vpop.permute.xlu0 %2370
  %2372 = vrot.lane.b32.xlu0 %v81, 15
  %v2373 = vpop.permute.xlu0 %2372
  %2374 = vrot.lane.b32.xlu0 %v85, 15
  %v2375 = vpop.permute.xlu0 %2374
  %2376 = vrot.lane.b32.xlu0 %v89, 15
  %v2377 = vpop.permute.xlu0 %2376
  %2378 = vrot.lane.b32.xlu0 %v93, 15
  %v2379 = vpop.permute.xlu0 %2378
  %2380 = vrot.lane.b32.xlu0 %v97, 15
  %v2381 = vpop.permute.xlu0 %2380
  %2382 = vrot.lane.b32.xlu0 %v101, 15
  %v2383 = vpop.permute.xlu0 %2382
  %2384 = vrot.lane.b32.xlu0 %v105, 15
  %v2385 = vpop.permute.xlu0 %2384
  %2386 = vrot.lane.b32.xlu0 %v109, 15
  %v2387 = vpop.permute.xlu0 %2386
  %2388 = vrot.lane.b32.xlu0 %v113, 15
  %v2389 = vpop.permute.xlu0 %2388
  %2390 = vrot.lane.b32.xlu0 %v117, 15
  %v2391 = vpop.permute.xlu0 %2390
  %2392 = vrot.lane.b32.xlu0 %v121, 15
  %v2393 = vpop.permute.xlu0 %2392
  %2394 = vrot.lane.b32.xlu0 %v125, 15
  %v2395 = vpop.permute.xlu0 %2394
  %2396 = vrot.lane.b32.xlu0 %v129, 15
  %v2397 = vpop.permute.xlu0 %2396
  %2398 = vrot.lane.b32.xlu0 %v133, 15
  %v2399 = vpop.permute.xlu0 %2398
  %2400 = vrot.lane.b32.xlu0 %v137, 15
  %v2401 = vpop.permute.xlu0 %2400
  %vm2402 = vcmp.lt.s32.totalorder %v187, 15
  %v2403 = vsel %vm2402, %v2399, %v2401
  %v2404 = vsel %vm2402, %v2397, %v2399
  %v2405 = vsel %vm2402, %v2395, %v2397
  %v2406 = vsel %vm2402, %v2393, %v2395
  %v2407 = vsel %vm2402, %v2391, %v2393
  %v2408 = vsel %vm2402, %v2389, %v2391
  %v2409 = vsel %vm2402, %v2387, %v2389
  %v2410 = vsel %vm2402, %v2385, %v2387
  %v2411 = vsel %vm2402, %v2383, %v2385
  %v2412 = vsel %vm2402, %v2381, %v2383
  %v2413 = vsel %vm2402, %v2379, %v2381
  %v2414 = vsel %vm2402, %v2377, %v2379
  %v2415 = vsel %vm2402, %v2375, %v2377
  %v2416 = vsel %vm2402, %v2373, %v2375
  %v2417 = vsel %vm2402, %v2371, %v2373
  %v2418 = vsel %vm2402, %v2401, %v2371
  %s2419 = scalar_lea.vmem %s2, 128
  %v2420 = vld [vmem:[%s2419] ss:$8 sm:$0xf]
  %v2421 = vld [vmem:[%s2419] ss:$8 sm:$0xf0]
  %v2422 = vor.u32 %v2420, %v2421
  %s2423 = scalar_lea.vmem %s2, 192
  %v2424 = vld [vmem:[%s2423] ss:$8 sm:$0xf]
  %v2425 = vld [vmem:[%s2423] ss:$8 sm:$0xf0]
  %v2426 = vor.u32 %v2424, %v2425
  %v2429 = vlaneseq
  %v2430 = vshrl.u32 %v2429, 7
  %v2431 = vsub.s32 0, %v2430
  %v2432 = vrot.slane %v2422, %v2431
  %v2433 = vlaneseq
  %v2434 = vshrl.u32 %v2433, 7
  %v2435 = vsub.s32 1, %v2434
  %v2436 = vrot.slane %v2422, %v2435
  %v2437 = vlaneseq
  %v2438 = vshrl.u32 %v2437, 7
  %v2439 = vsub.s32 2, %v2438
  %v2440 = vrot.slane %v2422, %v2439
  %v2441 = vlaneseq
  %v2442 = vshrl.u32 %v2441, 7
  %v2443 = vsub.s32 3, %v2442
  %v2444 = vrot.slane %v2422, %v2443
  %v2445 = vlaneseq
  %v2446 = vshrl.u32 %v2445, 7
  %v2447 = vsub.s32 4, %v2446
  %v2448 = vrot.slane %v2422, %v2447
  %v2449 = vlaneseq
  %v2450 = vshrl.u32 %v2449, 7
  %v2451 = vsub.s32 5, %v2450
  %v2452 = vrot.slane %v2422, %v2451
  %v2453 = vlaneseq
  %v2454 = vshrl.u32 %v2453, 7
  %v2455 = vsub.s32 6, %v2454
  %v2456 = vrot.slane %v2422, %v2455
  %v2457 = vlaneseq
  %v2458 = vshrl.u32 %v2457, 7
  %v2459 = vsub.s32 7, %v2458
  %v2460 = vrot.slane %v2422, %v2459
  %v2461 = vlaneseq
  %v2462 = vshrl.u32 %v2461, 7
  %v2463 = vsub.s32 0, %v2462
  %v2464 = vrot.slane %v2426, %v2463
  %v2465 = vlaneseq
  %v2466 = vshrl.u32 %v2465, 7
  %v2467 = vsub.s32 1, %v2466
  %v2468 = vrot.slane %v2426, %v2467
  %v2469 = vlaneseq
  %v2470 = vshrl.u32 %v2469, 7
  %v2471 = vsub.s32 2, %v2470
  %v2472 = vrot.slane %v2426, %v2471
  %v2473 = vlaneseq
  %v2474 = vshrl.u32 %v2473, 7
  %v2475 = vsub.s32 3, %v2474
  %v2476 = vrot.slane %v2426, %v2475
  %v2477 = vlaneseq
  %v2478 = vshrl.u32 %v2477, 7
  %v2479 = vsub.s32 4, %v2478
  %v2480 = vrot.slane %v2426, %v2479
  %v2481 = vlaneseq
  %v2482 = vshrl.u32 %v2481, 7
  %v2483 = vsub.s32 5, %v2482
  %v2484 = vrot.slane %v2426, %v2483
  %v2485 = vlaneseq
  %v2486 = vshrl.u32 %v2485, 7
  %v2487 = vsub.s32 6, %v2486
  %v2488 = vrot.slane %v2426, %v2487
  %v2489 = vlaneseq
  %v2490 = vshrl.u32 %v2489, 7
  %v2491 = vsub.s32 7, %v2490
  %v2492 = vrot.slane %v2426, %v2491
  %v2509 = vmul.f32 %v2418, %v2432
  %v2510 = vmul.f32 %v2417, %v2436
  %v2511 = vmul.f32 %v2416, %v2440
  %v2512 = vmul.f32 %v2415, %v2444
  %v2513 = vmul.f32 %v2414, %v2448
  %v2514 = vmul.f32 %v2413, %v2452
  %v2515 = vmul.f32 %v2412, %v2456
  %v2516 = vmul.f32 %v2411, %v2460
  %v2517 = vmul.f32 %v2410, %v2464
  %v2518 = vmul.f32 %v2409, %v2468
  %v2519 = vmul.f32 %v2408, %v2472
  %v2520 = vmul.f32 %v2407, %v2476
  %v2521 = vmul.f32 %v2406, %v2480
  %v2522 = vmul.f32 %v2405, %v2484
  %v2523 = vmul.f32 %v2404, %v2488
  %v2524 = vmul.f32 %v2403, %v2492
  %v2541 = vcombine.low %v2509, %v2510
  %v2542 = vcombine.low %v2511, %v2512
  %v2543 = vcombine.low %v2513, %v2514
  %v2544 = vcombine.low %v2515, %v2516
  %v2546 = vunpack.c.l.s4 1966171168
  %v2547 = vunpack.c.0.s8 %v2546
  %v2548 = vlaneseq
  %v2549 = vshrl.u32 %v2548, 7
  %v2550 = vsub.s32 %v2547, %v2549
  %v2551 = vrot.slane %v2541, %v2550
  %v2553 = vunpack.c.l.s4 1966171168
  %v2554 = vunpack.c.0.s8 %v2553
  %v2555 = vlaneseq
  %v2556 = vshrl.u32 %v2555, 7
  %v2557 = vsub.s32 %v2554, %v2556
  %v2558 = vrot.slane %v2542, %v2557
  %v2560 = vunpack.c.l.s4 1966171168
  %v2561 = vunpack.c.0.s8 %v2560
  %v2562 = vlaneseq
  %v2563 = vshrl.u32 %v2562, 7
  %v2564 = vsub.s32 %v2561, %v2563
  %v2565 = vrot.slane %v2543, %v2564
  %v2567 = vunpack.c.l.s4 1966171168
  %v2568 = vunpack.c.0.s8 %v2567
  %v2569 = vlaneseq
  %v2570 = vshrl.u32 %v2569, 7
  %v2571 = vsub.s32 %v2568, %v2570
  %v2572 = vrot.slane %v2544, %v2571
  %v2573 = vcombine.low %v2551, %v2558
  %v2574 = vcombine.low %v2565, %v2572
  %v2576 = vunpack.c.l.s4 1966171168
  %v2577 = vunpack.c.0.s8 %v2576
  %v2578 = vlaneseq
  %v2579 = vshrl.u32 %v2578, 7
  %v2580 = vsub.s32 %v2577, %v2579
  %v2581 = vrot.slane %v2573, %v2580
  %v2583 = vunpack.c.l.s4 1966171168
  %v2584 = vunpack.c.0.s8 %v2583
  %v2585 = vlaneseq
  %v2586 = vshrl.u32 %v2585, 7
  %v2587 = vsub.s32 %v2584, %v2586
  %v2588 = vrot.slane %v2574, %v2587
  %v2589 = vcombine.low %v2581, %v2588
  %v2590 = vcombine.low %v2517, %v2518
  %v2591 = vcombine.low %v2519, %v2520
  %v2592 = vcombine.low %v2521, %v2522
  %v2593 = vcombine.low %v2523, %v2524
  %v2595 = vunpack.c.l.s4 1966171168
  %v2596 = vunpack.c.0.s8 %v2595
  %v2597 = vlaneseq
  %v2598 = vshrl.u32 %v2597, 7
  %v2599 = vsub.s32 %v2596, %v2598
  %v2600 = vrot.slane %v2590, %v2599
  %v2602 = vunpack.c.l.s4 1966171168
  %v2603 = vunpack.c.0.s8 %v2602
  %v2604 = vlaneseq
  %v2605 = vshrl.u32 %v2604, 7
  %v2606 = vsub.s32 %v2603, %v2605
  %v2607 = vrot.slane %v2591, %v2606
  %v2609 = vunpack.c.l.s4 1966171168
  %v2610 = vunpack.c.0.s8 %v2609
  %v2611 = vlaneseq
  %v2612 = vshrl.u32 %v2611, 7
  %v2613 = vsub.s32 %v2610, %v2612
  %v2614 = vrot.slane %v2592, %v2613
  %v2616 = vunpack.c.l.s4 1966171168
  %v2617 = vunpack.c.0.s8 %v2616
  %v2618 = vlaneseq
  %v2619 = vshrl.u32 %v2618, 7
  %v2620 = vsub.s32 %v2617, %v2619
  %v2621 = vrot.slane %v2593, %v2620
  %v2622 = vcombine.low %v2600, %v2607
  %v2623 = vcombine.low %v2614, %v2621
  %v2625 = vunpack.c.l.s4 1966171168
  %v2626 = vunpack.c.0.s8 %v2625
  %v2627 = vlaneseq
  %v2628 = vshrl.u32 %v2627, 7
  %v2629 = vsub.s32 %v2626, %v2628
  %v2630 = vrot.slane %v2622, %v2629
  %v2632 = vunpack.c.l.s4 1966171168
  %v2633 = vunpack.c.0.s8 %v2632
  %v2634 = vlaneseq
  %v2635 = vshrl.u32 %v2634, 7
  %v2636 = vsub.s32 %v2633, %v2635
  %v2637 = vrot.slane %v2623, %v2636
  %v2638 = vcombine.low %v2630, %v2637
  %s2641 = scalar_lea.vmem [#allocation2], 128
  %2642 = vst [vmem:[%s2641] ss:$8 sm:$0xf] %v2589
  %2643 = vst [vmem:[%s2641] ss:$8 sm:$0xf0] %v2589
  %s2644 = scalar_lea.vmem [#allocation2], 192
  %2645 = vst [vmem:[%s2644] ss:$8 sm:$0xf] %v2638
  %2646 = vst [vmem:[%s2644] ss:$8 sm:$0xf0] %v2638
  %2647 = vrot.lane.b32.xlu0 %v77, 14
  %v2648 = vpop.permute.xlu0 %2647
  %2649 = vrot.lane.b32.xlu0 %v81, 14
  %v2650 = vpop.permute.xlu0 %2649
  %2651 = vrot.lane.b32.xlu0 %v85, 14
  %v2652 = vpop.permute.xlu0 %2651
  %2653 = vrot.lane.b32.xlu0 %v89, 14
  %v2654 = vpop.permute.xlu0 %2653
  %2655 = vrot.lane.b32.xlu0 %v93, 14
  %v2656 = vpop.permute.xlu0 %2655
  %2657 = vrot.lane.b32.xlu0 %v97, 14
  %v2658 = vpop.permute.xlu0 %2657
  %2659 = vrot.lane.b32.xlu0 %v101, 14
  %v2660 = vpop.permute.xlu0 %2659
  %2661 = vrot.lane.b32.xlu0 %v105, 14
  %v2662 = vpop.permute.xlu0 %2661
  %2663 = vrot.lane.b32.xlu0 %v109, 14
  %v2664 = vpop.permute.xlu0 %2663
  %2665 = vrot.lane.b32.xlu0 %v113, 14
  %v2666 = vpop.permute.xlu0 %2665
  %2667 = vrot.lane.b32.xlu0 %v117, 14
  %v2668 = vpop.permute.xlu0 %2667
  %2669 = vrot.lane.b32.xlu0 %v121, 14
  %v2670 = vpop.permute.xlu0 %2669
  %2671 = vrot.lane.b32.xlu0 %v125, 14
  %v2672 = vpop.permute.xlu0 %2671
  %2673 = vrot.lane.b32.xlu0 %v129, 14
  %v2674 = vpop.permute.xlu0 %2673
  %2675 = vrot.lane.b32.xlu0 %v133, 14
  %v2676 = vpop.permute.xlu0 %2675
  %2677 = vrot.lane.b32.xlu0 %v137, 14
  %v2678 = vpop.permute.xlu0 %2677
  %vm2679 = vcmp.lt.s32.totalorder %v187, 14
  %v2680 = vsel %vm2679, %v2676, %v2678
  %v2681 = vsel %vm2679, %v2674, %v2676
  %v2682 = vsel %vm2679, %v2672, %v2674
  %v2683 = vsel %vm2679, %v2670, %v2672
  %v2684 = vsel %vm2679, %v2668, %v2670
  %v2685 = vsel %vm2679, %v2666, %v2668
  %v2686 = vsel %vm2679, %v2664, %v2666
  %v2687 = vsel %vm2679, %v2662, %v2664
  %v2688 = vsel %vm2679, %v2660, %v2662
  %v2689 = vsel %vm2679, %v2658, %v2660
  %v2690 = vsel %vm2679, %v2656, %v2658
  %v2691 = vsel %vm2679, %v2654, %v2656
  %v2692 = vsel %vm2679, %v2652, %v2654
  %v2693 = vsel %vm2679, %v2650, %v2652
  %v2694 = vsel %vm2679, %v2648, %v2650
  %v2695 = vsel %vm2679, %v2678, %v2648
  %s2696 = scalar_lea.vmem %s2, 129
  %v2697 = vld [vmem:[%s2696] ss:$8 sm:$0xf]
  %v2698 = vld [vmem:[%s2696] ss:$8 sm:$0xf0]
  %v2699 = vor.u32 %v2697, %v2698
  %s2700 = scalar_lea.vmem %s2, 193
  %v2701 = vld [vmem:[%s2700] ss:$8 sm:$0xf]
  %v2702 = vld [vmem:[%s2700] ss:$8 sm:$0xf0]
  %v2703 = vor.u32 %v2701, %v2702
  %v2706 = vlaneseq
  %v2707 = vshrl.u32 %v2706, 7
  %v2708 = vsub.s32 0, %v2707
  %v2709 = vrot.slane %v2699, %v2708
  %v2710 = vlaneseq
  %v2711 = vshrl.u32 %v2710, 7
  %v2712 = vsub.s32 1, %v2711
  %v2713 = vrot.slane %v2699, %v2712
  %v2714 = vlaneseq
  %v2715 = vshrl.u32 %v2714, 7
  %v2716 = vsub.s32 2, %v2715
  %v2717 = vrot.slane %v2699, %v2716
  %v2718 = vlaneseq
  %v2719 = vshrl.u32 %v2718, 7
  %v2720 = vsub.s32 3, %v2719
  %v2721 = vrot.slane %v2699, %v2720
  %v2722 = vlaneseq
  %v2723 = vshrl.u32 %v2722, 7
  %v2724 = vsub.s32 4, %v2723
  %v2725 = vrot.slane %v2699, %v2724
  %v2726 = vlaneseq
  %v2727 = vshrl.u32 %v2726, 7
  %v2728 = vsub.s32 5, %v2727
  %v2729 = vrot.slane %v2699, %v2728
  %v2730 = vlaneseq
  %v2731 = vshrl.u32 %v2730, 7
  %v2732 = vsub.s32 6, %v2731
  %v2733 = vrot.slane %v2699, %v2732
  %v2734 = vlaneseq
  %v2735 = vshrl.u32 %v2734, 7
  %v2736 = vsub.s32 7, %v2735
  %v2737 = vrot.slane %v2699, %v2736
  %v2738 = vlaneseq
  %v2739 = vshrl.u32 %v2738, 7
  %v2740 = vsub.s32 0, %v2739
  %v2741 = vrot.slane %v2703, %v2740
  %v2742 = vlaneseq
  %v2743 = vshrl.u32 %v2742, 7
  %v2744 = vsub.s32 1, %v2743
  %v2745 = vrot.slane %v2703, %v2744
  %v2746 = vlaneseq
  %v2747 = vshrl.u32 %v2746, 7
  %v2748 = vsub.s32 2, %v2747
  %v2749 = vrot.slane %v2703, %v2748
  %v2750 = vlaneseq
  %v2751 = vshrl.u32 %v2750, 7
  %v2752 = vsub.s32 3, %v2751
  %v2753 = vrot.slane %v2703, %v2752
  %v2754 = vlaneseq
  %v2755 = vshrl.u32 %v2754, 7
  %v2756 = vsub.s32 4, %v2755
  %v2757 = vrot.slane %v2703, %v2756
  %v2758 = vlaneseq
  %v2759 = vshrl.u32 %v2758, 7
  %v2760 = vsub.s32 5, %v2759
  %v2761 = vrot.slane %v2703, %v2760
  %v2762 = vlaneseq
  %v2763 = vshrl.u32 %v2762, 7
  %v2764 = vsub.s32 6, %v2763
  %v2765 = vrot.slane %v2703, %v2764
  %v2766 = vlaneseq
  %v2767 = vshrl.u32 %v2766, 7
  %v2768 = vsub.s32 7, %v2767
  %v2769 = vrot.slane %v2703, %v2768
  %v2786 = vmul.f32 %v2695, %v2709
  %v2787 = vmul.f32 %v2694, %v2713
  %v2788 = vmul.f32 %v2693, %v2717
  %v2789 = vmul.f32 %v2692, %v2721
  %v2790 = vmul.f32 %v2691, %v2725
  %v2791 = vmul.f32 %v2690, %v2729
  %v2792 = vmul.f32 %v2689, %v2733
  %v2793 = vmul.f32 %v2688, %v2737
  %v2794 = vmul.f32 %v2687, %v2741
  %v2795 = vmul.f32 %v2686, %v2745
  %v2796 = vmul.f32 %v2685, %v2749
  %v2797 = vmul.f32 %v2684, %v2753
  %v2798 = vmul.f32 %v2683, %v2757
  %v2799 = vmul.f32 %v2682, %v2761
  %v2800 = vmul.f32 %v2681, %v2765
  %v2801 = vmul.f32 %v2680, %v2769
  %v2818 = vcombine.low %v2786, %v2787
  %v2819 = vcombine.low %v2788, %v2789
  %v2820 = vcombine.low %v2790, %v2791
  %v2821 = vcombine.low %v2792, %v2793
  %v2823 = vunpack.c.l.s4 1966171168
  %v2824 = vunpack.c.0.s8 %v2823
  %v2825 = vlaneseq
  %v2826 = vshrl.u32 %v2825, 7
  %v2827 = vsub.s32 %v2824, %v2826
  %v2828 = vrot.slane %v2818, %v2827
  %v2830 = vunpack.c.l.s4 1966171168
  %v2831 = vunpack.c.0.s8 %v2830
  %v2832 = vlaneseq
  %v2833 = vshrl.u32 %v2832, 7
  %v2834 = vsub.s32 %v2831, %v2833
  %v2835 = vrot.slane %v2819, %v2834
  %v2837 = vunpack.c.l.s4 1966171168
  %v2838 = vunpack.c.0.s8 %v2837
  %v2839 = vlaneseq
  %v2840 = vshrl.u32 %v2839, 7
  %v2841 = vsub.s32 %v2838, %v2840
  %v2842 = vrot.slane %v2820, %v2841
  %v2844 = vunpack.c.l.s4 1966171168
  %v2845 = vunpack.c.0.s8 %v2844
  %v2846 = vlaneseq
  %v2847 = vshrl.u32 %v2846, 7
  %v2848 = vsub.s32 %v2845, %v2847
  %v2849 = vrot.slane %v2821, %v2848
  %v2850 = vcombine.low %v2828, %v2835
  %v2851 = vcombine.low %v2842, %v2849
  %v2853 = vunpack.c.l.s4 1966171168
  %v2854 = vunpack.c.0.s8 %v2853
  %v2855 = vlaneseq
  %v2856 = vshrl.u32 %v2855, 7
  %v2857 = vsub.s32 %v2854, %v2856
  %v2858 = vrot.slane %v2850, %v2857
  %v2860 = vunpack.c.l.s4 1966171168
  %v2861 = vunpack.c.0.s8 %v2860
  %v2862 = vlaneseq
  %v2863 = vshrl.u32 %v2862, 7
  %v2864 = vsub.s32 %v2861, %v2863
  %v2865 = vrot.slane %v2851, %v2864
  %v2866 = vcombine.low %v2858, %v2865
  %v2867 = vcombine.low %v2794, %v2795
  %v2868 = vcombine.low %v2796, %v2797
  %v2869 = vcombine.low %v2798, %v2799
  %v2870 = vcombine.low %v2800, %v2801
  %v2872 = vunpack.c.l.s4 1966171168
  %v2873 = vunpack.c.0.s8 %v2872
  %v2874 = vlaneseq
  %v2875 = vshrl.u32 %v2874, 7
  %v2876 = vsub.s32 %v2873, %v2875
  %v2877 = vrot.slane %v2867, %v2876
  %v2879 = vunpack.c.l.s4 1966171168
  %v2880 = vunpack.c.0.s8 %v2879
  %v2881 = vlaneseq
  %v2882 = vshrl.u32 %v2881, 7
  %v2883 = vsub.s32 %v2880, %v2882
  %v2884 = vrot.slane %v2868, %v2883
  %v2886 = vunpack.c.l.s4 1966171168
  %v2887 = vunpack.c.0.s8 %v2886
  %v2888 = vlaneseq
  %v2889 = vshrl.u32 %v2888, 7
  %v2890 = vsub.s32 %v2887, %v2889
  %v2891 = vrot.slane %v2869, %v2890
  %v2893 = vunpack.c.l.s4 1966171168
  %v2894 = vunpack.c.0.s8 %v2893
  %v2895 = vlaneseq
  %v2896 = vshrl.u32 %v2895, 7
  %v2897 = vsub.s32 %v2894, %v2896
  %v2898 = vrot.slane %v2870, %v2897
  %v2899 = vcombine.low %v2877, %v2884
  %v2900 = vcombine.low %v2891, %v2898
  %v2902 = vunpack.c.l.s4 1966171168
  %v2903 = vunpack.c.0.s8 %v2902
  %v2904 = vlaneseq
  %v2905 = vshrl.u32 %v2904, 7
  %v2906 = vsub.s32 %v2903, %v2905
  %v2907 = vrot.slane %v2899, %v2906
  %v2909 = vunpack.c.l.s4 1966171168
  %v2910 = vunpack.c.0.s8 %v2909
  %v2911 = vlaneseq
  %v2912 = vshrl.u32 %v2911, 7
  %v2913 = vsub.s32 %v2910, %v2912
  %v2914 = vrot.slane %v2900, %v2913
  %v2915 = vcombine.low %v2907, %v2914
  %s2918 = scalar_lea.vmem [#allocation2], 129
  %2919 = vst [vmem:[%s2918] ss:$8 sm:$0xf] %v2866
  %2920 = vst [vmem:[%s2918] ss:$8 sm:$0xf0] %v2866
  %s2921 = scalar_lea.vmem [#allocation2], 193
  %2922 = vst [vmem:[%s2921] ss:$8 sm:$0xf] %v2915
  %2923 = vst [vmem:[%s2921] ss:$8 sm:$0xf0] %v2915
  %2924 = vrot.lane.b32.xlu0 %v77, 2
  %v2925 = vpop.permute.xlu0 %2924
  %2926 = vrot.lane.b32.xlu0 %v81, 2
  %v2927 = vpop.permute.xlu0 %2926
  %2928 = vrot.lane.b32.xlu0 %v85, 2
  %v2929 = vpop.permute.xlu0 %2928
  %2930 = vrot.lane.b32.xlu0 %v89, 2
  %v2931 = vpop.permute.xlu0 %2930
  %2932 = vrot.lane.b32.xlu0 %v93, 2
  %v2933 = vpop.permute.xlu0 %2932
  %2934 = vrot.lane.b32.xlu0 %v97, 2
  %v2935 = vpop.permute.xlu0 %2934
  %2936 = vrot.lane.b32.xlu0 %v101, 2
  %v2937 = vpop.permute.xlu0 %2936
  %2938 = vrot.lane.b32.xlu0 %v105, 2
  %v2939 = vpop.permute.xlu0 %2938
  %2940 = vrot.lane.b32.xlu0 %v109, 2
  %v2941 = vpop.permute.xlu0 %2940
  %2942 = vrot.lane.b32.xlu0 %v113, 2
  %v2943 = vpop.permute.xlu0 %2942
  %2944 = vrot.lane.b32.xlu0 %v117, 2
  %v2945 = vpop.permute.xlu0 %2944
  %2946 = vrot.lane.b32.xlu0 %v121, 2
  %v2947 = vpop.permute.xlu0 %2946
  %2948 = vrot.lane.b32.xlu0 %v125, 2
  %v2949 = vpop.permute.xlu0 %2948
  %2950 = vrot.lane.b32.xlu0 %v129, 2
  %v2951 = vpop.permute.xlu0 %2950
  %2952 = vrot.lane.b32.xlu0 %v133, 2
  %v2953 = vpop.permute.xlu0 %2952
  %2954 = vrot.lane.b32.xlu0 %v137, 2
  %v2955 = vpop.permute.xlu0 %2954
  %vm2956 = vcmp.lt.s32.totalorder %v187, 2
  %v2957 = vsel %vm2956, %v2953, %v2955
  %v2958 = vsel %vm2956, %v2951, %v2953
  %v2959 = vsel %vm2956, %v2949, %v2951
  %v2960 = vsel %vm2956, %v2947, %v2949
  %v2961 = vsel %vm2956, %v2945, %v2947
  %v2962 = vsel %vm2956, %v2943, %v2945
  %v2963 = vsel %vm2956, %v2941, %v2943
  %v2964 = vsel %vm2956, %v2939, %v2941
  %v2965 = vsel %vm2956, %v2937, %v2939
  %v2966 = vsel %vm2956, %v2935, %v2937
  %v2967 = vsel %vm2956, %v2933, %v2935
  %v2968 = vsel %vm2956, %v2931, %v2933
  %v2969 = vsel %vm2956, %v2929, %v2931
  %v2970 = vsel %vm2956, %v2927, %v2929
  %v2971 = vsel %vm2956, %v2925, %v2927
  %v2972 = vsel %vm2956, %v2955, %v2925
  %s2973 = scalar_lea.vmem %s2, 130
  %v2974 = vld [vmem:[%s2973] ss:$8 sm:$0xf]
  %v2975 = vld [vmem:[%s2973] ss:$8 sm:$0xf0]
  %v2976 = vor.u32 %v2974, %v2975
  %s2977 = scalar_lea.vmem %s2, 194
  %v2978 = vld [vmem:[%s2977] ss:$8 sm:$0xf]
  %v2979 = vld [vmem:[%s2977] ss:$8 sm:$0xf0]
  %v2980 = vor.u32 %v2978, %v2979
  %v2983 = vlaneseq
  %v2984 = vshrl.u32 %v2983, 7
  %v2985 = vsub.s32 0, %v2984
  %v2986 = vrot.slane %v2976, %v2985
  %v2987 = vlaneseq
  %v2988 = vshrl.u32 %v2987, 7
  %v2989 = vsub.s32 1, %v2988
  %v2990 = vrot.slane %v2976, %v2989
  %v2991 = vlaneseq
  %v2992 = vshrl.u32 %v2991, 7
  %v2993 = vsub.s32 2, %v2992
  %v2994 = vrot.slane %v2976, %v2993
  %v2995 = vlaneseq
  %v2996 = vshrl.u32 %v2995, 7
  %v2997 = vsub.s32 3, %v2996
  %v2998 = vrot.slane %v2976, %v2997
  %v2999 = vlaneseq
  %v3000 = vshrl.u32 %v2999, 7
  %v3001 = vsub.s32 4, %v3000
  %v3002 = vrot.slane %v2976, %v3001
  %v3003 = vlaneseq
  %v3004 = vshrl.u32 %v3003, 7
  %v3005 = vsub.s32 5, %v3004
  %v3006 = vrot.slane %v2976, %v3005
  %v3007 = vlaneseq
  %v3008 = vshrl.u32 %v3007, 7
  %v3009 = vsub.s32 6, %v3008
  %v3010 = vrot.slane %v2976, %v3009
  %v3011 = vlaneseq
  %v3012 = vshrl.u32 %v3011, 7
  %v3013 = vsub.s32 7, %v3012
  %v3014 = vrot.slane %v2976, %v3013
  %v3015 = vlaneseq
  %v3016 = vshrl.u32 %v3015, 7
  %v3017 = vsub.s32 0, %v3016
  %v3018 = vrot.slane %v2980, %v3017
  %v3019 = vlaneseq
  %v3020 = vshrl.u32 %v3019, 7
  %v3021 = vsub.s32 1, %v3020
  %v3022 = vrot.slane %v2980, %v3021
  %v3023 = vlaneseq
  %v3024 = vshrl.u32 %v3023, 7
  %v3025 = vsub.s32 2, %v3024
  %v3026 = vrot.slane %v2980, %v3025
  %v3027 = vlaneseq
  %v3028 = vshrl.u32 %v3027, 7
  %v3029 = vsub.s32 3, %v3028
  %v3030 = vrot.slane %v2980, %v3029
  %v3031 = vlaneseq
  %v3032 = vshrl.u32 %v3031, 7
  %v3033 = vsub.s32 4, %v3032
  %v3034 = vrot.slane %v2980, %v3033
  %v3035 = vlaneseq
  %v3036 = vshrl.u32 %v3035, 7
  %v3037 = vsub.s32 5, %v3036
  %v3038 = vrot.slane %v2980, %v3037
  %v3039 = vlaneseq
  %v3040 = vshrl.u32 %v3039, 7
  %v3041 = vsub.s32 6, %v3040
  %v3042 = vrot.slane %v2980, %v3041
  %v3043 = vlaneseq
  %v3044 = vshrl.u32 %v3043, 7
  %v3045 = vsub.s32 7, %v3044
  %v3046 = vrot.slane %v2980, %v3045
  %v3063 = vmul.f32 %v2972, %v2986
  %v3064 = vmul.f32 %v2971, %v2990
  %v3065 = vmul.f32 %v2970, %v2994
  %v3066 = vmul.f32 %v2969, %v2998
  %v3067 = vmul.f32 %v2968, %v3002
  %v3068 = vmul.f32 %v2967, %v3006
  %v3069 = vmul.f32 %v2966, %v3010
  %v3070 = vmul.f32 %v2965, %v3014
  %v3071 = vmul.f32 %v2964, %v3018
  %v3072 = vmul.f32 %v2963, %v3022
  %v3073 = vmul.f32 %v2962, %v3026
  %v3074 = vmul.f32 %v2961, %v3030
  %v3075 = vmul.f32 %v2960, %v3034
  %v3076 = vmul.f32 %v2959, %v3038
  %v3077 = vmul.f32 %v2958, %v3042
  %v3078 = vmul.f32 %v2957, %v3046
  %v3095 = vcombine.low %v3063, %v3064
  %v3096 = vcombine.low %v3065, %v3066
  %v3097 = vcombine.low %v3067, %v3068
  %v3098 = vcombine.low %v3069, %v3070
  %v3100 = vunpack.c.l.s4 1966171168
  %v3101 = vunpack.c.0.s8 %v3100
  %v3102 = vlaneseq
  %v3103 = vshrl.u32 %v3102, 7
  %v3104 = vsub.s32 %v3101, %v3103
  %v3105 = vrot.slane %v3095, %v3104
  %v3107 = vunpack.c.l.s4 1966171168
  %v3108 = vunpack.c.0.s8 %v3107
  %v3109 = vlaneseq
  %v3110 = vshrl.u32 %v3109, 7
  %v3111 = vsub.s32 %v3108, %v3110
  %v3112 = vrot.slane %v3096, %v3111
  %v3114 = vunpack.c.l.s4 1966171168
  %v3115 = vunpack.c.0.s8 %v3114
  %v3116 = vlaneseq
  %v3117 = vshrl.u32 %v3116, 7
  %v3118 = vsub.s32 %v3115, %v3117
  %v3119 = vrot.slane %v3097, %v3118
  %v3121 = vunpack.c.l.s4 1966171168
  %v3122 = vunpack.c.0.s8 %v3121
  %v3123 = vlaneseq
  %v3124 = vshrl.u32 %v3123, 7
  %v3125 = vsub.s32 %v3122, %v3124
  %v3126 = vrot.slane %v3098, %v3125
  %v3127 = vcombine.low %v3105, %v3112
  %v3128 = vcombine.low %v3119, %v3126
  %v3130 = vunpack.c.l.s4 1966171168
  %v3131 = vunpack.c.0.s8 %v3130
  %v3132 = vlaneseq
  %v3133 = vshrl.u32 %v3132, 7
  %v3134 = vsub.s32 %v3131, %v3133
  %v3135 = vrot.slane %v3127, %v3134
  %v3137 = vunpack.c.l.s4 1966171168
  %v3138 = vunpack.c.0.s8 %v3137
  %v3139 = vlaneseq
  %v3140 = vshrl.u32 %v3139, 7
  %v3141 = vsub.s32 %v3138, %v3140
  %v3142 = vrot.slane %v3128, %v3141
  %v3143 = vcombine.low %v3135, %v3142
  %v3144 = vcombine.low %v3071, %v3072
  %v3145 = vcombine.low %v3073, %v3074
  %v3146 = vcombine.low %v3075, %v3076
  %v3147 = vcombine.low %v3077, %v3078
  %v3149 = vunpack.c.l.s4 1966171168
  %v3150 = vunpack.c.0.s8 %v3149
  %v3151 = vlaneseq
  %v3152 = vshrl.u32 %v3151, 7
  %v3153 = vsub.s32 %v3150, %v3152
  %v3154 = vrot.slane %v3144, %v3153
  %v3156 = vunpack.c.l.s4 1966171168
  %v3157 = vunpack.c.0.s8 %v3156
  %v3158 = vlaneseq
  %v3159 = vshrl.u32 %v3158, 7
  %v3160 = vsub.s32 %v3157, %v3159
  %v3161 = vrot.slane %v3145, %v3160
  %v3163 = vunpack.c.l.s4 1966171168
  %v3164 = vunpack.c.0.s8 %v3163
  %v3165 = vlaneseq
  %v3166 = vshrl.u32 %v3165, 7
  %v3167 = vsub.s32 %v3164, %v3166
  %v3168 = vrot.slane %v3146, %v3167
  %v3170 = vunpack.c.l.s4 1966171168
  %v3171 = vunpack.c.0.s8 %v3170
  %v3172 = vlaneseq
  %v3173 = vshrl.u32 %v3172, 7
  %v3174 = vsub.s32 %v3171, %v3173
  %v3175 = vrot.slane %v3147, %v3174
  %v3176 = vcombine.low %v3154, %v3161
  %v3177 = vcombine.low %v3168, %v3175
  %v3179 = vunpack.c.l.s4 1966171168
  %v3180 = vunpack.c.0.s8 %v3179
  %v3181 = vlaneseq
  %v3182 = vshrl.u32 %v3181, 7
  %v3183 = vsub.s32 %v3180, %v3182
  %v3184 = vrot.slane %v3176, %v3183
  %v3186 = vunpack.c.l.s4 1966171168
  %v3187 = vunpack.c.0.s8 %v3186
  %v3188 = vlaneseq
  %v3189 = vshrl.u32 %v3188, 7
  %v3190 = vsub.s32 %v3187, %v3189
  %v3191 = vrot.slane %v3177, %v3190
  %v3192 = vcombine.low %v3184, %v3191
  %s3195 = scalar_lea.vmem [#allocation2], 130
  %3196 = vst [vmem:[%s3195] ss:$8 sm:$0xf] %v3143
  %3197 = vst [vmem:[%s3195] ss:$8 sm:$0xf0] %v3143
  %s3198 = scalar_lea.vmem [#allocation2], 194
  %3199 = vst [vmem:[%s3198] ss:$8 sm:$0xf] %v3192
  %3200 = vst [vmem:[%s3198] ss:$8 sm:$0xf0] %v3192
  %3201 = vrot.lane.b32.xlu0 %v77, 1
  %v3202 = vpop.permute.xlu0 %3201
  %3203 = vrot.lane.b32.xlu0 %v81, 1
  %v3204 = vpop.permute.xlu0 %3203
  %3205 = vrot.lane.b32.xlu0 %v85, 1
  %v3206 = vpop.permute.xlu0 %3205
  %3207 = vrot.lane.b32.xlu0 %v89, 1
  %v3208 = vpop.permute.xlu0 %3207
  %3209 = vrot.lane.b32.xlu0 %v93, 1
  %v3210 = vpop.permute.xlu0 %3209
  %3211 = vrot.lane.b32.xlu0 %v97, 1
  %v3212 = vpop.permute.xlu0 %3211
  %3213 = vrot.lane.b32.xlu0 %v101, 1
  %v3214 = vpop.permute.xlu0 %3213
  %3215 = vrot.lane.b32.xlu0 %v105, 1
  %v3216 = vpop.permute.xlu0 %3215
  %3217 = vrot.lane.b32.xlu0 %v109, 1
  %v3218 = vpop.permute.xlu0 %3217
  %3219 = vrot.lane.b32.xlu0 %v113, 1
  %v3220 = vpop.permute.xlu0 %3219
  %3221 = vrot.lane.b32.xlu0 %v117, 1
  %v3222 = vpop.permute.xlu0 %3221
  %3223 = vrot.lane.b32.xlu0 %v121, 1
  %v3224 = vpop.permute.xlu0 %3223
  %3225 = vrot.lane.b32.xlu0 %v125, 1
  %v3226 = vpop.permute.xlu0 %3225
  %3227 = vrot.lane.b32.xlu0 %v129, 1
  %v3228 = vpop.permute.xlu0 %3227
  %3229 = vrot.lane.b32.xlu0 %v133, 1
  %v3230 = vpop.permute.xlu0 %3229
  %3231 = vrot.lane.b32.xlu0 %v137, 1
  %v3232 = vpop.permute.xlu0 %3231
  %vm3233 = vcmp.lt.s32.totalorder %v187, 1
  %v3234 = vsel %vm3233, %v3230, %v3232
  %v3235 = vsel %vm3233, %v3228, %v3230
  %v3236 = vsel %vm3233, %v3226, %v3228
  %v3237 = vsel %vm3233, %v3224, %v3226
  %v3238 = vsel %vm3233, %v3222, %v3224
  %v3239 = vsel %vm3233, %v3220, %v3222
  %v3240 = vsel %vm3233, %v3218, %v3220
  %v3241 = vsel %vm3233, %v3216, %v3218
  %v3242 = vsel %vm3233, %v3214, %v3216
  %v3243 = vsel %vm3233, %v3212, %v3214
  %v3244 = vsel %vm3233, %v3210, %v3212
  %v3245 = vsel %vm3233, %v3208, %v3210
  %v3246 = vsel %vm3233, %v3206, %v3208
  %v3247 = vsel %vm3233, %v3204, %v3206
  %v3248 = vsel %vm3233, %v3202, %v3204
  %v3249 = vsel %vm3233, %v3232, %v3202
  %s3250 = scalar_lea.vmem %s2, 131
  %v3251 = vld [vmem:[%s3250] ss:$8 sm:$0xf]
  %v3252 = vld [vmem:[%s3250] ss:$8 sm:$0xf0]
  %v3253 = vor.u32 %v3251, %v3252
  %s3254 = scalar_lea.vmem %s2, 195
  %v3255 = vld [vmem:[%s3254] ss:$8 sm:$0xf]
  %v3256 = vld [vmem:[%s3254] ss:$8 sm:$0xf0]
  %v3257 = vor.u32 %v3255, %v3256
  %v3260 = vlaneseq
  %v3261 = vshrl.u32 %v3260, 7
  %v3262 = vsub.s32 0, %v3261
  %v3263 = vrot.slane %v3253, %v3262
  %v3264 = vlaneseq
  %v3265 = vshrl.u32 %v3264, 7
  %v3266 = vsub.s32 1, %v3265
  %v3267 = vrot.slane %v3253, %v3266
  %v3268 = vlaneseq
  %v3269 = vshrl.u32 %v3268, 7
  %v3270 = vsub.s32 2, %v3269
  %v3271 = vrot.slane %v3253, %v3270
  %v3272 = vlaneseq
  %v3273 = vshrl.u32 %v3272, 7
  %v3274 = vsub.s32 3, %v3273
  %v3275 = vrot.slane %v3253, %v3274
  %v3276 = vlaneseq
  %v3277 = vshrl.u32 %v3276, 7
  %v3278 = vsub.s32 4, %v3277
  %v3279 = vrot.slane %v3253, %v3278
  %v3280 = vlaneseq
  %v3281 = vshrl.u32 %v3280, 7
  %v3282 = vsub.s32 5, %v3281
  %v3283 = vrot.slane %v3253, %v3282
  %v3284 = vlaneseq
  %v3285 = vshrl.u32 %v3284, 7
  %v3286 = vsub.s32 6, %v3285
  %v3287 = vrot.slane %v3253, %v3286
  %v3288 = vlaneseq
  %v3289 = vshrl.u32 %v3288, 7
  %v3290 = vsub.s32 7, %v3289
  %v3291 = vrot.slane %v3253, %v3290
  %v3292 = vlaneseq
  %v3293 = vshrl.u32 %v3292, 7
  %v3294 = vsub.s32 0, %v3293
  %v3295 = vrot.slane %v3257, %v3294
  %v3296 = vlaneseq
  %v3297 = vshrl.u32 %v3296, 7
  %v3298 = vsub.s32 1, %v3297
  %v3299 = vrot.slane %v3257, %v3298
  %v3300 = vlaneseq
  %v3301 = vshrl.u32 %v3300, 7
  %v3302 = vsub.s32 2, %v3301
  %v3303 = vrot.slane %v3257, %v3302
  %v3304 = vlaneseq
  %v3305 = vshrl.u32 %v3304, 7
  %v3306 = vsub.s32 3, %v3305
  %v3307 = vrot.slane %v3257, %v3306
  %v3308 = vlaneseq
  %v3309 = vshrl.u32 %v3308, 7
  %v3310 = vsub.s32 4, %v3309
  %v3311 = vrot.slane %v3257, %v3310
  %v3312 = vlaneseq
  %v3313 = vshrl.u32 %v3312, 7
  %v3314 = vsub.s32 5, %v3313
  %v3315 = vrot.slane %v3257, %v3314
  %v3316 = vlaneseq
  %v3317 = vshrl.u32 %v3316, 7
  %v3318 = vsub.s32 6, %v3317
  %v3319 = vrot.slane %v3257, %v3318
  %v3320 = vlaneseq
  %v3321 = vshrl.u32 %v3320, 7
  %v3322 = vsub.s32 7, %v3321
  %v3323 = vrot.slane %v3257, %v3322
  %v3340 = vmul.f32 %v3249, %v3263
  %v3341 = vmul.f32 %v3248, %v3267
  %v3342 = vmul.f32 %v3247, %v3271
  %v3343 = vmul.f32 %v3246, %v3275
  %v3344 = vmul.f32 %v3245, %v3279
  %v3345 = vmul.f32 %v3244, %v3283
  %v3346 = vmul.f32 %v3243, %v3287
  %v3347 = vmul.f32 %v3242, %v3291
  %v3348 = vmul.f32 %v3241, %v3295
  %v3349 = vmul.f32 %v3240, %v3299
  %v3350 = vmul.f32 %v3239, %v3303
  %v3351 = vmul.f32 %v3238, %v3307
  %v3352 = vmul.f32 %v3237, %v3311
  %v3353 = vmul.f32 %v3236, %v3315
  %v3354 = vmul.f32 %v3235, %v3319
  %v3355 = vmul.f32 %v3234, %v3323
  %v3372 = vcombine.low %v3340, %v3341
  %v3373 = vcombine.low %v3342, %v3343
  %v3374 = vcombine.low %v3344, %v3345
  %v3375 = vcombine.low %v3346, %v3347
  %v3377 = vunpack.c.l.s4 1966171168
  %v3378 = vunpack.c.0.s8 %v3377
  %v3379 = vlaneseq
  %v3380 = vshrl.u32 %v3379, 7
  %v3381 = vsub.s32 %v3378, %v3380
  %v3382 = vrot.slane %v3372, %v3381
  %v3384 = vunpack.c.l.s4 1966171168
  %v3385 = vunpack.c.0.s8 %v3384
  %v3386 = vlaneseq
  %v3387 = vshrl.u32 %v3386, 7
  %v3388 = vsub.s32 %v3385, %v3387
  %v3389 = vrot.slane %v3373, %v3388
  %v3391 = vunpack.c.l.s4 1966171168
  %v3392 = vunpack.c.0.s8 %v3391
  %v3393 = vlaneseq
  %v3394 = vshrl.u32 %v3393, 7
  %v3395 = vsub.s32 %v3392, %v3394
  %v3396 = vrot.slane %v3374, %v3395
  %v3398 = vunpack.c.l.s4 1966171168
  %v3399 = vunpack.c.0.s8 %v3398
  %v3400 = vlaneseq
  %v3401 = vshrl.u32 %v3400, 7
  %v3402 = vsub.s32 %v3399, %v3401
  %v3403 = vrot.slane %v3375, %v3402
  %v3404 = vcombine.low %v3382, %v3389
  %v3405 = vcombine.low %v3396, %v3403
  %v3407 = vunpack.c.l.s4 1966171168
  %v3408 = vunpack.c.0.s8 %v3407
  %v3409 = vlaneseq
  %v3410 = vshrl.u32 %v3409, 7
  %v3411 = vsub.s32 %v3408, %v3410
  %v3412 = vrot.slane %v3404, %v3411
  %v3414 = vunpack.c.l.s4 1966171168
  %v3415 = vunpack.c.0.s8 %v3414
  %v3416 = vlaneseq
  %v3417 = vshrl.u32 %v3416, 7
  %v3418 = vsub.s32 %v3415, %v3417
  %v3419 = vrot.slane %v3405, %v3418
  %v3420 = vcombine.low %v3412, %v3419
  %v3421 = vcombine.low %v3348, %v3349
  %v3422 = vcombine.low %v3350, %v3351
  %v3423 = vcombine.low %v3352, %v3353
  %v3424 = vcombine.low %v3354, %v3355
  %v3426 = vunpack.c.l.s4 1966171168
  %v3427 = vunpack.c.0.s8 %v3426
  %v3428 = vlaneseq
  %v3429 = vshrl.u32 %v3428, 7
  %v3430 = vsub.s32 %v3427, %v3429
  %v3431 = vrot.slane %v3421, %v3430
  %v3433 = vunpack.c.l.s4 1966171168
  %v3434 = vunpack.c.0.s8 %v3433
  %v3435 = vlaneseq
  %v3436 = vshrl.u32 %v3435, 7
  %v3437 = vsub.s32 %v3434, %v3436
  %v3438 = vrot.slane %v3422, %v3437
  %v3440 = vunpack.c.l.s4 1966171168
  %v3441 = vunpack.c.0.s8 %v3440
  %v3442 = vlaneseq
  %v3443 = vshrl.u32 %v3442, 7
  %v3444 = vsub.s32 %v3441, %v3443
  %v3445 = vrot.slane %v3423, %v3444
  %v3447 = vunpack.c.l.s4 1966171168
  %v3448 = vunpack.c.0.s8 %v3447
  %v3449 = vlaneseq
  %v3450 = vshrl.u32 %v3449, 7
  %v3451 = vsub.s32 %v3448, %v3450
  %v3452 = vrot.slane %v3424, %v3451
  %v3453 = vcombine.low %v3431, %v3438
  %v3454 = vcombine.low %v3445, %v3452
  %v3456 = vunpack.c.l.s4 1966171168
  %v3457 = vunpack.c.0.s8 %v3456
  %v3458 = vlaneseq
  %v3459 = vshrl.u32 %v3458, 7
  %v3460 = vsub.s32 %v3457, %v3459
  %v3461 = vrot.slane %v3453, %v3460
  %v3463 = vunpack.c.l.s4 1966171168
  %v3464 = vunpack.c.0.s8 %v3463
  %v3465 = vlaneseq
  %v3466 = vshrl.u32 %v3465, 7
  %v3467 = vsub.s32 %v3464, %v3466
  %v3468 = vrot.slane %v3454, %v3467
  %v3469 = vcombine.low %v3461, %v3468
  %s3472 = scalar_lea.vmem [#allocation2], 131
  %3473 = vst [vmem:[%s3472] ss:$8 sm:$0xf] %v3420
  %3474 = vst [vmem:[%s3472] ss:$8 sm:$0xf0] %v3420
  %s3475 = scalar_lea.vmem [#allocation2], 195
  %3476 = vst [vmem:[%s3475] ss:$8 sm:$0xf] %v3469
  %3477 = vst [vmem:[%s3475] ss:$8 sm:$0xf0] %v3469
  %s3478 = scalar_lea.vmem %s2, 132
  %v3479 = vld [vmem:[%s3478] ss:$8 sm:$0xf]
  %v3480 = vld [vmem:[%s3478] ss:$8 sm:$0xf0]
  %v3481 = vor.u32 %v3479, %v3480
  %s3482 = scalar_lea.vmem %s2, 196
  %v3483 = vld [vmem:[%s3482] ss:$8 sm:$0xf]
  %v3484 = vld [vmem:[%s3482] ss:$8 sm:$0xf0]
  %v3485 = vor.u32 %v3483, %v3484
  %v3486 = vmul.f32 %v70, %v3481
  %v3487 = vmul.f32 %v71, %v3485
  %s3488 = scalar_lea.vmem [#allocation2], 132
  %3489 = vst [vmem:[%s3488] ss:$8 sm:$0xf] %v3486
  %3490 = vst [vmem:[%s3488] ss:$8 sm:$0xf0] %v3486
  %s3491 = scalar_lea.vmem [#allocation2], 196
  %3492 = vst [vmem:[%s3491] ss:$8 sm:$0xf] %v3487
  %3493 = vst [vmem:[%s3491] ss:$8 sm:$0xf0] %v3487
  %3494 = vrot.lane.b32.xlu0 %v77, 127
  %v3495 = vpop.permute.xlu0 %3494
  %3496 = vrot.lane.b32.xlu0 %v81, 127
  %v3497 = vpop.permute.xlu0 %3496
  %3498 = vrot.lane.b32.xlu0 %v85, 127
  %v3499 = vpop.permute.xlu0 %3498
  %3500 = vrot.lane.b32.xlu0 %v89, 127
  %v3501 = vpop.permute.xlu0 %3500
  %3502 = vrot.lane.b32.xlu0 %v93, 127
  %v3503 = vpop.permute.xlu0 %3502
  %3504 = vrot.lane.b32.xlu0 %v97, 127
  %v3505 = vpop.permute.xlu0 %3504
  %3506 = vrot.lane.b32.xlu0 %v101, 127
  %v3507 = vpop.permute.xlu0 %3506
  %3508 = vrot.lane.b32.xlu0 %v105, 127
  %v3509 = vpop.permute.xlu0 %3508
  %3510 = vrot.lane.b32.xlu0 %v109, 127
  %v3511 = vpop.permute.xlu0 %3510
  %3512 = vrot.lane.b32.xlu0 %v113, 127
  %v3513 = vpop.permute.xlu0 %3512
  %3514 = vrot.lane.b32.xlu0 %v117, 127
  %v3515 = vpop.permute.xlu0 %3514
  %3516 = vrot.lane.b32.xlu0 %v121, 127
  %v3517 = vpop.permute.xlu0 %3516
  %3518 = vrot.lane.b32.xlu0 %v125, 127
  %v3519 = vpop.permute.xlu0 %3518
  %3520 = vrot.lane.b32.xlu0 %v129, 127
  %v3521 = vpop.permute.xlu0 %3520
  %3522 = vrot.lane.b32.xlu0 %v133, 127
  %v3523 = vpop.permute.xlu0 %3522
  %3524 = vrot.lane.b32.xlu0 %v137, 127
  %v3525 = vpop.permute.xlu0 %3524
  %vm3526 = vcmp.lt.s32.totalorder %v187, 127
  %v3527 = vsel %vm3526, %v3523, %v3525
  %v3528 = vsel %vm3526, %v3521, %v3523
  %v3529 = vsel %vm3526, %v3519, %v3521
  %v3530 = vsel %vm3526, %v3517, %v3519
  %v3531 = vsel %vm3526, %v3515, %v3517
  %v3532 = vsel %vm3526, %v3513, %v3515
  %v3533 = vsel %vm3526, %v3511, %v3513
  %v3534 = vsel %vm3526, %v3509, %v3511
  %v3535 = vsel %vm3526, %v3507, %v3509
  %v3536 = vsel %vm3526, %v3505, %v3507
  %v3537 = vsel %vm3526, %v3503, %v3505
  %v3538 = vsel %vm3526, %v3501, %v3503
  %v3539 = vsel %vm3526, %v3499, %v3501
  %v3540 = vsel %vm3526, %v3497, %v3499
  %v3541 = vsel %vm3526, %v3495, %v3497
  %v3542 = vsel %vm3526, %v3525, %v3495
  %s3543 = scalar_lea.vmem %s2, 133
  %v3544 = vld [vmem:[%s3543] ss:$8 sm:$0xf]
  %v3545 = vld [vmem:[%s3543] ss:$8 sm:$0xf0]
  %v3546 = vor.u32 %v3544, %v3545
  %s3547 = scalar_lea.vmem %s2, 197
  %v3548 = vld [vmem:[%s3547] ss:$8 sm:$0xf]
  %v3549 = vld [vmem:[%s3547] ss:$8 sm:$0xf0]
  %v3550 = vor.u32 %v3548, %v3549
  %v3553 = vlaneseq
  %v3554 = vshrl.u32 %v3553, 7
  %v3555 = vsub.s32 0, %v3554
  %v3556 = vrot.slane %v3546, %v3555
  %v3557 = vlaneseq
  %v3558 = vshrl.u32 %v3557, 7
  %v3559 = vsub.s32 1, %v3558
  %v3560 = vrot.slane %v3546, %v3559
  %v3561 = vlaneseq
  %v3562 = vshrl.u32 %v3561, 7
  %v3563 = vsub.s32 2, %v3562
  %v3564 = vrot.slane %v3546, %v3563
  %v3565 = vlaneseq
  %v3566 = vshrl.u32 %v3565, 7
  %v3567 = vsub.s32 3, %v3566
  %v3568 = vrot.slane %v3546, %v3567
  %v3569 = vlaneseq
  %v3570 = vshrl.u32 %v3569, 7
  %v3571 = vsub.s32 4, %v3570
  %v3572 = vrot.slane %v3546, %v3571
  %v3573 = vlaneseq
  %v3574 = vshrl.u32 %v3573, 7
  %v3575 = vsub.s32 5, %v3574
  %v3576 = vrot.slane %v3546, %v3575
  %v3577 = vlaneseq
  %v3578 = vshrl.u32 %v3577, 7
  %v3579 = vsub.s32 6, %v3578
  %v3580 = vrot.slane %v3546, %v3579
  %v3581 = vlaneseq
  %v3582 = vshrl.u32 %v3581, 7
  %v3583 = vsub.s32 7, %v3582
  %v3584 = vrot.slane %v3546, %v3583
  %v3585 = vlaneseq
  %v3586 = vshrl.u32 %v3585, 7
  %v3587 = vsub.s32 0, %v3586
  %v3588 = vrot.slane %v3550, %v3587
  %v3589 = vlaneseq
  %v3590 = vshrl.u32 %v3589, 7
  %v3591 = vsub.s32 1, %v3590
  %v3592 = vrot.slane %v3550, %v3591
  %v3593 = vlaneseq
  %v3594 = vshrl.u32 %v3593, 7
  %v3595 = vsub.s32 2, %v3594
  %v3596 = vrot.slane %v3550, %v3595
  %v3597 = vlaneseq
  %v3598 = vshrl.u32 %v3597, 7
  %v3599 = vsub.s32 3, %v3598
  %v3600 = vrot.slane %v3550, %v3599
  %v3601 = vlaneseq
  %v3602 = vshrl.u32 %v3601, 7
  %v3603 = vsub.s32 4, %v3602
  %v3604 = vrot.slane %v3550, %v3603
  %v3605 = vlaneseq
  %v3606 = vshrl.u32 %v3605, 7
  %v3607 = vsub.s32 5, %v3606
  %v3608 = vrot.slane %v3550, %v3607
  %v3609 = vlaneseq
  %v3610 = vshrl.u32 %v3609, 7
  %v3611 = vsub.s32 6, %v3610
  %v3612 = vrot.slane %v3550, %v3611
  %v3613 = vlaneseq
  %v3614 = vshrl.u32 %v3613, 7
  %v3615 = vsub.s32 7, %v3614
  %v3616 = vrot.slane %v3550, %v3615
  %v3633 = vmul.f32 %v3541, %v3556
  %v3634 = vmul.f32 %v3540, %v3560
  %v3635 = vmul.f32 %v3539, %v3564
  %v3636 = vmul.f32 %v3538, %v3568
  %v3637 = vmul.f32 %v3537, %v3572
  %v3638 = vmul.f32 %v3536, %v3576
  %v3639 = vmul.f32 %v3535, %v3580
  %v3640 = vmul.f32 %v3534, %v3584
  %v3641 = vmul.f32 %v3533, %v3588
  %v3642 = vmul.f32 %v3532, %v3592
  %v3643 = vmul.f32 %v3531, %v3596
  %v3644 = vmul.f32 %v3530, %v3600
  %v3645 = vmul.f32 %v3529, %v3604
  %v3646 = vmul.f32 %v3528, %v3608
  %v3647 = vmul.f32 %v3527, %v3612
  %v3648 = vmul.f32 %v3542, %v3616
  %v3665 = vcombine.low %v3633, %v3634
  %v3666 = vcombine.low %v3635, %v3636
  %v3667 = vcombine.low %v3637, %v3638
  %v3668 = vcombine.low %v3639, %v3640
  %v3670 = vunpack.c.l.s4 1966171168
  %v3671 = vunpack.c.0.s8 %v3670
  %v3672 = vlaneseq
  %v3673 = vshrl.u32 %v3672, 7
  %v3674 = vsub.s32 %v3671, %v3673
  %v3675 = vrot.slane %v3665, %v3674
  %v3677 = vunpack.c.l.s4 1966171168
  %v3678 = vunpack.c.0.s8 %v3677
  %v3679 = vlaneseq
  %v3680 = vshrl.u32 %v3679, 7
  %v3681 = vsub.s32 %v3678, %v3680
  %v3682 = vrot.slane %v3666, %v3681
  %v3684 = vunpack.c.l.s4 1966171168
  %v3685 = vunpack.c.0.s8 %v3684
  %v3686 = vlaneseq
  %v3687 = vshrl.u32 %v3686, 7
  %v3688 = vsub.s32 %v3685, %v3687
  %v3689 = vrot.slane %v3667, %v3688
  %v3691 = vunpack.c.l.s4 1966171168
  %v3692 = vunpack.c.0.s8 %v3691
  %v3693 = vlaneseq
  %v3694 = vshrl.u32 %v3693, 7
  %v3695 = vsub.s32 %v3692, %v3694
  %v3696 = vrot.slane %v3668, %v3695
  %v3697 = vcombine.low %v3675, %v3682
  %v3698 = vcombine.low %v3689, %v3696
  %v3700 = vunpack.c.l.s4 1966171168
  %v3701 = vunpack.c.0.s8 %v3700
  %v3702 = vlaneseq
  %v3703 = vshrl.u32 %v3702, 7
  %v3704 = vsub.s32 %v3701, %v3703
  %v3705 = vrot.slane %v3697, %v3704
  %v3707 = vunpack.c.l.s4 1966171168
  %v3708 = vunpack.c.0.s8 %v3707
  %v3709 = vlaneseq
  %v3710 = vshrl.u32 %v3709, 7
  %v3711 = vsub.s32 %v3708, %v3710
  %v3712 = vrot.slane %v3698, %v3711
  %v3713 = vcombine.low %v3705, %v3712
  %v3714 = vcombine.low %v3641, %v3642
  %v3715 = vcombine.low %v3643, %v3644
  %v3716 = vcombine.low %v3645, %v3646
  %v3717 = vcombine.low %v3647, %v3648
  %v3719 = vunpack.c.l.s4 1966171168
  %v3720 = vunpack.c.0.s8 %v3719
  %v3721 = vlaneseq
  %v3722 = vshrl.u32 %v3721, 7
  %v3723 = vsub.s32 %v3720, %v3722
  %v3724 = vrot.slane %v3714, %v3723
  %v3726 = vunpack.c.l.s4 1966171168
  %v3727 = vunpack.c.0.s8 %v3726
  %v3728 = vlaneseq
  %v3729 = vshrl.u32 %v3728, 7
  %v3730 = vsub.s32 %v3727, %v3729
  %v3731 = vrot.slane %v3715, %v3730
  %v3733 = vunpack.c.l.s4 1966171168
  %v3734 = vunpack.c.0.s8 %v3733
  %v3735 = vlaneseq
  %v3736 = vshrl.u32 %v3735, 7
  %v3737 = vsub.s32 %v3734, %v3736
  %v3738 = vrot.slane %v3716, %v3737
  %v3740 = vunpack.c.l.s4 1966171168
  %v3741 = vunpack.c.0.s8 %v3740
  %v3742 = vlaneseq
  %v3743 = vshrl.u32 %v3742, 7
  %v3744 = vsub.s32 %v3741, %v3743
  %v3745 = vrot.slane %v3717, %v3744
  %v3746 = vcombine.low %v3724, %v3731
  %v3747 = vcombine.low %v3738, %v3745
  %v3749 = vunpack.c.l.s4 1966171168
  %v3750 = vunpack.c.0.s8 %v3749
  %v3751 = vlaneseq
  %v3752 = vshrl.u32 %v3751, 7
  %v3753 = vsub.s32 %v3750, %v3752
  %v3754 = vrot.slane %v3746, %v3753
  %v3756 = vunpack.c.l.s4 1966171168
  %v3757 = vunpack.c.0.s8 %v3756
  %v3758 = vlaneseq
  %v3759 = vshrl.u32 %v3758, 7
  %v3760 = vsub.s32 %v3757, %v3759
  %v3761 = vrot.slane %v3747, %v3760
  %v3762 = vcombine.low %v3754, %v3761
  %s3765 = scalar_lea.vmem [#allocation2], 133
  %3766 = vst [vmem:[%s3765] ss:$8 sm:$0xf] %v3713
  %3767 = vst [vmem:[%s3765] ss:$8 sm:$0xf0] %v3713
  %s3768 = scalar_lea.vmem [#allocation2], 197
  %3769 = vst [vmem:[%s3768] ss:$8 sm:$0xf] %v3762
  %3770 = vst [vmem:[%s3768] ss:$8 sm:$0xf0] %v3762
  %3771 = vrot.lane.b32.xlu0 %v77, 126
  %v3772 = vpop.permute.xlu0 %3771
  %3773 = vrot.lane.b32.xlu0 %v81, 126
  %v3774 = vpop.permute.xlu0 %3773
  %3775 = vrot.lane.b32.xlu0 %v85, 126
  %v3776 = vpop.permute.xlu0 %3775
  %3777 = vrot.lane.b32.xlu0 %v89, 126
  %v3778 = vpop.permute.xlu0 %3777
  %3779 = vrot.lane.b32.xlu0 %v93, 126
  %v3780 = vpop.permute.xlu0 %3779
  %3781 = vrot.lane.b32.xlu0 %v97, 126
  %v3782 = vpop.permute.xlu0 %3781
  %3783 = vrot.lane.b32.xlu0 %v101, 126
  %v3784 = vpop.permute.xlu0 %3783
  %3785 = vrot.lane.b32.xlu0 %v105, 126
  %v3786 = vpop.permute.xlu0 %3785
  %3787 = vrot.lane.b32.xlu0 %v109, 126
  %v3788 = vpop.permute.xlu0 %3787
  %3789 = vrot.lane.b32.xlu0 %v113, 126
  %v3790 = vpop.permute.xlu0 %3789
  %3791 = vrot.lane.b32.xlu0 %v117, 126
  %v3792 = vpop.permute.xlu0 %3791
  %3793 = vrot.lane.b32.xlu0 %v121, 126
  %v3794 = vpop.permute.xlu0 %3793
  %3795 = vrot.lane.b32.xlu0 %v125, 126
  %v3796 = vpop.permute.xlu0 %3795
  %3797 = vrot.lane.b32.xlu0 %v129, 126
  %v3798 = vpop.permute.xlu0 %3797
  %3799 = vrot.lane.b32.xlu0 %v133, 126
  %v3800 = vpop.permute.xlu0 %3799
  %3801 = vrot.lane.b32.xlu0 %v137, 126
  %v3802 = vpop.permute.xlu0 %3801
  %vm3803 = vcmp.lt.s32.totalorder %v187, 126
  %v3804 = vsel %vm3803, %v3800, %v3802
  %v3805 = vsel %vm3803, %v3798, %v3800
  %v3806 = vsel %vm3803, %v3796, %v3798
  %v3807 = vsel %vm3803, %v3794, %v3796
  %v3808 = vsel %vm3803, %v3792, %v3794
  %v3809 = vsel %vm3803, %v3790, %v3792
  %v3810 = vsel %vm3803, %v3788, %v3790
  %v3811 = vsel %vm3803, %v3786, %v3788
  %v3812 = vsel %vm3803, %v3784, %v3786
  %v3813 = vsel %vm3803, %v3782, %v3784
  %v3814 = vsel %vm3803, %v3780, %v3782
  %v3815 = vsel %vm3803, %v3778, %v3780
  %v3816 = vsel %vm3803, %v3776, %v3778
  %v3817 = vsel %vm3803, %v3774, %v3776
  %v3818 = vsel %vm3803, %v3772, %v3774
  %v3819 = vsel %vm3803, %v3802, %v3772
  %s3820 = scalar_lea.vmem %s2, 134
  %v3821 = vld [vmem:[%s3820] ss:$8 sm:$0xf]
  %v3822 = vld [vmem:[%s3820] ss:$8 sm:$0xf0]
  %v3823 = vor.u32 %v3821, %v3822
  %s3824 = scalar_lea.vmem %s2, 198
  %v3825 = vld [vmem:[%s3824] ss:$8 sm:$0xf]
  %v3826 = vld [vmem:[%s3824] ss:$8 sm:$0xf0]
  %v3827 = vor.u32 %v3825, %v3826
  %v3830 = vlaneseq
  %v3831 = vshrl.u32 %v3830, 7
  %v3832 = vsub.s32 0, %v3831
  %v3833 = vrot.slane %v3823, %v3832
  %v3834 = vlaneseq
  %v3835 = vshrl.u32 %v3834, 7
  %v3836 = vsub.s32 1, %v3835
  %v3837 = vrot.slane %v3823, %v3836
  %v3838 = vlaneseq
  %v3839 = vshrl.u32 %v3838, 7
  %v3840 = vsub.s32 2, %v3839
  %v3841 = vrot.slane %v3823, %v3840
  %v3842 = vlaneseq
  %v3843 = vshrl.u32 %v3842, 7
  %v3844 = vsub.s32 3, %v3843
  %v3845 = vrot.slane %v3823, %v3844
  %v3846 = vlaneseq
  %v3847 = vshrl.u32 %v3846, 7
  %v3848 = vsub.s32 4, %v3847
  %v3849 = vrot.slane %v3823, %v3848
  %v3850 = vlaneseq
  %v3851 = vshrl.u32 %v3850, 7
  %v3852 = vsub.s32 5, %v3851
  %v3853 = vrot.slane %v3823, %v3852
  %v3854 = vlaneseq
  %v3855 = vshrl.u32 %v3854, 7
  %v3856 = vsub.s32 6, %v3855
  %v3857 = vrot.slane %v3823, %v3856
  %v3858 = vlaneseq
  %v3859 = vshrl.u32 %v3858, 7
  %v3860 = vsub.s32 7, %v3859
  %v3861 = vrot.slane %v3823, %v3860
  %v3862 = vlaneseq
  %v3863 = vshrl.u32 %v3862, 7
  %v3864 = vsub.s32 0, %v3863
  %v3865 = vrot.slane %v3827, %v3864
  %v3866 = vlaneseq
  %v3867 = vshrl.u32 %v3866, 7
  %v3868 = vsub.s32 1, %v3867
  %v3869 = vrot.slane %v3827, %v3868
  %v3870 = vlaneseq
  %v3871 = vshrl.u32 %v3870, 7
  %v3872 = vsub.s32 2, %v3871
  %v3873 = vrot.slane %v3827, %v3872
  %v3874 = vlaneseq
  %v3875 = vshrl.u32 %v3874, 7
  %v3876 = vsub.s32 3, %v3875
  %v3877 = vrot.slane %v3827, %v3876
  %v3878 = vlaneseq
  %v3879 = vshrl.u32 %v3878, 7
  %v3880 = vsub.s32 4, %v3879
  %v3881 = vrot.slane %v3827, %v3880
  %v3882 = vlaneseq
  %v3883 = vshrl.u32 %v3882, 7
  %v3884 = vsub.s32 5, %v3883
  %v3885 = vrot.slane %v3827, %v3884
  %v3886 = vlaneseq
  %v3887 = vshrl.u32 %v3886, 7
  %v3888 = vsub.s32 6, %v3887
  %v3889 = vrot.slane %v3827, %v3888
  %v3890 = vlaneseq
  %v3891 = vshrl.u32 %v3890, 7
  %v3892 = vsub.s32 7, %v3891
  %v3893 = vrot.slane %v3827, %v3892
  %v3910 = vmul.f32 %v3818, %v3833
  %v3911 = vmul.f32 %v3817, %v3837
  %v3912 = vmul.f32 %v3816, %v3841
  %v3913 = vmul.f32 %v3815, %v3845
  %v3914 = vmul.f32 %v3814, %v3849
  %v3915 = vmul.f32 %v3813, %v3853
  %v3916 = vmul.f32 %v3812, %v3857
  %v3917 = vmul.f32 %v3811, %v3861
  %v3918 = vmul.f32 %v3810, %v3865
  %v3919 = vmul.f32 %v3809, %v3869
  %v3920 = vmul.f32 %v3808, %v3873
  %v3921 = vmul.f32 %v3807, %v3877
  %v3922 = vmul.f32 %v3806, %v3881
  %v3923 = vmul.f32 %v3805, %v3885
  %v3924 = vmul.f32 %v3804, %v3889
  %v3925 = vmul.f32 %v3819, %v3893
  %v3942 = vcombine.low %v3910, %v3911
  %v3943 = vcombine.low %v3912, %v3913
  %v3944 = vcombine.low %v3914, %v3915
  %v3945 = vcombine.low %v3916, %v3917
  %v3947 = vunpack.c.l.s4 1966171168
  %v3948 = vunpack.c.0.s8 %v3947
  %v3949 = vlaneseq
  %v3950 = vshrl.u32 %v3949, 7
  %v3951 = vsub.s32 %v3948, %v3950
  %v3952 = vrot.slane %v3942, %v3951
  %v3954 = vunpack.c.l.s4 1966171168
  %v3955 = vunpack.c.0.s8 %v3954
  %v3956 = vlaneseq
  %v3957 = vshrl.u32 %v3956, 7
  %v3958 = vsub.s32 %v3955, %v3957
  %v3959 = vrot.slane %v3943, %v3958
  %v3961 = vunpack.c.l.s4 1966171168
  %v3962 = vunpack.c.0.s8 %v3961
  %v3963 = vlaneseq
  %v3964 = vshrl.u32 %v3963, 7
  %v3965 = vsub.s32 %v3962, %v3964
  %v3966 = vrot.slane %v3944, %v3965
  %v3968 = vunpack.c.l.s4 1966171168
  %v3969 = vunpack.c.0.s8 %v3968
  %v3970 = vlaneseq
  %v3971 = vshrl.u32 %v3970, 7
  %v3972 = vsub.s32 %v3969, %v3971
  %v3973 = vrot.slane %v3945, %v3972
  %v3974 = vcombine.low %v3952, %v3959
  %v3975 = vcombine.low %v3966, %v3973
  %v3977 = vunpack.c.l.s4 1966171168
  %v3978 = vunpack.c.0.s8 %v3977
  %v3979 = vlaneseq
  %v3980 = vshrl.u32 %v3979, 7
  %v3981 = vsub.s32 %v3978, %v3980
  %v3982 = vrot.slane %v3974, %v3981
  %v3984 = vunpack.c.l.s4 1966171168
  %v3985 = vunpack.c.0.s8 %v3984
  %v3986 = vlaneseq
  %v3987 = vshrl.u32 %v3986, 7
  %v3988 = vsub.s32 %v3985, %v3987
  %v3989 = vrot.slane %v3975, %v3988
  %v3990 = vcombine.low %v3982, %v3989
  %v3991 = vcombine.low %v3918, %v3919
  %v3992 = vcombine.low %v3920, %v3921
  %v3993 = vcombine.low %v3922, %v3923
  %v3994 = vcombine.low %v3924, %v3925
  %v3996 = vunpack.c.l.s4 1966171168
  %v3997 = vunpack.c.0.s8 %v3996
  %v3998 = vlaneseq
  %v3999 = vshrl.u32 %v3998, 7
  %v4000 = vsub.s32 %v3997, %v3999
  %v4001 = vrot.slane %v3991, %v4000
  %v4003 = vunpack.c.l.s4 1966171168
  %v4004 = vunpack.c.0.s8 %v4003
  %v4005 = vlaneseq
  %v4006 = vshrl.u32 %v4005, 7
  %v4007 = vsub.s32 %v4004, %v4006
  %v4008 = vrot.slane %v3992, %v4007
  %v4010 = vunpack.c.l.s4 1966171168
  %v4011 = vunpack.c.0.s8 %v4010
  %v4012 = vlaneseq
  %v4013 = vshrl.u32 %v4012, 7
  %v4014 = vsub.s32 %v4011, %v4013
  %v4015 = vrot.slane %v3993, %v4014
  %v4017 = vunpack.c.l.s4 1966171168
  %v4018 = vunpack.c.0.s8 %v4017
  %v4019 = vlaneseq
  %v4020 = vshrl.u32 %v4019, 7
  %v4021 = vsub.s32 %v4018, %v4020
  %v4022 = vrot.slane %v3994, %v4021
  %v4023 = vcombine.low %v4001, %v4008
  %v4024 = vcombine.low %v4015, %v4022
  %v4026 = vunpack.c.l.s4 1966171168
  %v4027 = vunpack.c.0.s8 %v4026
  %v4028 = vlaneseq
  %v4029 = vshrl.u32 %v4028, 7
  %v4030 = vsub.s32 %v4027, %v4029
  %v4031 = vrot.slane %v4023, %v4030
  %v4033 = vunpack.c.l.s4 1966171168
  %v4034 = vunpack.c.0.s8 %v4033
  %v4035 = vlaneseq
  %v4036 = vshrl.u32 %v4035, 7
  %v4037 = vsub.s32 %v4034, %v4036
  %v4038 = vrot.slane %v4024, %v4037
  %v4039 = vcombine.low %v4031, %v4038
  %s4042 = scalar_lea.vmem [#allocation2], 134
  %4043 = vst [vmem:[%s4042] ss:$8 sm:$0xf] %v3990
  %4044 = vst [vmem:[%s4042] ss:$8 sm:$0xf0] %v3990
  %s4045 = scalar_lea.vmem [#allocation2], 198
  %4046 = vst [vmem:[%s4045] ss:$8 sm:$0xf] %v4039
  %4047 = vst [vmem:[%s4045] ss:$8 sm:$0xf0] %v4039
  %4048 = vrot.lane.b32.xlu0 %v77, 114
  %v4049 = vpop.permute.xlu0 %4048
  %4050 = vrot.lane.b32.xlu0 %v81, 114
  %v4051 = vpop.permute.xlu0 %4050
  %4052 = vrot.lane.b32.xlu0 %v85, 114
  %v4053 = vpop.permute.xlu0 %4052
  %4054 = vrot.lane.b32.xlu0 %v89, 114
  %v4055 = vpop.permute.xlu0 %4054
  %4056 = vrot.lane.b32.xlu0 %v93, 114
  %v4057 = vpop.permute.xlu0 %4056
  %4058 = vrot.lane.b32.xlu0 %v97, 114
  %v4059 = vpop.permute.xlu0 %4058
  %4060 = vrot.lane.b32.xlu0 %v101, 114
  %v4061 = vpop.permute.xlu0 %4060
  %4062 = vrot.lane.b32.xlu0 %v105, 114
  %v4063 = vpop.permute.xlu0 %4062
  %4064 = vrot.lane.b32.xlu0 %v109, 114
  %v4065 = vpop.permute.xlu0 %4064
  %4066 = vrot.lane.b32.xlu0 %v113, 114
  %v4067 = vpop.permute.xlu0 %4066
  %4068 = vrot.lane.b32.xlu0 %v117, 114
  %v4069 = vpop.permute.xlu0 %4068
  %4070 = vrot.lane.b32.xlu0 %v121, 114
  %v4071 = vpop.permute.xlu0 %4070
  %4072 = vrot.lane.b32.xlu0 %v125, 114
  %v4073 = vpop.permute.xlu0 %4072
  %4074 = vrot.lane.b32.xlu0 %v129, 114
  %v4075 = vpop.permute.xlu0 %4074
  %4076 = vrot.lane.b32.xlu0 %v133, 114
  %v4077 = vpop.permute.xlu0 %4076
  %4078 = vrot.lane.b32.xlu0 %v137, 114
  %v4079 = vpop.permute.xlu0 %4078
  %vm4080 = vcmp.lt.s32.totalorder %v187, 114
  %v4081 = vsel %vm4080, %v4077, %v4079
  %v4082 = vsel %vm4080, %v4075, %v4077
  %v4083 = vsel %vm4080, %v4073, %v4075
  %v4084 = vsel %vm4080, %v4071, %v4073
  %v4085 = vsel %vm4080, %v4069, %v4071
  %v4086 = vsel %vm4080, %v4067, %v4069
  %v4087 = vsel %vm4080, %v4065, %v4067
  %v4088 = vsel %vm4080, %v4063, %v4065
  %v4089 = vsel %vm4080, %v4061, %v4063
  %v4090 = vsel %vm4080, %v4059, %v4061
  %v4091 = vsel %vm4080, %v4057, %v4059
  %v4092 = vsel %vm4080, %v4055, %v4057
  %v4093 = vsel %vm4080, %v4053, %v4055
  %v4094 = vsel %vm4080, %v4051, %v4053
  %v4095 = vsel %vm4080, %v4049, %v4051
  %v4096 = vsel %vm4080, %v4079, %v4049
  %s4097 = scalar_lea.vmem %s2, 135
  %v4098 = vld [vmem:[%s4097] ss:$8 sm:$0xf]
  %v4099 = vld [vmem:[%s4097] ss:$8 sm:$0xf0]
  %v4100 = vor.u32 %v4098, %v4099
  %s4101 = scalar_lea.vmem %s2, 199
  %v4102 = vld [vmem:[%s4101] ss:$8 sm:$0xf]
  %v4103 = vld [vmem:[%s4101] ss:$8 sm:$0xf0]
  %v4104 = vor.u32 %v4102, %v4103
  %v4107 = vlaneseq
  %v4108 = vshrl.u32 %v4107, 7
  %v4109 = vsub.s32 0, %v4108
  %v4110 = vrot.slane %v4100, %v4109
  %v4111 = vlaneseq
  %v4112 = vshrl.u32 %v4111, 7
  %v4113 = vsub.s32 1, %v4112
  %v4114 = vrot.slane %v4100, %v4113
  %v4115 = vlaneseq
  %v4116 = vshrl.u32 %v4115, 7
  %v4117 = vsub.s32 2, %v4116
  %v4118 = vrot.slane %v4100, %v4117
  %v4119 = vlaneseq
  %v4120 = vshrl.u32 %v4119, 7
  %v4121 = vsub.s32 3, %v4120
  %v4122 = vrot.slane %v4100, %v4121
  %v4123 = vlaneseq
  %v4124 = vshrl.u32 %v4123, 7
  %v4125 = vsub.s32 4, %v4124
  %v4126 = vrot.slane %v4100, %v4125
  %v4127 = vlaneseq
  %v4128 = vshrl.u32 %v4127, 7
  %v4129 = vsub.s32 5, %v4128
  %v4130 = vrot.slane %v4100, %v4129
  %v4131 = vlaneseq
  %v4132 = vshrl.u32 %v4131, 7
  %v4133 = vsub.s32 6, %v4132
  %v4134 = vrot.slane %v4100, %v4133
  %v4135 = vlaneseq
  %v4136 = vshrl.u32 %v4135, 7
  %v4137 = vsub.s32 7, %v4136
  %v4138 = vrot.slane %v4100, %v4137
  %v4139 = vlaneseq
  %v4140 = vshrl.u32 %v4139, 7
  %v4141 = vsub.s32 0, %v4140
  %v4142 = vrot.slane %v4104, %v4141
  %v4143 = vlaneseq
  %v4144 = vshrl.u32 %v4143, 7
  %v4145 = vsub.s32 1, %v4144
  %v4146 = vrot.slane %v4104, %v4145
  %v4147 = vlaneseq
  %v4148 = vshrl.u32 %v4147, 7
  %v4149 = vsub.s32 2, %v4148
  %v4150 = vrot.slane %v4104, %v4149
  %v4151 = vlaneseq
  %v4152 = vshrl.u32 %v4151, 7
  %v4153 = vsub.s32 3, %v4152
  %v4154 = vrot.slane %v4104, %v4153
  %v4155 = vlaneseq
  %v4156 = vshrl.u32 %v4155, 7
  %v4157 = vsub.s32 4, %v4156
  %v4158 = vrot.slane %v4104, %v4157
  %v4159 = vlaneseq
  %v4160 = vshrl.u32 %v4159, 7
  %v4161 = vsub.s32 5, %v4160
  %v4162 = vrot.slane %v4104, %v4161
  %v4163 = vlaneseq
  %v4164 = vshrl.u32 %v4163, 7
  %v4165 = vsub.s32 6, %v4164
  %v4166 = vrot.slane %v4104, %v4165
  %v4167 = vlaneseq
  %v4168 = vshrl.u32 %v4167, 7
  %v4169 = vsub.s32 7, %v4168
  %v4170 = vrot.slane %v4104, %v4169
  %v4187 = vmul.f32 %v4095, %v4110
  %v4188 = vmul.f32 %v4094, %v4114
  %v4189 = vmul.f32 %v4093, %v4118
  %v4190 = vmul.f32 %v4092, %v4122
  %v4191 = vmul.f32 %v4091, %v4126
  %v4192 = vmul.f32 %v4090, %v4130
  %v4193 = vmul.f32 %v4089, %v4134
  %v4194 = vmul.f32 %v4088, %v4138
  %v4195 = vmul.f32 %v4087, %v4142
  %v4196 = vmul.f32 %v4086, %v4146
  %v4197 = vmul.f32 %v4085, %v4150
  %v4198 = vmul.f32 %v4084, %v4154
  %v4199 = vmul.f32 %v4083, %v4158
  %v4200 = vmul.f32 %v4082, %v4162
  %v4201 = vmul.f32 %v4081, %v4166
  %v4202 = vmul.f32 %v4096, %v4170
  %v4219 = vcombine.low %v4187, %v4188
  %v4220 = vcombine.low %v4189, %v4190
  %v4221 = vcombine.low %v4191, %v4192
  %v4222 = vcombine.low %v4193, %v4194
  %v4224 = vunpack.c.l.s4 1966171168
  %v4225 = vunpack.c.0.s8 %v4224
  %v4226 = vlaneseq
  %v4227 = vshrl.u32 %v4226, 7
  %v4228 = vsub.s32 %v4225, %v4227
  %v4229 = vrot.slane %v4219, %v4228
  %v4231 = vunpack.c.l.s4 1966171168
  %v4232 = vunpack.c.0.s8 %v4231
  %v4233 = vlaneseq
  %v4234 = vshrl.u32 %v4233, 7
  %v4235 = vsub.s32 %v4232, %v4234
  %v4236 = vrot.slane %v4220, %v4235
  %v4238 = vunpack.c.l.s4 1966171168
  %v4239 = vunpack.c.0.s8 %v4238
  %v4240 = vlaneseq
  %v4241 = vshrl.u32 %v4240, 7
  %v4242 = vsub.s32 %v4239, %v4241
  %v4243 = vrot.slane %v4221, %v4242
  %v4245 = vunpack.c.l.s4 1966171168
  %v4246 = vunpack.c.0.s8 %v4245
  %v4247 = vlaneseq
  %v4248 = vshrl.u32 %v4247, 7
  %v4249 = vsub.s32 %v4246, %v4248
  %v4250 = vrot.slane %v4222, %v4249
  %v4251 = vcombine.low %v4229, %v4236
  %v4252 = vcombine.low %v4243, %v4250
  %v4254 = vunpack.c.l.s4 1966171168
  %v4255 = vunpack.c.0.s8 %v4254
  %v4256 = vlaneseq
  %v4257 = vshrl.u32 %v4256, 7
  %v4258 = vsub.s32 %v4255, %v4257
  %v4259 = vrot.slane %v4251, %v4258
  %v4261 = vunpack.c.l.s4 1966171168
  %v4262 = vunpack.c.0.s8 %v4261
  %v4263 = vlaneseq
  %v4264 = vshrl.u32 %v4263, 7
  %v4265 = vsub.s32 %v4262, %v4264
  %v4266 = vrot.slane %v4252, %v4265
  %v4267 = vcombine.low %v4259, %v4266
  %v4268 = vcombine.low %v4195, %v4196
  %v4269 = vcombine.low %v4197, %v4198
  %v4270 = vcombine.low %v4199, %v4200
  %v4271 = vcombine.low %v4201, %v4202
  %v4273 = vunpack.c.l.s4 1966171168
  %v4274 = vunpack.c.0.s8 %v4273
  %v4275 = vlaneseq
  %v4276 = vshrl.u32 %v4275, 7
  %v4277 = vsub.s32 %v4274, %v4276
  %v4278 = vrot.slane %v4268, %v4277
  %v4280 = vunpack.c.l.s4 1966171168
  %v4281 = vunpack.c.0.s8 %v4280
  %v4282 = vlaneseq
  %v4283 = vshrl.u32 %v4282, 7
  %v4284 = vsub.s32 %v4281, %v4283
  %v4285 = vrot.slane %v4269, %v4284
  %v4287 = vunpack.c.l.s4 1966171168
  %v4288 = vunpack.c.0.s8 %v4287
  %v4289 = vlaneseq
  %v4290 = vshrl.u32 %v4289, 7
  %v4291 = vsub.s32 %v4288, %v4290
  %v4292 = vrot.slane %v4270, %v4291
  %v4294 = vunpack.c.l.s4 1966171168
  %v4295 = vunpack.c.0.s8 %v4294
  %v4296 = vlaneseq
  %v4297 = vshrl.u32 %v4296, 7
  %v4298 = vsub.s32 %v4295, %v4297
  %v4299 = vrot.slane %v4271, %v4298
  %v4300 = vcombine.low %v4278, %v4285
  %v4301 = vcombine.low %v4292, %v4299
  %v4303 = vunpack.c.l.s4 1966171168
  %v4304 = vunpack.c.0.s8 %v4303
  %v4305 = vlaneseq
  %v4306 = vshrl.u32 %v4305, 7
  %v4307 = vsub.s32 %v4304, %v4306
  %v4308 = vrot.slane %v4300, %v4307
  %v4310 = vunpack.c.l.s4 1966171168
  %v4311 = vunpack.c.0.s8 %v4310
  %v4312 = vlaneseq
  %v4313 = vshrl.u32 %v4312, 7
  %v4314 = vsub.s32 %v4311, %v4313
  %v4315 = vrot.slane %v4301, %v4314
  %v4316 = vcombine.low %v4308, %v4315
  %s4319 = scalar_lea.vmem [#allocation2], 135
  %4320 = vst [vmem:[%s4319] ss:$8 sm:$0xf] %v4267
  %4321 = vst [vmem:[%s4319] ss:$8 sm:$0xf0] %v4267
  %s4322 = scalar_lea.vmem [#allocation2], 199
  %4323 = vst [vmem:[%s4322] ss:$8 sm:$0xf] %v4316
  %4324 = vst [vmem:[%s4322] ss:$8 sm:$0xf0] %v4316
  %4325 = vrot.lane.b32.xlu0 %v77, 113
  %v4326 = vpop.permute.xlu0 %4325
  %4327 = vrot.lane.b32.xlu0 %v81, 113
  %v4328 = vpop.permute.xlu0 %4327
  %4329 = vrot.lane.b32.xlu0 %v85, 113
  %v4330 = vpop.permute.xlu0 %4329
  %4331 = vrot.lane.b32.xlu0 %v89, 113
  %v4332 = vpop.permute.xlu0 %4331
  %4333 = vrot.lane.b32.xlu0 %v93, 113
  %v4334 = vpop.permute.xlu0 %4333
  %4335 = vrot.lane.b32.xlu0 %v97, 113
  %v4336 = vpop.permute.xlu0 %4335
  %4337 = vrot.lane.b32.xlu0 %v101, 113
  %v4338 = vpop.permute.xlu0 %4337
  %4339 = vrot.lane.b32.xlu0 %v105, 113
  %v4340 = vpop.permute.xlu0 %4339
  %4341 = vrot.lane.b32.xlu0 %v109, 113
  %v4342 = vpop.permute.xlu0 %4341
  %4343 = vrot.lane.b32.xlu0 %v113, 113
  %v4344 = vpop.permute.xlu0 %4343
  %4345 = vrot.lane.b32.xlu0 %v117, 113
  %v4346 = vpop.permute.xlu0 %4345
  %4347 = vrot.lane.b32.xlu0 %v121, 113
  %v4348 = vpop.permute.xlu0 %4347
  %4349 = vrot.lane.b32.xlu0 %v125, 113
  %v4350 = vpop.permute.xlu0 %4349
  %4351 = vrot.lane.b32.xlu0 %v129, 113
  %v4352 = vpop.permute.xlu0 %4351
  %4353 = vrot.lane.b32.xlu0 %v133, 113
  %v4354 = vpop.permute.xlu0 %4353
  %4355 = vrot.lane.b32.xlu0 %v137, 113
  %v4356 = vpop.permute.xlu0 %4355
  %vm4357 = vcmp.lt.s32.totalorder %v187, 113
  %v4358 = vsel %vm4357, %v4354, %v4356
  %v4359 = vsel %vm4357, %v4352, %v4354
  %v4360 = vsel %vm4357, %v4350, %v4352
  %v4361 = vsel %vm4357, %v4348, %v4350
  %v4362 = vsel %vm4357, %v4346, %v4348
  %v4363 = vsel %vm4357, %v4344, %v4346
  %v4364 = vsel %vm4357, %v4342, %v4344
  %v4365 = vsel %vm4357, %v4340, %v4342
  %v4366 = vsel %vm4357, %v4338, %v4340
  %v4367 = vsel %vm4357, %v4336, %v4338
  %v4368 = vsel %vm4357, %v4334, %v4336
  %v4369 = vsel %vm4357, %v4332, %v4334
  %v4370 = vsel %vm4357, %v4330, %v4332
  %v4371 = vsel %vm4357, %v4328, %v4330
  %v4372 = vsel %vm4357, %v4326, %v4328
  %v4373 = vsel %vm4357, %v4356, %v4326
  %s4374 = scalar_lea.vmem %s2, 256
  %v4375 = vld [vmem:[%s4374] ss:$8 sm:$0xf]
  %v4376 = vld [vmem:[%s4374] ss:$8 sm:$0xf0]
  %v4377 = vor.u32 %v4375, %v4376
  %s4378 = scalar_lea.vmem %s2, 320
  %v4379 = vld [vmem:[%s4378] ss:$8 sm:$0xf]
  %v4380 = vld [vmem:[%s4378] ss:$8 sm:$0xf0]
  %v4381 = vor.u32 %v4379, %v4380
  %v4384 = vlaneseq
  %v4385 = vshrl.u32 %v4384, 7
  %v4386 = vsub.s32 0, %v4385
  %v4387 = vrot.slane %v4377, %v4386
  %v4388 = vlaneseq
  %v4389 = vshrl.u32 %v4388, 7
  %v4390 = vsub.s32 1, %v4389
  %v4391 = vrot.slane %v4377, %v4390
  %v4392 = vlaneseq
  %v4393 = vshrl.u32 %v4392, 7
  %v4394 = vsub.s32 2, %v4393
  %v4395 = vrot.slane %v4377, %v4394
  %v4396 = vlaneseq
  %v4397 = vshrl.u32 %v4396, 7
  %v4398 = vsub.s32 3, %v4397
  %v4399 = vrot.slane %v4377, %v4398
  %v4400 = vlaneseq
  %v4401 = vshrl.u32 %v4400, 7
  %v4402 = vsub.s32 4, %v4401
  %v4403 = vrot.slane %v4377, %v4402
  %v4404 = vlaneseq
  %v4405 = vshrl.u32 %v4404, 7
  %v4406 = vsub.s32 5, %v4405
  %v4407 = vrot.slane %v4377, %v4406
  %v4408 = vlaneseq
  %v4409 = vshrl.u32 %v4408, 7
  %v4410 = vsub.s32 6, %v4409
  %v4411 = vrot.slane %v4377, %v4410
  %v4412 = vlaneseq
  %v4413 = vshrl.u32 %v4412, 7
  %v4414 = vsub.s32 7, %v4413
  %v4415 = vrot.slane %v4377, %v4414
  %v4416 = vlaneseq
  %v4417 = vshrl.u32 %v4416, 7
  %v4418 = vsub.s32 0, %v4417
  %v4419 = vrot.slane %v4381, %v4418
  %v4420 = vlaneseq
  %v4421 = vshrl.u32 %v4420, 7
  %v4422 = vsub.s32 1, %v4421
  %v4423 = vrot.slane %v4381, %v4422
  %v4424 = vlaneseq
  %v4425 = vshrl.u32 %v4424, 7
  %v4426 = vsub.s32 2, %v4425
  %v4427 = vrot.slane %v4381, %v4426
  %v4428 = vlaneseq
  %v4429 = vshrl.u32 %v4428, 7
  %v4430 = vsub.s32 3, %v4429
  %v4431 = vrot.slane %v4381, %v4430
  %v4432 = vlaneseq
  %v4433 = vshrl.u32 %v4432, 7
  %v4434 = vsub.s32 4, %v4433
  %v4435 = vrot.slane %v4381, %v4434
  %v4436 = vlaneseq
  %v4437 = vshrl.u32 %v4436, 7
  %v4438 = vsub.s32 5, %v4437
  %v4439 = vrot.slane %v4381, %v4438
  %v4440 = vlaneseq
  %v4441 = vshrl.u32 %v4440, 7
  %v4442 = vsub.s32 6, %v4441
  %v4443 = vrot.slane %v4381, %v4442
  %v4444 = vlaneseq
  %v4445 = vshrl.u32 %v4444, 7
  %v4446 = vsub.s32 7, %v4445
  %v4447 = vrot.slane %v4381, %v4446
  %v4464 = vmul.f32 %v4372, %v4387
  %v4465 = vmul.f32 %v4371, %v4391
  %v4466 = vmul.f32 %v4370, %v4395
  %v4467 = vmul.f32 %v4369, %v4399
  %v4468 = vmul.f32 %v4368, %v4403
  %v4469 = vmul.f32 %v4367, %v4407
  %v4470 = vmul.f32 %v4366, %v4411
  %v4471 = vmul.f32 %v4365, %v4415
  %v4472 = vmul.f32 %v4364, %v4419
  %v4473 = vmul.f32 %v4363, %v4423
  %v4474 = vmul.f32 %v4362, %v4427
  %v4475 = vmul.f32 %v4361, %v4431
  %v4476 = vmul.f32 %v4360, %v4435
  %v4477 = vmul.f32 %v4359, %v4439
  %v4478 = vmul.f32 %v4358, %v4443
  %v4479 = vmul.f32 %v4373, %v4447
  %v4496 = vcombine.low %v4464, %v4465
  %v4497 = vcombine.low %v4466, %v4467
  %v4498 = vcombine.low %v4468, %v4469
  %v4499 = vcombine.low %v4470, %v4471
  %v4501 = vunpack.c.l.s4 1966171168
  %v4502 = vunpack.c.0.s8 %v4501
  %v4503 = vlaneseq
  %v4504 = vshrl.u32 %v4503, 7
  %v4505 = vsub.s32 %v4502, %v4504
  %v4506 = vrot.slane %v4496, %v4505
  %v4508 = vunpack.c.l.s4 1966171168
  %v4509 = vunpack.c.0.s8 %v4508
  %v4510 = vlaneseq
  %v4511 = vshrl.u32 %v4510, 7
  %v4512 = vsub.s32 %v4509, %v4511
  %v4513 = vrot.slane %v4497, %v4512
  %v4515 = vunpack.c.l.s4 1966171168
  %v4516 = vunpack.c.0.s8 %v4515
  %v4517 = vlaneseq
  %v4518 = vshrl.u32 %v4517, 7
  %v4519 = vsub.s32 %v4516, %v4518
  %v4520 = vrot.slane %v4498, %v4519
  %v4522 = vunpack.c.l.s4 1966171168
  %v4523 = vunpack.c.0.s8 %v4522
  %v4524 = vlaneseq
  %v4525 = vshrl.u32 %v4524, 7
  %v4526 = vsub.s32 %v4523, %v4525
  %v4527 = vrot.slane %v4499, %v4526
  %v4528 = vcombine.low %v4506, %v4513
  %v4529 = vcombine.low %v4520, %v4527
  %v4531 = vunpack.c.l.s4 1966171168
  %v4532 = vunpack.c.0.s8 %v4531
  %v4533 = vlaneseq
  %v4534 = vshrl.u32 %v4533, 7
  %v4535 = vsub.s32 %v4532, %v4534
  %v4536 = vrot.slane %v4528, %v4535
  %v4538 = vunpack.c.l.s4 1966171168
  %v4539 = vunpack.c.0.s8 %v4538
  %v4540 = vlaneseq
  %v4541 = vshrl.u32 %v4540, 7
  %v4542 = vsub.s32 %v4539, %v4541
  %v4543 = vrot.slane %v4529, %v4542
  %v4544 = vcombine.low %v4536, %v4543
  %v4545 = vcombine.low %v4472, %v4473
  %v4546 = vcombine.low %v4474, %v4475
  %v4547 = vcombine.low %v4476, %v4477
  %v4548 = vcombine.low %v4478, %v4479
  %v4550 = vunpack.c.l.s4 1966171168
  %v4551 = vunpack.c.0.s8 %v4550
  %v4552 = vlaneseq
  %v4553 = vshrl.u32 %v4552, 7
  %v4554 = vsub.s32 %v4551, %v4553
  %v4555 = vrot.slane %v4545, %v4554
  %v4557 = vunpack.c.l.s4 1966171168
  %v4558 = vunpack.c.0.s8 %v4557
  %v4559 = vlaneseq
  %v4560 = vshrl.u32 %v4559, 7
  %v4561 = vsub.s32 %v4558, %v4560
  %v4562 = vrot.slane %v4546, %v4561
  %v4564 = vunpack.c.l.s4 1966171168
  %v4565 = vunpack.c.0.s8 %v4564
  %v4566 = vlaneseq
  %v4567 = vshrl.u32 %v4566, 7
  %v4568 = vsub.s32 %v4565, %v4567
  %v4569 = vrot.slane %v4547, %v4568
  %v4571 = vunpack.c.l.s4 1966171168
  %v4572 = vunpack.c.0.s8 %v4571
  %v4573 = vlaneseq
  %v4574 = vshrl.u32 %v4573, 7
  %v4575 = vsub.s32 %v4572, %v4574
  %v4576 = vrot.slane %v4548, %v4575
  %v4577 = vcombine.low %v4555, %v4562
  %v4578 = vcombine.low %v4569, %v4576
  %v4580 = vunpack.c.l.s4 1966171168
  %v4581 = vunpack.c.0.s8 %v4580
  %v4582 = vlaneseq
  %v4583 = vshrl.u32 %v4582, 7
  %v4584 = vsub.s32 %v4581, %v4583
  %v4585 = vrot.slane %v4577, %v4584
  %v4587 = vunpack.c.l.s4 1966171168
  %v4588 = vunpack.c.0.s8 %v4587
  %v4589 = vlaneseq
  %v4590 = vshrl.u32 %v4589, 7
  %v4591 = vsub.s32 %v4588, %v4590
  %v4592 = vrot.slane %v4578, %v4591
  %v4593 = vcombine.low %v4585, %v4592
  %s4596 = scalar_lea.vmem [#allocation2], 256
  %4597 = vst [vmem:[%s4596] ss:$8 sm:$0xf] %v4544
  %4598 = vst [vmem:[%s4596] ss:$8 sm:$0xf0] %v4544
  %s4599 = scalar_lea.vmem [#allocation2], 320
  %4600 = vst [vmem:[%s4599] ss:$8 sm:$0xf] %v4593
  %4601 = vst [vmem:[%s4599] ss:$8 sm:$0xf0] %v4593
  %4602 = vrot.lane.b32.xlu0 %v77, 112
  %v4603 = vpop.permute.xlu0 %4602
  %4604 = vrot.lane.b32.xlu0 %v81, 112
  %v4605 = vpop.permute.xlu0 %4604
  %4606 = vrot.lane.b32.xlu0 %v85, 112
  %v4607 = vpop.permute.xlu0 %4606
  %4608 = vrot.lane.b32.xlu0 %v89, 112
  %v4609 = vpop.permute.xlu0 %4608
  %4610 = vrot.lane.b32.xlu0 %v93, 112
  %v4611 = vpop.permute.xlu0 %4610
  %4612 = vrot.lane.b32.xlu0 %v97, 112
  %v4613 = vpop.permute.xlu0 %4612
  %4614 = vrot.lane.b32.xlu0 %v101, 112
  %v4615 = vpop.permute.xlu0 %4614
  %4616 = vrot.lane.b32.xlu0 %v105, 112
  %v4617 = vpop.permute.xlu0 %4616
  %4618 = vrot.lane.b32.xlu0 %v109, 112
  %v4619 = vpop.permute.xlu0 %4618
  %4620 = vrot.lane.b32.xlu0 %v113, 112
  %v4621 = vpop.permute.xlu0 %4620
  %4622 = vrot.lane.b32.xlu0 %v117, 112
  %v4623 = vpop.permute.xlu0 %4622
  %4624 = vrot.lane.b32.xlu0 %v121, 112
  %v4625 = vpop.permute.xlu0 %4624
  %4626 = vrot.lane.b32.xlu0 %v125, 112
  %v4627 = vpop.permute.xlu0 %4626
  %4628 = vrot.lane.b32.xlu0 %v129, 112
  %v4629 = vpop.permute.xlu0 %4628
  %4630 = vrot.lane.b32.xlu0 %v133, 112
  %v4631 = vpop.permute.xlu0 %4630
  %4632 = vrot.lane.b32.xlu0 %v137, 112
  %v4633 = vpop.permute.xlu0 %4632
  %vm4634 = vcmp.lt.s32.totalorder %v187, 112
  %v4635 = vsel %vm4634, %v4631, %v4633
  %v4636 = vsel %vm4634, %v4629, %v4631
  %v4637 = vsel %vm4634, %v4627, %v4629
  %v4638 = vsel %vm4634, %v4625, %v4627
  %v4639 = vsel %vm4634, %v4623, %v4625
  %v4640 = vsel %vm4634, %v4621, %v4623
  %v4641 = vsel %vm4634, %v4619, %v4621
  %v4642 = vsel %vm4634, %v4617, %v4619
  %v4643 = vsel %vm4634, %v4615, %v4617
  %v4644 = vsel %vm4634, %v4613, %v4615
  %v4645 = vsel %vm4634, %v4611, %v4613
  %v4646 = vsel %vm4634, %v4609, %v4611
  %v4647 = vsel %vm4634, %v4607, %v4609
  %v4648 = vsel %vm4634, %v4605, %v4607
  %v4649 = vsel %vm4634, %v4603, %v4605
  %v4650 = vsel %vm4634, %v4633, %v4603
  %s4651 = scalar_lea.vmem %s2, 257
  %v4652 = vld [vmem:[%s4651] ss:$8 sm:$0xf]
  %v4653 = vld [vmem:[%s4651] ss:$8 sm:$0xf0]
  %v4654 = vor.u32 %v4652, %v4653
  %s4655 = scalar_lea.vmem %s2, 321
  %v4656 = vld [vmem:[%s4655] ss:$8 sm:$0xf]
  %v4657 = vld [vmem:[%s4655] ss:$8 sm:$0xf0]
  %v4658 = vor.u32 %v4656, %v4657
  %v4661 = vlaneseq
  %v4662 = vshrl.u32 %v4661, 7
  %v4663 = vsub.s32 0, %v4662
  %v4664 = vrot.slane %v4654, %v4663
  %v4665 = vlaneseq
  %v4666 = vshrl.u32 %v4665, 7
  %v4667 = vsub.s32 1, %v4666
  %v4668 = vrot.slane %v4654, %v4667
  %v4669 = vlaneseq
  %v4670 = vshrl.u32 %v4669, 7
  %v4671 = vsub.s32 2, %v4670
  %v4672 = vrot.slane %v4654, %v4671
  %v4673 = vlaneseq
  %v4674 = vshrl.u32 %v4673, 7
  %v4675 = vsub.s32 3, %v4674
  %v4676 = vrot.slane %v4654, %v4675
  %v4677 = vlaneseq
  %v4678 = vshrl.u32 %v4677, 7
  %v4679 = vsub.s32 4, %v4678
  %v4680 = vrot.slane %v4654, %v4679
  %v4681 = vlaneseq
  %v4682 = vshrl.u32 %v4681, 7
  %v4683 = vsub.s32 5, %v4682
  %v4684 = vrot.slane %v4654, %v4683
  %v4685 = vlaneseq
  %v4686 = vshrl.u32 %v4685, 7
  %v4687 = vsub.s32 6, %v4686
  %v4688 = vrot.slane %v4654, %v4687
  %v4689 = vlaneseq
  %v4690 = vshrl.u32 %v4689, 7
  %v4691 = vsub.s32 7, %v4690
  %v4692 = vrot.slane %v4654, %v4691
  %v4693 = vlaneseq
  %v4694 = vshrl.u32 %v4693, 7
  %v4695 = vsub.s32 0, %v4694
  %v4696 = vrot.slane %v4658, %v4695
  %v4697 = vlaneseq
  %v4698 = vshrl.u32 %v4697, 7
  %v4699 = vsub.s32 1, %v4698
  %v4700 = vrot.slane %v4658, %v4699
  %v4701 = vlaneseq
  %v4702 = vshrl.u32 %v4701, 7
  %v4703 = vsub.s32 2, %v4702
  %v4704 = vrot.slane %v4658, %v4703
  %v4705 = vlaneseq
  %v4706 = vshrl.u32 %v4705, 7
  %v4707 = vsub.s32 3, %v4706
  %v4708 = vrot.slane %v4658, %v4707
  %v4709 = vlaneseq
  %v4710 = vshrl.u32 %v4709, 7
  %v4711 = vsub.s32 4, %v4710
  %v4712 = vrot.slane %v4658, %v4711
  %v4713 = vlaneseq
  %v4714 = vshrl.u32 %v4713, 7
  %v4715 = vsub.s32 5, %v4714
  %v4716 = vrot.slane %v4658, %v4715
  %v4717 = vlaneseq
  %v4718 = vshrl.u32 %v4717, 7
  %v4719 = vsub.s32 6, %v4718
  %v4720 = vrot.slane %v4658, %v4719
  %v4721 = vlaneseq
  %v4722 = vshrl.u32 %v4721, 7
  %v4723 = vsub.s32 7, %v4722
  %v4724 = vrot.slane %v4658, %v4723
  %v4741 = vmul.f32 %v4649, %v4664
  %v4742 = vmul.f32 %v4648, %v4668
  %v4743 = vmul.f32 %v4647, %v4672
  %v4744 = vmul.f32 %v4646, %v4676
  %v4745 = vmul.f32 %v4645, %v4680
  %v4746 = vmul.f32 %v4644, %v4684
  %v4747 = vmul.f32 %v4643, %v4688
  %v4748 = vmul.f32 %v4642, %v4692
  %v4749 = vmul.f32 %v4641, %v4696
  %v4750 = vmul.f32 %v4640, %v4700
  %v4751 = vmul.f32 %v4639, %v4704
  %v4752 = vmul.f32 %v4638, %v4708
  %v4753 = vmul.f32 %v4637, %v4712
  %v4754 = vmul.f32 %v4636, %v4716
  %v4755 = vmul.f32 %v4635, %v4720
  %v4756 = vmul.f32 %v4650, %v4724
  %v4773 = vcombine.low %v4741, %v4742
  %v4774 = vcombine.low %v4743, %v4744
  %v4775 = vcombine.low %v4745, %v4746
  %v4776 = vcombine.low %v4747, %v4748
  %v4778 = vunpack.c.l.s4 1966171168
  %v4779 = vunpack.c.0.s8 %v4778
  %v4780 = vlaneseq
  %v4781 = vshrl.u32 %v4780, 7
  %v4782 = vsub.s32 %v4779, %v4781
  %v4783 = vrot.slane %v4773, %v4782
  %v4785 = vunpack.c.l.s4 1966171168
  %v4786 = vunpack.c.0.s8 %v4785
  %v4787 = vlaneseq
  %v4788 = vshrl.u32 %v4787, 7
  %v4789 = vsub.s32 %v4786, %v4788
  %v4790 = vrot.slane %v4774, %v4789
  %v4792 = vunpack.c.l.s4 1966171168
  %v4793 = vunpack.c.0.s8 %v4792
  %v4794 = vlaneseq
  %v4795 = vshrl.u32 %v4794, 7
  %v4796 = vsub.s32 %v4793, %v4795
  %v4797 = vrot.slane %v4775, %v4796
  %v4799 = vunpack.c.l.s4 1966171168
  %v4800 = vunpack.c.0.s8 %v4799
  %v4801 = vlaneseq
  %v4802 = vshrl.u32 %v4801, 7
  %v4803 = vsub.s32 %v4800, %v4802
  %v4804 = vrot.slane %v4776, %v4803
  %v4805 = vcombine.low %v4783, %v4790
  %v4806 = vcombine.low %v4797, %v4804
  %v4808 = vunpack.c.l.s4 1966171168
  %v4809 = vunpack.c.0.s8 %v4808
  %v4810 = vlaneseq
  %v4811 = vshrl.u32 %v4810, 7
  %v4812 = vsub.s32 %v4809, %v4811
  %v4813 = vrot.slane %v4805, %v4812
  %v4815 = vunpack.c.l.s4 1966171168
  %v4816 = vunpack.c.0.s8 %v4815
  %v4817 = vlaneseq
  %v4818 = vshrl.u32 %v4817, 7
  %v4819 = vsub.s32 %v4816, %v4818
  %v4820 = vrot.slane %v4806, %v4819
  %v4821 = vcombine.low %v4813, %v4820
  %v4822 = vcombine.low %v4749, %v4750
  %v4823 = vcombine.low %v4751, %v4752
  %v4824 = vcombine.low %v4753, %v4754
  %v4825 = vcombine.low %v4755, %v4756
  %v4827 = vunpack.c.l.s4 1966171168
  %v4828 = vunpack.c.0.s8 %v4827
  %v4829 = vlaneseq
  %v4830 = vshrl.u32 %v4829, 7
  %v4831 = vsub.s32 %v4828, %v4830
  %v4832 = vrot.slane %v4822, %v4831
  %v4834 = vunpack.c.l.s4 1966171168
  %v4835 = vunpack.c.0.s8 %v4834
  %v4836 = vlaneseq
  %v4837 = vshrl.u32 %v4836, 7
  %v4838 = vsub.s32 %v4835, %v4837
  %v4839 = vrot.slane %v4823, %v4838
  %v4841 = vunpack.c.l.s4 1966171168
  %v4842 = vunpack.c.0.s8 %v4841
  %v4843 = vlaneseq
  %v4844 = vshrl.u32 %v4843, 7
  %v4845 = vsub.s32 %v4842, %v4844
  %v4846 = vrot.slane %v4824, %v4845
  %v4848 = vunpack.c.l.s4 1966171168
  %v4849 = vunpack.c.0.s8 %v4848
  %v4850 = vlaneseq
  %v4851 = vshrl.u32 %v4850, 7
  %v4852 = vsub.s32 %v4849, %v4851
  %v4853 = vrot.slane %v4825, %v4852
  %v4854 = vcombine.low %v4832, %v4839
  %v4855 = vcombine.low %v4846, %v4853
  %v4857 = vunpack.c.l.s4 1966171168
  %v4858 = vunpack.c.0.s8 %v4857
  %v4859 = vlaneseq
  %v4860 = vshrl.u32 %v4859, 7
  %v4861 = vsub.s32 %v4858, %v4860
  %v4862 = vrot.slane %v4854, %v4861
  %v4864 = vunpack.c.l.s4 1966171168
  %v4865 = vunpack.c.0.s8 %v4864
  %v4866 = vlaneseq
  %v4867 = vshrl.u32 %v4866, 7
  %v4868 = vsub.s32 %v4865, %v4867
  %v4869 = vrot.slane %v4855, %v4868
  %v4870 = vcombine.low %v4862, %v4869
  %s4873 = scalar_lea.vmem [#allocation2], 257
  %4874 = vst [vmem:[%s4873] ss:$8 sm:$0xf] %v4821
  %4875 = vst [vmem:[%s4873] ss:$8 sm:$0xf0] %v4821
  %s4876 = scalar_lea.vmem [#allocation2], 321
  %4877 = vst [vmem:[%s4876] ss:$8 sm:$0xf] %v4870
  %4878 = vst [vmem:[%s4876] ss:$8 sm:$0xf0] %v4870
  %4879 = vrot.lane.b32.xlu0 %v77, 111
  %v4880 = vpop.permute.xlu0 %4879
  %4881 = vrot.lane.b32.xlu0 %v81, 111
  %v4882 = vpop.permute.xlu0 %4881
  %4883 = vrot.lane.b32.xlu0 %v85, 111
  %v4884 = vpop.permute.xlu0 %4883
  %4885 = vrot.lane.b32.xlu0 %v89, 111
  %v4886 = vpop.permute.xlu0 %4885
  %4887 = vrot.lane.b32.xlu0 %v93, 111
  %v4888 = vpop.permute.xlu0 %4887
  %4889 = vrot.lane.b32.xlu0 %v97, 111
  %v4890 = vpop.permute.xlu0 %4889
  %4891 = vrot.lane.b32.xlu0 %v101, 111
  %v4892 = vpop.permute.xlu0 %4891
  %4893 = vrot.lane.b32.xlu0 %v105, 111
  %v4894 = vpop.permute.xlu0 %4893
  %4895 = vrot.lane.b32.xlu0 %v109, 111
  %v4896 = vpop.permute.xlu0 %4895
  %4897 = vrot.lane.b32.xlu0 %v113, 111
  %v4898 = vpop.permute.xlu0 %4897
  %4899 = vrot.lane.b32.xlu0 %v117, 111
  %v4900 = vpop.permute.xlu0 %4899
  %4901 = vrot.lane.b32.xlu0 %v121, 111
  %v4902 = vpop.permute.xlu0 %4901
  %4903 = vrot.lane.b32.xlu0 %v125, 111
  %v4904 = vpop.permute.xlu0 %4903
  %4905 = vrot.lane.b32.xlu0 %v129, 111
  %v4906 = vpop.permute.xlu0 %4905
  %4907 = vrot.lane.b32.xlu0 %v133, 111
  %v4908 = vpop.permute.xlu0 %4907
  %4909 = vrot.lane.b32.xlu0 %v137, 111
  %v4910 = vpop.permute.xlu0 %4909
  %vm4911 = vcmp.lt.s32.totalorder %v187, 111
  %v4912 = vsel %vm4911, %v4908, %v4910
  %v4913 = vsel %vm4911, %v4906, %v4908
  %v4914 = vsel %vm4911, %v4904, %v4906
  %v4915 = vsel %vm4911, %v4902, %v4904
  %v4916 = vsel %vm4911, %v4900, %v4902
  %v4917 = vsel %vm4911, %v4898, %v4900
  %v4918 = vsel %vm4911, %v4896, %v4898
  %v4919 = vsel %vm4911, %v4894, %v4896
  %v4920 = vsel %vm4911, %v4892, %v4894
  %v4921 = vsel %vm4911, %v4890, %v4892
  %v4922 = vsel %vm4911, %v4888, %v4890
  %v4923 = vsel %vm4911, %v4886, %v4888
  %v4924 = vsel %vm4911, %v4884, %v4886
  %v4925 = vsel %vm4911, %v4882, %v4884
  %v4926 = vsel %vm4911, %v4880, %v4882
  %v4927 = vsel %vm4911, %v4910, %v4880
  %s4928 = scalar_lea.vmem %s2, 258
  %v4929 = vld [vmem:[%s4928] ss:$8 sm:$0xf]
  %v4930 = vld [vmem:[%s4928] ss:$8 sm:$0xf0]
  %v4931 = vor.u32 %v4929, %v4930
  %s4932 = scalar_lea.vmem %s2, 322
  %v4933 = vld [vmem:[%s4932] ss:$8 sm:$0xf]
  %v4934 = vld [vmem:[%s4932] ss:$8 sm:$0xf0]
  %v4935 = vor.u32 %v4933, %v4934
  %v4938 = vlaneseq
  %v4939 = vshrl.u32 %v4938, 7
  %v4940 = vsub.s32 0, %v4939
  %v4941 = vrot.slane %v4931, %v4940
  %v4942 = vlaneseq
  %v4943 = vshrl.u32 %v4942, 7
  %v4944 = vsub.s32 1, %v4943
  %v4945 = vrot.slane %v4931, %v4944
  %v4946 = vlaneseq
  %v4947 = vshrl.u32 %v4946, 7
  %v4948 = vsub.s32 2, %v4947
  %v4949 = vrot.slane %v4931, %v4948
  %v4950 = vlaneseq
  %v4951 = vshrl.u32 %v4950, 7
  %v4952 = vsub.s32 3, %v4951
  %v4953 = vrot.slane %v4931, %v4952
  %v4954 = vlaneseq
  %v4955 = vshrl.u32 %v4954, 7
  %v4956 = vsub.s32 4, %v4955
  %v4957 = vrot.slane %v4931, %v4956
  %v4958 = vlaneseq
  %v4959 = vshrl.u32 %v4958, 7
  %v4960 = vsub.s32 5, %v4959
  %v4961 = vrot.slane %v4931, %v4960
  %v4962 = vlaneseq
  %v4963 = vshrl.u32 %v4962, 7
  %v4964 = vsub.s32 6, %v4963
  %v4965 = vrot.slane %v4931, %v4964
  %v4966 = vlaneseq
  %v4967 = vshrl.u32 %v4966, 7
  %v4968 = vsub.s32 7, %v4967
  %v4969 = vrot.slane %v4931, %v4968
  %v4970 = vlaneseq
  %v4971 = vshrl.u32 %v4970, 7
  %v4972 = vsub.s32 0, %v4971
  %v4973 = vrot.slane %v4935, %v4972
  %v4974 = vlaneseq
  %v4975 = vshrl.u32 %v4974, 7
  %v4976 = vsub.s32 1, %v4975
  %v4977 = vrot.slane %v4935, %v4976
  %v4978 = vlaneseq
  %v4979 = vshrl.u32 %v4978, 7
  %v4980 = vsub.s32 2, %v4979
  %v4981 = vrot.slane %v4935, %v4980
  %v4982 = vlaneseq
  %v4983 = vshrl.u32 %v4982, 7
  %v4984 = vsub.s32 3, %v4983
  %v4985 = vrot.slane %v4935, %v4984
  %v4986 = vlaneseq
  %v4987 = vshrl.u32 %v4986, 7
  %v4988 = vsub.s32 4, %v4987
  %v4989 = vrot.slane %v4935, %v4988
  %v4990 = vlaneseq
  %v4991 = vshrl.u32 %v4990, 7
  %v4992 = vsub.s32 5, %v4991
  %v4993 = vrot.slane %v4935, %v4992
  %v4994 = vlaneseq
  %v4995 = vshrl.u32 %v4994, 7
  %v4996 = vsub.s32 6, %v4995
  %v4997 = vrot.slane %v4935, %v4996
  %v4998 = vlaneseq
  %v4999 = vshrl.u32 %v4998, 7
  %v5000 = vsub.s32 7, %v4999
  %v5001 = vrot.slane %v4935, %v5000
  %v5018 = vmul.f32 %v4926, %v4941
  %v5019 = vmul.f32 %v4925, %v4945
  %v5020 = vmul.f32 %v4924, %v4949
  %v5021 = vmul.f32 %v4923, %v4953
  %v5022 = vmul.f32 %v4922, %v4957
  %v5023 = vmul.f32 %v4921, %v4961
  %v5024 = vmul.f32 %v4920, %v4965
  %v5025 = vmul.f32 %v4919, %v4969
  %v5026 = vmul.f32 %v4918, %v4973
  %v5027 = vmul.f32 %v4917, %v4977
  %v5028 = vmul.f32 %v4916, %v4981
  %v5029 = vmul.f32 %v4915, %v4985
  %v5030 = vmul.f32 %v4914, %v4989
  %v5031 = vmul.f32 %v4913, %v4993
  %v5032 = vmul.f32 %v4912, %v4997
  %v5033 = vmul.f32 %v4927, %v5001
  %v5050 = vcombine.low %v5018, %v5019
  %v5051 = vcombine.low %v5020, %v5021
  %v5052 = vcombine.low %v5022, %v5023
  %v5053 = vcombine.low %v5024, %v5025
  %v5055 = vunpack.c.l.s4 1966171168
  %v5056 = vunpack.c.0.s8 %v5055
  %v5057 = vlaneseq
  %v5058 = vshrl.u32 %v5057, 7
  %v5059 = vsub.s32 %v5056, %v5058
  %v5060 = vrot.slane %v5050, %v5059
  %v5062 = vunpack.c.l.s4 1966171168
  %v5063 = vunpack.c.0.s8 %v5062
  %v5064 = vlaneseq
  %v5065 = vshrl.u32 %v5064, 7
  %v5066 = vsub.s32 %v5063, %v5065
  %v5067 = vrot.slane %v5051, %v5066
  %v5069 = vunpack.c.l.s4 1966171168
  %v5070 = vunpack.c.0.s8 %v5069
  %v5071 = vlaneseq
  %v5072 = vshrl.u32 %v5071, 7
  %v5073 = vsub.s32 %v5070, %v5072
  %v5074 = vrot.slane %v5052, %v5073
  %v5076 = vunpack.c.l.s4 1966171168
  %v5077 = vunpack.c.0.s8 %v5076
  %v5078 = vlaneseq
  %v5079 = vshrl.u32 %v5078, 7
  %v5080 = vsub.s32 %v5077, %v5079
  %v5081 = vrot.slane %v5053, %v5080
  %v5082 = vcombine.low %v5060, %v5067
  %v5083 = vcombine.low %v5074, %v5081
  %v5085 = vunpack.c.l.s4 1966171168
  %v5086 = vunpack.c.0.s8 %v5085
  %v5087 = vlaneseq
  %v5088 = vshrl.u32 %v5087, 7
  %v5089 = vsub.s32 %v5086, %v5088
  %v5090 = vrot.slane %v5082, %v5089
  %v5092 = vunpack.c.l.s4 1966171168
  %v5093 = vunpack.c.0.s8 %v5092
  %v5094 = vlaneseq
  %v5095 = vshrl.u32 %v5094, 7
  %v5096 = vsub.s32 %v5093, %v5095
  %v5097 = vrot.slane %v5083, %v5096
  %v5098 = vcombine.low %v5090, %v5097
  %v5099 = vcombine.low %v5026, %v5027
  %v5100 = vcombine.low %v5028, %v5029
  %v5101 = vcombine.low %v5030, %v5031
  %v5102 = vcombine.low %v5032, %v5033
  %v5104 = vunpack.c.l.s4 1966171168
  %v5105 = vunpack.c.0.s8 %v5104
  %v5106 = vlaneseq
  %v5107 = vshrl.u32 %v5106, 7
  %v5108 = vsub.s32 %v5105, %v5107
  %v5109 = vrot.slane %v5099, %v5108
  %v5111 = vunpack.c.l.s4 1966171168
  %v5112 = vunpack.c.0.s8 %v5111
  %v5113 = vlaneseq
  %v5114 = vshrl.u32 %v5113, 7
  %v5115 = vsub.s32 %v5112, %v5114
  %v5116 = vrot.slane %v5100, %v5115
  %v5118 = vunpack.c.l.s4 1966171168
  %v5119 = vunpack.c.0.s8 %v5118
  %v5120 = vlaneseq
  %v5121 = vshrl.u32 %v5120, 7
  %v5122 = vsub.s32 %v5119, %v5121
  %v5123 = vrot.slane %v5101, %v5122
  %v5125 = vunpack.c.l.s4 1966171168
  %v5126 = vunpack.c.0.s8 %v5125
  %v5127 = vlaneseq
  %v5128 = vshrl.u32 %v5127, 7
  %v5129 = vsub.s32 %v5126, %v5128
  %v5130 = vrot.slane %v5102, %v5129
  %v5131 = vcombine.low %v5109, %v5116
  %v5132 = vcombine.low %v5123, %v5130
  %v5134 = vunpack.c.l.s4 1966171168
  %v5135 = vunpack.c.0.s8 %v5134
  %v5136 = vlaneseq
  %v5137 = vshrl.u32 %v5136, 7
  %v5138 = vsub.s32 %v5135, %v5137
  %v5139 = vrot.slane %v5131, %v5138
  %v5141 = vunpack.c.l.s4 1966171168
  %v5142 = vunpack.c.0.s8 %v5141
  %v5143 = vlaneseq
  %v5144 = vshrl.u32 %v5143, 7
  %v5145 = vsub.s32 %v5142, %v5144
  %v5146 = vrot.slane %v5132, %v5145
  %v5147 = vcombine.low %v5139, %v5146
  %s5150 = scalar_lea.vmem [#allocation2], 258
  %5151 = vst [vmem:[%s5150] ss:$8 sm:$0xf] %v5098
  %5152 = vst [vmem:[%s5150] ss:$8 sm:$0xf0] %v5098
  %s5153 = scalar_lea.vmem [#allocation2], 322
  %5154 = vst [vmem:[%s5153] ss:$8 sm:$0xf] %v5147
  %5155 = vst [vmem:[%s5153] ss:$8 sm:$0xf0] %v5147
  %5156 = vrot.lane.b32.xlu0 %v77, 110
  %v5157 = vpop.permute.xlu0 %5156
  %5158 = vrot.lane.b32.xlu0 %v81, 110
  %v5159 = vpop.permute.xlu0 %5158
  %5160 = vrot.lane.b32.xlu0 %v85, 110
  %v5161 = vpop.permute.xlu0 %5160
  %5162 = vrot.lane.b32.xlu0 %v89, 110
  %v5163 = vpop.permute.xlu0 %5162
  %5164 = vrot.lane.b32.xlu0 %v93, 110
  %v5165 = vpop.permute.xlu0 %5164
  %5166 = vrot.lane.b32.xlu0 %v97, 110
  %v5167 = vpop.permute.xlu0 %5166
  %5168 = vrot.lane.b32.xlu0 %v101, 110
  %v5169 = vpop.permute.xlu0 %5168
  %5170 = vrot.lane.b32.xlu0 %v105, 110
  %v5171 = vpop.permute.xlu0 %5170
  %5172 = vrot.lane.b32.xlu0 %v109, 110
  %v5173 = vpop.permute.xlu0 %5172
  %5174 = vrot.lane.b32.xlu0 %v113, 110
  %v5175 = vpop.permute.xlu0 %5174
  %5176 = vrot.lane.b32.xlu0 %v117, 110
  %v5177 = vpop.permute.xlu0 %5176
  %5178 = vrot.lane.b32.xlu0 %v121, 110
  %v5179 = vpop.permute.xlu0 %5178
  %5180 = vrot.lane.b32.xlu0 %v125, 110
  %v5181 = vpop.permute.xlu0 %5180
  %5182 = vrot.lane.b32.xlu0 %v129, 110
  %v5183 = vpop.permute.xlu0 %5182
  %5184 = vrot.lane.b32.xlu0 %v133, 110
  %v5185 = vpop.permute.xlu0 %5184
  %5186 = vrot.lane.b32.xlu0 %v137, 110
  %v5187 = vpop.permute.xlu0 %5186
  %vm5188 = vcmp.lt.s32.totalorder %v187, 110
  %v5189 = vsel %vm5188, %v5185, %v5187
  %v5190 = vsel %vm5188, %v5183, %v5185
  %v5191 = vsel %vm5188, %v5181, %v5183
  %v5192 = vsel %vm5188, %v5179, %v5181
  %v5193 = vsel %vm5188, %v5177, %v5179
  %v5194 = vsel %vm5188, %v5175, %v5177
  %v5195 = vsel %vm5188, %v5173, %v5175
  %v5196 = vsel %vm5188, %v5171, %v5173
  %v5197 = vsel %vm5188, %v5169, %v5171
  %v5198 = vsel %vm5188, %v5167, %v5169
  %v5199 = vsel %vm5188, %v5165, %v5167
  %v5200 = vsel %vm5188, %v5163, %v5165
  %v5201 = vsel %vm5188, %v5161, %v5163
  %v5202 = vsel %vm5188, %v5159, %v5161
  %v5203 = vsel %vm5188, %v5157, %v5159
  %v5204 = vsel %vm5188, %v5187, %v5157
  %s5205 = scalar_lea.vmem %s2, 259
  %v5206 = vld [vmem:[%s5205] ss:$8 sm:$0xf]
  %v5207 = vld [vmem:[%s5205] ss:$8 sm:$0xf0]
  %v5208 = vor.u32 %v5206, %v5207
  %s5209 = scalar_lea.vmem %s2, 323
  %v5210 = vld [vmem:[%s5209] ss:$8 sm:$0xf]
  %v5211 = vld [vmem:[%s5209] ss:$8 sm:$0xf0]
  %v5212 = vor.u32 %v5210, %v5211
  %v5215 = vlaneseq
  %v5216 = vshrl.u32 %v5215, 7
  %v5217 = vsub.s32 0, %v5216
  %v5218 = vrot.slane %v5208, %v5217
  %v5219 = vlaneseq
  %v5220 = vshrl.u32 %v5219, 7
  %v5221 = vsub.s32 1, %v5220
  %v5222 = vrot.slane %v5208, %v5221
  %v5223 = vlaneseq
  %v5224 = vshrl.u32 %v5223, 7
  %v5225 = vsub.s32 2, %v5224
  %v5226 = vrot.slane %v5208, %v5225
  %v5227 = vlaneseq
  %v5228 = vshrl.u32 %v5227, 7
  %v5229 = vsub.s32 3, %v5228
  %v5230 = vrot.slane %v5208, %v5229
  %v5231 = vlaneseq
  %v5232 = vshrl.u32 %v5231, 7
  %v5233 = vsub.s32 4, %v5232
  %v5234 = vrot.slane %v5208, %v5233
  %v5235 = vlaneseq
  %v5236 = vshrl.u32 %v5235, 7
  %v5237 = vsub.s32 5, %v5236
  %v5238 = vrot.slane %v5208, %v5237
  %v5239 = vlaneseq
  %v5240 = vshrl.u32 %v5239, 7
  %v5241 = vsub.s32 6, %v5240
  %v5242 = vrot.slane %v5208, %v5241
  %v5243 = vlaneseq
  %v5244 = vshrl.u32 %v5243, 7
  %v5245 = vsub.s32 7, %v5244
  %v5246 = vrot.slane %v5208, %v5245
  %v5247 = vlaneseq
  %v5248 = vshrl.u32 %v5247, 7
  %v5249 = vsub.s32 0, %v5248
  %v5250 = vrot.slane %v5212, %v5249
  %v5251 = vlaneseq
  %v5252 = vshrl.u32 %v5251, 7
  %v5253 = vsub.s32 1, %v5252
  %v5254 = vrot.slane %v5212, %v5253
  %v5255 = vlaneseq
  %v5256 = vshrl.u32 %v5255, 7
  %v5257 = vsub.s32 2, %v5256
  %v5258 = vrot.slane %v5212, %v5257
  %v5259 = vlaneseq
  %v5260 = vshrl.u32 %v5259, 7
  %v5261 = vsub.s32 3, %v5260
  %v5262 = vrot.slane %v5212, %v5261
  %v5263 = vlaneseq
  %v5264 = vshrl.u32 %v5263, 7
  %v5265 = vsub.s32 4, %v5264
  %v5266 = vrot.slane %v5212, %v5265
  %v5267 = vlaneseq
  %v5268 = vshrl.u32 %v5267, 7
  %v5269 = vsub.s32 5, %v5268
  %v5270 = vrot.slane %v5212, %v5269
  %v5271 = vlaneseq
  %v5272 = vshrl.u32 %v5271, 7
  %v5273 = vsub.s32 6, %v5272
  %v5274 = vrot.slane %v5212, %v5273
  %v5275 = vlaneseq
  %v5276 = vshrl.u32 %v5275, 7
  %v5277 = vsub.s32 7, %v5276
  %v5278 = vrot.slane %v5212, %v5277
  %v5295 = vmul.f32 %v5203, %v5218
  %v5296 = vmul.f32 %v5202, %v5222
  %v5297 = vmul.f32 %v5201, %v5226
  %v5298 = vmul.f32 %v5200, %v5230
  %v5299 = vmul.f32 %v5199, %v5234
  %v5300 = vmul.f32 %v5198, %v5238
  %v5301 = vmul.f32 %v5197, %v5242
  %v5302 = vmul.f32 %v5196, %v5246
  %v5303 = vmul.f32 %v5195, %v5250
  %v5304 = vmul.f32 %v5194, %v5254
  %v5305 = vmul.f32 %v5193, %v5258
  %v5306 = vmul.f32 %v5192, %v5262
  %v5307 = vmul.f32 %v5191, %v5266
  %v5308 = vmul.f32 %v5190, %v5270
  %v5309 = vmul.f32 %v5189, %v5274
  %v5310 = vmul.f32 %v5204, %v5278
  %v5327 = vcombine.low %v5295, %v5296
  %v5328 = vcombine.low %v5297, %v5298
  %v5329 = vcombine.low %v5299, %v5300
  %v5330 = vcombine.low %v5301, %v5302
  %v5332 = vunpack.c.l.s4 1966171168
  %v5333 = vunpack.c.0.s8 %v5332
  %v5334 = vlaneseq
  %v5335 = vshrl.u32 %v5334, 7
  %v5336 = vsub.s32 %v5333, %v5335
  %v5337 = vrot.slane %v5327, %v5336
  %v5339 = vunpack.c.l.s4 1966171168
  %v5340 = vunpack.c.0.s8 %v5339
  %v5341 = vlaneseq
  %v5342 = vshrl.u32 %v5341, 7
  %v5343 = vsub.s32 %v5340, %v5342
  %v5344 = vrot.slane %v5328, %v5343
  %v5346 = vunpack.c.l.s4 1966171168
  %v5347 = vunpack.c.0.s8 %v5346
  %v5348 = vlaneseq
  %v5349 = vshrl.u32 %v5348, 7
  %v5350 = vsub.s32 %v5347, %v5349
  %v5351 = vrot.slane %v5329, %v5350
  %v5353 = vunpack.c.l.s4 1966171168
  %v5354 = vunpack.c.0.s8 %v5353
  %v5355 = vlaneseq
  %v5356 = vshrl.u32 %v5355, 7
  %v5357 = vsub.s32 %v5354, %v5356
  %v5358 = vrot.slane %v5330, %v5357
  %v5359 = vcombine.low %v5337, %v5344
  %v5360 = vcombine.low %v5351, %v5358
  %v5362 = vunpack.c.l.s4 1966171168
  %v5363 = vunpack.c.0.s8 %v5362
  %v5364 = vlaneseq
  %v5365 = vshrl.u32 %v5364, 7
  %v5366 = vsub.s32 %v5363, %v5365
  %v5367 = vrot.slane %v5359, %v5366
  %v5369 = vunpack.c.l.s4 1966171168
  %v5370 = vunpack.c.0.s8 %v5369
  %v5371 = vlaneseq
  %v5372 = vshrl.u32 %v5371, 7
  %v5373 = vsub.s32 %v5370, %v5372
  %v5374 = vrot.slane %v5360, %v5373
  %v5375 = vcombine.low %v5367, %v5374
  %v5376 = vcombine.low %v5303, %v5304
  %v5377 = vcombine.low %v5305, %v5306
  %v5378 = vcombine.low %v5307, %v5308
  %v5379 = vcombine.low %v5309, %v5310
  %v5381 = vunpack.c.l.s4 1966171168
  %v5382 = vunpack.c.0.s8 %v5381
  %v5383 = vlaneseq
  %v5384 = vshrl.u32 %v5383, 7
  %v5385 = vsub.s32 %v5382, %v5384
  %v5386 = vrot.slane %v5376, %v5385
  %v5388 = vunpack.c.l.s4 1966171168
  %v5389 = vunpack.c.0.s8 %v5388
  %v5390 = vlaneseq
  %v5391 = vshrl.u32 %v5390, 7
  %v5392 = vsub.s32 %v5389, %v5391
  %v5393 = vrot.slane %v5377, %v5392
  %v5395 = vunpack.c.l.s4 1966171168
  %v5396 = vunpack.c.0.s8 %v5395
  %v5397 = vlaneseq
  %v5398 = vshrl.u32 %v5397, 7
  %v5399 = vsub.s32 %v5396, %v5398
  %v5400 = vrot.slane %v5378, %v5399
  %v5402 = vunpack.c.l.s4 1966171168
  %v5403 = vunpack.c.0.s8 %v5402
  %v5404 = vlaneseq
  %v5405 = vshrl.u32 %v5404, 7
  %v5406 = vsub.s32 %v5403, %v5405
  %v5407 = vrot.slane %v5379, %v5406
  %v5408 = vcombine.low %v5386, %v5393
  %v5409 = vcombine.low %v5400, %v5407
  %v5411 = vunpack.c.l.s4 1966171168
  %v5412 = vunpack.c.0.s8 %v5411
  %v5413 = vlaneseq
  %v5414 = vshrl.u32 %v5413, 7
  %v5415 = vsub.s32 %v5412, %v5414
  %v5416 = vrot.slane %v5408, %v5415
  %v5418 = vunpack.c.l.s4 1966171168
  %v5419 = vunpack.c.0.s8 %v5418
  %v5420 = vlaneseq
  %v5421 = vshrl.u32 %v5420, 7
  %v5422 = vsub.s32 %v5419, %v5421
  %v5423 = vrot.slane %v5409, %v5422
  %v5424 = vcombine.low %v5416, %v5423
  %s5427 = scalar_lea.vmem [#allocation2], 259
  %5428 = vst [vmem:[%s5427] ss:$8 sm:$0xf] %v5375
  %5429 = vst [vmem:[%s5427] ss:$8 sm:$0xf0] %v5375
  %s5430 = scalar_lea.vmem [#allocation2], 323
  %5431 = vst [vmem:[%s5430] ss:$8 sm:$0xf] %v5424
  %5432 = vst [vmem:[%s5430] ss:$8 sm:$0xf0] %v5424
  %5433 = vrot.lane.b32.xlu0 %v77, 98
  %v5434 = vpop.permute.xlu0 %5433
  %5435 = vrot.lane.b32.xlu0 %v81, 98
  %v5436 = vpop.permute.xlu0 %5435
  %5437 = vrot.lane.b32.xlu0 %v85, 98
  %v5438 = vpop.permute.xlu0 %5437
  %5439 = vrot.lane.b32.xlu0 %v89, 98
  %v5440 = vpop.permute.xlu0 %5439
  %5441 = vrot.lane.b32.xlu0 %v93, 98
  %v5442 = vpop.permute.xlu0 %5441
  %5443 = vrot.lane.b32.xlu0 %v97, 98
  %v5444 = vpop.permute.xlu0 %5443
  %5445 = vrot.lane.b32.xlu0 %v101, 98
  %v5446 = vpop.permute.xlu0 %5445
  %5447 = vrot.lane.b32.xlu0 %v105, 98
  %v5448 = vpop.permute.xlu0 %5447
  %5449 = vrot.lane.b32.xlu0 %v109, 98
  %v5450 = vpop.permute.xlu0 %5449
  %5451 = vrot.lane.b32.xlu0 %v113, 98
  %v5452 = vpop.permute.xlu0 %5451
  %5453 = vrot.lane.b32.xlu0 %v117, 98
  %v5454 = vpop.permute.xlu0 %5453
  %5455 = vrot.lane.b32.xlu0 %v121, 98
  %v5456 = vpop.permute.xlu0 %5455
  %5457 = vrot.lane.b32.xlu0 %v125, 98
  %v5458 = vpop.permute.xlu0 %5457
  %5459 = vrot.lane.b32.xlu0 %v129, 98
  %v5460 = vpop.permute.xlu0 %5459
  %5461 = vrot.lane.b32.xlu0 %v133, 98
  %v5462 = vpop.permute.xlu0 %5461
  %5463 = vrot.lane.b32.xlu0 %v137, 98
  %v5464 = vpop.permute.xlu0 %5463
  %vm5465 = vcmp.lt.s32.totalorder %v187, 98
  %v5466 = vsel %vm5465, %v5462, %v5464
  %v5467 = vsel %vm5465, %v5460, %v5462
  %v5468 = vsel %vm5465, %v5458, %v5460
  %v5469 = vsel %vm5465, %v5456, %v5458
  %v5470 = vsel %vm5465, %v5454, %v5456
  %v5471 = vsel %vm5465, %v5452, %v5454
  %v5472 = vsel %vm5465, %v5450, %v5452
  %v5473 = vsel %vm5465, %v5448, %v5450
  %v5474 = vsel %vm5465, %v5446, %v5448
  %v5475 = vsel %vm5465, %v5444, %v5446
  %v5476 = vsel %vm5465, %v5442, %v5444
  %v5477 = vsel %vm5465, %v5440, %v5442
  %v5478 = vsel %vm5465, %v5438, %v5440
  %v5479 = vsel %vm5465, %v5436, %v5438
  %v5480 = vsel %vm5465, %v5434, %v5436
  %v5481 = vsel %vm5465, %v5464, %v5434
  %s5482 = scalar_lea.vmem %s2, 260
  %v5483 = vld [vmem:[%s5482] ss:$8 sm:$0xf]
  %v5484 = vld [vmem:[%s5482] ss:$8 sm:$0xf0]
  %v5485 = vor.u32 %v5483, %v5484
  %s5486 = scalar_lea.vmem %s2, 324
  %v5487 = vld [vmem:[%s5486] ss:$8 sm:$0xf]
  %v5488 = vld [vmem:[%s5486] ss:$8 sm:$0xf0]
  %v5489 = vor.u32 %v5487, %v5488
  %v5492 = vlaneseq
  %v5493 = vshrl.u32 %v5492, 7
  %v5494 = vsub.s32 0, %v5493
  %v5495 = vrot.slane %v5485, %v5494
  %v5496 = vlaneseq
  %v5497 = vshrl.u32 %v5496, 7
  %v5498 = vsub.s32 1, %v5497
  %v5499 = vrot.slane %v5485, %v5498
  %v5500 = vlaneseq
  %v5501 = vshrl.u32 %v5500, 7
  %v5502 = vsub.s32 2, %v5501
  %v5503 = vrot.slane %v5485, %v5502
  %v5504 = vlaneseq
  %v5505 = vshrl.u32 %v5504, 7
  %v5506 = vsub.s32 3, %v5505
  %v5507 = vrot.slane %v5485, %v5506
  %v5508 = vlaneseq
  %v5509 = vshrl.u32 %v5508, 7
  %v5510 = vsub.s32 4, %v5509
  %v5511 = vrot.slane %v5485, %v5510
  %v5512 = vlaneseq
  %v5513 = vshrl.u32 %v5512, 7
  %v5514 = vsub.s32 5, %v5513
  %v5515 = vrot.slane %v5485, %v5514
  %v5516 = vlaneseq
  %v5517 = vshrl.u32 %v5516, 7
  %v5518 = vsub.s32 6, %v5517
  %v5519 = vrot.slane %v5485, %v5518
  %v5520 = vlaneseq
  %v5521 = vshrl.u32 %v5520, 7
  %v5522 = vsub.s32 7, %v5521
  %v5523 = vrot.slane %v5485, %v5522
  %v5524 = vlaneseq
  %v5525 = vshrl.u32 %v5524, 7
  %v5526 = vsub.s32 0, %v5525
  %v5527 = vrot.slane %v5489, %v5526
  %v5528 = vlaneseq
  %v5529 = vshrl.u32 %v5528, 7
  %v5530 = vsub.s32 1, %v5529
  %v5531 = vrot.slane %v5489, %v5530
  %v5532 = vlaneseq
  %v5533 = vshrl.u32 %v5532, 7
  %v5534 = vsub.s32 2, %v5533
  %v5535 = vrot.slane %v5489, %v5534
  %v5536 = vlaneseq
  %v5537 = vshrl.u32 %v5536, 7
  %v5538 = vsub.s32 3, %v5537
  %v5539 = vrot.slane %v5489, %v5538
  %v5540 = vlaneseq
  %v5541 = vshrl.u32 %v5540, 7
  %v5542 = vsub.s32 4, %v5541
  %v5543 = vrot.slane %v5489, %v5542
  %v5544 = vlaneseq
  %v5545 = vshrl.u32 %v5544, 7
  %v5546 = vsub.s32 5, %v5545
  %v5547 = vrot.slane %v5489, %v5546
  %v5548 = vlaneseq
  %v5549 = vshrl.u32 %v5548, 7
  %v5550 = vsub.s32 6, %v5549
  %v5551 = vrot.slane %v5489, %v5550
  %v5552 = vlaneseq
  %v5553 = vshrl.u32 %v5552, 7
  %v5554 = vsub.s32 7, %v5553
  %v5555 = vrot.slane %v5489, %v5554
  %v5572 = vmul.f32 %v5480, %v5495
  %v5573 = vmul.f32 %v5479, %v5499
  %v5574 = vmul.f32 %v5478, %v5503
  %v5575 = vmul.f32 %v5477, %v5507
  %v5576 = vmul.f32 %v5476, %v5511
  %v5577 = vmul.f32 %v5475, %v5515
  %v5578 = vmul.f32 %v5474, %v5519
  %v5579 = vmul.f32 %v5473, %v5523
  %v5580 = vmul.f32 %v5472, %v5527
  %v5581 = vmul.f32 %v5471, %v5531
  %v5582 = vmul.f32 %v5470, %v5535
  %v5583 = vmul.f32 %v5469, %v5539
  %v5584 = vmul.f32 %v5468, %v5543
  %v5585 = vmul.f32 %v5467, %v5547
  %v5586 = vmul.f32 %v5466, %v5551
  %v5587 = vmul.f32 %v5481, %v5555
  %v5604 = vcombine.low %v5572, %v5573
  %v5605 = vcombine.low %v5574, %v5575
  %v5606 = vcombine.low %v5576, %v5577
  %v5607 = vcombine.low %v5578, %v5579
  %v5609 = vunpack.c.l.s4 1966171168
  %v5610 = vunpack.c.0.s8 %v5609
  %v5611 = vlaneseq
  %v5612 = vshrl.u32 %v5611, 7
  %v5613 = vsub.s32 %v5610, %v5612
  %v5614 = vrot.slane %v5604, %v5613
  %v5616 = vunpack.c.l.s4 1966171168
  %v5617 = vunpack.c.0.s8 %v5616
  %v5618 = vlaneseq
  %v5619 = vshrl.u32 %v5618, 7
  %v5620 = vsub.s32 %v5617, %v5619
  %v5621 = vrot.slane %v5605, %v5620
  %v5623 = vunpack.c.l.s4 1966171168
  %v5624 = vunpack.c.0.s8 %v5623
  %v5625 = vlaneseq
  %v5626 = vshrl.u32 %v5625, 7
  %v5627 = vsub.s32 %v5624, %v5626
  %v5628 = vrot.slane %v5606, %v5627
  %v5630 = vunpack.c.l.s4 1966171168
  %v5631 = vunpack.c.0.s8 %v5630
  %v5632 = vlaneseq
  %v5633 = vshrl.u32 %v5632, 7
  %v5634 = vsub.s32 %v5631, %v5633
  %v5635 = vrot.slane %v5607, %v5634
  %v5636 = vcombine.low %v5614, %v5621
  %v5637 = vcombine.low %v5628, %v5635
  %v5639 = vunpack.c.l.s4 1966171168
  %v5640 = vunpack.c.0.s8 %v5639
  %v5641 = vlaneseq
  %v5642 = vshrl.u32 %v5641, 7
  %v5643 = vsub.s32 %v5640, %v5642
  %v5644 = vrot.slane %v5636, %v5643
  %v5646 = vunpack.c.l.s4 1966171168
  %v5647 = vunpack.c.0.s8 %v5646
  %v5648 = vlaneseq
  %v5649 = vshrl.u32 %v5648, 7
  %v5650 = vsub.s32 %v5647, %v5649
  %v5651 = vrot.slane %v5637, %v5650
  %v5652 = vcombine.low %v5644, %v5651
  %v5653 = vcombine.low %v5580, %v5581
  %v5654 = vcombine.low %v5582, %v5583
  %v5655 = vcombine.low %v5584, %v5585
  %v5656 = vcombine.low %v5586, %v5587
  %v5658 = vunpack.c.l.s4 1966171168
  %v5659 = vunpack.c.0.s8 %v5658
  %v5660 = vlaneseq
  %v5661 = vshrl.u32 %v5660, 7
  %v5662 = vsub.s32 %v5659, %v5661
  %v5663 = vrot.slane %v5653, %v5662
  %v5665 = vunpack.c.l.s4 1966171168
  %v5666 = vunpack.c.0.s8 %v5665
  %v5667 = vlaneseq
  %v5668 = vshrl.u32 %v5667, 7
  %v5669 = vsub.s32 %v5666, %v5668
  %v5670 = vrot.slane %v5654, %v5669
  %v5672 = vunpack.c.l.s4 1966171168
  %v5673 = vunpack.c.0.s8 %v5672
  %v5674 = vlaneseq
  %v5675 = vshrl.u32 %v5674, 7
  %v5676 = vsub.s32 %v5673, %v5675
  %v5677 = vrot.slane %v5655, %v5676
  %v5679 = vunpack.c.l.s4 1966171168
  %v5680 = vunpack.c.0.s8 %v5679
  %v5681 = vlaneseq
  %v5682 = vshrl.u32 %v5681, 7
  %v5683 = vsub.s32 %v5680, %v5682
  %v5684 = vrot.slane %v5656, %v5683
  %v5685 = vcombine.low %v5663, %v5670
  %v5686 = vcombine.low %v5677, %v5684
  %v5688 = vunpack.c.l.s4 1966171168
  %v5689 = vunpack.c.0.s8 %v5688
  %v5690 = vlaneseq
  %v5691 = vshrl.u32 %v5690, 7
  %v5692 = vsub.s32 %v5689, %v5691
  %v5693 = vrot.slane %v5685, %v5692
  %v5695 = vunpack.c.l.s4 1966171168
  %v5696 = vunpack.c.0.s8 %v5695
  %v5697 = vlaneseq
  %v5698 = vshrl.u32 %v5697, 7
  %v5699 = vsub.s32 %v5696, %v5698
  %v5700 = vrot.slane %v5686, %v5699
  %v5701 = vcombine.low %v5693, %v5700
  %s5704 = scalar_lea.vmem [#allocation2], 260
  %5705 = vst [vmem:[%s5704] ss:$8 sm:$0xf] %v5652
  %5706 = vst [vmem:[%s5704] ss:$8 sm:$0xf0] %v5652
  %s5707 = scalar_lea.vmem [#allocation2], 324
  %5708 = vst [vmem:[%s5707] ss:$8 sm:$0xf] %v5701
  %5709 = vst [vmem:[%s5707] ss:$8 sm:$0xf0] %v5701
  %5710 = vrot.lane.b32.xlu0 %v77, 97
  %v5711 = vpop.permute.xlu0 %5710
  %5712 = vrot.lane.b32.xlu0 %v81, 97
  %v5713 = vpop.permute.xlu0 %5712
  %5714 = vrot.lane.b32.xlu0 %v85, 97
  %v5715 = vpop.permute.xlu0 %5714
  %5716 = vrot.lane.b32.xlu0 %v89, 97
  %v5717 = vpop.permute.xlu0 %5716
  %5718 = vrot.lane.b32.xlu0 %v93, 97
  %v5719 = vpop.permute.xlu0 %5718
  %5720 = vrot.lane.b32.xlu0 %v97, 97
  %v5721 = vpop.permute.xlu0 %5720
  %5722 = vrot.lane.b32.xlu0 %v101, 97
  %v5723 = vpop.permute.xlu0 %5722
  %5724 = vrot.lane.b32.xlu0 %v105, 97
  %v5725 = vpop.permute.xlu0 %5724
  %5726 = vrot.lane.b32.xlu0 %v109, 97
  %v5727 = vpop.permute.xlu0 %5726
  %5728 = vrot.lane.b32.xlu0 %v113, 97
  %v5729 = vpop.permute.xlu0 %5728
  %5730 = vrot.lane.b32.xlu0 %v117, 97
  %v5731 = vpop.permute.xlu0 %5730
  %5732 = vrot.lane.b32.xlu0 %v121, 97
  %v5733 = vpop.permute.xlu0 %5732
  %5734 = vrot.lane.b32.xlu0 %v125, 97
  %v5735 = vpop.permute.xlu0 %5734
  %5736 = vrot.lane.b32.xlu0 %v129, 97
  %v5737 = vpop.permute.xlu0 %5736
  %5738 = vrot.lane.b32.xlu0 %v133, 97
  %v5739 = vpop.permute.xlu0 %5738
  %5740 = vrot.lane.b32.xlu0 %v137, 97
  %v5741 = vpop.permute.xlu0 %5740
  %vm5742 = vcmp.lt.s32.totalorder %v187, 97
  %v5743 = vsel %vm5742, %v5739, %v5741
  %v5744 = vsel %vm5742, %v5737, %v5739
  %v5745 = vsel %vm5742, %v5735, %v5737
  %v5746 = vsel %vm5742, %v5733, %v5735
  %v5747 = vsel %vm5742, %v5731, %v5733
  %v5748 = vsel %vm5742, %v5729, %v5731
  %v5749 = vsel %vm5742, %v5727, %v5729
  %v5750 = vsel %vm5742, %v5725, %v5727
  %v5751 = vsel %vm5742, %v5723, %v5725
  %v5752 = vsel %vm5742, %v5721, %v5723
  %v5753 = vsel %vm5742, %v5719, %v5721
  %v5754 = vsel %vm5742, %v5717, %v5719
  %v5755 = vsel %vm5742, %v5715, %v5717
  %v5756 = vsel %vm5742, %v5713, %v5715
  %v5757 = vsel %vm5742, %v5711, %v5713
  %v5758 = vsel %vm5742, %v5741, %v5711
  %s5759 = scalar_lea.vmem %s2, 261
  %v5760 = vld [vmem:[%s5759] ss:$8 sm:$0xf]
  %v5761 = vld [vmem:[%s5759] ss:$8 sm:$0xf0]
  %v5762 = vor.u32 %v5760, %v5761
  %s5763 = scalar_lea.vmem %s2, 325
  %v5764 = vld [vmem:[%s5763] ss:$8 sm:$0xf]
  %v5765 = vld [vmem:[%s5763] ss:$8 sm:$0xf0]
  %v5766 = vor.u32 %v5764, %v5765
  %v5769 = vlaneseq
  %v5770 = vshrl.u32 %v5769, 7
  %v5771 = vsub.s32 0, %v5770
  %v5772 = vrot.slane %v5762, %v5771
  %v5773 = vlaneseq
  %v5774 = vshrl.u32 %v5773, 7
  %v5775 = vsub.s32 1, %v5774
  %v5776 = vrot.slane %v5762, %v5775
  %v5777 = vlaneseq
  %v5778 = vshrl.u32 %v5777, 7
  %v5779 = vsub.s32 2, %v5778
  %v5780 = vrot.slane %v5762, %v5779
  %v5781 = vlaneseq
  %v5782 = vshrl.u32 %v5781, 7
  %v5783 = vsub.s32 3, %v5782
  %v5784 = vrot.slane %v5762, %v5783
  %v5785 = vlaneseq
  %v5786 = vshrl.u32 %v5785, 7
  %v5787 = vsub.s32 4, %v5786
  %v5788 = vrot.slane %v5762, %v5787
  %v5789 = vlaneseq
  %v5790 = vshrl.u32 %v5789, 7
  %v5791 = vsub.s32 5, %v5790
  %v5792 = vrot.slane %v5762, %v5791
  %v5793 = vlaneseq
  %v5794 = vshrl.u32 %v5793, 7
  %v5795 = vsub.s32 6, %v5794
  %v5796 = vrot.slane %v5762, %v5795
  %v5797 = vlaneseq
  %v5798 = vshrl.u32 %v5797, 7
  %v5799 = vsub.s32 7, %v5798
  %v5800 = vrot.slane %v5762, %v5799
  %v5801 = vlaneseq
  %v5802 = vshrl.u32 %v5801, 7
  %v5803 = vsub.s32 0, %v5802
  %v5804 = vrot.slane %v5766, %v5803
  %v5805 = vlaneseq
  %v5806 = vshrl.u32 %v5805, 7
  %v5807 = vsub.s32 1, %v5806
  %v5808 = vrot.slane %v5766, %v5807
  %v5809 = vlaneseq
  %v5810 = vshrl.u32 %v5809, 7
  %v5811 = vsub.s32 2, %v5810
  %v5812 = vrot.slane %v5766, %v5811
  %v5813 = vlaneseq
  %v5814 = vshrl.u32 %v5813, 7
  %v5815 = vsub.s32 3, %v5814
  %v5816 = vrot.slane %v5766, %v5815
  %v5817 = vlaneseq
  %v5818 = vshrl.u32 %v5817, 7
  %v5819 = vsub.s32 4, %v5818
  %v5820 = vrot.slane %v5766, %v5819
  %v5821 = vlaneseq
  %v5822 = vshrl.u32 %v5821, 7
  %v5823 = vsub.s32 5, %v5822
  %v5824 = vrot.slane %v5766, %v5823
  %v5825 = vlaneseq
  %v5826 = vshrl.u32 %v5825, 7
  %v5827 = vsub.s32 6, %v5826
  %v5828 = vrot.slane %v5766, %v5827
  %v5829 = vlaneseq
  %v5830 = vshrl.u32 %v5829, 7
  %v5831 = vsub.s32 7, %v5830
  %v5832 = vrot.slane %v5766, %v5831
  %v5849 = vmul.f32 %v5757, %v5772
  %v5850 = vmul.f32 %v5756, %v5776
  %v5851 = vmul.f32 %v5755, %v5780
  %v5852 = vmul.f32 %v5754, %v5784
  %v5853 = vmul.f32 %v5753, %v5788
  %v5854 = vmul.f32 %v5752, %v5792
  %v5855 = vmul.f32 %v5751, %v5796
  %v5856 = vmul.f32 %v5750, %v5800
  %v5857 = vmul.f32 %v5749, %v5804
  %v5858 = vmul.f32 %v5748, %v5808
  %v5859 = vmul.f32 %v5747, %v5812
  %v5860 = vmul.f32 %v5746, %v5816
  %v5861 = vmul.f32 %v5745, %v5820
  %v5862 = vmul.f32 %v5744, %v5824
  %v5863 = vmul.f32 %v5743, %v5828
  %v5864 = vmul.f32 %v5758, %v5832
  %v5881 = vcombine.low %v5849, %v5850
  %v5882 = vcombine.low %v5851, %v5852
  %v5883 = vcombine.low %v5853, %v5854
  %v5884 = vcombine.low %v5855, %v5856
  %v5886 = vunpack.c.l.s4 1966171168
  %v5887 = vunpack.c.0.s8 %v5886
  %v5888 = vlaneseq
  %v5889 = vshrl.u32 %v5888, 7
  %v5890 = vsub.s32 %v5887, %v5889
  %v5891 = vrot.slane %v5881, %v5890
  %v5893 = vunpack.c.l.s4 1966171168
  %v5894 = vunpack.c.0.s8 %v5893
  %v5895 = vlaneseq
  %v5896 = vshrl.u32 %v5895, 7
  %v5897 = vsub.s32 %v5894, %v5896
  %v5898 = vrot.slane %v5882, %v5897
  %v5900 = vunpack.c.l.s4 1966171168
  %v5901 = vunpack.c.0.s8 %v5900
  %v5902 = vlaneseq
  %v5903 = vshrl.u32 %v5902, 7
  %v5904 = vsub.s32 %v5901, %v5903
  %v5905 = vrot.slane %v5883, %v5904
  %v5907 = vunpack.c.l.s4 1966171168
  %v5908 = vunpack.c.0.s8 %v5907
  %v5909 = vlaneseq
  %v5910 = vshrl.u32 %v5909, 7
  %v5911 = vsub.s32 %v5908, %v5910
  %v5912 = vrot.slane %v5884, %v5911
  %v5913 = vcombine.low %v5891, %v5898
  %v5914 = vcombine.low %v5905, %v5912
  %v5916 = vunpack.c.l.s4 1966171168
  %v5917 = vunpack.c.0.s8 %v5916
  %v5918 = vlaneseq
  %v5919 = vshrl.u32 %v5918, 7
  %v5920 = vsub.s32 %v5917, %v5919
  %v5921 = vrot.slane %v5913, %v5920
  %v5923 = vunpack.c.l.s4 1966171168
  %v5924 = vunpack.c.0.s8 %v5923
  %v5925 = vlaneseq
  %v5926 = vshrl.u32 %v5925, 7
  %v5927 = vsub.s32 %v5924, %v5926
  %v5928 = vrot.slane %v5914, %v5927
  %v5929 = vcombine.low %v5921, %v5928
  %v5930 = vcombine.low %v5857, %v5858
  %v5931 = vcombine.low %v5859, %v5860
  %v5932 = vcombine.low %v5861, %v5862
  %v5933 = vcombine.low %v5863, %v5864
  %v5935 = vunpack.c.l.s4 1966171168
  %v5936 = vunpack.c.0.s8 %v5935
  %v5937 = vlaneseq
  %v5938 = vshrl.u32 %v5937, 7
  %v5939 = vsub.s32 %v5936, %v5938
  %v5940 = vrot.slane %v5930, %v5939
  %v5942 = vunpack.c.l.s4 1966171168
  %v5943 = vunpack.c.0.s8 %v5942
  %v5944 = vlaneseq
  %v5945 = vshrl.u32 %v5944, 7
  %v5946 = vsub.s32 %v5943, %v5945
  %v5947 = vrot.slane %v5931, %v5946
  %v5949 = vunpack.c.l.s4 1966171168
  %v5950 = vunpack.c.0.s8 %v5949
  %v5951 = vlaneseq
  %v5952 = vshrl.u32 %v5951, 7
  %v5953 = vsub.s32 %v5950, %v5952
  %v5954 = vrot.slane %v5932, %v5953
  %v5956 = vunpack.c.l.s4 1966171168
  %v5957 = vunpack.c.0.s8 %v5956
  %v5958 = vlaneseq
  %v5959 = vshrl.u32 %v5958, 7
  %v5960 = vsub.s32 %v5957, %v5959
  %v5961 = vrot.slane %v5933, %v5960
  %v5962 = vcombine.low %v5940, %v5947
  %v5963 = vcombine.low %v5954, %v5961
  %v5965 = vunpack.c.l.s4 1966171168
  %v5966 = vunpack.c.0.s8 %v5965
  %v5967 = vlaneseq
  %v5968 = vshrl.u32 %v5967, 7
  %v5969 = vsub.s32 %v5966, %v5968
  %v5970 = vrot.slane %v5962, %v5969
  %v5972 = vunpack.c.l.s4 1966171168
  %v5973 = vunpack.c.0.s8 %v5972
  %v5974 = vlaneseq
  %v5975 = vshrl.u32 %v5974, 7
  %v5976 = vsub.s32 %v5973, %v5975
  %v5977 = vrot.slane %v5963, %v5976
  %v5978 = vcombine.low %v5970, %v5977
  %s5981 = scalar_lea.vmem [#allocation2], 261
  %5982 = vst [vmem:[%s5981] ss:$8 sm:$0xf] %v5929
  %5983 = vst [vmem:[%s5981] ss:$8 sm:$0xf0] %v5929
  %s5984 = scalar_lea.vmem [#allocation2], 325
  %5985 = vst [vmem:[%s5984] ss:$8 sm:$0xf] %v5978
  %5986 = vst [vmem:[%s5984] ss:$8 sm:$0xf0] %v5978
  %5987 = vrot.lane.b32.xlu0 %v77, 96
  %v5988 = vpop.permute.xlu0 %5987
  %5989 = vrot.lane.b32.xlu0 %v81, 96
  %v5990 = vpop.permute.xlu0 %5989
  %5991 = vrot.lane.b32.xlu0 %v85, 96
  %v5992 = vpop.permute.xlu0 %5991
  %5993 = vrot.lane.b32.xlu0 %v89, 96
  %v5994 = vpop.permute.xlu0 %5993
  %5995 = vrot.lane.b32.xlu0 %v93, 96
  %v5996 = vpop.permute.xlu0 %5995
  %5997 = vrot.lane.b32.xlu0 %v97, 96
  %v5998 = vpop.permute.xlu0 %5997
  %5999 = vrot.lane.b32.xlu0 %v101, 96
  %v6000 = vpop.permute.xlu0 %5999
  %6001 = vrot.lane.b32.xlu0 %v105, 96
  %v6002 = vpop.permute.xlu0 %6001
  %6003 = vrot.lane.b32.xlu0 %v109, 96
  %v6004 = vpop.permute.xlu0 %6003
  %6005 = vrot.lane.b32.xlu0 %v113, 96
  %v6006 = vpop.permute.xlu0 %6005
  %6007 = vrot.lane.b32.xlu0 %v117, 96
  %v6008 = vpop.permute.xlu0 %6007
  %6009 = vrot.lane.b32.xlu0 %v121, 96
  %v6010 = vpop.permute.xlu0 %6009
  %6011 = vrot.lane.b32.xlu0 %v125, 96
  %v6012 = vpop.permute.xlu0 %6011
  %6013 = vrot.lane.b32.xlu0 %v129, 96
  %v6014 = vpop.permute.xlu0 %6013
  %6015 = vrot.lane.b32.xlu0 %v133, 96
  %v6016 = vpop.permute.xlu0 %6015
  %6017 = vrot.lane.b32.xlu0 %v137, 96
  %v6018 = vpop.permute.xlu0 %6017
  %vm6019 = vcmp.lt.s32.totalorder %v187, 96
  %v6020 = vsel %vm6019, %v6016, %v6018
  %v6021 = vsel %vm6019, %v6014, %v6016
  %v6022 = vsel %vm6019, %v6012, %v6014
  %v6023 = vsel %vm6019, %v6010, %v6012
  %v6024 = vsel %vm6019, %v6008, %v6010
  %v6025 = vsel %vm6019, %v6006, %v6008
  %v6026 = vsel %vm6019, %v6004, %v6006
  %v6027 = vsel %vm6019, %v6002, %v6004
  %v6028 = vsel %vm6019, %v6000, %v6002
  %v6029 = vsel %vm6019, %v5998, %v6000
  %v6030 = vsel %vm6019, %v5996, %v5998
  %v6031 = vsel %vm6019, %v5994, %v5996
  %v6032 = vsel %vm6019, %v5992, %v5994
  %v6033 = vsel %vm6019, %v5990, %v5992
  %v6034 = vsel %vm6019, %v5988, %v5990
  %v6035 = vsel %vm6019, %v6018, %v5988
  %s6036 = scalar_lea.vmem %s2, 262
  %v6037 = vld [vmem:[%s6036] ss:$8 sm:$0xf]
  %v6038 = vld [vmem:[%s6036] ss:$8 sm:$0xf0]
  %v6039 = vor.u32 %v6037, %v6038
  %s6040 = scalar_lea.vmem %s2, 326
  %v6041 = vld [vmem:[%s6040] ss:$8 sm:$0xf]
  %v6042 = vld [vmem:[%s6040] ss:$8 sm:$0xf0]
  %v6043 = vor.u32 %v6041, %v6042
  %v6046 = vlaneseq
  %v6047 = vshrl.u32 %v6046, 7
  %v6048 = vsub.s32 0, %v6047
  %v6049 = vrot.slane %v6039, %v6048
  %v6050 = vlaneseq
  %v6051 = vshrl.u32 %v6050, 7
  %v6052 = vsub.s32 1, %v6051
  %v6053 = vrot.slane %v6039, %v6052
  %v6054 = vlaneseq
  %v6055 = vshrl.u32 %v6054, 7
  %v6056 = vsub.s32 2, %v6055
  %v6057 = vrot.slane %v6039, %v6056
  %v6058 = vlaneseq
  %v6059 = vshrl.u32 %v6058, 7
  %v6060 = vsub.s32 3, %v6059
  %v6061 = vrot.slane %v6039, %v6060
  %v6062 = vlaneseq
  %v6063 = vshrl.u32 %v6062, 7
  %v6064 = vsub.s32 4, %v6063
  %v6065 = vrot.slane %v6039, %v6064
  %v6066 = vlaneseq
  %v6067 = vshrl.u32 %v6066, 7
  %v6068 = vsub.s32 5, %v6067
  %v6069 = vrot.slane %v6039, %v6068
  %v6070 = vlaneseq
  %v6071 = vshrl.u32 %v6070, 7
  %v6072 = vsub.s32 6, %v6071
  %v6073 = vrot.slane %v6039, %v6072
  %v6074 = vlaneseq
  %v6075 = vshrl.u32 %v6074, 7
  %v6076 = vsub.s32 7, %v6075
  %v6077 = vrot.slane %v6039, %v6076
  %v6078 = vlaneseq
  %v6079 = vshrl.u32 %v6078, 7
  %v6080 = vsub.s32 0, %v6079
  %v6081 = vrot.slane %v6043, %v6080
  %v6082 = vlaneseq
  %v6083 = vshrl.u32 %v6082, 7
  %v6084 = vsub.s32 1, %v6083
  %v6085 = vrot.slane %v6043, %v6084
  %v6086 = vlaneseq
  %v6087 = vshrl.u32 %v6086, 7
  %v6088 = vsub.s32 2, %v6087
  %v6089 = vrot.slane %v6043, %v6088
  %v6090 = vlaneseq
  %v6091 = vshrl.u32 %v6090, 7
  %v6092 = vsub.s32 3, %v6091
  %v6093 = vrot.slane %v6043, %v6092
  %v6094 = vlaneseq
  %v6095 = vshrl.u32 %v6094, 7
  %v6096 = vsub.s32 4, %v6095
  %v6097 = vrot.slane %v6043, %v6096
  %v6098 = vlaneseq
  %v6099 = vshrl.u32 %v6098, 7
  %v6100 = vsub.s32 5, %v6099
  %v6101 = vrot.slane %v6043, %v6100
  %v6102 = vlaneseq
  %v6103 = vshrl.u32 %v6102, 7
  %v6104 = vsub.s32 6, %v6103
  %v6105 = vrot.slane %v6043, %v6104
  %v6106 = vlaneseq
  %v6107 = vshrl.u32 %v6106, 7
  %v6108 = vsub.s32 7, %v6107
  %v6109 = vrot.slane %v6043, %v6108
  %v6126 = vmul.f32 %v6034, %v6049
  %v6127 = vmul.f32 %v6033, %v6053
  %v6128 = vmul.f32 %v6032, %v6057
  %v6129 = vmul.f32 %v6031, %v6061
  %v6130 = vmul.f32 %v6030, %v6065
  %v6131 = vmul.f32 %v6029, %v6069
  %v6132 = vmul.f32 %v6028, %v6073
  %v6133 = vmul.f32 %v6027, %v6077
  %v6134 = vmul.f32 %v6026, %v6081
  %v6135 = vmul.f32 %v6025, %v6085
  %v6136 = vmul.f32 %v6024, %v6089
  %v6137 = vmul.f32 %v6023, %v6093
  %v6138 = vmul.f32 %v6022, %v6097
  %v6139 = vmul.f32 %v6021, %v6101
  %v6140 = vmul.f32 %v6020, %v6105
  %v6141 = vmul.f32 %v6035, %v6109
  %v6158 = vcombine.low %v6126, %v6127
  %v6159 = vcombine.low %v6128, %v6129
  %v6160 = vcombine.low %v6130, %v6131
  %v6161 = vcombine.low %v6132, %v6133
  %v6163 = vunpack.c.l.s4 1966171168
  %v6164 = vunpack.c.0.s8 %v6163
  %v6165 = vlaneseq
  %v6166 = vshrl.u32 %v6165, 7
  %v6167 = vsub.s32 %v6164, %v6166
  %v6168 = vrot.slane %v6158, %v6167
  %v6170 = vunpack.c.l.s4 1966171168
  %v6171 = vunpack.c.0.s8 %v6170
  %v6172 = vlaneseq
  %v6173 = vshrl.u32 %v6172, 7
  %v6174 = vsub.s32 %v6171, %v6173
  %v6175 = vrot.slane %v6159, %v6174
  %v6177 = vunpack.c.l.s4 1966171168
  %v6178 = vunpack.c.0.s8 %v6177
  %v6179 = vlaneseq
  %v6180 = vshrl.u32 %v6179, 7
  %v6181 = vsub.s32 %v6178, %v6180
  %v6182 = vrot.slane %v6160, %v6181
  %v6184 = vunpack.c.l.s4 1966171168
  %v6185 = vunpack.c.0.s8 %v6184
  %v6186 = vlaneseq
  %v6187 = vshrl.u32 %v6186, 7
  %v6188 = vsub.s32 %v6185, %v6187
  %v6189 = vrot.slane %v6161, %v6188
  %v6190 = vcombine.low %v6168, %v6175
  %v6191 = vcombine.low %v6182, %v6189
  %v6193 = vunpack.c.l.s4 1966171168
  %v6194 = vunpack.c.0.s8 %v6193
  %v6195 = vlaneseq
  %v6196 = vshrl.u32 %v6195, 7
  %v6197 = vsub.s32 %v6194, %v6196
  %v6198 = vrot.slane %v6190, %v6197
  %v6200 = vunpack.c.l.s4 1966171168
  %v6201 = vunpack.c.0.s8 %v6200
  %v6202 = vlaneseq
  %v6203 = vshrl.u32 %v6202, 7
  %v6204 = vsub.s32 %v6201, %v6203
  %v6205 = vrot.slane %v6191, %v6204
  %v6206 = vcombine.low %v6198, %v6205
  %v6207 = vcombine.low %v6134, %v6135
  %v6208 = vcombine.low %v6136, %v6137
  %v6209 = vcombine.low %v6138, %v6139
  %v6210 = vcombine.low %v6140, %v6141
  %v6212 = vunpack.c.l.s4 1966171168
  %v6213 = vunpack.c.0.s8 %v6212
  %v6214 = vlaneseq
  %v6215 = vshrl.u32 %v6214, 7
  %v6216 = vsub.s32 %v6213, %v6215
  %v6217 = vrot.slane %v6207, %v6216
  %v6219 = vunpack.c.l.s4 1966171168
  %v6220 = vunpack.c.0.s8 %v6219
  %v6221 = vlaneseq
  %v6222 = vshrl.u32 %v6221, 7
  %v6223 = vsub.s32 %v6220, %v6222
  %v6224 = vrot.slane %v6208, %v6223
  %v6226 = vunpack.c.l.s4 1966171168
  %v6227 = vunpack.c.0.s8 %v6226
  %v6228 = vlaneseq
  %v6229 = vshrl.u32 %v6228, 7
  %v6230 = vsub.s32 %v6227, %v6229
  %v6231 = vrot.slane %v6209, %v6230
  %v6233 = vunpack.c.l.s4 1966171168
  %v6234 = vunpack.c.0.s8 %v6233
  %v6235 = vlaneseq
  %v6236 = vshrl.u32 %v6235, 7
  %v6237 = vsub.s32 %v6234, %v6236
  %v6238 = vrot.slane %v6210, %v6237
  %v6239 = vcombine.low %v6217, %v6224
  %v6240 = vcombine.low %v6231, %v6238
  %v6242 = vunpack.c.l.s4 1966171168
  %v6243 = vunpack.c.0.s8 %v6242
  %v6244 = vlaneseq
  %v6245 = vshrl.u32 %v6244, 7
  %v6246 = vsub.s32 %v6243, %v6245
  %v6247 = vrot.slane %v6239, %v6246
  %v6249 = vunpack.c.l.s4 1966171168
  %v6250 = vunpack.c.0.s8 %v6249
  %v6251 = vlaneseq
  %v6252 = vshrl.u32 %v6251, 7
  %v6253 = vsub.s32 %v6250, %v6252
  %v6254 = vrot.slane %v6240, %v6253
  %v6255 = vcombine.low %v6247, %v6254
  %s6258 = scalar_lea.vmem [#allocation2], 262
  %6259 = vst [vmem:[%s6258] ss:$8 sm:$0xf] %v6206
  %6260 = vst [vmem:[%s6258] ss:$8 sm:$0xf0] %v6206
  %s6261 = scalar_lea.vmem [#allocation2], 326
  %6262 = vst [vmem:[%s6261] ss:$8 sm:$0xf] %v6255
  %6263 = vst [vmem:[%s6261] ss:$8 sm:$0xf0] %v6255
  %6264 = vrot.lane.b32.xlu0 %v77, 95
  %v6265 = vpop.permute.xlu0 %6264
  %6266 = vrot.lane.b32.xlu0 %v81, 95
  %v6267 = vpop.permute.xlu0 %6266
  %6268 = vrot.lane.b32.xlu0 %v85, 95
  %v6269 = vpop.permute.xlu0 %6268
  %6270 = vrot.lane.b32.xlu0 %v89, 95
  %v6271 = vpop.permute.xlu0 %6270
  %6272 = vrot.lane.b32.xlu0 %v93, 95
  %v6273 = vpop.permute.xlu0 %6272
  %6274 = vrot.lane.b32.xlu0 %v97, 95
  %v6275 = vpop.permute.xlu0 %6274
  %6276 = vrot.lane.b32.xlu0 %v101, 95
  %v6277 = vpop.permute.xlu0 %6276
  %6278 = vrot.lane.b32.xlu0 %v105, 95
  %v6279 = vpop.permute.xlu0 %6278
  %6280 = vrot.lane.b32.xlu0 %v109, 95
  %v6281 = vpop.permute.xlu0 %6280
  %6282 = vrot.lane.b32.xlu0 %v113, 95
  %v6283 = vpop.permute.xlu0 %6282
  %6284 = vrot.lane.b32.xlu0 %v117, 95
  %v6285 = vpop.permute.xlu0 %6284
  %6286 = vrot.lane.b32.xlu0 %v121, 95
  %v6287 = vpop.permute.xlu0 %6286
  %6288 = vrot.lane.b32.xlu0 %v125, 95
  %v6289 = vpop.permute.xlu0 %6288
  %6290 = vrot.lane.b32.xlu0 %v129, 95
  %v6291 = vpop.permute.xlu0 %6290
  %6292 = vrot.lane.b32.xlu0 %v133, 95
  %v6293 = vpop.permute.xlu0 %6292
  %6294 = vrot.lane.b32.xlu0 %v137, 95
  %v6295 = vpop.permute.xlu0 %6294
  %vm6296 = vcmp.lt.s32.totalorder %v187, 95
  %v6297 = vsel %vm6296, %v6293, %v6295
  %v6298 = vsel %vm6296, %v6291, %v6293
  %v6299 = vsel %vm6296, %v6289, %v6291
  %v6300 = vsel %vm6296, %v6287, %v6289
  %v6301 = vsel %vm6296, %v6285, %v6287
  %v6302 = vsel %vm6296, %v6283, %v6285
  %v6303 = vsel %vm6296, %v6281, %v6283
  %v6304 = vsel %vm6296, %v6279, %v6281
  %v6305 = vsel %vm6296, %v6277, %v6279
  %v6306 = vsel %vm6296, %v6275, %v6277
  %v6307 = vsel %vm6296, %v6273, %v6275
  %v6308 = vsel %vm6296, %v6271, %v6273
  %v6309 = vsel %vm6296, %v6269, %v6271
  %v6310 = vsel %vm6296, %v6267, %v6269
  %v6311 = vsel %vm6296, %v6265, %v6267
  %v6312 = vsel %vm6296, %v6295, %v6265
  %s6313 = scalar_lea.vmem %s2, 263
  %v6314 = vld [vmem:[%s6313] ss:$8 sm:$0xf]
  %v6315 = vld [vmem:[%s6313] ss:$8 sm:$0xf0]
  %v6316 = vor.u32 %v6314, %v6315
  %s6317 = scalar_lea.vmem %s2, 327
  %v6318 = vld [vmem:[%s6317] ss:$8 sm:$0xf]
  %v6319 = vld [vmem:[%s6317] ss:$8 sm:$0xf0]
  %v6320 = vor.u32 %v6318, %v6319
  %v6323 = vlaneseq
  %v6324 = vshrl.u32 %v6323, 7
  %v6325 = vsub.s32 0, %v6324
  %v6326 = vrot.slane %v6316, %v6325
  %v6327 = vlaneseq
  %v6328 = vshrl.u32 %v6327, 7
  %v6329 = vsub.s32 1, %v6328
  %v6330 = vrot.slane %v6316, %v6329
  %v6331 = vlaneseq
  %v6332 = vshrl.u32 %v6331, 7
  %v6333 = vsub.s32 2, %v6332
  %v6334 = vrot.slane %v6316, %v6333
  %v6335 = vlaneseq
  %v6336 = vshrl.u32 %v6335, 7
  %v6337 = vsub.s32 3, %v6336
  %v6338 = vrot.slane %v6316, %v6337
  %v6339 = vlaneseq
  %v6340 = vshrl.u32 %v6339, 7
  %v6341 = vsub.s32 4, %v6340
  %v6342 = vrot.slane %v6316, %v6341
  %v6343 = vlaneseq
  %v6344 = vshrl.u32 %v6343, 7
  %v6345 = vsub.s32 5, %v6344
  %v6346 = vrot.slane %v6316, %v6345
  %v6347 = vlaneseq
  %v6348 = vshrl.u32 %v6347, 7
  %v6349 = vsub.s32 6, %v6348
  %v6350 = vrot.slane %v6316, %v6349
  %v6351 = vlaneseq
  %v6352 = vshrl.u32 %v6351, 7
  %v6353 = vsub.s32 7, %v6352
  %v6354 = vrot.slane %v6316, %v6353
  %v6355 = vlaneseq
  %v6356 = vshrl.u32 %v6355, 7
  %v6357 = vsub.s32 0, %v6356
  %v6358 = vrot.slane %v6320, %v6357
  %v6359 = vlaneseq
  %v6360 = vshrl.u32 %v6359, 7
  %v6361 = vsub.s32 1, %v6360
  %v6362 = vrot.slane %v6320, %v6361
  %v6363 = vlaneseq
  %v6364 = vshrl.u32 %v6363, 7
  %v6365 = vsub.s32 2, %v6364
  %v6366 = vrot.slane %v6320, %v6365
  %v6367 = vlaneseq
  %v6368 = vshrl.u32 %v6367, 7
  %v6369 = vsub.s32 3, %v6368
  %v6370 = vrot.slane %v6320, %v6369
  %v6371 = vlaneseq
  %v6372 = vshrl.u32 %v6371, 7
  %v6373 = vsub.s32 4, %v6372
  %v6374 = vrot.slane %v6320, %v6373
  %v6375 = vlaneseq
  %v6376 = vshrl.u32 %v6375, 7
  %v6377 = vsub.s32 5, %v6376
  %v6378 = vrot.slane %v6320, %v6377
  %v6379 = vlaneseq
  %v6380 = vshrl.u32 %v6379, 7
  %v6381 = vsub.s32 6, %v6380
  %v6382 = vrot.slane %v6320, %v6381
  %v6383 = vlaneseq
  %v6384 = vshrl.u32 %v6383, 7
  %v6385 = vsub.s32 7, %v6384
  %v6386 = vrot.slane %v6320, %v6385
  %v6403 = vmul.f32 %v6311, %v6326
  %v6404 = vmul.f32 %v6310, %v6330
  %v6405 = vmul.f32 %v6309, %v6334
  %v6406 = vmul.f32 %v6308, %v6338
  %v6407 = vmul.f32 %v6307, %v6342
  %v6408 = vmul.f32 %v6306, %v6346
  %v6409 = vmul.f32 %v6305, %v6350
  %v6410 = vmul.f32 %v6304, %v6354
  %v6411 = vmul.f32 %v6303, %v6358
  %v6412 = vmul.f32 %v6302, %v6362
  %v6413 = vmul.f32 %v6301, %v6366
  %v6414 = vmul.f32 %v6300, %v6370
  %v6415 = vmul.f32 %v6299, %v6374
  %v6416 = vmul.f32 %v6298, %v6378
  %v6417 = vmul.f32 %v6297, %v6382
  %v6418 = vmul.f32 %v6312, %v6386
  %v6435 = vcombine.low %v6403, %v6404
  %v6436 = vcombine.low %v6405, %v6406
  %v6437 = vcombine.low %v6407, %v6408
  %v6438 = vcombine.low %v6409, %v6410
  %v6440 = vunpack.c.l.s4 1966171168
  %v6441 = vunpack.c.0.s8 %v6440
  %v6442 = vlaneseq
  %v6443 = vshrl.u32 %v6442, 7
  %v6444 = vsub.s32 %v6441, %v6443
  %v6445 = vrot.slane %v6435, %v6444
  %v6447 = vunpack.c.l.s4 1966171168
  %v6448 = vunpack.c.0.s8 %v6447
  %v6449 = vlaneseq
  %v6450 = vshrl.u32 %v6449, 7
  %v6451 = vsub.s32 %v6448, %v6450
  %v6452 = vrot.slane %v6436, %v6451
  %v6454 = vunpack.c.l.s4 1966171168
  %v6455 = vunpack.c.0.s8 %v6454
  %v6456 = vlaneseq
  %v6457 = vshrl.u32 %v6456, 7
  %v6458 = vsub.s32 %v6455, %v6457
  %v6459 = vrot.slane %v6437, %v6458
  %v6461 = vunpack.c.l.s4 1966171168
  %v6462 = vunpack.c.0.s8 %v6461
  %v6463 = vlaneseq
  %v6464 = vshrl.u32 %v6463, 7
  %v6465 = vsub.s32 %v6462, %v6464
  %v6466 = vrot.slane %v6438, %v6465
  %v6467 = vcombine.low %v6445, %v6452
  %v6468 = vcombine.low %v6459, %v6466
  %v6470 = vunpack.c.l.s4 1966171168
  %v6471 = vunpack.c.0.s8 %v6470
  %v6472 = vlaneseq
  %v6473 = vshrl.u32 %v6472, 7
  %v6474 = vsub.s32 %v6471, %v6473
  %v6475 = vrot.slane %v6467, %v6474
  %v6477 = vunpack.c.l.s4 1966171168
  %v6478 = vunpack.c.0.s8 %v6477
  %v6479 = vlaneseq
  %v6480 = vshrl.u32 %v6479, 7
  %v6481 = vsub.s32 %v6478, %v6480
  %v6482 = vrot.slane %v6468, %v6481
  %v6483 = vcombine.low %v6475, %v6482
  %v6484 = vcombine.low %v6411, %v6412
  %v6485 = vcombine.low %v6413, %v6414
  %v6486 = vcombine.low %v6415, %v6416
  %v6487 = vcombine.low %v6417, %v6418
  %v6489 = vunpack.c.l.s4 1966171168
  %v6490 = vunpack.c.0.s8 %v6489
  %v6491 = vlaneseq
  %v6492 = vshrl.u32 %v6491, 7
  %v6493 = vsub.s32 %v6490, %v6492
  %v6494 = vrot.slane %v6484, %v6493
  %v6496 = vunpack.c.l.s4 1966171168
  %v6497 = vunpack.c.0.s8 %v6496
  %v6498 = vlaneseq
  %v6499 = vshrl.u32 %v6498, 7
  %v6500 = vsub.s32 %v6497, %v6499
  %v6501 = vrot.slane %v6485, %v6500
  %v6503 = vunpack.c.l.s4 1966171168
  %v6504 = vunpack.c.0.s8 %v6503
  %v6505 = vlaneseq
  %v6506 = vshrl.u32 %v6505, 7
  %v6507 = vsub.s32 %v6504, %v6506
  %v6508 = vrot.slane %v6486, %v6507
  %v6510 = vunpack.c.l.s4 1966171168
  %v6511 = vunpack.c.0.s8 %v6510
  %v6512 = vlaneseq
  %v6513 = vshrl.u32 %v6512, 7
  %v6514 = vsub.s32 %v6511, %v6513
  %v6515 = vrot.slane %v6487, %v6514
  %v6516 = vcombine.low %v6494, %v6501
  %v6517 = vcombine.low %v6508, %v6515
  %v6519 = vunpack.c.l.s4 1966171168
  %v6520 = vunpack.c.0.s8 %v6519
  %v6521 = vlaneseq
  %v6522 = vshrl.u32 %v6521, 7
  %v6523 = vsub.s32 %v6520, %v6522
  %v6524 = vrot.slane %v6516, %v6523
  %v6526 = vunpack.c.l.s4 1966171168
  %v6527 = vunpack.c.0.s8 %v6526
  %v6528 = vlaneseq
  %v6529 = vshrl.u32 %v6528, 7
  %v6530 = vsub.s32 %v6527, %v6529
  %v6531 = vrot.slane %v6517, %v6530
  %v6532 = vcombine.low %v6524, %v6531
  %s6535 = scalar_lea.vmem [#allocation2], 263
  %6536 = vst [vmem:[%s6535] ss:$8 sm:$0xf] %v6483
  %6537 = vst [vmem:[%s6535] ss:$8 sm:$0xf0] %v6483
  %s6538 = scalar_lea.vmem [#allocation2], 327
  %6539 = vst [vmem:[%s6538] ss:$8 sm:$0xf] %v6532
  %6540 = vst [vmem:[%s6538] ss:$8 sm:$0xf0] %v6532
  %6541 = vrot.lane.b32.xlu0 %v77, 94
  %v6542 = vpop.permute.xlu0 %6541
  %6543 = vrot.lane.b32.xlu0 %v81, 94
  %v6544 = vpop.permute.xlu0 %6543
  %6545 = vrot.lane.b32.xlu0 %v85, 94
  %v6546 = vpop.permute.xlu0 %6545
  %6547 = vrot.lane.b32.xlu0 %v89, 94
  %v6548 = vpop.permute.xlu0 %6547
  %6549 = vrot.lane.b32.xlu0 %v93, 94
  %v6550 = vpop.permute.xlu0 %6549
  %6551 = vrot.lane.b32.xlu0 %v97, 94
  %v6552 = vpop.permute.xlu0 %6551
  %6553 = vrot.lane.b32.xlu0 %v101, 94
  %v6554 = vpop.permute.xlu0 %6553
  %6555 = vrot.lane.b32.xlu0 %v105, 94
  %v6556 = vpop.permute.xlu0 %6555
  %6557 = vrot.lane.b32.xlu0 %v109, 94
  %v6558 = vpop.permute.xlu0 %6557
  %6559 = vrot.lane.b32.xlu0 %v113, 94
  %v6560 = vpop.permute.xlu0 %6559
  %6561 = vrot.lane.b32.xlu0 %v117, 94
  %v6562 = vpop.permute.xlu0 %6561
  %6563 = vrot.lane.b32.xlu0 %v121, 94
  %v6564 = vpop.permute.xlu0 %6563
  %6565 = vrot.lane.b32.xlu0 %v125, 94
  %v6566 = vpop.permute.xlu0 %6565
  %6567 = vrot.lane.b32.xlu0 %v129, 94
  %v6568 = vpop.permute.xlu0 %6567
  %6569 = vrot.lane.b32.xlu0 %v133, 94
  %v6570 = vpop.permute.xlu0 %6569
  %6571 = vrot.lane.b32.xlu0 %v137, 94
  %v6572 = vpop.permute.xlu0 %6571
  %vm6573 = vcmp.lt.s32.totalorder %v187, 94
  %v6574 = vsel %vm6573, %v6570, %v6572
  %v6575 = vsel %vm6573, %v6568, %v6570
  %v6576 = vsel %vm6573, %v6566, %v6568
  %v6577 = vsel %vm6573, %v6564, %v6566
  %v6578 = vsel %vm6573, %v6562, %v6564
  %v6579 = vsel %vm6573, %v6560, %v6562
  %v6580 = vsel %vm6573, %v6558, %v6560
  %v6581 = vsel %vm6573, %v6556, %v6558
  %v6582 = vsel %vm6573, %v6554, %v6556
  %v6583 = vsel %vm6573, %v6552, %v6554
  %v6584 = vsel %vm6573, %v6550, %v6552
  %v6585 = vsel %vm6573, %v6548, %v6550
  %v6586 = vsel %vm6573, %v6546, %v6548
  %v6587 = vsel %vm6573, %v6544, %v6546
  %v6588 = vsel %vm6573, %v6542, %v6544
  %v6589 = vsel %vm6573, %v6572, %v6542
  %s6590 = scalar_lea.vmem %s2, 384
  %v6591 = vld [vmem:[%s6590] ss:$8 sm:$0xf]
  %v6592 = vld [vmem:[%s6590] ss:$8 sm:$0xf0]
  %v6593 = vor.u32 %v6591, %v6592
  %s6594 = scalar_lea.vmem %s2, 448
  %v6595 = vld [vmem:[%s6594] ss:$8 sm:$0xf]
  %v6596 = vld [vmem:[%s6594] ss:$8 sm:$0xf0]
  %v6597 = vor.u32 %v6595, %v6596
  %v6600 = vlaneseq
  %v6601 = vshrl.u32 %v6600, 7
  %v6602 = vsub.s32 0, %v6601
  %v6603 = vrot.slane %v6593, %v6602
  %v6604 = vlaneseq
  %v6605 = vshrl.u32 %v6604, 7
  %v6606 = vsub.s32 1, %v6605
  %v6607 = vrot.slane %v6593, %v6606
  %v6608 = vlaneseq
  %v6609 = vshrl.u32 %v6608, 7
  %v6610 = vsub.s32 2, %v6609
  %v6611 = vrot.slane %v6593, %v6610
  %v6612 = vlaneseq
  %v6613 = vshrl.u32 %v6612, 7
  %v6614 = vsub.s32 3, %v6613
  %v6615 = vrot.slane %v6593, %v6614
  %v6616 = vlaneseq
  %v6617 = vshrl.u32 %v6616, 7
  %v6618 = vsub.s32 4, %v6617
  %v6619 = vrot.slane %v6593, %v6618
  %v6620 = vlaneseq
  %v6621 = vshrl.u32 %v6620, 7
  %v6622 = vsub.s32 5, %v6621
  %v6623 = vrot.slane %v6593, %v6622
  %v6624 = vlaneseq
  %v6625 = vshrl.u32 %v6624, 7
  %v6626 = vsub.s32 6, %v6625
  %v6627 = vrot.slane %v6593, %v6626
  %v6628 = vlaneseq
  %v6629 = vshrl.u32 %v6628, 7
  %v6630 = vsub.s32 7, %v6629
  %v6631 = vrot.slane %v6593, %v6630
  %v6632 = vlaneseq
  %v6633 = vshrl.u32 %v6632, 7
  %v6634 = vsub.s32 0, %v6633
  %v6635 = vrot.slane %v6597, %v6634
  %v6636 = vlaneseq
  %v6637 = vshrl.u32 %v6636, 7
  %v6638 = vsub.s32 1, %v6637
  %v6639 = vrot.slane %v6597, %v6638
  %v6640 = vlaneseq
  %v6641 = vshrl.u32 %v6640, 7
  %v6642 = vsub.s32 2, %v6641
  %v6643 = vrot.slane %v6597, %v6642
  %v6644 = vlaneseq
  %v6645 = vshrl.u32 %v6644, 7
  %v6646 = vsub.s32 3, %v6645
  %v6647 = vrot.slane %v6597, %v6646
  %v6648 = vlaneseq
  %v6649 = vshrl.u32 %v6648, 7
  %v6650 = vsub.s32 4, %v6649
  %v6651 = vrot.slane %v6597, %v6650
  %v6652 = vlaneseq
  %v6653 = vshrl.u32 %v6652, 7
  %v6654 = vsub.s32 5, %v6653
  %v6655 = vrot.slane %v6597, %v6654
  %v6656 = vlaneseq
  %v6657 = vshrl.u32 %v6656, 7
  %v6658 = vsub.s32 6, %v6657
  %v6659 = vrot.slane %v6597, %v6658
  %v6660 = vlaneseq
  %v6661 = vshrl.u32 %v6660, 7
  %v6662 = vsub.s32 7, %v6661
  %v6663 = vrot.slane %v6597, %v6662
  %v6680 = vmul.f32 %v6588, %v6603
  %v6681 = vmul.f32 %v6587, %v6607
  %v6682 = vmul.f32 %v6586, %v6611
  %v6683 = vmul.f32 %v6585, %v6615
  %v6684 = vmul.f32 %v6584, %v6619
  %v6685 = vmul.f32 %v6583, %v6623
  %v6686 = vmul.f32 %v6582, %v6627
  %v6687 = vmul.f32 %v6581, %v6631
  %v6688 = vmul.f32 %v6580, %v6635
  %v6689 = vmul.f32 %v6579, %v6639
  %v6690 = vmul.f32 %v6578, %v6643
  %v6691 = vmul.f32 %v6577, %v6647
  %v6692 = vmul.f32 %v6576, %v6651
  %v6693 = vmul.f32 %v6575, %v6655
  %v6694 = vmul.f32 %v6574, %v6659
  %v6695 = vmul.f32 %v6589, %v6663
  %v6712 = vcombine.low %v6680, %v6681
  %v6713 = vcombine.low %v6682, %v6683
  %v6714 = vcombine.low %v6684, %v6685
  %v6715 = vcombine.low %v6686, %v6687
  %v6717 = vunpack.c.l.s4 1966171168
  %v6718 = vunpack.c.0.s8 %v6717
  %v6719 = vlaneseq
  %v6720 = vshrl.u32 %v6719, 7
  %v6721 = vsub.s32 %v6718, %v6720
  %v6722 = vrot.slane %v6712, %v6721
  %v6724 = vunpack.c.l.s4 1966171168
  %v6725 = vunpack.c.0.s8 %v6724
  %v6726 = vlaneseq
  %v6727 = vshrl.u32 %v6726, 7
  %v6728 = vsub.s32 %v6725, %v6727
  %v6729 = vrot.slane %v6713, %v6728
  %v6731 = vunpack.c.l.s4 1966171168
  %v6732 = vunpack.c.0.s8 %v6731
  %v6733 = vlaneseq
  %v6734 = vshrl.u32 %v6733, 7
  %v6735 = vsub.s32 %v6732, %v6734
  %v6736 = vrot.slane %v6714, %v6735
  %v6738 = vunpack.c.l.s4 1966171168
  %v6739 = vunpack.c.0.s8 %v6738
  %v6740 = vlaneseq
  %v6741 = vshrl.u32 %v6740, 7
  %v6742 = vsub.s32 %v6739, %v6741
  %v6743 = vrot.slane %v6715, %v6742
  %v6744 = vcombine.low %v6722, %v6729
  %v6745 = vcombine.low %v6736, %v6743
  %v6747 = vunpack.c.l.s4 1966171168
  %v6748 = vunpack.c.0.s8 %v6747
  %v6749 = vlaneseq
  %v6750 = vshrl.u32 %v6749, 7
  %v6751 = vsub.s32 %v6748, %v6750
  %v6752 = vrot.slane %v6744, %v6751
  %v6754 = vunpack.c.l.s4 1966171168
  %v6755 = vunpack.c.0.s8 %v6754
  %v6756 = vlaneseq
  %v6757 = vshrl.u32 %v6756, 7
  %v6758 = vsub.s32 %v6755, %v6757
  %v6759 = vrot.slane %v6745, %v6758
  %v6760 = vcombine.low %v6752, %v6759
  %v6761 = vcombine.low %v6688, %v6689
  %v6762 = vcombine.low %v6690, %v6691
  %v6763 = vcombine.low %v6692, %v6693
  %v6764 = vcombine.low %v6694, %v6695
  %v6766 = vunpack.c.l.s4 1966171168
  %v6767 = vunpack.c.0.s8 %v6766
  %v6768 = vlaneseq
  %v6769 = vshrl.u32 %v6768, 7
  %v6770 = vsub.s32 %v6767, %v6769
  %v6771 = vrot.slane %v6761, %v6770
  %v6773 = vunpack.c.l.s4 1966171168
  %v6774 = vunpack.c.0.s8 %v6773
  %v6775 = vlaneseq
  %v6776 = vshrl.u32 %v6775, 7
  %v6777 = vsub.s32 %v6774, %v6776
  %v6778 = vrot.slane %v6762, %v6777
  %v6780 = vunpack.c.l.s4 1966171168
  %v6781 = vunpack.c.0.s8 %v6780
  %v6782 = vlaneseq
  %v6783 = vshrl.u32 %v6782, 7
  %v6784 = vsub.s32 %v6781, %v6783
  %v6785 = vrot.slane %v6763, %v6784
  %v6787 = vunpack.c.l.s4 1966171168
  %v6788 = vunpack.c.0.s8 %v6787
  %v6789 = vlaneseq
  %v6790 = vshrl.u32 %v6789, 7
  %v6791 = vsub.s32 %v6788, %v6790
  %v6792 = vrot.slane %v6764, %v6791
  %v6793 = vcombine.low %v6771, %v6778
  %v6794 = vcombine.low %v6785, %v6792
  %v6796 = vunpack.c.l.s4 1966171168
  %v6797 = vunpack.c.0.s8 %v6796
  %v6798 = vlaneseq
  %v6799 = vshrl.u32 %v6798, 7
  %v6800 = vsub.s32 %v6797, %v6799
  %v6801 = vrot.slane %v6793, %v6800
  %v6803 = vunpack.c.l.s4 1966171168
  %v6804 = vunpack.c.0.s8 %v6803
  %v6805 = vlaneseq
  %v6806 = vshrl.u32 %v6805, 7
  %v6807 = vsub.s32 %v6804, %v6806
  %v6808 = vrot.slane %v6794, %v6807
  %v6809 = vcombine.low %v6801, %v6808
  %s6812 = scalar_lea.vmem [#allocation2], 384
  %6813 = vst [vmem:[%s6812] ss:$8 sm:$0xf] %v6760
  %6814 = vst [vmem:[%s6812] ss:$8 sm:$0xf0] %v6760
  %s6815 = scalar_lea.vmem [#allocation2], 448
  %6816 = vst [vmem:[%s6815] ss:$8 sm:$0xf] %v6809
  %6817 = vst [vmem:[%s6815] ss:$8 sm:$0xf0] %v6809
  %v6818 = vld [vmem:[%s4] sm:$0xf]
  %v6819 = vld [vmem:[#allocation2] sm:$0xff]
  %v6820 = vld [vmem:[#allocation2 + $0x8] sm:$0xff]
  %v6821 = vld [vmem:[#allocation2 + $0x10] sm:$0xff]
  %v6822 = vld [vmem:[#allocation2 + $0x18] sm:$0xff]
  %v6823 = vld [vmem:[#allocation2 + $0x20] sm:$0xff]
  %v6824 = vld [vmem:[#allocation2 + $0x28] sm:$0xff]
  %v6825 = vld [vmem:[#allocation2 + $0x30] sm:$0xff]
  %v6826 = vld [vmem:[#allocation2 + $0x38] sm:$0xff]
  %v6827 = vld [vmem:[#allocation2 + $0x40] sm:$0xff]
  %v6828 = vld [vmem:[#allocation2 + $0x48] sm:$0xff]
  %v6829 = vld [vmem:[#allocation2 + $0x50] sm:$0xff]
  %v6830 = vld [vmem:[#allocation2 + $0x58] sm:$0xff]
  %v6831 = vld [vmem:[#allocation2 + $0x60] sm:$0xff]
  %v6832 = vld [vmem:[#allocation2 + $0x68] sm:$0xff]
  %v6833 = vld [vmem:[#allocation2 + $0x70] sm:$0xff]
  %v6834 = vld [vmem:[#allocation2 + $0x78] sm:$0xff]
  %v6835 = vld [vmem:[#allocation2 + $0x80] sm:$0xff]
  %v6836 = vld [vmem:[#allocation2 + $0x88] sm:$0xff]
  %v6837 = vld [vmem:[#allocation2 + $0x90] sm:$0xff]
  %v6838 = vld [vmem:[#allocation2 + $0x98] sm:$0xff]
  %v6839 = vld [vmem:[#allocation2 + $0xa0] sm:$0xff]
  %v6840 = vld [vmem:[#allocation2 + $0xa8] sm:$0xff]
  %v6841 = vld [vmem:[#allocation2 + $0xb0] sm:$0xff]
  %v6842 = vld [vmem:[#allocation2 + $0xb8] sm:$0xff]
  %v6843 = vld [vmem:[#allocation2 + $0xc0] sm:$0xff]
  %v6844 = vld [vmem:[#allocation2 + $0xc8] sm:$0xff]
  %v6845 = vld [vmem:[#allocation2 + $0xd0] sm:$0xff]
  %v6846 = vld [vmem:[#allocation2 + $0xd8] sm:$0xff]
  %v6847 = vld [vmem:[#allocation2 + $0xe0] sm:$0xff]
  %v6848 = vld [vmem:[#allocation2 + $0xe8] sm:$0xff]
  %v6849 = vld [vmem:[#allocation2 + $0xf0] sm:$0xff]
  %v6850 = vld [vmem:[#allocation2 + $0xf8] sm:$0xff]
  %v6851 = vld [vmem:[#allocation2 + $0x100] sm:$0xff]
  %v6852 = vld [vmem:[#allocation2 + $0x108] sm:$0xff]
  %v6853 = vld [vmem:[#allocation2 + $0x110] sm:$0xff]
  %v6854 = vld [vmem:[#allocation2 + $0x118] sm:$0xff]
  %v6855 = vld [vmem:[#allocation2 + $0x120] sm:$0xff]
  %v6856 = vld [vmem:[#allocation2 + $0x128] sm:$0xff]
  %v6857 = vld [vmem:[#allocation2 + $0x130] sm:$0xff]
  %v6858 = vld [vmem:[#allocation2 + $0x138] sm:$0xff]
  %v6859 = vld [vmem:[#allocation2 + $0x140] sm:$0xff]
  %v6860 = vld [vmem:[#allocation2 + $0x148] sm:$0xff]
  %v6861 = vld [vmem:[#allocation2 + $0x150] sm:$0xff]
  %v6862 = vld [vmem:[#allocation2 + $0x158] sm:$0xff]
  %v6863 = vld [vmem:[#allocation2 + $0x160] sm:$0xff]
  %v6864 = vld [vmem:[#allocation2 + $0x168] sm:$0xff]
  %v6865 = vld [vmem:[#allocation2 + $0x170] sm:$0xff]
  %v6866 = vld [vmem:[#allocation2 + $0x178] sm:$0xff]
  %v6867 = vld [vmem:[#allocation2 + $0x180] sm:$0xff]
  %v6868 = vld [vmem:[#allocation2 + $0x188] sm:$0xff]
  %v6869 = vld [vmem:[#allocation2 + $0x190] sm:$0xff]
  %v6870 = vld [vmem:[#allocation2 + $0x198] sm:$0xff]
  %v6871 = vld [vmem:[#allocation2 + $0x1a0] sm:$0xff]
  %v6872 = vld [vmem:[#allocation2 + $0x1a8] sm:$0xff]
  %v6873 = vld [vmem:[#allocation2 + $0x1b0] sm:$0xff]
  %v6874 = vld [vmem:[#allocation2 + $0x1b8] sm:$0xff]
  %v6875 = vld [vmem:[#allocation2 + $0x1c0] sm:$0xff]
  %v6876 = vld [vmem:[#allocation2 + $0x1c8] sm:$0xff]
  %v6877 = vld [vmem:[#allocation2 + $0x1d0] sm:$0xff]
  %v6878 = vld [vmem:[#allocation2 + $0x1d8] sm:$0xff]
  %v6879 = vld [vmem:[#allocation2 + $0x1e0] sm:$0xff]
  %v6880 = vld [vmem:[#allocation2 + $0x1e8] sm:$0xff]
  %v6881 = vld [vmem:[#allocation2 + $0x1f0] sm:$0xff]
  %v6882 = vld [vmem:[#allocation2 + $0x1f8] sm:$0xff]
  %v6883 = vld [vmem:[#allocation2 + $0x200] sm:$0xff]
  %v6884 = vld [vmem:[#allocation2 + $0x208] sm:$0xff]
  %v6885 = vld [vmem:[#allocation2 + $0x210] sm:$0xff]
  %v6886 = vld [vmem:[#allocation2 + $0x218] sm:$0xff]
  %v6887 = vld [vmem:[#allocation2 + $0x220] sm:$0xff]
  %v6888 = vld [vmem:[#allocation2 + $0x228] sm:$0xff]
  %v6889 = vld [vmem:[#allocation2 + $0x230] sm:$0xff]
  %v6890 = vld [vmem:[#allocation2 + $0x238] sm:$0xff]
  %v6891 = vld [vmem:[#allocation2 + $0x240] sm:$0xff]
  %v6892 = vld [vmem:[#allocation2 + $0x248] sm:$0xff]
  %v6893 = vld [vmem:[#allocation2 + $0x250] sm:$0xff]
  %v6894 = vld [vmem:[#allocation2 + $0x258] sm:$0xff]
  %v6895 = vld [vmem:[#allocation2 + $0x260] sm:$0xff]
  %v6896 = vld [vmem:[#allocation2 + $0x268] sm:$0xff]
  %v6897 = vld [vmem:[#allocation2 + $0x270] sm:$0xff]
  %v6898 = vld [vmem:[#allocation2 + $0x278] sm:$0xff]
  %vm6899 = vcmask 326656
  %v6901 = vsel %vm6899, %v6818, 0
  %6903 = vmatprep.subr.mxu0 0.0
  %6904 = vmatpush1.msra.mxu0 0.0
  %6905 = vmatprep.subr.mxu0 0.0
  %6906 = vmatpush1.msra.mxu0 0.0
  %6907 = vmatprep.subr.mxu0 0.0
  %6908 = vmatpush1.msra.mxu0 0.0
  %6909 = vmatprep.subr.mxu0 0.0
  %6910 = vmatpush1.msra.mxu0 0.0
  %6911 = vmatprep.subr.mxu0 0.0
  %6912 = vmatpush1.msra.mxu0 0.0
  %6913 = vmatprep.subr.mxu0 0.0
  %6914 = vmatpush1.msra.mxu0 0.0
  %6915 = vmatprep.subr.mxu0 0.0
  %6916 = vmatpush1.msra.mxu0 0.0
  %6917 = vmatprep.subr.mxu0 0.0
  %6918 = vmatpush1.msra.mxu0 0.0
  %6919 = vmatprep.subr.mxu0 0.0
  %6920 = vmatpush1.msra.mxu0 0.0
  %6921 = vmatprep.subr.mxu0 0.0
  %6922 = vmatpush1.msra.mxu0 0.0
  %6923 = vmatprep.subr.mxu0 0.0
  %6924 = vmatpush1.msra.mxu0 0.0
  %6925 = vmatprep.subr.mxu0 %v6884
  %6926 = vmatpush1.msra.mxu0 %v6883
  %6927 = vmatprep.subr.mxu0 %v6868
  %6928 = vmatpush1.msra.mxu0 %v6867
  %6929 = vmatprep.subr.mxu0 %v6852
  %6930 = vmatpush1.msra.mxu0 %v6851
  %6931 = vmatprep.subr.mxu0 %v6836
  %6932 = vmatpush1.msra.mxu0 %v6835
  %6933 = vmatprep.subr.mxu0 %v6820
  %6934 = vmatpush1.msra.mxu0 %v6819
  %6935 = vmatprep.subr.mxu0 0.0
  %6936 = vmatpush2.msra.mxu0 0.0
  %6937 = vmatprep.subr.mxu0 0.0
  %6938 = vmatpush2.msra.mxu0 0.0
  %6939 = vmatprep.subr.mxu0 0.0
  %6940 = vmatpush2.msra.mxu0 0.0
  %6941 = vmatprep.subr.mxu0 0.0
  %6942 = vmatpush2.msra.mxu0 0.0
  %6943 = vmatprep.subr.mxu0 0.0
  %6944 = vmatpush2.msra.mxu0 0.0
  %6945 = vmatprep.subr.mxu0 0.0
  %6946 = vmatpush2.msra.mxu0 0.0
  %6947 = vmatprep.subr.mxu0 0.0
  %6948 = vmatpush2.msra.mxu0 0.0
  %6949 = vmatprep.subr.mxu0 0.0
  %6950 = vmatpush2.msra.mxu0 0.0
  %6951 = vmatprep.subr.mxu0 0.0
  %6952 = vmatpush2.msra.mxu0 0.0
  %6953 = vmatprep.subr.mxu0 0.0
  %6954 = vmatpush2.msra.mxu0 0.0
  %6955 = vmatprep.subr.mxu0 0.0
  %6956 = vmatpush2.msra.mxu0 0.0
  %6957 = vmatprep.subr.mxu0 0.0
  %6958 = vmatpush2.msra.mxu0 0.0
  %6959 = vmatprep.subr.mxu0 0.0
  %6960 = vmatpush2.msra.mxu0 0.0
  %6961 = vmatprep.subr.mxu0 0.0
  %6962 = vmatpush2.msra.mxu0 0.0
  %6963 = vmatprep.subr.mxu0 0.0
  %6964 = vmatpush2.msra.mxu0 0.0
  %6965 = vmatprep.subr.mxu0 0.0
  %6966 = vmatpush2.msra.mxu0 0.0
  %6967 = vmatprep.mubr.f32.mxu0 0.0
  %6968 = vmatmul.mubr.f32.gmra.mxu0 %v6901
  %v6969 = vpop.f32.mrf.mxu0
  %v6970 = vadd.f32 0.0, %v6969
  %v6971 = vpop.f32.mrf.mxu0
  %v6972 = vadd.f32 0.0, %v6971
  %6973 = vdwg.mxu0
  %6974 = vmatprep.subr.mxu0 0.0
  %6975 = vmatpush1.msra.mxu0 0.0
  %6976 = vmatprep.subr.mxu0 0.0
  %6977 = vmatpush1.msra.mxu0 0.0
  %6978 = vmatprep.subr.mxu0 0.0
  %6979 = vmatpush1.msra.mxu0 0.0
  %6980 = vmatprep.subr.mxu0 0.0
  %6981 = vmatpush1.msra.mxu0 0.0
  %6982 = vmatprep.subr.mxu0 0.0
  %6983 = vmatpush1.msra.mxu0 0.0
  %6984 = vmatprep.subr.mxu0 0.0
  %6985 = vmatpush1.msra.mxu0 0.0
  %6986 = vmatprep.subr.mxu0 0.0
  %6987 = vmatpush1.msra.mxu0 0.0
  %6988 = vmatprep.subr.mxu0 0.0
  %6989 = vmatpush1.msra.mxu0 0.0
  %6990 = vmatprep.subr.mxu0 0.0
  %6991 = vmatpush1.msra.mxu0 0.0
  %6992 = vmatprep.subr.mxu0 0.0
  %6993 = vmatpush1.msra.mxu0 0.0
  %6994 = vmatprep.subr.mxu0 0.0
  %6995 = vmatpush1.msra.mxu0 0.0
  %6996 = vmatprep.subr.mxu0 %v6886
  %6997 = vmatpush1.msra.mxu0 %v6885
  %6998 = vmatprep.subr.mxu0 %v6870
  %6999 = vmatpush1.msra.mxu0 %v6869
  %7000 = vmatprep.subr.mxu0 %v6854
  %7001 = vmatpush1.msra.mxu0 %v6853
  %7002 = vmatprep.subr.mxu0 %v6838
  %7003 = vmatpush1.msra.mxu0 %v6837
  %7004 = vmatprep.subr.mxu0 %v6822
  %7005 = vmatpush1.msra.mxu0 %v6821
  %7006 = vmatprep.subr.mxu0 0.0
  %7007 = vmatpush2.msra.mxu0 0.0
  %7008 = vmatprep.subr.mxu0 0.0
  %7009 = vmatpush2.msra.mxu0 0.0
  %7010 = vmatprep.subr.mxu0 0.0
  %7011 = vmatpush2.msra.mxu0 0.0
  %7012 = vmatprep.subr.mxu0 0.0
  %7013 = vmatpush2.msra.mxu0 0.0
  %7014 = vmatprep.subr.mxu0 0.0
  %7015 = vmatpush2.msra.mxu0 0.0
  %7016 = vmatprep.subr.mxu0 0.0
  %7017 = vmatpush2.msra.mxu0 0.0
  %7018 = vmatprep.subr.mxu0 0.0
  %7019 = vmatpush2.msra.mxu0 0.0
  %7020 = vmatprep.subr.mxu0 0.0
  %7021 = vmatpush2.msra.mxu0 0.0
  %7022 = vmatprep.subr.mxu0 0.0
  %7023 = vmatpush2.msra.mxu0 0.0
  %7024 = vmatprep.subr.mxu0 0.0
  %7025 = vmatpush2.msra.mxu0 0.0
  %7026 = vmatprep.subr.mxu0 0.0
  %7027 = vmatpush2.msra.mxu0 0.0
  %7028 = vmatprep.subr.mxu0 0.0
  %7029 = vmatpush2.msra.mxu0 0.0
  %7030 = vmatprep.subr.mxu0 0.0
  %7031 = vmatpush2.msra.mxu0 0.0
  %7032 = vmatprep.subr.mxu0 0.0
  %7033 = vmatpush2.msra.mxu0 0.0
  %7034 = vmatprep.subr.mxu0 0.0
  %7035 = vmatpush2.msra.mxu0 0.0
  %7036 = vmatprep.subr.mxu0 0.0
  %7037 = vmatpush2.msra.mxu0 0.0
  %7038 = vmatprep.mubr.f32.mxu0 0.0
  %7039 = vmatmul.mubr.f32.gmra.mxu0 %v6901
  %v7040 = vpop.f32.mrf.mxu0
  %v7041 = vadd.f32 0.0, %v7040
  %v7042 = vpop.f32.mrf.mxu0
  %v7043 = vadd.f32 0.0, %v7042
  %7044 = vdwg.mxu0
  %7045 = vmatprep.subr.mxu0 0.0
  %7046 = vmatpush1.msra.mxu0 0.0
  %7047 = vmatprep.subr.mxu0 0.0
  %7048 = vmatpush1.msra.mxu0 0.0
  %7049 = vmatprep.subr.mxu0 0.0
  %7050 = vmatpush1.msra.mxu0 0.0
  %7051 = vmatprep.subr.mxu0 0.0
  %7052 = vmatpush1.msra.mxu0 0.0
  %7053 = vmatprep.subr.mxu0 0.0
  %7054 = vmatpush1.msra.mxu0 0.0
  %7055 = vmatprep.subr.mxu0 0.0
  %7056 = vmatpush1.msra.mxu0 0.0
  %7057 = vmatprep.subr.mxu0 0.0
  %7058 = vmatpush1.msra.mxu0 0.0
  %7059 = vmatprep.subr.mxu0 0.0
  %7060 = vmatpush1.msra.mxu0 0.0
  %7061 = vmatprep.subr.mxu0 0.0
  %7062 = vmatpush1.msra.mxu0 0.0
  %7063 = vmatprep.subr.mxu0 0.0
  %7064 = vmatpush1.msra.mxu0 0.0
  %7065 = vmatprep.subr.mxu0 0.0
  %7066 = vmatpush1.msra.mxu0 0.0
  %7067 = vmatprep.subr.mxu0 %v6888
  %7068 = vmatpush1.msra.mxu0 %v6887
  %7069 = vmatprep.subr.mxu0 %v6872
  %7070 = vmatpush1.msra.mxu0 %v6871
  %7071 = vmatprep.subr.mxu0 %v6856
  %7072 = vmatpush1.msra.mxu0 %v6855
  %7073 = vmatprep.subr.mxu0 %v6840
  %7074 = vmatpush1.msra.mxu0 %v6839
  %7075 = vmatprep.subr.mxu0 %v6824
  %7076 = vmatpush1.msra.mxu0 %v6823
  %7077 = vmatprep.subr.mxu0 0.0
  %7078 = vmatpush2.msra.mxu0 0.0
  %7079 = vmatprep.subr.mxu0 0.0
  %7080 = vmatpush2.msra.mxu0 0.0
  %7081 = vmatprep.subr.mxu0 0.0
  %7082 = vmatpush2.msra.mxu0 0.0
  %7083 = vmatprep.subr.mxu0 0.0
  %7084 = vmatpush2.msra.mxu0 0.0
  %7085 = vmatprep.subr.mxu0 0.0
  %7086 = vmatpush2.msra.mxu0 0.0
  %7087 = vmatprep.subr.mxu0 0.0
  %7088 = vmatpush2.msra.mxu0 0.0
  %7089 = vmatprep.subr.mxu0 0.0
  %7090 = vmatpush2.msra.mxu0 0.0
  %7091 = vmatprep.subr.mxu0 0.0
  %7092 = vmatpush2.msra.mxu0 0.0
  %7093 = vmatprep.subr.mxu0 0.0
  %7094 = vmatpush2.msra.mxu0 0.0
  %7095 = vmatprep.subr.mxu0 0.0
  %7096 = vmatpush2.msra.mxu0 0.0
  %7097 = vmatprep.subr.mxu0 0.0
  %7098 = vmatpush2.msra.mxu0 0.0
  %7099 = vmatprep.subr.mxu0 0.0
  %7100 = vmatpush2.msra.mxu0 0.0
  %7101 = vmatprep.subr.mxu0 0.0
  %7102 = vmatpush2.msra.mxu0 0.0
  %7103 = vmatprep.subr.mxu0 0.0
  %7104 = vmatpush2.msra.mxu0 0.0
  %7105 = vmatprep.subr.mxu0 0.0
  %7106 = vmatpush2.msra.mxu0 0.0
  %7107 = vmatprep.subr.mxu0 0.0
  %7108 = vmatpush2.msra.mxu0 0.0
  %7109 = vmatprep.mubr.f32.mxu0 0.0
  %7110 = vmatmul.mubr.f32.gmra.mxu0 %v6901
  %v7111 = vpop.f32.mrf.mxu0
  %v7112 = vadd.f32 0.0, %v7111
  %v7113 = vpop.f32.mrf.mxu0
  %v7114 = vadd.f32 0.0, %v7113
  %7115 = vdwg.mxu0
  %7116 = vmatprep.subr.mxu0 0.0
  %7117 = vmatpush1.msra.mxu0 0.0
  %7118 = vmatprep.subr.mxu0 0.0
  %7119 = vmatpush1.msra.mxu0 0.0
  %7120 = vmatprep.subr.mxu0 0.0
  %7121 = vmatpush1.msra.mxu0 0.0
  %7122 = vmatprep.subr.mxu0 0.0
  %7123 = vmatpush1.msra.mxu0 0.0
  %7124 = vmatprep.subr.mxu0 0.0
  %7125 = vmatpush1.msra.mxu0 0.0
  %7126 = vmatprep.subr.mxu0 0.0
  %7127 = vmatpush1.msra.mxu0 0.0
  %7128 = vmatprep.subr.mxu0 0.0
  %7129 = vmatpush1.msra.mxu0 0.0
  %7130 = vmatprep.subr.mxu0 0.0
  %7131 = vmatpush1.msra.mxu0 0.0
  %7132 = vmatprep.subr.mxu0 0.0
  %7133 = vmatpush1.msra.mxu0 0.0
  %7134 = vmatprep.subr.mxu0 0.0
  %7135 = vmatpush1.msra.mxu0 0.0
  %7136 = vmatprep.subr.mxu0 0.0
  %7137 = vmatpush1.msra.mxu0 0.0
  %7138 = vmatprep.subr.mxu0 %v6890
  %7139 = vmatpush1.msra.mxu0 %v6889
  %7140 = vmatprep.subr.mxu0 %v6874
  %7141 = vmatpush1.msra.mxu0 %v6873
  %7142 = vmatprep.subr.mxu0 %v6858
  %7143 = vmatpush1.msra.mxu0 %v6857
  %7144 = vmatprep.subr.mxu0 %v6842
  %7145 = vmatpush1.msra.mxu0 %v6841
  %7146 = vmatprep.subr.mxu0 %v6826
  %7147 = vmatpush1.msra.mxu0 %v6825
  %7148 = vmatprep.subr.mxu0 0.0
  %7149 = vmatpush2.msra.mxu0 0.0
  %7150 = vmatprep.subr.mxu0 0.0
  %7151 = vmatpush2.msra.mxu0 0.0
  %7152 = vmatprep.subr.mxu0 0.0
  %7153 = vmatpush2.msra.mxu0 0.0
  %7154 = vmatprep.subr.mxu0 0.0
  %7155 = vmatpush2.msra.mxu0 0.0
  %7156 = vmatprep.subr.mxu0 0.0
  %7157 = vmatpush2.msra.mxu0 0.0
  %7158 = vmatprep.subr.mxu0 0.0
  %7159 = vmatpush2.msra.mxu0 0.0
  %7160 = vmatprep.subr.mxu0 0.0
  %7161 = vmatpush2.msra.mxu0 0.0
  %7162 = vmatprep.subr.mxu0 0.0
  %7163 = vmatpush2.msra.mxu0 0.0
  %7164 = vmatprep.subr.mxu0 0.0
  %7165 = vmatpush2.msra.mxu0 0.0
  %7166 = vmatprep.subr.mxu0 0.0
  %7167 = vmatpush2.msra.mxu0 0.0
  %7168 = vmatprep.subr.mxu0 0.0
  %7169 = vmatpush2.msra.mxu0 0.0
  %7170 = vmatprep.subr.mxu0 0.0
  %7171 = vmatpush2.msra.mxu0 0.0
  %7172 = vmatprep.subr.mxu0 0.0
  %7173 = vmatpush2.msra.mxu0 0.0
  %7174 = vmatprep.subr.mxu0 0.0
  %7175 = vmatpush2.msra.mxu0 0.0
  %7176 = vmatprep.subr.mxu0 0.0
  %7177 = vmatpush2.msra.mxu0 0.0
  %7178 = vmatprep.subr.mxu0 0.0
  %7179 = vmatpush2.msra.mxu0 0.0
  %7180 = vmatprep.mubr.f32.mxu0 0.0
  %7181 = vmatmul.mubr.f32.gmra.mxu0 %v6901
  %v7182 = vpop.f32.mrf.mxu0
  %v7183 = vadd.f32 0.0, %v7182
  %v7184 = vpop.f32.mrf.mxu0
  %v7185 = vadd.f32 0.0, %v7184
  %7186 = vdwg.mxu0
  %7187 = vmatprep.subr.mxu0 0.0
  %7188 = vmatpush1.msra.mxu0 0.0
  %7189 = vmatprep.subr.mxu0 0.0
  %7190 = vmatpush1.msra.mxu0 0.0
  %7191 = vmatprep.subr.mxu0 0.0
  %7192 = vmatpush1.msra.mxu0 0.0
  %7193 = vmatprep.subr.mxu0 0.0
  %7194 = vmatpush1.msra.mxu0 0.0
  %7195 = vmatprep.subr.mxu0 0.0
  %7196 = vmatpush1.msra.mxu0 0.0
  %7197 = vmatprep.subr.mxu0 0.0
  %7198 = vmatpush1.msra.mxu0 0.0
  %7199 = vmatprep.subr.mxu0 0.0
  %7200 = vmatpush1.msra.mxu0 0.0
  %7201 = vmatprep.subr.mxu0 0.0
  %7202 = vmatpush1.msra.mxu0 0.0
  %7203 = vmatprep.subr.mxu0 0.0
  %7204 = vmatpush1.msra.mxu0 0.0
  %7205 = vmatprep.subr.mxu0 0.0
  %7206 = vmatpush1.msra.mxu0 0.0
  %7207 = vmatprep.subr.mxu0 0.0
  %7208 = vmatpush1.msra.mxu0 0.0
  %7209 = vmatprep.subr.mxu0 %v6892
  %7210 = vmatpush1.msra.mxu0 %v6891
  %7211 = vmatprep.subr.mxu0 %v6876
  %7212 = vmatpush1.msra.mxu0 %v6875
  %7213 = vmatprep.subr.mxu0 %v6860
  %7214 = vmatpush1.msra.mxu0 %v6859
  %7215 = vmatprep.subr.mxu0 %v6844
  %7216 = vmatpush1.msra.mxu0 %v6843
  %7217 = vmatprep.subr.mxu0 %v6828
  %7218 = vmatpush1.msra.mxu0 %v6827
  %7219 = vmatprep.subr.mxu0 0.0
  %7220 = vmatpush2.msra.mxu0 0.0
  %7221 = vmatprep.subr.mxu0 0.0
  %7222 = vmatpush2.msra.mxu0 0.0
  %7223 = vmatprep.subr.mxu0 0.0
  %7224 = vmatpush2.msra.mxu0 0.0
  %7225 = vmatprep.subr.mxu0 0.0
  %7226 = vmatpush2.msra.mxu0 0.0
  %7227 = vmatprep.subr.mxu0 0.0
  %7228 = vmatpush2.msra.mxu0 0.0
  %7229 = vmatprep.subr.mxu0 0.0
  %7230 = vmatpush2.msra.mxu0 0.0
  %7231 = vmatprep.subr.mxu0 0.0
  %7232 = vmatpush2.msra.mxu0 0.0
  %7233 = vmatprep.subr.mxu0 0.0
  %7234 = vmatpush2.msra.mxu0 0.0
  %7235 = vmatprep.subr.mxu0 0.0
  %7236 = vmatpush2.msra.mxu0 0.0
  %7237 = vmatprep.subr.mxu0 0.0
  %7238 = vmatpush2.msra.mxu0 0.0
  %7239 = vmatprep.subr.mxu0 0.0
  %7240 = vmatpush2.msra.mxu0 0.0
  %7241 = vmatprep.subr.mxu0 0.0
  %7242 = vmatpush2.msra.mxu0 0.0
  %7243 = vmatprep.subr.mxu0 0.0
  %7244 = vmatpush2.msra.mxu0 0.0
  %7245 = vmatprep.subr.mxu0 0.0
  %7246 = vmatpush2.msra.mxu0 0.0
  %7247 = vmatprep.subr.mxu0 0.0
  %7248 = vmatpush2.msra.mxu0 0.0
  %7249 = vmatprep.subr.mxu0 0.0
  %7250 = vmatpush2.msra.mxu0 0.0
  %7251 = vmatprep.mubr.f32.mxu0 0.0
  %7252 = vmatmul.mubr.f32.gmra.mxu0 %v6901
  %v7253 = vpop.f32.mrf.mxu0
  %v7254 = vadd.f32 0.0, %v7253
  %v7255 = vpop.f32.mrf.mxu0
  %v7256 = vadd.f32 0.0, %v7255
  %7257 = vdwg.mxu0
  %7258 = vmatprep.subr.mxu0 0.0
  %7259 = vmatpush1.msra.mxu0 0.0
  %7260 = vmatprep.subr.mxu0 0.0
  %7261 = vmatpush1.msra.mxu0 0.0
  %7262 = vmatprep.subr.mxu0 0.0
  %7263 = vmatpush1.msra.mxu0 0.0
  %7264 = vmatprep.subr.mxu0 0.0
  %7265 = vmatpush1.msra.mxu0 0.0
  %7266 = vmatprep.subr.mxu0 0.0
  %7267 = vmatpush1.msra.mxu0 0.0
  %7268 = vmatprep.subr.mxu0 0.0
  %7269 = vmatpush1.msra.mxu0 0.0
  %7270 = vmatprep.subr.mxu0 0.0
  %7271 = vmatpush1.msra.mxu0 0.0
  %7272 = vmatprep.subr.mxu0 0.0
  %7273 = vmatpush1.msra.mxu0 0.0
  %7274 = vmatprep.subr.mxu0 0.0
  %7275 = vmatpush1.msra.mxu0 0.0
  %7276 = vmatprep.subr.mxu0 0.0
  %7277 = vmatpush1.msra.mxu0 0.0
  %7278 = vmatprep.subr.mxu0 0.0
  %7279 = vmatpush1.msra.mxu0 0.0
  %7280 = vmatprep.subr.mxu0 %v6894
  %7281 = vmatpush1.msra.mxu0 %v6893
  %7282 = vmatprep.subr.mxu0 %v6878
  %7283 = vmatpush1.msra.mxu0 %v6877
  %7284 = vmatprep.subr.mxu0 %v6862
  %7285 = vmatpush1.msra.mxu0 %v6861
  %7286 = vmatprep.subr.mxu0 %v6846
  %7287 = vmatpush1.msra.mxu0 %v6845
  %7288 = vmatprep.subr.mxu0 %v6830
  %7289 = vmatpush1.msra.mxu0 %v6829
  %7290 = vmatprep.subr.mxu0 0.0
  %7291 = vmatpush2.msra.mxu0 0.0
  %7292 = vmatprep.subr.mxu0 0.0
  %7293 = vmatpush2.msra.mxu0 0.0
  %7294 = vmatprep.subr.mxu0 0.0
  %7295 = vmatpush2.msra.mxu0 0.0
  %7296 = vmatprep.subr.mxu0 0.0
  %7297 = vmatpush2.msra.mxu0 0.0
  %7298 = vmatprep.subr.mxu0 0.0
  %7299 = vmatpush2.msra.mxu0 0.0
  %7300 = vmatprep.subr.mxu0 0.0
  %7301 = vmatpush2.msra.mxu0 0.0
  %7302 = vmatprep.subr.mxu0 0.0
  %7303 = vmatpush2.msra.mxu0 0.0
  %7304 = vmatprep.subr.mxu0 0.0
  %7305 = vmatpush2.msra.mxu0 0.0
  %7306 = vmatprep.subr.mxu0 0.0
  %7307 = vmatpush2.msra.mxu0 0.0
  %7308 = vmatprep.subr.mxu0 0.0
  %7309 = vmatpush2.msra.mxu0 0.0
  %7310 = vmatprep.subr.mxu0 0.0
  %7311 = vmatpush2.msra.mxu0 0.0
  %7312 = vmatprep.subr.mxu0 0.0
  %7313 = vmatpush2.msra.mxu0 0.0
  %7314 = vmatprep.subr.mxu0 0.0
  %7315 = vmatpush2.msra.mxu0 0.0
  %7316 = vmatprep.subr.mxu0 0.0
  %7317 = vmatpush2.msra.mxu0 0.0
  %7318 = vmatprep.subr.mxu0 0.0
  %7319 = vmatpush2.msra.mxu0 0.0
  %7320 = vmatprep.subr.mxu0 0.0
  %7321 = vmatpush2.msra.mxu0 0.0
  %7322 = vmatprep.mubr.f32.mxu0 0.0
  %7323 = vmatmul.mubr.f32.gmra.mxu0 %v6901
  %v7324 = vpop.f32.mrf.mxu0
  %v7325 = vadd.f32 0.0, %v7324
  %v7326 = vpop.f32.mrf.mxu0
  %v7327 = vadd.f32 0.0, %v7326
  %7328 = vdwg.mxu0
  %7329 = vmatprep.subr.mxu0 0.0
  %7330 = vmatpush1.msra.mxu0 0.0
  %7331 = vmatprep.subr.mxu0 0.0
  %7332 = vmatpush1.msra.mxu0 0.0
  %7333 = vmatprep.subr.mxu0 0.0
  %7334 = vmatpush1.msra.mxu0 0.0
  %7335 = vmatprep.subr.mxu0 0.0
  %7336 = vmatpush1.msra.mxu0 0.0
  %7337 = vmatprep.subr.mxu0 0.0
  %7338 = vmatpush1.msra.mxu0 0.0
  %7339 = vmatprep.subr.mxu0 0.0
  %7340 = vmatpush1.msra.mxu0 0.0
  %7341 = vmatprep.subr.mxu0 0.0
  %7342 = vmatpush1.msra.mxu0 0.0
  %7343 = vmatprep.subr.mxu0 0.0
  %7344 = vmatpush1.msra.mxu0 0.0
  %7345 = vmatprep.subr.mxu0 0.0
  %7346 = vmatpush1.msra.mxu0 0.0
  %7347 = vmatprep.subr.mxu0 0.0
  %7348 = vmatpush1.msra.mxu0 0.0
  %7349 = vmatprep.subr.mxu0 0.0
  %7350 = vmatpush1.msra.mxu0 0.0
  %7351 = vmatprep.subr.mxu0 %v6896
  %7352 = vmatpush1.msra.mxu0 %v6895
  %7353 = vmatprep.subr.mxu0 %v6880
  %7354 = vmatpush1.msra.mxu0 %v6879
  %7355 = vmatprep.subr.mxu0 %v6864
  %7356 = vmatpush1.msra.mxu0 %v6863
  %7357 = vmatprep.subr.mxu0 %v6848
  %7358 = vmatpush1.msra.mxu0 %v6847
  %7359 = vmatprep.subr.mxu0 %v6832
  %7360 = vmatpush1.msra.mxu0 %v6831
  %7361 = vmatprep.subr.mxu0 0.0
  %7362 = vmatpush2.msra.mxu0 0.0
  %7363 = vmatprep.subr.mxu0 0.0
  %7364 = vmatpush2.msra.mxu0 0.0
  %7365 = vmatprep.subr.mxu0 0.0
  %7366 = vmatpush2.msra.mxu0 0.0
  %7367 = vmatprep.subr.mxu0 0.0
  %7368 = vmatpush2.msra.mxu0 0.0
  %7369 = vmatprep.subr.mxu0 0.0
  %7370 = vmatpush2.msra.mxu0 0.0
  %7371 = vmatprep.subr.mxu0 0.0
  %7372 = vmatpush2.msra.mxu0 0.0
  %7373 = vmatprep.subr.mxu0 0.0
  %7374 = vmatpush2.msra.mxu0 0.0
  %7375 = vmatprep.subr.mxu0 0.0
  %7376 = vmatpush2.msra.mxu0 0.0
  %7377 = vmatprep.subr.mxu0 0.0
  %7378 = vmatpush2.msra.mxu0 0.0
  %7379 = vmatprep.subr.mxu0 0.0
  %7380 = vmatpush2.msra.mxu0 0.0
  %7381 = vmatprep.subr.mxu0 0.0
  %7382 = vmatpush2.msra.mxu0 0.0
  %7383 = vmatprep.subr.mxu0 0.0
  %7384 = vmatpush2.msra.mxu0 0.0
  %7385 = vmatprep.subr.mxu0 0.0
  %7386 = vmatpush2.msra.mxu0 0.0
  %7387 = vmatprep.subr.mxu0 0.0
  %7388 = vmatpush2.msra.mxu0 0.0
  %7389 = vmatprep.subr.mxu0 0.0
  %7390 = vmatpush2.msra.mxu0 0.0
  %7391 = vmatprep.subr.mxu0 0.0
  %7392 = vmatpush2.msra.mxu0 0.0
  %7393 = vmatprep.mubr.f32.mxu0 0.0
  %7394 = vmatmul.mubr.f32.gmra.mxu0 %v6901
  %v7395 = vpop.f32.mrf.mxu0
  %v7396 = vadd.f32 0.0, %v7395
  %v7397 = vpop.f32.mrf.mxu0
  %v7398 = vadd.f32 0.0, %v7397
  %7399 = vdwg.mxu0
  %7400 = vmatprep.subr.mxu0 0.0
  %7401 = vmatpush1.msra.mxu0 0.0
  %7402 = vmatprep.subr.mxu0 0.0
  %7403 = vmatpush1.msra.mxu0 0.0
  %7404 = vmatprep.subr.mxu0 0.0
  %7405 = vmatpush1.msra.mxu0 0.0
  %7406 = vmatprep.subr.mxu0 0.0
  %7407 = vmatpush1.msra.mxu0 0.0
  %7408 = vmatprep.subr.mxu0 0.0
  %7409 = vmatpush1.msra.mxu0 0.0
  %7410 = vmatprep.subr.mxu0 0.0
  %7411 = vmatpush1.msra.mxu0 0.0
  %7412 = vmatprep.subr.mxu0 0.0
  %7413 = vmatpush1.msra.mxu0 0.0
  %7414 = vmatprep.subr.mxu0 0.0
  %7415 = vmatpush1.msra.mxu0 0.0
  %7416 = vmatprep.subr.mxu0 0.0
  %7417 = vmatpush1.msra.mxu0 0.0
  %7418 = vmatprep.subr.mxu0 0.0
  %7419 = vmatpush1.msra.mxu0 0.0
  %7420 = vmatprep.subr.mxu0 0.0
  %7421 = vmatpush1.msra.mxu0 0.0
  %7422 = vmatprep.subr.mxu0 %v6898
  %7423 = vmatpush1.msra.mxu0 %v6897
  %7424 = vmatprep.subr.mxu0 %v6882
  %7425 = vmatpush1.msra.mxu0 %v6881
  %7426 = vmatprep.subr.mxu0 %v6866
  %7427 = vmatpush1.msra.mxu0 %v6865
  %7428 = vmatprep.subr.mxu0 %v6850
  %7429 = vmatpush1.msra.mxu0 %v6849
  %7430 = vmatprep.subr.mxu0 %v6834
  %7431 = vmatpush1.msra.mxu0 %v6833
  %7432 = vmatprep.subr.mxu0 0.0
  %7433 = vmatpush2.msra.mxu0 0.0
  %7434 = vmatprep.subr.mxu0 0.0
  %7435 = vmatpush2.msra.mxu0 0.0
  %7436 = vmatprep.subr.mxu0 0.0
  %7437 = vmatpush2.msra.mxu0 0.0
  %7438 = vmatprep.subr.mxu0 0.0
  %7439 = vmatpush2.msra.mxu0 0.0
  %7440 = vmatprep.subr.mxu0 0.0
  %7441 = vmatpush2.msra.mxu0 0.0
  %7442 = vmatprep.subr.mxu0 0.0
  %7443 = vmatpush2.msra.mxu0 0.0
  %7444 = vmatprep.subr.mxu0 0.0
  %7445 = vmatpush2.msra.mxu0 0.0
  %7446 = vmatprep.subr.mxu0 0.0
  %7447 = vmatpush2.msra.mxu0 0.0
  %7448 = vmatprep.subr.mxu0 0.0
  %7449 = vmatpush2.msra.mxu0 0.0
  %7450 = vmatprep.subr.mxu0 0.0
  %7451 = vmatpush2.msra.mxu0 0.0
  %7452 = vmatprep.subr.mxu0 0.0
  %7453 = vmatpush2.msra.mxu0 0.0
  %7454 = vmatprep.subr.mxu0 0.0
  %7455 = vmatpush2.msra.mxu0 0.0
  %7456 = vmatprep.subr.mxu0 0.0
  %7457 = vmatpush2.msra.mxu0 0.0
  %7458 = vmatprep.subr.mxu0 0.0
  %7459 = vmatpush2.msra.mxu0 0.0
  %7460 = vmatprep.subr.mxu0 0.0
  %7461 = vmatpush2.msra.mxu0 0.0
  %7462 = vmatprep.subr.mxu0 0.0
  %7463 = vmatpush2.msra.mxu0 0.0
  %7464 = vmatprep.mubr.f32.mxu0 0.0
  %7465 = vmatmul.mubr.f32.gmra.mxu0 %v6901
  %v7466 = vpop.f32.mrf.mxu0
  %v7467 = vadd.f32 0.0, %v7466
  %v7468 = vpop.f32.mrf.mxu0
  %v7469 = vadd.f32 0.0, %v7468
  %7470 = vdwg.mxu0
  %v7471 = vmax.f32 %v6970, 0.0
  %v7472 = vmax.f32 %v6972, 0.0
  %v7473 = vmax.f32 %v7041, 0.0
  %v7474 = vmax.f32 %v7043, 0.0
  %v7475 = vmax.f32 %v7112, 0.0
  %v7476 = vmax.f32 %v7114, 0.0
  %v7477 = vmax.f32 %v7183, 0.0
  %v7478 = vmax.f32 %v7185, 0.0
  %v7479 = vmax.f32 %v7254, 0.0
  %v7480 = vmax.f32 %v7256, 0.0
  %v7481 = vmax.f32 %v7325, 0.0
  %v7482 = vmax.f32 %v7327, 0.0
  %v7483 = vmax.f32 %v7396, 0.0
  %v7484 = vmax.f32 %v7398, 0.0
  %v7485 = vmax.f32 %v7467, 0.0
  %v7486 = vmax.f32 %v7469, 0.0
  %7487 = vrot.lane.b32.xlu0 %v7471, 17
  %v7488 = vpop.permute.xlu0 %7487
  %7489 = vrot.lane.b32.xlu0 %v7472, 17
  %v7490 = vpop.permute.xlu0 %7489
  %7491 = vrot.lane.b32.xlu0 %v7473, 17
  %v7492 = vpop.permute.xlu0 %7491
  %7493 = vrot.lane.b32.xlu0 %v7474, 17
  %v7494 = vpop.permute.xlu0 %7493
  %7495 = vrot.lane.b32.xlu0 %v7475, 17
  %v7496 = vpop.permute.xlu0 %7495
  %7497 = vrot.lane.b32.xlu0 %v7476, 17
  %v7498 = vpop.permute.xlu0 %7497
  %7499 = vrot.lane.b32.xlu0 %v7477, 17
  %v7500 = vpop.permute.xlu0 %7499
  %7501 = vrot.lane.b32.xlu0 %v7478, 17
  %v7502 = vpop.permute.xlu0 %7501
  %7503 = vrot.lane.b32.xlu0 %v7479, 17
  %v7504 = vpop.permute.xlu0 %7503
  %7505 = vrot.lane.b32.xlu0 %v7480, 17
  %v7506 = vpop.permute.xlu0 %7505
  %7507 = vrot.lane.b32.xlu0 %v7481, 17
  %v7508 = vpop.permute.xlu0 %7507
  %7509 = vrot.lane.b32.xlu0 %v7482, 17
  %v7510 = vpop.permute.xlu0 %7509
  %7511 = vrot.lane.b32.xlu0 %v7483, 17
  %v7512 = vpop.permute.xlu0 %7511
  %7513 = vrot.lane.b32.xlu0 %v7484, 17
  %v7514 = vpop.permute.xlu0 %7513
  %7515 = vrot.lane.b32.xlu0 %v7485, 17
  %v7516 = vpop.permute.xlu0 %7515
  %7517 = vrot.lane.b32.xlu0 %v7486, 17
  %v7518 = vpop.permute.xlu0 %7517
  %v7519 = vsel %vm1848, %v7516, %v7518
  %v7520 = vsel %vm1848, %v7514, %v7516
  %v7521 = vsel %vm1848, %v7512, %v7514
  %v7522 = vsel %vm1848, %v7510, %v7512
  %v7523 = vsel %vm1848, %v7508, %v7510
  %v7524 = vsel %vm1848, %v7506, %v7508
  %v7525 = vsel %vm1848, %v7504, %v7506
  %v7526 = vsel %vm1848, %v7502, %v7504
  %v7527 = vsel %vm1848, %v7500, %v7502
  %v7528 = vsel %vm1848, %v7498, %v7500
  %v7529 = vsel %vm1848, %v7496, %v7498
  %v7530 = vsel %vm1848, %v7494, %v7496
  %v7531 = vsel %vm1848, %v7492, %v7494
  %v7532 = vsel %vm1848, %v7490, %v7492
  %v7533 = vsel %vm1848, %v7488, %v7490
  %v7534 = vsel %vm1848, %v7518, %v7488
  %s7535 = scalar_lea.vmem %s2, 385
  %v7536 = vld [vmem:[%s7535] ss:$8 sm:$0xf]
  %v7537 = vld [vmem:[%s7535] ss:$8 sm:$0xf0]
  %v7538 = vor.u32 %v7536, %v7537
  %s7539 = scalar_lea.vmem %s2, 449
  %v7540 = vld [vmem:[%s7539] ss:$8 sm:$0xf]
  %v7541 = vld [vmem:[%s7539] ss:$8 sm:$0xf0]
  %v7542 = vor.u32 %v7540, %v7541
  %v7545 = vlaneseq
  %v7546 = vshrl.u32 %v7545, 7
  %v7547 = vsub.s32 0, %v7546
  %v7548 = vrot.slane %v7538, %v7547
  %v7549 = vlaneseq
  %v7550 = vshrl.u32 %v7549, 7
  %v7551 = vsub.s32 1, %v7550
  %v7552 = vrot.slane %v7538, %v7551
  %v7553 = vlaneseq
  %v7554 = vshrl.u32 %v7553, 7
  %v7555 = vsub.s32 2, %v7554
  %v7556 = vrot.slane %v7538, %v7555
  %v7557 = vlaneseq
  %v7558 = vshrl.u32 %v7557, 7
  %v7559 = vsub.s32 3, %v7558
  %v7560 = vrot.slane %v7538, %v7559
  %v7561 = vlaneseq
  %v7562 = vshrl.u32 %v7561, 7
  %v7563 = vsub.s32 4, %v7562
  %v7564 = vrot.slane %v7538, %v7563
  %v7565 = vlaneseq
  %v7566 = vshrl.u32 %v7565, 7
  %v7567 = vsub.s32 5, %v7566
  %v7568 = vrot.slane %v7538, %v7567
  %v7569 = vlaneseq
  %v7570 = vshrl.u32 %v7569, 7
  %v7571 = vsub.s32 6, %v7570
  %v7572 = vrot.slane %v7538, %v7571
  %v7573 = vlaneseq
  %v7574 = vshrl.u32 %v7573, 7
  %v7575 = vsub.s32 7, %v7574
  %v7576 = vrot.slane %v7538, %v7575
  %v7577 = vlaneseq
  %v7578 = vshrl.u32 %v7577, 7
  %v7579 = vsub.s32 0, %v7578
  %v7580 = vrot.slane %v7542, %v7579
  %v7581 = vlaneseq
  %v7582 = vshrl.u32 %v7581, 7
  %v7583 = vsub.s32 1, %v7582
  %v7584 = vrot.slane %v7542, %v7583
  %v7585 = vlaneseq
  %v7586 = vshrl.u32 %v7585, 7
  %v7587 = vsub.s32 2, %v7586
  %v7588 = vrot.slane %v7542, %v7587
  %v7589 = vlaneseq
  %v7590 = vshrl.u32 %v7589, 7
  %v7591 = vsub.s32 3, %v7590
  %v7592 = vrot.slane %v7542, %v7591
  %v7593 = vlaneseq
  %v7594 = vshrl.u32 %v7593, 7
  %v7595 = vsub.s32 4, %v7594
  %v7596 = vrot.slane %v7542, %v7595
  %v7597 = vlaneseq
  %v7598 = vshrl.u32 %v7597, 7
  %v7599 = vsub.s32 5, %v7598
  %v7600 = vrot.slane %v7542, %v7599
  %v7601 = vlaneseq
  %v7602 = vshrl.u32 %v7601, 7
  %v7603 = vsub.s32 6, %v7602
  %v7604 = vrot.slane %v7542, %v7603
  %v7605 = vlaneseq
  %v7606 = vshrl.u32 %v7605, 7
  %v7607 = vsub.s32 7, %v7606
  %v7608 = vrot.slane %v7542, %v7607
  %v7625 = vmul.f32 %v7534, %v7548
  %v7626 = vmul.f32 %v7533, %v7552
  %v7627 = vmul.f32 %v7532, %v7556
  %v7628 = vmul.f32 %v7531, %v7560
  %v7629 = vmul.f32 %v7530, %v7564
  %v7630 = vmul.f32 %v7529, %v7568
  %v7631 = vmul.f32 %v7528, %v7572
  %v7632 = vmul.f32 %v7527, %v7576
  %v7633 = vmul.f32 %v7526, %v7580
  %v7634 = vmul.f32 %v7525, %v7584
  %v7635 = vmul.f32 %v7524, %v7588
  %v7636 = vmul.f32 %v7523, %v7592
  %v7637 = vmul.f32 %v7522, %v7596
  %v7638 = vmul.f32 %v7521, %v7600
  %v7639 = vmul.f32 %v7520, %v7604
  %v7640 = vmul.f32 %v7519, %v7608
  %7641 = vst [vmem:[#allocation2] sm:$0xf] %v7625
  %7642 = vst [vmem:[#allocation2 + $0x8] sm:$0xf] %v7626
  %7643 = vst [vmem:[#allocation2 + $0x10] sm:$0xf] %v7627
  %7644 = vst [vmem:[#allocation2 + $0x18] sm:$0xf] %v7628
  %7645 = vst [vmem:[#allocation2 + $0x20] sm:$0xf] %v7629
  %7646 = vst [vmem:[#allocation2 + $0x28] sm:$0xf] %v7630
  %7647 = vst [vmem:[#allocation2 + $0x30] sm:$0xf] %v7631
  %7648 = vst [vmem:[#allocation2 + $0x38] sm:$0xf] %v7632
  %7649 = vst [vmem:[#allocation2 + $0x40] sm:$0xf] %v7633
  %7650 = vst [vmem:[#allocation2 + $0x48] sm:$0xf] %v7634
  %7651 = vst [vmem:[#allocation2 + $0x50] sm:$0xf] %v7635
  %7652 = vst [vmem:[#allocation2 + $0x58] sm:$0xf] %v7636
  %7653 = vst [vmem:[#allocation2 + $0x60] sm:$0xf] %v7637
  %7654 = vst [vmem:[#allocation2 + $0x68] sm:$0xf] %v7638
  %7655 = vst [vmem:[#allocation2 + $0x70] sm:$0xf] %v7639
  %7656 = vst [vmem:[#allocation2 + $0x78] sm:$0xf] %v7640
  %7657 = vrot.lane.b32.xlu0 %v7471, 16
  %v7658 = vpop.permute.xlu0 %7657
  %7659 = vrot.lane.b32.xlu0 %v7472, 16
  %v7660 = vpop.permute.xlu0 %7659
  %7661 = vrot.lane.b32.xlu0 %v7473, 16
  %v7662 = vpop.permute.xlu0 %7661
  %7663 = vrot.lane.b32.xlu0 %v7474, 16
  %v7664 = vpop.permute.xlu0 %7663
  %7665 = vrot.lane.b32.xlu0 %v7475, 16
  %v7666 = vpop.permute.xlu0 %7665
  %7667 = vrot.lane.b32.xlu0 %v7476, 16
  %v7668 = vpop.permute.xlu0 %7667
  %7669 = vrot.lane.b32.xlu0 %v7477, 16
  %v7670 = vpop.permute.xlu0 %7669
  %7671 = vrot.lane.b32.xlu0 %v7478, 16
  %v7672 = vpop.permute.xlu0 %7671
  %7673 = vrot.lane.b32.xlu0 %v7479, 16
  %v7674 = vpop.permute.xlu0 %7673
  %7675 = vrot.lane.b32.xlu0 %v7480, 16
  %v7676 = vpop.permute.xlu0 %7675
  %7677 = vrot.lane.b32.xlu0 %v7481, 16
  %v7678 = vpop.permute.xlu0 %7677
  %7679 = vrot.lane.b32.xlu0 %v7482, 16
  %v7680 = vpop.permute.xlu0 %7679
  %7681 = vrot.lane.b32.xlu0 %v7483, 16
  %v7682 = vpop.permute.xlu0 %7681
  %7683 = vrot.lane.b32.xlu0 %v7484, 16
  %v7684 = vpop.permute.xlu0 %7683
  %7685 = vrot.lane.b32.xlu0 %v7485, 16
  %v7686 = vpop.permute.xlu0 %7685
  %7687 = vrot.lane.b32.xlu0 %v7486, 16
  %v7688 = vpop.permute.xlu0 %7687
  %v7689 = vsel %vm2125, %v7686, %v7688
  %v7690 = vsel %vm2125, %v7684, %v7686
  %v7691 = vsel %vm2125, %v7682, %v7684
  %v7692 = vsel %vm2125, %v7680, %v7682
  %v7693 = vsel %vm2125, %v7678, %v7680
  %v7694 = vsel %vm2125, %v7676, %v7678
  %v7695 = vsel %vm2125, %v7674, %v7676
  %v7696 = vsel %vm2125, %v7672, %v7674
  %v7697 = vsel %vm2125, %v7670, %v7672
  %v7698 = vsel %vm2125, %v7668, %v7670
  %v7699 = vsel %vm2125, %v7666, %v7668
  %v7700 = vsel %vm2125, %v7664, %v7666
  %v7701 = vsel %vm2125, %v7662, %v7664
  %v7702 = vsel %vm2125, %v7660, %v7662
  %v7703 = vsel %vm2125, %v7658, %v7660
  %v7704 = vsel %vm2125, %v7688, %v7658
  %s7705 = scalar_lea.vmem %s2, 386
  %v7706 = vld [vmem:[%s7705] ss:$8 sm:$0xf]
  %v7707 = vld [vmem:[%s7705] ss:$8 sm:$0xf0]
  %v7708 = vor.u32 %v7706, %v7707
  %s7709 = scalar_lea.vmem %s2, 450
  %v7710 = vld [vmem:[%s7709] ss:$8 sm:$0xf]
  %v7711 = vld [vmem:[%s7709] ss:$8 sm:$0xf0]
  %v7712 = vor.u32 %v7710, %v7711
  %v7715 = vlaneseq
  %v7716 = vshrl.u32 %v7715, 7
  %v7717 = vsub.s32 0, %v7716
  %v7718 = vrot.slane %v7708, %v7717
  %v7719 = vlaneseq
  %v7720 = vshrl.u32 %v7719, 7
  %v7721 = vsub.s32 1, %v7720
  %v7722 = vrot.slane %v7708, %v7721
  %v7723 = vlaneseq
  %v7724 = vshrl.u32 %v7723, 7
  %v7725 = vsub.s32 2, %v7724
  %v7726 = vrot.slane %v7708, %v7725
  %v7727 = vlaneseq
  %v7728 = vshrl.u32 %v7727, 7
  %v7729 = vsub.s32 3, %v7728
  %v7730 = vrot.slane %v7708, %v7729
  %v7731 = vlaneseq
  %v7732 = vshrl.u32 %v7731, 7
  %v7733 = vsub.s32 4, %v7732
  %v7734 = vrot.slane %v7708, %v7733
  %v7735 = vlaneseq
  %v7736 = vshrl.u32 %v7735, 7
  %v7737 = vsub.s32 5, %v7736
  %v7738 = vrot.slane %v7708, %v7737
  %v7739 = vlaneseq
  %v7740 = vshrl.u32 %v7739, 7
  %v7741 = vsub.s32 6, %v7740
  %v7742 = vrot.slane %v7708, %v7741
  %v7743 = vlaneseq
  %v7744 = vshrl.u32 %v7743, 7
  %v7745 = vsub.s32 7, %v7744
  %v7746 = vrot.slane %v7708, %v7745
  %v7747 = vlaneseq
  %v7748 = vshrl.u32 %v7747, 7
  %v7749 = vsub.s32 0, %v7748
  %v7750 = vrot.slane %v7712, %v7749
  %v7751 = vlaneseq
  %v7752 = vshrl.u32 %v7751, 7
  %v7753 = vsub.s32 1, %v7752
  %v7754 = vrot.slane %v7712, %v7753
  %v7755 = vlaneseq
  %v7756 = vshrl.u32 %v7755, 7
  %v7757 = vsub.s32 2, %v7756
  %v7758 = vrot.slane %v7712, %v7757
  %v7759 = vlaneseq
  %v7760 = vshrl.u32 %v7759, 7
  %v7761 = vsub.s32 3, %v7760
  %v7762 = vrot.slane %v7712, %v7761
  %v7763 = vlaneseq
  %v7764 = vshrl.u32 %v7763, 7
  %v7765 = vsub.s32 4, %v7764
  %v7766 = vrot.slane %v7712, %v7765
  %v7767 = vlaneseq
  %v7768 = vshrl.u32 %v7767, 7
  %v7769 = vsub.s32 5, %v7768
  %v7770 = vrot.slane %v7712, %v7769
  %v7771 = vlaneseq
  %v7772 = vshrl.u32 %v7771, 7
  %v7773 = vsub.s32 6, %v7772
  %v7774 = vrot.slane %v7712, %v7773
  %v7775 = vlaneseq
  %v7776 = vshrl.u32 %v7775, 7
  %v7777 = vsub.s32 7, %v7776
  %v7778 = vrot.slane %v7712, %v7777
  %v7795 = vmul.f32 %v7704, %v7718
  %v7796 = vmul.f32 %v7703, %v7722
  %v7797 = vmul.f32 %v7702, %v7726
  %v7798 = vmul.f32 %v7701, %v7730
  %v7799 = vmul.f32 %v7700, %v7734
  %v7800 = vmul.f32 %v7699, %v7738
  %v7801 = vmul.f32 %v7698, %v7742
  %v7802 = vmul.f32 %v7697, %v7746
  %v7803 = vmul.f32 %v7696, %v7750
  %v7804 = vmul.f32 %v7695, %v7754
  %v7805 = vmul.f32 %v7694, %v7758
  %v7806 = vmul.f32 %v7693, %v7762
  %v7807 = vmul.f32 %v7692, %v7766
  %v7808 = vmul.f32 %v7691, %v7770
  %v7809 = vmul.f32 %v7690, %v7774
  %v7810 = vmul.f32 %v7689, %v7778
  %v7827 = vrot.slane %v7795, 4
  %v7828 = vrot.slane %v7796, 4
  %v7829 = vrot.slane %v7797, 4
  %v7830 = vrot.slane %v7798, 4
  %v7831 = vrot.slane %v7799, 4
  %v7832 = vrot.slane %v7800, 4
  %v7833 = vrot.slane %v7801, 4
  %v7834 = vrot.slane %v7802, 4
  %v7835 = vrot.slane %v7803, 4
  %v7836 = vrot.slane %v7804, 4
  %v7837 = vrot.slane %v7805, 4
  %v7838 = vrot.slane %v7806, 4
  %v7839 = vrot.slane %v7807, 4
  %v7840 = vrot.slane %v7808, 4
  %v7841 = vrot.slane %v7809, 4
  %v7842 = vrot.slane %v7810, 4
  %7859 = vst [vmem:[#allocation2] sm:$0xf0] %v7827
  %7860 = vst [vmem:[#allocation2 + $0x8] sm:$0xf0] %v7828
  %7861 = vst [vmem:[#allocation2 + $0x10] sm:$0xf0] %v7829
  %7862 = vst [vmem:[#allocation2 + $0x18] sm:$0xf0] %v7830
  %7863 = vst [vmem:[#allocation2 + $0x20] sm:$0xf0] %v7831
  %7864 = vst [vmem:[#allocation2 + $0x28] sm:$0xf0] %v7832
  %7865 = vst [vmem:[#allocation2 + $0x30] sm:$0xf0] %v7833
  %7866 = vst [vmem:[#allocation2 + $0x38] sm:$0xf0] %v7834
  %7867 = vst [vmem:[#allocation2 + $0x40] sm:$0xf0] %v7835
  %7868 = vst [vmem:[#allocation2 + $0x48] sm:$0xf0] %v7836
  %7869 = vst [vmem:[#allocation2 + $0x50] sm:$0xf0] %v7837
  %7870 = vst [vmem:[#allocation2 + $0x58] sm:$0xf0] %v7838
  %7871 = vst [vmem:[#allocation2 + $0x60] sm:$0xf0] %v7839
  %7872 = vst [vmem:[#allocation2 + $0x68] sm:$0xf0] %v7840
  %7873 = vst [vmem:[#allocation2 + $0x70] sm:$0xf0] %v7841
  %7874 = vst [vmem:[#allocation2 + $0x78] sm:$0xf0] %v7842
  %7875 = vrot.lane.b32.xlu0 %v7471, 15
  %v7876 = vpop.permute.xlu0 %7875
  %7877 = vrot.lane.b32.xlu0 %v7472, 15
  %v7878 = vpop.permute.xlu0 %7877
  %7879 = vrot.lane.b32.xlu0 %v7473, 15
  %v7880 = vpop.permute.xlu0 %7879
  %7881 = vrot.lane.b32.xlu0 %v7474, 15
  %v7882 = vpop.permute.xlu0 %7881
  %7883 = vrot.lane.b32.xlu0 %v7475, 15
  %v7884 = vpop.permute.xlu0 %7883
  %7885 = vrot.lane.b32.xlu0 %v7476, 15
  %v7886 = vpop.permute.xlu0 %7885
  %7887 = vrot.lane.b32.xlu0 %v7477, 15
  %v7888 = vpop.permute.xlu0 %7887
  %7889 = vrot.lane.b32.xlu0 %v7478, 15
  %v7890 = vpop.permute.xlu0 %7889
  %7891 = vrot.lane.b32.xlu0 %v7479, 15
  %v7892 = vpop.permute.xlu0 %7891
  %7893 = vrot.lane.b32.xlu0 %v7480, 15
  %v7894 = vpop.permute.xlu0 %7893
  %7895 = vrot.lane.b32.xlu0 %v7481, 15
  %v7896 = vpop.permute.xlu0 %7895
  %7897 = vrot.lane.b32.xlu0 %v7482, 15
  %v7898 = vpop.permute.xlu0 %7897
  %7899 = vrot.lane.b32.xlu0 %v7483, 15
  %v7900 = vpop.permute.xlu0 %7899
  %7901 = vrot.lane.b32.xlu0 %v7484, 15
  %v7902 = vpop.permute.xlu0 %7901
  %7903 = vrot.lane.b32.xlu0 %v7485, 15
  %v7904 = vpop.permute.xlu0 %7903
  %7905 = vrot.lane.b32.xlu0 %v7486, 15
  %v7906 = vpop.permute.xlu0 %7905
  %v7907 = vsel %vm2402, %v7904, %v7906
  %v7908 = vsel %vm2402, %v7902, %v7904
  %v7909 = vsel %vm2402, %v7900, %v7902
  %v7910 = vsel %vm2402, %v7898, %v7900
  %v7911 = vsel %vm2402, %v7896, %v7898
  %v7912 = vsel %vm2402, %v7894, %v7896
  %v7913 = vsel %vm2402, %v7892, %v7894
  %v7914 = vsel %vm2402, %v7890, %v7892
  %v7915 = vsel %vm2402, %v7888, %v7890
  %v7916 = vsel %vm2402, %v7886, %v7888
  %v7917 = vsel %vm2402, %v7884, %v7886
  %v7918 = vsel %vm2402, %v7882, %v7884
  %v7919 = vsel %vm2402, %v7880, %v7882
  %v7920 = vsel %vm2402, %v7878, %v7880
  %v7921 = vsel %vm2402, %v7876, %v7878
  %v7922 = vsel %vm2402, %v7906, %v7876
  %s7923 = scalar_lea.vmem %s2, 387
  %v7924 = vld [vmem:[%s7923] ss:$8 sm:$0xf]
  %v7925 = vld [vmem:[%s7923] ss:$8 sm:$0xf0]
  %v7926 = vor.u32 %v7924, %v7925
  %s7927 = scalar_lea.vmem %s2, 451
  %v7928 = vld [vmem:[%s7927] ss:$8 sm:$0xf]
  %v7929 = vld [vmem:[%s7927] ss:$8 sm:$0xf0]
  %v7930 = vor.u32 %v7928, %v7929
  %v7933 = vlaneseq
  %v7934 = vshrl.u32 %v7933, 7
  %v7935 = vsub.s32 0, %v7934
  %v7936 = vrot.slane %v7926, %v7935
  %v7937 = vlaneseq
  %v7938 = vshrl.u32 %v7937, 7
  %v7939 = vsub.s32 1, %v7938
  %v7940 = vrot.slane %v7926, %v7939
  %v7941 = vlaneseq
  %v7942 = vshrl.u32 %v7941, 7
  %v7943 = vsub.s32 2, %v7942
  %v7944 = vrot.slane %v7926, %v7943
  %v7945 = vlaneseq
  %v7946 = vshrl.u32 %v7945, 7
  %v7947 = vsub.s32 3, %v7946
  %v7948 = vrot.slane %v7926, %v7947
  %v7949 = vlaneseq
  %v7950 = vshrl.u32 %v7949, 7
  %v7951 = vsub.s32 4, %v7950
  %v7952 = vrot.slane %v7926, %v7951
  %v7953 = vlaneseq
  %v7954 = vshrl.u32 %v7953, 7
  %v7955 = vsub.s32 5, %v7954
  %v7956 = vrot.slane %v7926, %v7955
  %v7957 = vlaneseq
  %v7958 = vshrl.u32 %v7957, 7
  %v7959 = vsub.s32 6, %v7958
  %v7960 = vrot.slane %v7926, %v7959
  %v7961 = vlaneseq
  %v7962 = vshrl.u32 %v7961, 7
  %v7963 = vsub.s32 7, %v7962
  %v7964 = vrot.slane %v7926, %v7963
  %v7965 = vlaneseq
  %v7966 = vshrl.u32 %v7965, 7
  %v7967 = vsub.s32 0, %v7966
  %v7968 = vrot.slane %v7930, %v7967
  %v7969 = vlaneseq
  %v7970 = vshrl.u32 %v7969, 7
  %v7971 = vsub.s32 1, %v7970
  %v7972 = vrot.slane %v7930, %v7971
  %v7973 = vlaneseq
  %v7974 = vshrl.u32 %v7973, 7
  %v7975 = vsub.s32 2, %v7974
  %v7976 = vrot.slane %v7930, %v7975
  %v7977 = vlaneseq
  %v7978 = vshrl.u32 %v7977, 7
  %v7979 = vsub.s32 3, %v7978
  %v7980 = vrot.slane %v7930, %v7979
  %v7981 = vlaneseq
  %v7982 = vshrl.u32 %v7981, 7
  %v7983 = vsub.s32 4, %v7982
  %v7984 = vrot.slane %v7930, %v7983
  %v7985 = vlaneseq
  %v7986 = vshrl.u32 %v7985, 7
  %v7987 = vsub.s32 5, %v7986
  %v7988 = vrot.slane %v7930, %v7987
  %v7989 = vlaneseq
  %v7990 = vshrl.u32 %v7989, 7
  %v7991 = vsub.s32 6, %v7990
  %v7992 = vrot.slane %v7930, %v7991
  %v7993 = vlaneseq
  %v7994 = vshrl.u32 %v7993, 7
  %v7995 = vsub.s32 7, %v7994
  %v7996 = vrot.slane %v7930, %v7995
  %v8013 = vmul.f32 %v7922, %v7936
  %v8014 = vmul.f32 %v7921, %v7940
  %v8015 = vmul.f32 %v7920, %v7944
  %v8016 = vmul.f32 %v7919, %v7948
  %v8017 = vmul.f32 %v7918, %v7952
  %v8018 = vmul.f32 %v7917, %v7956
  %v8019 = vmul.f32 %v7916, %v7960
  %v8020 = vmul.f32 %v7915, %v7964
  %v8021 = vmul.f32 %v7914, %v7968
  %v8022 = vmul.f32 %v7913, %v7972
  %v8023 = vmul.f32 %v7912, %v7976
  %v8024 = vmul.f32 %v7911, %v7980
  %v8025 = vmul.f32 %v7910, %v7984
  %v8026 = vmul.f32 %v7909, %v7988
  %v8027 = vmul.f32 %v7908, %v7992
  %v8028 = vmul.f32 %v7907, %v7996
  %8029 = vst [vmem:[#allocation2 + $0x80] sm:$0xf] %v8013
  %8030 = vst [vmem:[#allocation2 + $0x88] sm:$0xf] %v8014
  %8031 = vst [vmem:[#allocation2 + $0x90] sm:$0xf] %v8015
  %8032 = vst [vmem:[#allocation2 + $0x98] sm:$0xf] %v8016
  %8033 = vst [vmem:[#allocation2 + $0xa0] sm:$0xf] %v8017
  %8034 = vst [vmem:[#allocation2 + $0xa8] sm:$0xf] %v8018
  %8035 = vst [vmem:[#allocation2 + $0xb0] sm:$0xf] %v8019
  %8036 = vst [vmem:[#allocation2 + $0xb8] sm:$0xf] %v8020
  %8037 = vst [vmem:[#allocation2 + $0xc0] sm:$0xf] %v8021
  %8038 = vst [vmem:[#allocation2 + $0xc8] sm:$0xf] %v8022
  %8039 = vst [vmem:[#allocation2 + $0xd0] sm:$0xf] %v8023
  %8040 = vst [vmem:[#allocation2 + $0xd8] sm:$0xf] %v8024
  %8041 = vst [vmem:[#allocation2 + $0xe0] sm:$0xf] %v8025
  %8042 = vst [vmem:[#allocation2 + $0xe8] sm:$0xf] %v8026
  %8043 = vst [vmem:[#allocation2 + $0xf0] sm:$0xf] %v8027
  %8044 = vst [vmem:[#allocation2 + $0xf8] sm:$0xf] %v8028
  %8045 = vrot.lane.b32.xlu0 %v7471, 1
  %v8046 = vpop.permute.xlu0 %8045
  %8047 = vrot.lane.b32.xlu0 %v7472, 1
  %v8048 = vpop.permute.xlu0 %8047
  %8049 = vrot.lane.b32.xlu0 %v7473, 1
  %v8050 = vpop.permute.xlu0 %8049
  %8051 = vrot.lane.b32.xlu0 %v7474, 1
  %v8052 = vpop.permute.xlu0 %8051
  %8053 = vrot.lane.b32.xlu0 %v7475, 1
  %v8054 = vpop.permute.xlu0 %8053
  %8055 = vrot.lane.b32.xlu0 %v7476, 1
  %v8056 = vpop.permute.xlu0 %8055
  %8057 = vrot.lane.b32.xlu0 %v7477, 1
  %v8058 = vpop.permute.xlu0 %8057
  %8059 = vrot.lane.b32.xlu0 %v7478, 1
  %v8060 = vpop.permute.xlu0 %8059
  %8061 = vrot.lane.b32.xlu0 %v7479, 1
  %v8062 = vpop.permute.xlu0 %8061
  %8063 = vrot.lane.b32.xlu0 %v7480, 1
  %v8064 = vpop.permute.xlu0 %8063
  %8065 = vrot.lane.b32.xlu0 %v7481, 1
  %v8066 = vpop.permute.xlu0 %8065
  %8067 = vrot.lane.b32.xlu0 %v7482, 1
  %v8068 = vpop.permute.xlu0 %8067
  %8069 = vrot.lane.b32.xlu0 %v7483, 1
  %v8070 = vpop.permute.xlu0 %8069
  %8071 = vrot.lane.b32.xlu0 %v7484, 1
  %v8072 = vpop.permute.xlu0 %8071
  %8073 = vrot.lane.b32.xlu0 %v7485, 1
  %v8074 = vpop.permute.xlu0 %8073
  %8075 = vrot.lane.b32.xlu0 %v7486, 1
  %v8076 = vpop.permute.xlu0 %8075
  %v8077 = vsel %vm3233, %v8074, %v8076
  %v8078 = vsel %vm3233, %v8072, %v8074
  %v8079 = vsel %vm3233, %v8070, %v8072
  %v8080 = vsel %vm3233, %v8068, %v8070
  %v8081 = vsel %vm3233, %v8066, %v8068
  %v8082 = vsel %vm3233, %v8064, %v8066
  %v8083 = vsel %vm3233, %v8062, %v8064
  %v8084 = vsel %vm3233, %v8060, %v8062
  %v8085 = vsel %vm3233, %v8058, %v8060
  %v8086 = vsel %vm3233, %v8056, %v8058
  %v8087 = vsel %vm3233, %v8054, %v8056
  %v8088 = vsel %vm3233, %v8052, %v8054
  %v8089 = vsel %vm3233, %v8050, %v8052
  %v8090 = vsel %vm3233, %v8048, %v8050
  %v8091 = vsel %vm3233, %v8046, %v8048
  %v8092 = vsel %vm3233, %v8076, %v8046
  %s8093 = scalar_lea.vmem %s2, 388
  %v8094 = vld [vmem:[%s8093] ss:$8 sm:$0xf]
  %v8095 = vld [vmem:[%s8093] ss:$8 sm:$0xf0]
  %v8096 = vor.u32 %v8094, %v8095
  %s8097 = scalar_lea.vmem %s2, 452
  %v8098 = vld [vmem:[%s8097] ss:$8 sm:$0xf]
  %v8099 = vld [vmem:[%s8097] ss:$8 sm:$0xf0]
  %v8100 = vor.u32 %v8098, %v8099
  %v8103 = vlaneseq
  %v8104 = vshrl.u32 %v8103, 7
  %v8105 = vsub.s32 0, %v8104
  %v8106 = vrot.slane %v8096, %v8105
  %v8107 = vlaneseq
  %v8108 = vshrl.u32 %v8107, 7
  %v8109 = vsub.s32 1, %v8108
  %v8110 = vrot.slane %v8096, %v8109
  %v8111 = vlaneseq
  %v8112 = vshrl.u32 %v8111, 7
  %v8113 = vsub.s32 2, %v8112
  %v8114 = vrot.slane %v8096, %v8113
  %v8115 = vlaneseq
  %v8116 = vshrl.u32 %v8115, 7
  %v8117 = vsub.s32 3, %v8116
  %v8118 = vrot.slane %v8096, %v8117
  %v8119 = vlaneseq
  %v8120 = vshrl.u32 %v8119, 7
  %v8121 = vsub.s32 4, %v8120
  %v8122 = vrot.slane %v8096, %v8121
  %v8123 = vlaneseq
  %v8124 = vshrl.u32 %v8123, 7
  %v8125 = vsub.s32 5, %v8124
  %v8126 = vrot.slane %v8096, %v8125
  %v8127 = vlaneseq
  %v8128 = vshrl.u32 %v8127, 7
  %v8129 = vsub.s32 6, %v8128
  %v8130 = vrot.slane %v8096, %v8129
  %v8131 = vlaneseq
  %v8132 = vshrl.u32 %v8131, 7
  %v8133 = vsub.s32 7, %v8132
  %v8134 = vrot.slane %v8096, %v8133
  %v8135 = vlaneseq
  %v8136 = vshrl.u32 %v8135, 7
  %v8137 = vsub.s32 0, %v8136
  %v8138 = vrot.slane %v8100, %v8137
  %v8139 = vlaneseq
  %v8140 = vshrl.u32 %v8139, 7
  %v8141 = vsub.s32 1, %v8140
  %v8142 = vrot.slane %v8100, %v8141
  %v8143 = vlaneseq
  %v8144 = vshrl.u32 %v8143, 7
  %v8145 = vsub.s32 2, %v8144
  %v8146 = vrot.slane %v8100, %v8145
  %v8147 = vlaneseq
  %v8148 = vshrl.u32 %v8147, 7
  %v8149 = vsub.s32 3, %v8148
  %v8150 = vrot.slane %v8100, %v8149
  %v8151 = vlaneseq
  %v8152 = vshrl.u32 %v8151, 7
  %v8153 = vsub.s32 4, %v8152
  %v8154 = vrot.slane %v8100, %v8153
  %v8155 = vlaneseq
  %v8156 = vshrl.u32 %v8155, 7
  %v8157 = vsub.s32 5, %v8156
  %v8158 = vrot.slane %v8100, %v8157
  %v8159 = vlaneseq
  %v8160 = vshrl.u32 %v8159, 7
  %v8161 = vsub.s32 6, %v8160
  %v8162 = vrot.slane %v8100, %v8161
  %v8163 = vlaneseq
  %v8164 = vshrl.u32 %v8163, 7
  %v8165 = vsub.s32 7, %v8164
  %v8166 = vrot.slane %v8100, %v8165
  %v8183 = vmul.f32 %v8092, %v8106
  %v8184 = vmul.f32 %v8091, %v8110
  %v8185 = vmul.f32 %v8090, %v8114
  %v8186 = vmul.f32 %v8089, %v8118
  %v8187 = vmul.f32 %v8088, %v8122
  %v8188 = vmul.f32 %v8087, %v8126
  %v8189 = vmul.f32 %v8086, %v8130
  %v8190 = vmul.f32 %v8085, %v8134
  %v8191 = vmul.f32 %v8084, %v8138
  %v8192 = vmul.f32 %v8083, %v8142
  %v8193 = vmul.f32 %v8082, %v8146
  %v8194 = vmul.f32 %v8081, %v8150
  %v8195 = vmul.f32 %v8080, %v8154
  %v8196 = vmul.f32 %v8079, %v8158
  %v8197 = vmul.f32 %v8078, %v8162
  %v8198 = vmul.f32 %v8077, %v8166
  %v8215 = vrot.slane %v8183, 4
  %v8216 = vrot.slane %v8184, 4
  %v8217 = vrot.slane %v8185, 4
  %v8218 = vrot.slane %v8186, 4
  %v8219 = vrot.slane %v8187, 4
  %v8220 = vrot.slane %v8188, 4
  %v8221 = vrot.slane %v8189, 4
  %v8222 = vrot.slane %v8190, 4
  %v8223 = vrot.slane %v8191, 4
  %v8224 = vrot.slane %v8192, 4
  %v8225 = vrot.slane %v8193, 4
  %v8226 = vrot.slane %v8194, 4
  %v8227 = vrot.slane %v8195, 4
  %v8228 = vrot.slane %v8196, 4
  %v8229 = vrot.slane %v8197, 4
  %v8230 = vrot.slane %v8198, 4
  %8247 = vst [vmem:[#allocation2 + $0x80] sm:$0xf0] %v8215
  %8248 = vst [vmem:[#allocation2 + $0x88] sm:$0xf0] %v8216
  %8249 = vst [vmem:[#allocation2 + $0x90] sm:$0xf0] %v8217
  %8250 = vst [vmem:[#allocation2 + $0x98] sm:$0xf0] %v8218
  %8251 = vst [vmem:[#allocation2 + $0xa0] sm:$0xf0] %v8219
  %8252 = vst [vmem:[#allocation2 + $0xa8] sm:$0xf0] %v8220
  %8253 = vst [vmem:[#allocation2 + $0xb0] sm:$0xf0] %v8221
  %8254 = vst [vmem:[#allocation2 + $0xb8] sm:$0xf0] %v8222
  %8255 = vst [vmem:[#allocation2 + $0xc0] sm:$0xf0] %v8223
  %8256 = vst [vmem:[#allocation2 + $0xc8] sm:$0xf0] %v8224
  %8257 = vst [vmem:[#allocation2 + $0xd0] sm:$0xf0] %v8225
  %8258 = vst [vmem:[#allocation2 + $0xd8] sm:$0xf0] %v8226
  %8259 = vst [vmem:[#allocation2 + $0xe0] sm:$0xf0] %v8227
  %8260 = vst [vmem:[#allocation2 + $0xe8] sm:$0xf0] %v8228
  %8261 = vst [vmem:[#allocation2 + $0xf0] sm:$0xf0] %v8229
  %8262 = vst [vmem:[#allocation2 + $0xf8] sm:$0xf0] %v8230
  %s8263 = scalar_lea.vmem %s2, 389
  %v8264 = vld [vmem:[%s8263] ss:$8 sm:$0xf]
  %v8265 = vld [vmem:[%s8263] ss:$8 sm:$0xf0]
  %v8266 = vor.u32 %v8264, %v8265
  %s8267 = scalar_lea.vmem %s2, 453
  %v8268 = vld [vmem:[%s8267] ss:$8 sm:$0xf]
  %v8269 = vld [vmem:[%s8267] ss:$8 sm:$0xf0]
  %v8270 = vor.u32 %v8268, %v8269
  %v8273 = vlaneseq
  %v8274 = vshrl.u32 %v8273, 7
  %v8275 = vsub.s32 0, %v8274
  %v8276 = vrot.slane %v8266, %v8275
  %v8277 = vlaneseq
  %v8278 = vshrl.u32 %v8277, 7
  %v8279 = vsub.s32 1, %v8278
  %v8280 = vrot.slane %v8266, %v8279
  %v8281 = vlaneseq
  %v8282 = vshrl.u32 %v8281, 7
  %v8283 = vsub.s32 2, %v8282
  %v8284 = vrot.slane %v8266, %v8283
  %v8285 = vlaneseq
  %v8286 = vshrl.u32 %v8285, 7
  %v8287 = vsub.s32 3, %v8286
  %v8288 = vrot.slane %v8266, %v8287
  %v8289 = vlaneseq
  %v8290 = vshrl.u32 %v8289, 7
  %v8291 = vsub.s32 4, %v8290
  %v8292 = vrot.slane %v8266, %v8291
  %v8293 = vlaneseq
  %v8294 = vshrl.u32 %v8293, 7
  %v8295 = vsub.s32 5, %v8294
  %v8296 = vrot.slane %v8266, %v8295
  %v8297 = vlaneseq
  %v8298 = vshrl.u32 %v8297, 7
  %v8299 = vsub.s32 6, %v8298
  %v8300 = vrot.slane %v8266, %v8299
  %v8301 = vlaneseq
  %v8302 = vshrl.u32 %v8301, 7
  %v8303 = vsub.s32 7, %v8302
  %v8304 = vrot.slane %v8266, %v8303
  %v8305 = vlaneseq
  %v8306 = vshrl.u32 %v8305, 7
  %v8307 = vsub.s32 0, %v8306
  %v8308 = vrot.slane %v8270, %v8307
  %v8309 = vlaneseq
  %v8310 = vshrl.u32 %v8309, 7
  %v8311 = vsub.s32 1, %v8310
  %v8312 = vrot.slane %v8270, %v8311
  %v8313 = vlaneseq
  %v8314 = vshrl.u32 %v8313, 7
  %v8315 = vsub.s32 2, %v8314
  %v8316 = vrot.slane %v8270, %v8315
  %v8317 = vlaneseq
  %v8318 = vshrl.u32 %v8317, 7
  %v8319 = vsub.s32 3, %v8318
  %v8320 = vrot.slane %v8270, %v8319
  %v8321 = vlaneseq
  %v8322 = vshrl.u32 %v8321, 7
  %v8323 = vsub.s32 4, %v8322
  %v8324 = vrot.slane %v8270, %v8323
  %v8325 = vlaneseq
  %v8326 = vshrl.u32 %v8325, 7
  %v8327 = vsub.s32 5, %v8326
  %v8328 = vrot.slane %v8270, %v8327
  %v8329 = vlaneseq
  %v8330 = vshrl.u32 %v8329, 7
  %v8331 = vsub.s32 6, %v8330
  %v8332 = vrot.slane %v8270, %v8331
  %v8333 = vlaneseq
  %v8334 = vshrl.u32 %v8333, 7
  %v8335 = vsub.s32 7, %v8334
  %v8336 = vrot.slane %v8270, %v8335
  %v8353 = vmul.f32 %v7471, %v8276
  %v8354 = vmul.f32 %v7472, %v8280
  %v8355 = vmul.f32 %v7473, %v8284
  %v8356 = vmul.f32 %v7474, %v8288
  %v8357 = vmul.f32 %v7475, %v8292
  %v8358 = vmul.f32 %v7476, %v8296
  %v8359 = vmul.f32 %v7477, %v8300
  %v8360 = vmul.f32 %v7478, %v8304
  %v8361 = vmul.f32 %v7479, %v8308
  %v8362 = vmul.f32 %v7480, %v8312
  %v8363 = vmul.f32 %v7481, %v8316
  %v8364 = vmul.f32 %v7482, %v8320
  %v8365 = vmul.f32 %v7483, %v8324
  %v8366 = vmul.f32 %v7484, %v8328
  %v8367 = vmul.f32 %v7485, %v8332
  %v8368 = vmul.f32 %v7486, %v8336
  %8369 = vst [vmem:[#allocation2 + $0x100] sm:$0xf] %v8353
  %8370 = vst [vmem:[#allocation2 + $0x108] sm:$0xf] %v8354
  %8371 = vst [vmem:[#allocation2 + $0x110] sm:$0xf] %v8355
  %8372 = vst [vmem:[#allocation2 + $0x118] sm:$0xf] %v8356
  %8373 = vst [vmem:[#allocation2 + $0x120] sm:$0xf] %v8357
  %8374 = vst [vmem:[#allocation2 + $0x128] sm:$0xf] %v8358
  %8375 = vst [vmem:[#allocation2 + $0x130] sm:$0xf] %v8359
  %8376 = vst [vmem:[#allocation2 + $0x138] sm:$0xf] %v8360
  %8377 = vst [vmem:[#allocation2 + $0x140] sm:$0xf] %v8361
  %8378 = vst [vmem:[#allocation2 + $0x148] sm:$0xf] %v8362
  %8379 = vst [vmem:[#allocation2 + $0x150] sm:$0xf] %v8363
  %8380 = vst [vmem:[#allocation2 + $0x158] sm:$0xf] %v8364
  %8381 = vst [vmem:[#allocation2 + $0x160] sm:$0xf] %v8365
  %8382 = vst [vmem:[#allocation2 + $0x168] sm:$0xf] %v8366
  %8383 = vst [vmem:[#allocation2 + $0x170] sm:$0xf] %v8367
  %8384 = vst [vmem:[#allocation2 + $0x178] sm:$0xf] %v8368
  %8385 = vrot.lane.b32.xlu0 %v7471, 127
  %v8386 = vpop.permute.xlu0 %8385
  %8387 = vrot.lane.b32.xlu0 %v7472, 127
  %v8388 = vpop.permute.xlu0 %8387
  %8389 = vrot.lane.b32.xlu0 %v7473, 127
  %v8390 = vpop.permute.xlu0 %8389
  %8391 = vrot.lane.b32.xlu0 %v7474, 127
  %v8392 = vpop.permute.xlu0 %8391
  %8393 = vrot.lane.b32.xlu0 %v7475, 127
  %v8394 = vpop.permute.xlu0 %8393
  %8395 = vrot.lane.b32.xlu0 %v7476, 127
  %v8396 = vpop.permute.xlu0 %8395
  %8397 = vrot.lane.b32.xlu0 %v7477, 127
  %v8398 = vpop.permute.xlu0 %8397
  %8399 = vrot.lane.b32.xlu0 %v7478, 127
  %v8400 = vpop.permute.xlu0 %8399
  %8401 = vrot.lane.b32.xlu0 %v7479, 127
  %v8402 = vpop.permute.xlu0 %8401
  %8403 = vrot.lane.b32.xlu0 %v7480, 127
  %v8404 = vpop.permute.xlu0 %8403
  %8405 = vrot.lane.b32.xlu0 %v7481, 127
  %v8406 = vpop.permute.xlu0 %8405
  %8407 = vrot.lane.b32.xlu0 %v7482, 127
  %v8408 = vpop.permute.xlu0 %8407
  %8409 = vrot.lane.b32.xlu0 %v7483, 127
  %v8410 = vpop.permute.xlu0 %8409
  %8411 = vrot.lane.b32.xlu0 %v7484, 127
  %v8412 = vpop.permute.xlu0 %8411
  %8413 = vrot.lane.b32.xlu0 %v7485, 127
  %v8414 = vpop.permute.xlu0 %8413
  %8415 = vrot.lane.b32.xlu0 %v7486, 127
  %v8416 = vpop.permute.xlu0 %8415
  %v8417 = vsel %vm3526, %v8414, %v8416
  %v8418 = vsel %vm3526, %v8412, %v8414
  %v8419 = vsel %vm3526, %v8410, %v8412
  %v8420 = vsel %vm3526, %v8408, %v8410
  %v8421 = vsel %vm3526, %v8406, %v8408
  %v8422 = vsel %vm3526, %v8404, %v8406
  %v8423 = vsel %vm3526, %v8402, %v8404
  %v8424 = vsel %vm3526, %v8400, %v8402
  %v8425 = vsel %vm3526, %v8398, %v8400
  %v8426 = vsel %vm3526, %v8396, %v8398
  %v8427 = vsel %vm3526, %v8394, %v8396
  %v8428 = vsel %vm3526, %v8392, %v8394
  %v8429 = vsel %vm3526, %v8390, %v8392
  %v8430 = vsel %vm3526, %v8388, %v8390
  %v8431 = vsel %vm3526, %v8386, %v8388
  %v8432 = vsel %vm3526, %v8416, %v8386
  %s8433 = scalar_lea.vmem %s2, 390
  %v8434 = vld [vmem:[%s8433] ss:$8 sm:$0xf]
  %v8435 = vld [vmem:[%s8433] ss:$8 sm:$0xf0]
  %v8436 = vor.u32 %v8434, %v8435
  %s8437 = scalar_lea.vmem %s2, 454
  %v8438 = vld [vmem:[%s8437] ss:$8 sm:$0xf]
  %v8439 = vld [vmem:[%s8437] ss:$8 sm:$0xf0]
  %v8440 = vor.u32 %v8438, %v8439
  %v8443 = vlaneseq
  %v8444 = vshrl.u32 %v8443, 7
  %v8445 = vsub.s32 0, %v8444
  %v8446 = vrot.slane %v8436, %v8445
  %v8447 = vlaneseq
  %v8448 = vshrl.u32 %v8447, 7
  %v8449 = vsub.s32 1, %v8448
  %v8450 = vrot.slane %v8436, %v8449
  %v8451 = vlaneseq
  %v8452 = vshrl.u32 %v8451, 7
  %v8453 = vsub.s32 2, %v8452
  %v8454 = vrot.slane %v8436, %v8453
  %v8455 = vlaneseq
  %v8456 = vshrl.u32 %v8455, 7
  %v8457 = vsub.s32 3, %v8456
  %v8458 = vrot.slane %v8436, %v8457
  %v8459 = vlaneseq
  %v8460 = vshrl.u32 %v8459, 7
  %v8461 = vsub.s32 4, %v8460
  %v8462 = vrot.slane %v8436, %v8461
  %v8463 = vlaneseq
  %v8464 = vshrl.u32 %v8463, 7
  %v8465 = vsub.s32 5, %v8464
  %v8466 = vrot.slane %v8436, %v8465
  %v8467 = vlaneseq
  %v8468 = vshrl.u32 %v8467, 7
  %v8469 = vsub.s32 6, %v8468
  %v8470 = vrot.slane %v8436, %v8469
  %v8471 = vlaneseq
  %v8472 = vshrl.u32 %v8471, 7
  %v8473 = vsub.s32 7, %v8472
  %v8474 = vrot.slane %v8436, %v8473
  %v8475 = vlaneseq
  %v8476 = vshrl.u32 %v8475, 7
  %v8477 = vsub.s32 0, %v8476
  %v8478 = vrot.slane %v8440, %v8477
  %v8479 = vlaneseq
  %v8480 = vshrl.u32 %v8479, 7
  %v8481 = vsub.s32 1, %v8480
  %v8482 = vrot.slane %v8440, %v8481
  %v8483 = vlaneseq
  %v8484 = vshrl.u32 %v8483, 7
  %v8485 = vsub.s32 2, %v8484
  %v8486 = vrot.slane %v8440, %v8485
  %v8487 = vlaneseq
  %v8488 = vshrl.u32 %v8487, 7
  %v8489 = vsub.s32 3, %v8488
  %v8490 = vrot.slane %v8440, %v8489
  %v8491 = vlaneseq
  %v8492 = vshrl.u32 %v8491, 7
  %v8493 = vsub.s32 4, %v8492
  %v8494 = vrot.slane %v8440, %v8493
  %v8495 = vlaneseq
  %v8496 = vshrl.u32 %v8495, 7
  %v8497 = vsub.s32 5, %v8496
  %v8498 = vrot.slane %v8440, %v8497
  %v8499 = vlaneseq
  %v8500 = vshrl.u32 %v8499, 7
  %v8501 = vsub.s32 6, %v8500
  %v8502 = vrot.slane %v8440, %v8501
  %v8503 = vlaneseq
  %v8504 = vshrl.u32 %v8503, 7
  %v8505 = vsub.s32 7, %v8504
  %v8506 = vrot.slane %v8440, %v8505
  %v8523 = vmul.f32 %v8431, %v8446
  %v8524 = vmul.f32 %v8430, %v8450
  %v8525 = vmul.f32 %v8429, %v8454
  %v8526 = vmul.f32 %v8428, %v8458
  %v8527 = vmul.f32 %v8427, %v8462
  %v8528 = vmul.f32 %v8426, %v8466
  %v8529 = vmul.f32 %v8425, %v8470
  %v8530 = vmul.f32 %v8424, %v8474
  %v8531 = vmul.f32 %v8423, %v8478
  %v8532 = vmul.f32 %v8422, %v8482
  %v8533 = vmul.f32 %v8421, %v8486
  %v8534 = vmul.f32 %v8420, %v8490
  %v8535 = vmul.f32 %v8419, %v8494
  %v8536 = vmul.f32 %v8418, %v8498
  %v8537 = vmul.f32 %v8417, %v8502
  %v8538 = vmul.f32 %v8432, %v8506
  %v8555 = vrot.slane %v8523, 4
  %v8556 = vrot.slane %v8524, 4
  %v8557 = vrot.slane %v8525, 4
  %v8558 = vrot.slane %v8526, 4
  %v8559 = vrot.slane %v8527, 4
  %v8560 = vrot.slane %v8528, 4
  %v8561 = vrot.slane %v8529, 4
  %v8562 = vrot.slane %v8530, 4
  %v8563 = vrot.slane %v8531, 4
  %v8564 = vrot.slane %v8532, 4
  %v8565 = vrot.slane %v8533, 4
  %v8566 = vrot.slane %v8534, 4
  %v8567 = vrot.slane %v8535, 4
  %v8568 = vrot.slane %v8536, 4
  %v8569 = vrot.slane %v8537, 4
  %v8570 = vrot.slane %v8538, 4
  %8587 = vst [vmem:[#allocation2 + $0x100] sm:$0xf0] %v8555
  %8588 = vst [vmem:[#allocation2 + $0x108] sm:$0xf0] %v8556
  %8589 = vst [vmem:[#allocation2 + $0x110] sm:$0xf0] %v8557
  %8590 = vst [vmem:[#allocation2 + $0x118] sm:$0xf0] %v8558
  %8591 = vst [vmem:[#allocation2 + $0x120] sm:$0xf0] %v8559
  %8592 = vst [vmem:[#allocation2 + $0x128] sm:$0xf0] %v8560
  %8593 = vst [vmem:[#allocation2 + $0x130] sm:$0xf0] %v8561
  %8594 = vst [vmem:[#allocation2 + $0x138] sm:$0xf0] %v8562
  %8595 = vst [vmem:[#allocation2 + $0x140] sm:$0xf0] %v8563
  %8596 = vst [vmem:[#allocation2 + $0x148] sm:$0xf0] %v8564
  %8597 = vst [vmem:[#allocation2 + $0x150] sm:$0xf0] %v8565
  %8598 = vst [vmem:[#allocation2 + $0x158] sm:$0xf0] %v8566
  %8599 = vst [vmem:[#allocation2 + $0x160] sm:$0xf0] %v8567
  %8600 = vst [vmem:[#allocation2 + $0x168] sm:$0xf0] %v8568
  %8601 = vst [vmem:[#allocation2 + $0x170] sm:$0xf0] %v8569
  %8602 = vst [vmem:[#allocation2 + $0x178] sm:$0xf0] %v8570
  %8603 = vrot.lane.b32.xlu0 %v7471, 113
  %v8604 = vpop.permute.xlu0 %8603
  %8605 = vrot.lane.b32.xlu0 %v7472, 113
  %v8606 = vpop.permute.xlu0 %8605
  %8607 = vrot.lane.b32.xlu0 %v7473, 113
  %v8608 = vpop.permute.xlu0 %8607
  %8609 = vrot.lane.b32.xlu0 %v7474, 113
  %v8610 = vpop.permute.xlu0 %8609
  %8611 = vrot.lane.b32.xlu0 %v7475, 113
  %v8612 = vpop.permute.xlu0 %8611
  %8613 = vrot.lane.b32.xlu0 %v7476, 113
  %v8614 = vpop.permute.xlu0 %8613
  %8615 = vrot.lane.b32.xlu0 %v7477, 113
  %v8616 = vpop.permute.xlu0 %8615
  %8617 = vrot.lane.b32.xlu0 %v7478, 113
  %v8618 = vpop.permute.xlu0 %8617
  %8619 = vrot.lane.b32.xlu0 %v7479, 113
  %v8620 = vpop.permute.xlu0 %8619
  %8621 = vrot.lane.b32.xlu0 %v7480, 113
  %v8622 = vpop.permute.xlu0 %8621
  %8623 = vrot.lane.b32.xlu0 %v7481, 113
  %v8624 = vpop.permute.xlu0 %8623
  %8625 = vrot.lane.b32.xlu0 %v7482, 113
  %v8626 = vpop.permute.xlu0 %8625
  %8627 = vrot.lane.b32.xlu0 %v7483, 113
  %v8628 = vpop.permute.xlu0 %8627
  %8629 = vrot.lane.b32.xlu0 %v7484, 113
  %v8630 = vpop.permute.xlu0 %8629
  %8631 = vrot.lane.b32.xlu0 %v7485, 113
  %v8632 = vpop.permute.xlu0 %8631
  %8633 = vrot.lane.b32.xlu0 %v7486, 113
  %v8634 = vpop.permute.xlu0 %8633
  %v8635 = vsel %vm4357, %v8632, %v8634
  %v8636 = vsel %vm4357, %v8630, %v8632
  %v8637 = vsel %vm4357, %v8628, %v8630
  %v8638 = vsel %vm4357, %v8626, %v8628
  %v8639 = vsel %vm4357, %v8624, %v8626
  %v8640 = vsel %vm4357, %v8622, %v8624
  %v8641 = vsel %vm4357, %v8620, %v8622
  %v8642 = vsel %vm4357, %v8618, %v8620
  %v8643 = vsel %vm4357, %v8616, %v8618
  %v8644 = vsel %vm4357, %v8614, %v8616
  %v8645 = vsel %vm4357, %v8612, %v8614
  %v8646 = vsel %vm4357, %v8610, %v8612
  %v8647 = vsel %vm4357, %v8608, %v8610
  %v8648 = vsel %vm4357, %v8606, %v8608
  %v8649 = vsel %vm4357, %v8604, %v8606
  %v8650 = vsel %vm4357, %v8634, %v8604
  %s8651 = scalar_lea.vmem %s2, 391
  %v8652 = vld [vmem:[%s8651] ss:$8 sm:$0xf]
  %v8653 = vld [vmem:[%s8651] ss:$8 sm:$0xf0]
  %v8654 = vor.u32 %v8652, %v8653
  %s8655 = scalar_lea.vmem %s2, 455
  %v8656 = vld [vmem:[%s8655] ss:$8 sm:$0xf]
  %v8657 = vld [vmem:[%s8655] ss:$8 sm:$0xf0]
  %v8658 = vor.u32 %v8656, %v8657
  %v8661 = vlaneseq
  %v8662 = vshrl.u32 %v8661, 7
  %v8663 = vsub.s32 0, %v8662
  %v8664 = vrot.slane %v8654, %v8663
  %v8665 = vlaneseq
  %v8666 = vshrl.u32 %v8665, 7
  %v8667 = vsub.s32 1, %v8666
  %v8668 = vrot.slane %v8654, %v8667
  %v8669 = vlaneseq
  %v8670 = vshrl.u32 %v8669, 7
  %v8671 = vsub.s32 2, %v8670
  %v8672 = vrot.slane %v8654, %v8671
  %v8673 = vlaneseq
  %v8674 = vshrl.u32 %v8673, 7
  %v8675 = vsub.s32 3, %v8674
  %v8676 = vrot.slane %v8654, %v8675
  %v8677 = vlaneseq
  %v8678 = vshrl.u32 %v8677, 7
  %v8679 = vsub.s32 4, %v8678
  %v8680 = vrot.slane %v8654, %v8679
  %v8681 = vlaneseq
  %v8682 = vshrl.u32 %v8681, 7
  %v8683 = vsub.s32 5, %v8682
  %v8684 = vrot.slane %v8654, %v8683
  %v8685 = vlaneseq
  %v8686 = vshrl.u32 %v8685, 7
  %v8687 = vsub.s32 6, %v8686
  %v8688 = vrot.slane %v8654, %v8687
  %v8689 = vlaneseq
  %v8690 = vshrl.u32 %v8689, 7
  %v8691 = vsub.s32 7, %v8690
  %v8692 = vrot.slane %v8654, %v8691
  %v8693 = vlaneseq
  %v8694 = vshrl.u32 %v8693, 7
  %v8695 = vsub.s32 0, %v8694
  %v8696 = vrot.slane %v8658, %v8695
  %v8697 = vlaneseq
  %v8698 = vshrl.u32 %v8697, 7
  %v8699 = vsub.s32 1, %v8698
  %v8700 = vrot.slane %v8658, %v8699
  %v8701 = vlaneseq
  %v8702 = vshrl.u32 %v8701, 7
  %v8703 = vsub.s32 2, %v8702
  %v8704 = vrot.slane %v8658, %v8703
  %v8705 = vlaneseq
  %v8706 = vshrl.u32 %v8705, 7
  %v8707 = vsub.s32 3, %v8706
  %v8708 = vrot.slane %v8658, %v8707
  %v8709 = vlaneseq
  %v8710 = vshrl.u32 %v8709, 7
  %v8711 = vsub.s32 4, %v8710
  %v8712 = vrot.slane %v8658, %v8711
  %v8713 = vlaneseq
  %v8714 = vshrl.u32 %v8713, 7
  %v8715 = vsub.s32 5, %v8714
  %v8716 = vrot.slane %v8658, %v8715
  %v8717 = vlaneseq
  %v8718 = vshrl.u32 %v8717, 7
  %v8719 = vsub.s32 6, %v8718
  %v8720 = vrot.slane %v8658, %v8719
  %v8721 = vlaneseq
  %v8722 = vshrl.u32 %v8721, 7
  %v8723 = vsub.s32 7, %v8722
  %v8724 = vrot.slane %v8658, %v8723
  %v8741 = vmul.f32 %v8649, %v8664
  %v8742 = vmul.f32 %v8648, %v8668
  %v8743 = vmul.f32 %v8647, %v8672
  %v8744 = vmul.f32 %v8646, %v8676
  %v8745 = vmul.f32 %v8645, %v8680
  %v8746 = vmul.f32 %v8644, %v8684
  %v8747 = vmul.f32 %v8643, %v8688
  %v8748 = vmul.f32 %v8642, %v8692
  %v8749 = vmul.f32 %v8641, %v8696
  %v8750 = vmul.f32 %v8640, %v8700
  %v8751 = vmul.f32 %v8639, %v8704
  %v8752 = vmul.f32 %v8638, %v8708
  %v8753 = vmul.f32 %v8637, %v8712
  %v8754 = vmul.f32 %v8636, %v8716
  %v8755 = vmul.f32 %v8635, %v8720
  %v8756 = vmul.f32 %v8650, %v8724
  %8757 = vst [vmem:[#allocation2 + $0x180] sm:$0xf] %v8741
  %8758 = vst [vmem:[#allocation2 + $0x188] sm:$0xf] %v8742
  %8759 = vst [vmem:[#allocation2 + $0x190] sm:$0xf] %v8743
  %8760 = vst [vmem:[#allocation2 + $0x198] sm:$0xf] %v8744
  %8761 = vst [vmem:[#allocation2 + $0x1a0] sm:$0xf] %v8745
  %8762 = vst [vmem:[#allocation2 + $0x1a8] sm:$0xf] %v8746
  %8763 = vst [vmem:[#allocation2 + $0x1b0] sm:$0xf] %v8747
  %8764 = vst [vmem:[#allocation2 + $0x1b8] sm:$0xf] %v8748
  %8765 = vst [vmem:[#allocation2 + $0x1c0] sm:$0xf] %v8749
  %8766 = vst [vmem:[#allocation2 + $0x1c8] sm:$0xf] %v8750
  %8767 = vst [vmem:[#allocation2 + $0x1d0] sm:$0xf] %v8751
  %8768 = vst [vmem:[#allocation2 + $0x1d8] sm:$0xf] %v8752
  %8769 = vst [vmem:[#allocation2 + $0x1e0] sm:$0xf] %v8753
  %8770 = vst [vmem:[#allocation2 + $0x1e8] sm:$0xf] %v8754
  %8771 = vst [vmem:[#allocation2 + $0x1f0] sm:$0xf] %v8755
  %8772 = vst [vmem:[#allocation2 + $0x1f8] sm:$0xf] %v8756
  %8773 = vrot.lane.b32.xlu0 %v7471, 112
  %v8774 = vpop.permute.xlu0 %8773
  %8775 = vrot.lane.b32.xlu0 %v7472, 112
  %v8776 = vpop.permute.xlu0 %8775
  %8777 = vrot.lane.b32.xlu0 %v7473, 112
  %v8778 = vpop.permute.xlu0 %8777
  %8779 = vrot.lane.b32.xlu0 %v7474, 112
  %v8780 = vpop.permute.xlu0 %8779
  %8781 = vrot.lane.b32.xlu0 %v7475, 112
  %v8782 = vpop.permute.xlu0 %8781
  %8783 = vrot.lane.b32.xlu0 %v7476, 112
  %v8784 = vpop.permute.xlu0 %8783
  %8785 = vrot.lane.b32.xlu0 %v7477, 112
  %v8786 = vpop.permute.xlu0 %8785
  %8787 = vrot.lane.b32.xlu0 %v7478, 112
  %v8788 = vpop.permute.xlu0 %8787
  %8789 = vrot.lane.b32.xlu0 %v7479, 112
  %v8790 = vpop.permute.xlu0 %8789
  %8791 = vrot.lane.b32.xlu0 %v7480, 112
  %v8792 = vpop.permute.xlu0 %8791
  %8793 = vrot.lane.b32.xlu0 %v7481, 112
  %v8794 = vpop.permute.xlu0 %8793
  %8795 = vrot.lane.b32.xlu0 %v7482, 112
  %v8796 = vpop.permute.xlu0 %8795
  %8797 = vrot.lane.b32.xlu0 %v7483, 112
  %v8798 = vpop.permute.xlu0 %8797
  %8799 = vrot.lane.b32.xlu0 %v7484, 112
  %v8800 = vpop.permute.xlu0 %8799
  %8801 = vrot.lane.b32.xlu0 %v7485, 112
  %v8802 = vpop.permute.xlu0 %8801
  %8803 = vrot.lane.b32.xlu0 %v7486, 112
  %v8804 = vpop.permute.xlu0 %8803
  %v8805 = vsel %vm4634, %v8802, %v8804
  %v8806 = vsel %vm4634, %v8800, %v8802
  %v8807 = vsel %vm4634, %v8798, %v8800
  %v8808 = vsel %vm4634, %v8796, %v8798
  %v8809 = vsel %vm4634, %v8794, %v8796
  %v8810 = vsel %vm4634, %v8792, %v8794
  %v8811 = vsel %vm4634, %v8790, %v8792
  %v8812 = vsel %vm4634, %v8788, %v8790
  %v8813 = vsel %vm4634, %v8786, %v8788
  %v8814 = vsel %vm4634, %v8784, %v8786
  %v8815 = vsel %vm4634, %v8782, %v8784
  %v8816 = vsel %vm4634, %v8780, %v8782
  %v8817 = vsel %vm4634, %v8778, %v8780
  %v8818 = vsel %vm4634, %v8776, %v8778
  %v8819 = vsel %vm4634, %v8774, %v8776
  %v8820 = vsel %vm4634, %v8804, %v8774
  %s8821 = scalar_lea.vmem %s2, 512
  %v8822 = vld [vmem:[%s8821] ss:$8 sm:$0xf]
  %v8823 = vld [vmem:[%s8821] ss:$8 sm:$0xf0]
  %v8824 = vor.u32 %v8822, %v8823
  %s8825 = scalar_lea.vmem %s2, 576
  %v8826 = vld [vmem:[%s8825] ss:$8 sm:$0xf]
  %v8827 = vld [vmem:[%s8825] ss:$8 sm:$0xf0]
  %v8828 = vor.u32 %v8826, %v8827
  %v8831 = vlaneseq
  %v8832 = vshrl.u32 %v8831, 7
  %v8833 = vsub.s32 0, %v8832
  %v8834 = vrot.slane %v8824, %v8833
  %v8835 = vlaneseq
  %v8836 = vshrl.u32 %v8835, 7
  %v8837 = vsub.s32 1, %v8836
  %v8838 = vrot.slane %v8824, %v8837
  %v8839 = vlaneseq
  %v8840 = vshrl.u32 %v8839, 7
  %v8841 = vsub.s32 2, %v8840
  %v8842 = vrot.slane %v8824, %v8841
  %v8843 = vlaneseq
  %v8844 = vshrl.u32 %v8843, 7
  %v8845 = vsub.s32 3, %v8844
  %v8846 = vrot.slane %v8824, %v8845
  %v8847 = vlaneseq
  %v8848 = vshrl.u32 %v8847, 7
  %v8849 = vsub.s32 4, %v8848
  %v8850 = vrot.slane %v8824, %v8849
  %v8851 = vlaneseq
  %v8852 = vshrl.u32 %v8851, 7
  %v8853 = vsub.s32 5, %v8852
  %v8854 = vrot.slane %v8824, %v8853
  %v8855 = vlaneseq
  %v8856 = vshrl.u32 %v8855, 7
  %v8857 = vsub.s32 6, %v8856
  %v8858 = vrot.slane %v8824, %v8857
  %v8859 = vlaneseq
  %v8860 = vshrl.u32 %v8859, 7
  %v8861 = vsub.s32 7, %v8860
  %v8862 = vrot.slane %v8824, %v8861
  %v8863 = vlaneseq
  %v8864 = vshrl.u32 %v8863, 7
  %v8865 = vsub.s32 0, %v8864
  %v8866 = vrot.slane %v8828, %v8865
  %v8867 = vlaneseq
  %v8868 = vshrl.u32 %v8867, 7
  %v8869 = vsub.s32 1, %v8868
  %v8870 = vrot.slane %v8828, %v8869
  %v8871 = vlaneseq
  %v8872 = vshrl.u32 %v8871, 7
  %v8873 = vsub.s32 2, %v8872
  %v8874 = vrot.slane %v8828, %v8873
  %v8875 = vlaneseq
  %v8876 = vshrl.u32 %v8875, 7
  %v8877 = vsub.s32 3, %v8876
  %v8878 = vrot.slane %v8828, %v8877
  %v8879 = vlaneseq
  %v8880 = vshrl.u32 %v8879, 7
  %v8881 = vsub.s32 4, %v8880
  %v8882 = vrot.slane %v8828, %v8881
  %v8883 = vlaneseq
  %v8884 = vshrl.u32 %v8883, 7
  %v8885 = vsub.s32 5, %v8884
  %v8886 = vrot.slane %v8828, %v8885
  %v8887 = vlaneseq
  %v8888 = vshrl.u32 %v8887, 7
  %v8889 = vsub.s32 6, %v8888
  %v8890 = vrot.slane %v8828, %v8889
  %v8891 = vlaneseq
  %v8892 = vshrl.u32 %v8891, 7
  %v8893 = vsub.s32 7, %v8892
  %v8894 = vrot.slane %v8828, %v8893
  %v8911 = vmul.f32 %v8819, %v8834
  %v8912 = vmul.f32 %v8818, %v8838
  %v8913 = vmul.f32 %v8817, %v8842
  %v8914 = vmul.f32 %v8816, %v8846
  %v8915 = vmul.f32 %v8815, %v8850
  %v8916 = vmul.f32 %v8814, %v8854
  %v8917 = vmul.f32 %v8813, %v8858
  %v8918 = vmul.f32 %v8812, %v8862
  %v8919 = vmul.f32 %v8811, %v8866
  %v8920 = vmul.f32 %v8810, %v8870
  %v8921 = vmul.f32 %v8809, %v8874
  %v8922 = vmul.f32 %v8808, %v8878
  %v8923 = vmul.f32 %v8807, %v8882
  %v8924 = vmul.f32 %v8806, %v8886
  %v8925 = vmul.f32 %v8805, %v8890
  %v8926 = vmul.f32 %v8820, %v8894
  %v8943 = vrot.slane %v8911, 4
  %v8944 = vrot.slane %v8912, 4
  %v8945 = vrot.slane %v8913, 4
  %v8946 = vrot.slane %v8914, 4
  %v8947 = vrot.slane %v8915, 4
  %v8948 = vrot.slane %v8916, 4
  %v8949 = vrot.slane %v8917, 4
  %v8950 = vrot.slane %v8918, 4
  %v8951 = vrot.slane %v8919, 4
  %v8952 = vrot.slane %v8920, 4
  %v8953 = vrot.slane %v8921, 4
  %v8954 = vrot.slane %v8922, 4
  %v8955 = vrot.slane %v8923, 4
  %v8956 = vrot.slane %v8924, 4
  %v8957 = vrot.slane %v8925, 4
  %v8958 = vrot.slane %v8926, 4
  %8975 = vst [vmem:[#allocation2 + $0x180] sm:$0xf0] %v8943
  %8976 = vst [vmem:[#allocation2 + $0x188] sm:$0xf0] %v8944
  %8977 = vst [vmem:[#allocation2 + $0x190] sm:$0xf0] %v8945
  %8978 = vst [vmem:[#allocation2 + $0x198] sm:$0xf0] %v8946
  %8979 = vst [vmem:[#allocation2 + $0x1a0] sm:$0xf0] %v8947
  %8980 = vst [vmem:[#allocation2 + $0x1a8] sm:$0xf0] %v8948
  %8981 = vst [vmem:[#allocation2 + $0x1b0] sm:$0xf0] %v8949
  %8982 = vst [vmem:[#allocation2 + $0x1b8] sm:$0xf0] %v8950
  %8983 = vst [vmem:[#allocation2 + $0x1c0] sm:$0xf0] %v8951
  %8984 = vst [vmem:[#allocation2 + $0x1c8] sm:$0xf0] %v8952
  %8985 = vst [vmem:[#allocation2 + $0x1d0] sm:$0xf0] %v8953
  %8986 = vst [vmem:[#allocation2 + $0x1d8] sm:$0xf0] %v8954
  %8987 = vst [vmem:[#allocation2 + $0x1e0] sm:$0xf0] %v8955
  %8988 = vst [vmem:[#allocation2 + $0x1e8] sm:$0xf0] %v8956
  %8989 = vst [vmem:[#allocation2 + $0x1f0] sm:$0xf0] %v8957
  %8990 = vst [vmem:[#allocation2 + $0x1f8] sm:$0xf0] %v8958
  %8991 = vrot.lane.b32.xlu0 %v7471, 111
  %v8992 = vpop.permute.xlu0 %8991
  %8993 = vrot.lane.b32.xlu0 %v7472, 111
  %v8994 = vpop.permute.xlu0 %8993
  %8995 = vrot.lane.b32.xlu0 %v7473, 111
  %v8996 = vpop.permute.xlu0 %8995
  %8997 = vrot.lane.b32.xlu0 %v7474, 111
  %v8998 = vpop.permute.xlu0 %8997
  %8999 = vrot.lane.b32.xlu0 %v7475, 111
  %v9000 = vpop.permute.xlu0 %8999
  %9001 = vrot.lane.b32.xlu0 %v7476, 111
  %v9002 = vpop.permute.xlu0 %9001
  %9003 = vrot.lane.b32.xlu0 %v7477, 111
  %v9004 = vpop.permute.xlu0 %9003
  %9005 = vrot.lane.b32.xlu0 %v7478, 111
  %v9006 = vpop.permute.xlu0 %9005
  %9007 = vrot.lane.b32.xlu0 %v7479, 111
  %v9008 = vpop.permute.xlu0 %9007
  %9009 = vrot.lane.b32.xlu0 %v7480, 111
  %v9010 = vpop.permute.xlu0 %9009
  %9011 = vrot.lane.b32.xlu0 %v7481, 111
  %v9012 = vpop.permute.xlu0 %9011
  %9013 = vrot.lane.b32.xlu0 %v7482, 111
  %v9014 = vpop.permute.xlu0 %9013
  %9015 = vrot.lane.b32.xlu0 %v7483, 111
  %v9016 = vpop.permute.xlu0 %9015
  %9017 = vrot.lane.b32.xlu0 %v7484, 111
  %v9018 = vpop.permute.xlu0 %9017
  %9019 = vrot.lane.b32.xlu0 %v7485, 111
  %v9020 = vpop.permute.xlu0 %9019
  %9021 = vrot.lane.b32.xlu0 %v7486, 111
  %v9022 = vpop.permute.xlu0 %9021
  %v9023 = vsel %vm4911, %v9020, %v9022
  %v9024 = vsel %vm4911, %v9018, %v9020
  %v9025 = vsel %vm4911, %v9016, %v9018
  %v9026 = vsel %vm4911, %v9014, %v9016
  %v9027 = vsel %vm4911, %v9012, %v9014
  %v9028 = vsel %vm4911, %v9010, %v9012
  %v9029 = vsel %vm4911, %v9008, %v9010
  %v9030 = vsel %vm4911, %v9006, %v9008
  %v9031 = vsel %vm4911, %v9004, %v9006
  %v9032 = vsel %vm4911, %v9002, %v9004
  %v9033 = vsel %vm4911, %v9000, %v9002
  %v9034 = vsel %vm4911, %v8998, %v9000
  %v9035 = vsel %vm4911, %v8996, %v8998
  %v9036 = vsel %vm4911, %v8994, %v8996
  %v9037 = vsel %vm4911, %v8992, %v8994
  %v9038 = vsel %vm4911, %v9022, %v8992
  %s9039 = scalar_lea.vmem %s2, 513
  %v9040 = vld [vmem:[%s9039] ss:$8 sm:$0xf]
  %v9041 = vld [vmem:[%s9039] ss:$8 sm:$0xf0]
  %v9042 = vor.u32 %v9040, %v9041
  %s9043 = scalar_lea.vmem %s2, 577
  %v9044 = vld [vmem:[%s9043] ss:$8 sm:$0xf]
  %v9045 = vld [vmem:[%s9043] ss:$8 sm:$0xf0]
  %v9046 = vor.u32 %v9044, %v9045
  %v9049 = vlaneseq
  %v9050 = vshrl.u32 %v9049, 7
  %v9051 = vsub.s32 0, %v9050
  %v9052 = vrot.slane %v9042, %v9051
  %v9053 = vlaneseq
  %v9054 = vshrl.u32 %v9053, 7
  %v9055 = vsub.s32 1, %v9054
  %v9056 = vrot.slane %v9042, %v9055
  %v9057 = vlaneseq
  %v9058 = vshrl.u32 %v9057, 7
  %v9059 = vsub.s32 2, %v9058
  %v9060 = vrot.slane %v9042, %v9059
  %v9061 = vlaneseq
  %v9062 = vshrl.u32 %v9061, 7
  %v9063 = vsub.s32 3, %v9062
  %v9064 = vrot.slane %v9042, %v9063
  %v9065 = vlaneseq
  %v9066 = vshrl.u32 %v9065, 7
  %v9067 = vsub.s32 4, %v9066
  %v9068 = vrot.slane %v9042, %v9067
  %v9069 = vlaneseq
  %v9070 = vshrl.u32 %v9069, 7
  %v9071 = vsub.s32 5, %v9070
  %v9072 = vrot.slane %v9042, %v9071
  %v9073 = vlaneseq
  %v9074 = vshrl.u32 %v9073, 7
  %v9075 = vsub.s32 6, %v9074
  %v9076 = vrot.slane %v9042, %v9075
  %v9077 = vlaneseq
  %v9078 = vshrl.u32 %v9077, 7
  %v9079 = vsub.s32 7, %v9078
  %v9080 = vrot.slane %v9042, %v9079
  %v9081 = vlaneseq
  %v9082 = vshrl.u32 %v9081, 7
  %v9083 = vsub.s32 0, %v9082
  %v9084 = vrot.slane %v9046, %v9083
  %v9085 = vlaneseq
  %v9086 = vshrl.u32 %v9085, 7
  %v9087 = vsub.s32 1, %v9086
  %v9088 = vrot.slane %v9046, %v9087
  %v9089 = vlaneseq
  %v9090 = vshrl.u32 %v9089, 7
  %v9091 = vsub.s32 2, %v9090
  %v9092 = vrot.slane %v9046, %v9091
  %v9093 = vlaneseq
  %v9094 = vshrl.u32 %v9093, 7
  %v9095 = vsub.s32 3, %v9094
  %v9096 = vrot.slane %v9046, %v9095
  %v9097 = vlaneseq
  %v9098 = vshrl.u32 %v9097, 7
  %v9099 = vsub.s32 4, %v9098
  %v9100 = vrot.slane %v9046, %v9099
  %v9101 = vlaneseq
  %v9102 = vshrl.u32 %v9101, 7
  %v9103 = vsub.s32 5, %v9102
  %v9104 = vrot.slane %v9046, %v9103
  %v9105 = vlaneseq
  %v9106 = vshrl.u32 %v9105, 7
  %v9107 = vsub.s32 6, %v9106
  %v9108 = vrot.slane %v9046, %v9107
  %v9109 = vlaneseq
  %v9110 = vshrl.u32 %v9109, 7
  %v9111 = vsub.s32 7, %v9110
  %v9112 = vrot.slane %v9046, %v9111
  %v9129 = vmul.f32 %v9037, %v9052
  %v9130 = vmul.f32 %v9036, %v9056
  %v9131 = vmul.f32 %v9035, %v9060
  %v9132 = vmul.f32 %v9034, %v9064
  %v9133 = vmul.f32 %v9033, %v9068
  %v9134 = vmul.f32 %v9032, %v9072
  %v9135 = vmul.f32 %v9031, %v9076
  %v9136 = vmul.f32 %v9030, %v9080
  %v9137 = vmul.f32 %v9029, %v9084
  %v9138 = vmul.f32 %v9028, %v9088
  %v9139 = vmul.f32 %v9027, %v9092
  %v9140 = vmul.f32 %v9026, %v9096
  %v9141 = vmul.f32 %v9025, %v9100
  %v9142 = vmul.f32 %v9024, %v9104
  %v9143 = vmul.f32 %v9023, %v9108
  %v9144 = vmul.f32 %v9038, %v9112
  %9145 = vst [vmem:[#allocation2 + $0x200] sm:$0xf] %v9129
  %9146 = vst [vmem:[#allocation2 + $0x208] sm:$0xf] %v9130
  %9147 = vst [vmem:[#allocation2 + $0x210] sm:$0xf] %v9131
  %9148 = vst [vmem:[#allocation2 + $0x218] sm:$0xf] %v9132
  %9149 = vst [vmem:[#allocation2 + $0x220] sm:$0xf] %v9133
  %9150 = vst [vmem:[#allocation2 + $0x228] sm:$0xf] %v9134
  %9151 = vst [vmem:[#allocation2 + $0x230] sm:$0xf] %v9135
  %9152 = vst [vmem:[#allocation2 + $0x238] sm:$0xf] %v9136
  %9153 = vst [vmem:[#allocation2 + $0x240] sm:$0xf] %v9137
  %9154 = vst [vmem:[#allocation2 + $0x248] sm:$0xf] %v9138
  %9155 = vst [vmem:[#allocation2 + $0x250] sm:$0xf] %v9139
  %9156 = vst [vmem:[#allocation2 + $0x258] sm:$0xf] %v9140
  %9157 = vst [vmem:[#allocation2 + $0x260] sm:$0xf] %v9141
  %9158 = vst [vmem:[#allocation2 + $0x268] sm:$0xf] %v9142
  %9159 = vst [vmem:[#allocation2 + $0x270] sm:$0xf] %v9143
  %9160 = vst [vmem:[#allocation2 + $0x278] sm:$0xf] %v9144
  %v9161 = vld [vmem:[%s5] sm:$0xff]
  %v9162 = vld [vmem:[#allocation2] sm:$0xff]
  %v9163 = vld [vmem:[#allocation2 + $0x8] sm:$0xff]
  %v9164 = vld [vmem:[#allocation2 + $0x10] sm:$0xff]
  %v9165 = vld [vmem:[#allocation2 + $0x18] sm:$0xff]
  %v9166 = vld [vmem:[#allocation2 + $0x20] sm:$0xff]
  %v9167 = vld [vmem:[#allocation2 + $0x28] sm:$0xff]
  %v9168 = vld [vmem:[#allocation2 + $0x30] sm:$0xff]
  %v9169 = vld [vmem:[#allocation2 + $0x38] sm:$0xff]
  %v9170 = vld [vmem:[#allocation2 + $0x40] sm:$0xff]
  %v9171 = vld [vmem:[#allocation2 + $0x48] sm:$0xff]
  %v9172 = vld [vmem:[#allocation2 + $0x50] sm:$0xff]
  %v9173 = vld [vmem:[#allocation2 + $0x58] sm:$0xff]
  %v9174 = vld [vmem:[#allocation2 + $0x60] sm:$0xff]
  %v9175 = vld [vmem:[#allocation2 + $0x68] sm:$0xff]
  %v9176 = vld [vmem:[#allocation2 + $0x70] sm:$0xff]
  %v9177 = vld [vmem:[#allocation2 + $0x78] sm:$0xff]
  %v9178 = vld [vmem:[#allocation2 + $0x80] sm:$0xff]
  %v9179 = vld [vmem:[#allocation2 + $0x88] sm:$0xff]
  %v9180 = vld [vmem:[#allocation2 + $0x90] sm:$0xff]
  %v9181 = vld [vmem:[#allocation2 + $0x98] sm:$0xff]
  %v9182 = vld [vmem:[#allocation2 + $0xa0] sm:$0xff]
  %v9183 = vld [vmem:[#allocation2 + $0xa8] sm:$0xff]
  %v9184 = vld [vmem:[#allocation2 + $0xb0] sm:$0xff]
  %v9185 = vld [vmem:[#allocation2 + $0xb8] sm:$0xff]
  %v9186 = vld [vmem:[#allocation2 + $0xc0] sm:$0xff]
  %v9187 = vld [vmem:[#allocation2 + $0xc8] sm:$0xff]
  %v9188 = vld [vmem:[#allocation2 + $0xd0] sm:$0xff]
  %v9189 = vld [vmem:[#allocation2 + $0xd8] sm:$0xff]
  %v9190 = vld [vmem:[#allocation2 + $0xe0] sm:$0xff]
  %v9191 = vld [vmem:[#allocation2 + $0xe8] sm:$0xff]
  %v9192 = vld [vmem:[#allocation2 + $0xf0] sm:$0xff]
  %v9193 = vld [vmem:[#allocation2 + $0xf8] sm:$0xff]
  %v9194 = vld [vmem:[#allocation2 + $0x100] sm:$0xff]
  %v9195 = vld [vmem:[#allocation2 + $0x108] sm:$0xff]
  %v9196 = vld [vmem:[#allocation2 + $0x110] sm:$0xff]
  %v9197 = vld [vmem:[#allocation2 + $0x118] sm:$0xff]
  %v9198 = vld [vmem:[#allocation2 + $0x120] sm:$0xff]
  %v9199 = vld [vmem:[#allocation2 + $0x128] sm:$0xff]
  %v9200 = vld [vmem:[#allocation2 + $0x130] sm:$0xff]
  %v9201 = vld [vmem:[#allocation2 + $0x138] sm:$0xff]
  %v9202 = vld [vmem:[#allocation2 + $0x140] sm:$0xff]
  %v9203 = vld [vmem:[#allocation2 + $0x148] sm:$0xff]
  %v9204 = vld [vmem:[#allocation2 + $0x150] sm:$0xff]
  %v9205 = vld [vmem:[#allocation2 + $0x158] sm:$0xff]
  %v9206 = vld [vmem:[#allocation2 + $0x160] sm:$0xff]
  %v9207 = vld [vmem:[#allocation2 + $0x168] sm:$0xff]
  %v9208 = vld [vmem:[#allocation2 + $0x170] sm:$0xff]
  %v9209 = vld [vmem:[#allocation2 + $0x178] sm:$0xff]
  %v9210 = vld [vmem:[#allocation2 + $0x180] sm:$0xff]
  %v9211 = vld [vmem:[#allocation2 + $0x188] sm:$0xff]
  %v9212 = vld [vmem:[#allocation2 + $0x190] sm:$0xff]
  %v9213 = vld [vmem:[#allocation2 + $0x198] sm:$0xff]
  %v9214 = vld [vmem:[#allocation2 + $0x1a0] sm:$0xff]
  %v9215 = vld [vmem:[#allocation2 + $0x1a8] sm:$0xff]
  %v9216 = vld [vmem:[#allocation2 + $0x1b0] sm:$0xff]
  %v9217 = vld [vmem:[#allocation2 + $0x1b8] sm:$0xff]
  %v9218 = vld [vmem:[#allocation2 + $0x1c0] sm:$0xff]
  %v9219 = vld [vmem:[#allocation2 + $0x1c8] sm:$0xff]
  %v9220 = vld [vmem:[#allocation2 + $0x1d0] sm:$0xff]
  %v9221 = vld [vmem:[#allocation2 + $0x1d8] sm:$0xff]
  %v9222 = vld [vmem:[#allocation2 + $0x1e0] sm:$0xff]
  %v9223 = vld [vmem:[#allocation2 + $0x1e8] sm:$0xff]
  %v9224 = vld [vmem:[#allocation2 + $0x1f0] sm:$0xff]
  %v9225 = vld [vmem:[#allocation2 + $0x1f8] sm:$0xff]
  %v9226 = vld [vmem:[#allocation2 + $0x200] sm:$0xff]
  %v9227 = vld [vmem:[#allocation2 + $0x208] sm:$0xff]
  %v9228 = vld [vmem:[#allocation2 + $0x210] sm:$0xff]
  %v9229 = vld [vmem:[#allocation2 + $0x218] sm:$0xff]
  %v9230 = vld [vmem:[#allocation2 + $0x220] sm:$0xff]
  %v9231 = vld [vmem:[#allocation2 + $0x228] sm:$0xff]
  %v9232 = vld [vmem:[#allocation2 + $0x230] sm:$0xff]
  %v9233 = vld [vmem:[#allocation2 + $0x238] sm:$0xff]
  %v9234 = vld [vmem:[#allocation2 + $0x240] sm:$0xff]
  %v9235 = vld [vmem:[#allocation2 + $0x248] sm:$0xff]
  %v9236 = vld [vmem:[#allocation2 + $0x250] sm:$0xff]
  %v9237 = vld [vmem:[#allocation2 + $0x258] sm:$0xff]
  %v9238 = vld [vmem:[#allocation2 + $0x260] sm:$0xff]
  %v9239 = vld [vmem:[#allocation2 + $0x268] sm:$0xff]
  %v9240 = vld [vmem:[#allocation2 + $0x270] sm:$0xff]
  %v9241 = vld [vmem:[#allocation2 + $0x278] sm:$0xff]
  %v9243 = vsel %vm6899, %v9161, 0
  %9245 = vmatprep.subr.mxu0 0.0
  %9246 = vmatpush1.msra.mxu0 0.0
  %9247 = vmatprep.subr.mxu0 0.0
  %9248 = vmatpush1.msra.mxu0 0.0
  %9249 = vmatprep.subr.mxu0 0.0
  %9250 = vmatpush1.msra.mxu0 0.0
  %9251 = vmatprep.subr.mxu0 0.0
  %9252 = vmatpush1.msra.mxu0 0.0
  %9253 = vmatprep.subr.mxu0 0.0
  %9254 = vmatpush1.msra.mxu0 0.0
  %9255 = vmatprep.subr.mxu0 0.0
  %9256 = vmatpush1.msra.mxu0 0.0
  %9257 = vmatprep.subr.mxu0 0.0
  %9258 = vmatpush1.msra.mxu0 0.0
  %9259 = vmatprep.subr.mxu0 0.0
  %9260 = vmatpush1.msra.mxu0 0.0
  %9261 = vmatprep.subr.mxu0 0.0
  %9262 = vmatpush1.msra.mxu0 0.0
  %9263 = vmatprep.subr.mxu0 0.0
  %9264 = vmatpush1.msra.mxu0 0.0
  %9265 = vmatprep.subr.mxu0 0.0
  %9266 = vmatpush1.msra.mxu0 0.0
  %9267 = vmatprep.subr.mxu0 %v9227
  %9268 = vmatpush1.msra.mxu0 %v9226
  %9269 = vmatprep.subr.mxu0 %v9211
  %9270 = vmatpush1.msra.mxu0 %v9210
  %9271 = vmatprep.subr.mxu0 %v9195
  %9272 = vmatpush1.msra.mxu0 %v9194
  %9273 = vmatprep.subr.mxu0 %v9179
  %9274 = vmatpush1.msra.mxu0 %v9178
  %9275 = vmatprep.subr.mxu0 %v9163
  %9276 = vmatpush1.msra.mxu0 %v9162
  %9277 = vmatprep.subr.mxu0 0.0
  %9278 = vmatpush2.msra.mxu0 0.0
  %9279 = vmatprep.subr.mxu0 0.0
  %9280 = vmatpush2.msra.mxu0 0.0
  %9281 = vmatprep.subr.mxu0 0.0
  %9282 = vmatpush2.msra.mxu0 0.0
  %9283 = vmatprep.subr.mxu0 0.0
  %9284 = vmatpush2.msra.mxu0 0.0
  %9285 = vmatprep.subr.mxu0 0.0
  %9286 = vmatpush2.msra.mxu0 0.0
  %9287 = vmatprep.subr.mxu0 0.0
  %9288 = vmatpush2.msra.mxu0 0.0
  %9289 = vmatprep.subr.mxu0 0.0
  %9290 = vmatpush2.msra.mxu0 0.0
  %9291 = vmatprep.subr.mxu0 0.0
  %9292 = vmatpush2.msra.mxu0 0.0
  %9293 = vmatprep.subr.mxu0 0.0
  %9294 = vmatpush2.msra.mxu0 0.0
  %9295 = vmatprep.subr.mxu0 0.0
  %9296 = vmatpush2.msra.mxu0 0.0
  %9297 = vmatprep.subr.mxu0 0.0
  %9298 = vmatpush2.msra.mxu0 0.0
  %9299 = vmatprep.subr.mxu0 0.0
  %9300 = vmatpush2.msra.mxu0 0.0
  %9301 = vmatprep.subr.mxu0 0.0
  %9302 = vmatpush2.msra.mxu0 0.0
  %9303 = vmatprep.subr.mxu0 0.0
  %9304 = vmatpush2.msra.mxu0 0.0
  %9305 = vmatprep.subr.mxu0 0.0
  %9306 = vmatpush2.msra.mxu0 0.0
  %9307 = vmatprep.subr.mxu0 0.0
  %9308 = vmatpush2.msra.mxu0 0.0
  %9309 = vmatprep.mubr.f32.mxu0 0.0
  %9310 = vmatmul.mubr.f32.gmra.mxu0 %v9243
  %v9311 = vpop.f32.mrf.mxu0
  %v9312 = vadd.f32 0.0, %v9311
  %v9313 = vpop.f32.mrf.mxu0
  %v9314 = vadd.f32 0.0, %v9313
  %9315 = vdwg.mxu0
  %9316 = vmatprep.subr.mxu0 0.0
  %9317 = vmatpush1.msra.mxu0 0.0
  %9318 = vmatprep.subr.mxu0 0.0
  %9319 = vmatpush1.msra.mxu0 0.0
  %9320 = vmatprep.subr.mxu0 0.0
  %9321 = vmatpush1.msra.mxu0 0.0
  %9322 = vmatprep.subr.mxu0 0.0
  %9323 = vmatpush1.msra.mxu0 0.0
  %9324 = vmatprep.subr.mxu0 0.0
  %9325 = vmatpush1.msra.mxu0 0.0
  %9326 = vmatprep.subr.mxu0 0.0
  %9327 = vmatpush1.msra.mxu0 0.0
  %9328 = vmatprep.subr.mxu0 0.0
  %9329 = vmatpush1.msra.mxu0 0.0
  %9330 = vmatprep.subr.mxu0 0.0
  %9331 = vmatpush1.msra.mxu0 0.0
  %9332 = vmatprep.subr.mxu0 0.0
  %9333 = vmatpush1.msra.mxu0 0.0
  %9334 = vmatprep.subr.mxu0 0.0
  %9335 = vmatpush1.msra.mxu0 0.0
  %9336 = vmatprep.subr.mxu0 0.0
  %9337 = vmatpush1.msra.mxu0 0.0
  %9338 = vmatprep.subr.mxu0 %v9229
  %9339 = vmatpush1.msra.mxu0 %v9228
  %9340 = vmatprep.subr.mxu0 %v9213
  %9341 = vmatpush1.msra.mxu0 %v9212
  %9342 = vmatprep.subr.mxu0 %v9197
  %9343 = vmatpush1.msra.mxu0 %v9196
  %9344 = vmatprep.subr.mxu0 %v9181
  %9345 = vmatpush1.msra.mxu0 %v9180
  %9346 = vmatprep.subr.mxu0 %v9165
  %9347 = vmatpush1.msra.mxu0 %v9164
  %9348 = vmatprep.subr.mxu0 0.0
  %9349 = vmatpush2.msra.mxu0 0.0
  %9350 = vmatprep.subr.mxu0 0.0
  %9351 = vmatpush2.msra.mxu0 0.0
  %9352 = vmatprep.subr.mxu0 0.0
  %9353 = vmatpush2.msra.mxu0 0.0
  %9354 = vmatprep.subr.mxu0 0.0
  %9355 = vmatpush2.msra.mxu0 0.0
  %9356 = vmatprep.subr.mxu0 0.0
  %9357 = vmatpush2.msra.mxu0 0.0
  %9358 = vmatprep.subr.mxu0 0.0
  %9359 = vmatpush2.msra.mxu0 0.0
  %9360 = vmatprep.subr.mxu0 0.0
  %9361 = vmatpush2.msra.mxu0 0.0
  %9362 = vmatprep.subr.mxu0 0.0
  %9363 = vmatpush2.msra.mxu0 0.0
  %9364 = vmatprep.subr.mxu0 0.0
  %9365 = vmatpush2.msra.mxu0 0.0
  %9366 = vmatprep.subr.mxu0 0.0
  %9367 = vmatpush2.msra.mxu0 0.0
  %9368 = vmatprep.subr.mxu0 0.0
  %9369 = vmatpush2.msra.mxu0 0.0
  %9370 = vmatprep.subr.mxu0 0.0
  %9371 = vmatpush2.msra.mxu0 0.0
  %9372 = vmatprep.subr.mxu0 0.0
  %9373 = vmatpush2.msra.mxu0 0.0
  %9374 = vmatprep.subr.mxu0 0.0
  %9375 = vmatpush2.msra.mxu0 0.0
  %9376 = vmatprep.subr.mxu0 0.0
  %9377 = vmatpush2.msra.mxu0 0.0
  %9378 = vmatprep.subr.mxu0 0.0
  %9379 = vmatpush2.msra.mxu0 0.0
  %9380 = vmatprep.mubr.f32.mxu0 0.0
  %9381 = vmatmul.mubr.f32.gmra.mxu0 %v9243
  %v9382 = vpop.f32.mrf.mxu0
  %v9383 = vadd.f32 0.0, %v9382
  %v9384 = vpop.f32.mrf.mxu0
  %v9385 = vadd.f32 0.0, %v9384
  %9386 = vdwg.mxu0
  %9387 = vmatprep.subr.mxu0 0.0
  %9388 = vmatpush1.msra.mxu0 0.0
  %9389 = vmatprep.subr.mxu0 0.0
  %9390 = vmatpush1.msra.mxu0 0.0
  %9391 = vmatprep.subr.mxu0 0.0
  %9392 = vmatpush1.msra.mxu0 0.0
  %9393 = vmatprep.subr.mxu0 0.0
  %9394 = vmatpush1.msra.mxu0 0.0
  %9395 = vmatprep.subr.mxu0 0.0
  %9396 = vmatpush1.msra.mxu0 0.0
  %9397 = vmatprep.subr.mxu0 0.0
  %9398 = vmatpush1.msra.mxu0 0.0
  %9399 = vmatprep.subr.mxu0 0.0
  %9400 = vmatpush1.msra.mxu0 0.0
  %9401 = vmatprep.subr.mxu0 0.0
  %9402 = vmatpush1.msra.mxu0 0.0
  %9403 = vmatprep.subr.mxu0 0.0
  %9404 = vmatpush1.msra.mxu0 0.0
  %9405 = vmatprep.subr.mxu0 0.0
  %9406 = vmatpush1.msra.mxu0 0.0
  %9407 = vmatprep.subr.mxu0 0.0
  %9408 = vmatpush1.msra.mxu0 0.0
  %9409 = vmatprep.subr.mxu0 %v9231
  %9410 = vmatpush1.msra.mxu0 %v9230
  %9411 = vmatprep.subr.mxu0 %v9215
  %9412 = vmatpush1.msra.mxu0 %v9214
  %9413 = vmatprep.subr.mxu0 %v9199
  %9414 = vmatpush1.msra.mxu0 %v9198
  %9415 = vmatprep.subr.mxu0 %v9183
  %9416 = vmatpush1.msra.mxu0 %v9182
  %9417 = vmatprep.subr.mxu0 %v9167
  %9418 = vmatpush1.msra.mxu0 %v9166
  %9419 = vmatprep.subr.mxu0 0.0
  %9420 = vmatpush2.msra.mxu0 0.0
  %9421 = vmatprep.subr.mxu0 0.0
  %9422 = vmatpush2.msra.mxu0 0.0
  %9423 = vmatprep.subr.mxu0 0.0
  %9424 = vmatpush2.msra.mxu0 0.0
  %9425 = vmatprep.subr.mxu0 0.0
  %9426 = vmatpush2.msra.mxu0 0.0
  %9427 = vmatprep.subr.mxu0 0.0
  %9428 = vmatpush2.msra.mxu0 0.0
  %9429 = vmatprep.subr.mxu0 0.0
  %9430 = vmatpush2.msra.mxu0 0.0
  %9431 = vmatprep.subr.mxu0 0.0
  %9432 = vmatpush2.msra.mxu0 0.0
  %9433 = vmatprep.subr.mxu0 0.0
  %9434 = vmatpush2.msra.mxu0 0.0
  %9435 = vmatprep.subr.mxu0 0.0
  %9436 = vmatpush2.msra.mxu0 0.0
  %9437 = vmatprep.subr.mxu0 0.0
  %9438 = vmatpush2.msra.mxu0 0.0
  %9439 = vmatprep.subr.mxu0 0.0
  %9440 = vmatpush2.msra.mxu0 0.0
  %9441 = vmatprep.subr.mxu0 0.0
  %9442 = vmatpush2.msra.mxu0 0.0
  %9443 = vmatprep.subr.mxu0 0.0
  %9444 = vmatpush2.msra.mxu0 0.0
  %9445 = vmatprep.subr.mxu0 0.0
  %9446 = vmatpush2.msra.mxu0 0.0
  %9447 = vmatprep.subr.mxu0 0.0
  %9448 = vmatpush2.msra.mxu0 0.0
  %9449 = vmatprep.subr.mxu0 0.0
  %9450 = vmatpush2.msra.mxu0 0.0
  %9451 = vmatprep.mubr.f32.mxu0 0.0
  %9452 = vmatmul.mubr.f32.gmra.mxu0 %v9243
  %v9453 = vpop.f32.mrf.mxu0
  %v9454 = vadd.f32 0.0, %v9453
  %v9455 = vpop.f32.mrf.mxu0
  %v9456 = vadd.f32 0.0, %v9455
  %9457 = vdwg.mxu0
  %9458 = vmatprep.subr.mxu0 0.0
  %9459 = vmatpush1.msra.mxu0 0.0
  %9460 = vmatprep.subr.mxu0 0.0
  %9461 = vmatpush1.msra.mxu0 0.0
  %9462 = vmatprep.subr.mxu0 0.0
  %9463 = vmatpush1.msra.mxu0 0.0
  %9464 = vmatprep.subr.mxu0 0.0
  %9465 = vmatpush1.msra.mxu0 0.0
  %9466 = vmatprep.subr.mxu0 0.0
  %9467 = vmatpush1.msra.mxu0 0.0
  %9468 = vmatprep.subr.mxu0 0.0
  %9469 = vmatpush1.msra.mxu0 0.0
  %9470 = vmatprep.subr.mxu0 0.0
  %9471 = vmatpush1.msra.mxu0 0.0
  %9472 = vmatprep.subr.mxu0 0.0
  %9473 = vmatpush1.msra.mxu0 0.0
  %9474 = vmatprep.subr.mxu0 0.0
  %9475 = vmatpush1.msra.mxu0 0.0
  %9476 = vmatprep.subr.mxu0 0.0
  %9477 = vmatpush1.msra.mxu0 0.0
  %9478 = vmatprep.subr.mxu0 0.0
  %9479 = vmatpush1.msra.mxu0 0.0
  %9480 = vmatprep.subr.mxu0 %v9233
  %9481 = vmatpush1.msra.mxu0 %v9232
  %9482 = vmatprep.subr.mxu0 %v9217
  %9483 = vmatpush1.msra.mxu0 %v9216
  %9484 = vmatprep.subr.mxu0 %v9201
  %9485 = vmatpush1.msra.mxu0 %v9200
  %9486 = vmatprep.subr.mxu0 %v9185
  %9487 = vmatpush1.msra.mxu0 %v9184
  %9488 = vmatprep.subr.mxu0 %v9169
  %9489 = vmatpush1.msra.mxu0 %v9168
  %9490 = vmatprep.subr.mxu0 0.0
  %9491 = vmatpush2.msra.mxu0 0.0
  %9492 = vmatprep.subr.mxu0 0.0
  %9493 = vmatpush2.msra.mxu0 0.0
  %9494 = vmatprep.subr.mxu0 0.0
  %9495 = vmatpush2.msra.mxu0 0.0
  %9496 = vmatprep.subr.mxu0 0.0
  %9497 = vmatpush2.msra.mxu0 0.0
  %9498 = vmatprep.subr.mxu0 0.0
  %9499 = vmatpush2.msra.mxu0 0.0
  %9500 = vmatprep.subr.mxu0 0.0
  %9501 = vmatpush2.msra.mxu0 0.0
  %9502 = vmatprep.subr.mxu0 0.0
  %9503 = vmatpush2.msra.mxu0 0.0
  %9504 = vmatprep.subr.mxu0 0.0
  %9505 = vmatpush2.msra.mxu0 0.0
  %9506 = vmatprep.subr.mxu0 0.0
  %9507 = vmatpush2.msra.mxu0 0.0
  %9508 = vmatprep.subr.mxu0 0.0
  %9509 = vmatpush2.msra.mxu0 0.0
  %9510 = vmatprep.subr.mxu0 0.0
  %9511 = vmatpush2.msra.mxu0 0.0
  %9512 = vmatprep.subr.mxu0 0.0
  %9513 = vmatpush2.msra.mxu0 0.0
  %9514 = vmatprep.subr.mxu0 0.0
  %9515 = vmatpush2.msra.mxu0 0.0
  %9516 = vmatprep.subr.mxu0 0.0
  %9517 = vmatpush2.msra.mxu0 0.0
  %9518 = vmatprep.subr.mxu0 0.0
  %9519 = vmatpush2.msra.mxu0 0.0
  %9520 = vmatprep.subr.mxu0 0.0
  %9521 = vmatpush2.msra.mxu0 0.0
  %9522 = vmatprep.mubr.f32.mxu0 0.0
  %9523 = vmatmul.mubr.f32.gmra.mxu0 %v9243
  %v9524 = vpop.f32.mrf.mxu0
  %v9525 = vadd.f32 0.0, %v9524
  %v9526 = vpop.f32.mrf.mxu0
  %v9527 = vadd.f32 0.0, %v9526
  %9528 = vdwg.mxu0
  %9529 = vmatprep.subr.mxu0 0.0
  %9530 = vmatpush1.msra.mxu0 0.0
  %9531 = vmatprep.subr.mxu0 0.0
  %9532 = vmatpush1.msra.mxu0 0.0
  %9533 = vmatprep.subr.mxu0 0.0
  %9534 = vmatpush1.msra.mxu0 0.0
  %9535 = vmatprep.subr.mxu0 0.0
  %9536 = vmatpush1.msra.mxu0 0.0
  %9537 = vmatprep.subr.mxu0 0.0
  %9538 = vmatpush1.msra.mxu0 0.0
  %9539 = vmatprep.subr.mxu0 0.0
  %9540 = vmatpush1.msra.mxu0 0.0
  %9541 = vmatprep.subr.mxu0 0.0
  %9542 = vmatpush1.msra.mxu0 0.0
  %9543 = vmatprep.subr.mxu0 0.0
  %9544 = vmatpush1.msra.mxu0 0.0
  %9545 = vmatprep.subr.mxu0 0.0
  %9546 = vmatpush1.msra.mxu0 0.0
  %9547 = vmatprep.subr.mxu0 0.0
  %9548 = vmatpush1.msra.mxu0 0.0
  %9549 = vmatprep.subr.mxu0 0.0
  %9550 = vmatpush1.msra.mxu0 0.0
  %9551 = vmatprep.subr.mxu0 %v9235
  %9552 = vmatpush1.msra.mxu0 %v9234
  %9553 = vmatprep.subr.mxu0 %v9219
  %9554 = vmatpush1.msra.mxu0 %v9218
  %9555 = vmatprep.subr.mxu0 %v9203
  %9556 = vmatpush1.msra.mxu0 %v9202
  %9557 = vmatprep.subr.mxu0 %v9187
  %9558 = vmatpush1.msra.mxu0 %v9186
  %9559 = vmatprep.subr.mxu0 %v9171
  %9560 = vmatpush1.msra.mxu0 %v9170
  %9561 = vmatprep.subr.mxu0 0.0
  %9562 = vmatpush2.msra.mxu0 0.0
  %9563 = vmatprep.subr.mxu0 0.0
  %9564 = vmatpush2.msra.mxu0 0.0
  %9565 = vmatprep.subr.mxu0 0.0
  %9566 = vmatpush2.msra.mxu0 0.0
  %9567 = vmatprep.subr.mxu0 0.0
  %9568 = vmatpush2.msra.mxu0 0.0
  %9569 = vmatprep.subr.mxu0 0.0
  %9570 = vmatpush2.msra.mxu0 0.0
  %9571 = vmatprep.subr.mxu0 0.0
  %9572 = vmatpush2.msra.mxu0 0.0
  %9573 = vmatprep.subr.mxu0 0.0
  %9574 = vmatpush2.msra.mxu0 0.0
  %9575 = vmatprep.subr.mxu0 0.0
  %9576 = vmatpush2.msra.mxu0 0.0
  %9577 = vmatprep.subr.mxu0 0.0
  %9578 = vmatpush2.msra.mxu0 0.0
  %9579 = vmatprep.subr.mxu0 0.0
  %9580 = vmatpush2.msra.mxu0 0.0
  %9581 = vmatprep.subr.mxu0 0.0
  %9582 = vmatpush2.msra.mxu0 0.0
  %9583 = vmatprep.subr.mxu0 0.0
  %9584 = vmatpush2.msra.mxu0 0.0
  %9585 = vmatprep.subr.mxu0 0.0
  %9586 = vmatpush2.msra.mxu0 0.0
  %9587 = vmatprep.subr.mxu0 0.0
  %9588 = vmatpush2.msra.mxu0 0.0
  %9589 = vmatprep.subr.mxu0 0.0
  %9590 = vmatpush2.msra.mxu0 0.0
  %9591 = vmatprep.subr.mxu0 0.0
  %9592 = vmatpush2.msra.mxu0 0.0
  %9593 = vmatprep.mubr.f32.mxu0 0.0
  %9594 = vmatmul.mubr.f32.gmra.mxu0 %v9243
  %v9595 = vpop.f32.mrf.mxu0
  %v9596 = vadd.f32 0.0, %v9595
  %v9597 = vpop.f32.mrf.mxu0
  %v9598 = vadd.f32 0.0, %v9597
  %9599 = vdwg.mxu0
  %9600 = vmatprep.subr.mxu0 0.0
  %9601 = vmatpush1.msra.mxu0 0.0
  %9602 = vmatprep.subr.mxu0 0.0
  %9603 = vmatpush1.msra.mxu0 0.0
  %9604 = vmatprep.subr.mxu0 0.0
  %9605 = vmatpush1.msra.mxu0 0.0
  %9606 = vmatprep.subr.mxu0 0.0
  %9607 = vmatpush1.msra.mxu0 0.0
  %9608 = vmatprep.subr.mxu0 0.0
  %9609 = vmatpush1.msra.mxu0 0.0
  %9610 = vmatprep.subr.mxu0 0.0
  %9611 = vmatpush1.msra.mxu0 0.0
  %9612 = vmatprep.subr.mxu0 0.0
  %9613 = vmatpush1.msra.mxu0 0.0
  %9614 = vmatprep.subr.mxu0 0.0
  %9615 = vmatpush1.msra.mxu0 0.0
  %9616 = vmatprep.subr.mxu0 0.0
  %9617 = vmatpush1.msra.mxu0 0.0
  %9618 = vmatprep.subr.mxu0 0.0
  %9619 = vmatpush1.msra.mxu0 0.0
  %9620 = vmatprep.subr.mxu0 0.0
  %9621 = vmatpush1.msra.mxu0 0.0
  %9622 = vmatprep.subr.mxu0 %v9237
  %9623 = vmatpush1.msra.mxu0 %v9236
  %9624 = vmatprep.subr.mxu0 %v9221
  %9625 = vmatpush1.msra.mxu0 %v9220
  %9626 = vmatprep.subr.mxu0 %v9205
  %9627 = vmatpush1.msra.mxu0 %v9204
  %9628 = vmatprep.subr.mxu0 %v9189
  %9629 = vmatpush1.msra.mxu0 %v9188
  %9630 = vmatprep.subr.mxu0 %v9173
  %9631 = vmatpush1.msra.mxu0 %v9172
  %9632 = vmatprep.subr.mxu0 0.0
  %9633 = vmatpush2.msra.mxu0 0.0
  %9634 = vmatprep.subr.mxu0 0.0
  %9635 = vmatpush2.msra.mxu0 0.0
  %9636 = vmatprep.subr.mxu0 0.0
  %9637 = vmatpush2.msra.mxu0 0.0
  %9638 = vmatprep.subr.mxu0 0.0
  %9639 = vmatpush2.msra.mxu0 0.0
  %9640 = vmatprep.subr.mxu0 0.0
  %9641 = vmatpush2.msra.mxu0 0.0
  %9642 = vmatprep.subr.mxu0 0.0
  %9643 = vmatpush2.msra.mxu0 0.0
  %9644 = vmatprep.subr.mxu0 0.0
  %9645 = vmatpush2.msra.mxu0 0.0
  %9646 = vmatprep.subr.mxu0 0.0
  %9647 = vmatpush2.msra.mxu0 0.0
  %9648 = vmatprep.subr.mxu0 0.0
  %9649 = vmatpush2.msra.mxu0 0.0
  %9650 = vmatprep.subr.mxu0 0.0
  %9651 = vmatpush2.msra.mxu0 0.0
  %9652 = vmatprep.subr.mxu0 0.0
  %9653 = vmatpush2.msra.mxu0 0.0
  %9654 = vmatprep.subr.mxu0 0.0
  %9655 = vmatpush2.msra.mxu0 0.0
  %9656 = vmatprep.subr.mxu0 0.0
  %9657 = vmatpush2.msra.mxu0 0.0
  %9658 = vmatprep.subr.mxu0 0.0
  %9659 = vmatpush2.msra.mxu0 0.0
  %9660 = vmatprep.subr.mxu0 0.0
  %9661 = vmatpush2.msra.mxu0 0.0
  %9662 = vmatprep.subr.mxu0 0.0
  %9663 = vmatpush2.msra.mxu0 0.0
  %9664 = vmatprep.mubr.f32.mxu0 0.0
  %9665 = vmatmul.mubr.f32.gmra.mxu0 %v9243
  %v9666 = vpop.f32.mrf.mxu0
  %v9667 = vadd.f32 0.0, %v9666
  %v9668 = vpop.f32.mrf.mxu0
  %v9669 = vadd.f32 0.0, %v9668
  %9670 = vdwg.mxu0
  %9671 = vmatprep.subr.mxu0 0.0
  %9672 = vmatpush1.msra.mxu0 0.0
  %9673 = vmatprep.subr.mxu0 0.0
  %9674 = vmatpush1.msra.mxu0 0.0
  %9675 = vmatprep.subr.mxu0 0.0
  %9676 = vmatpush1.msra.mxu0 0.0
  %9677 = vmatprep.subr.mxu0 0.0
  %9678 = vmatpush1.msra.mxu0 0.0
  %9679 = vmatprep.subr.mxu0 0.0
  %9680 = vmatpush1.msra.mxu0 0.0
  %9681 = vmatprep.subr.mxu0 0.0
  %9682 = vmatpush1.msra.mxu0 0.0
  %9683 = vmatprep.subr.mxu0 0.0
  %9684 = vmatpush1.msra.mxu0 0.0
  %9685 = vmatprep.subr.mxu0 0.0
  %9686 = vmatpush1.msra.mxu0 0.0
  %9687 = vmatprep.subr.mxu0 0.0
  %9688 = vmatpush1.msra.mxu0 0.0
  %9689 = vmatprep.subr.mxu0 0.0
  %9690 = vmatpush1.msra.mxu0 0.0
  %9691 = vmatprep.subr.mxu0 0.0
  %9692 = vmatpush1.msra.mxu0 0.0
  %9693 = vmatprep.subr.mxu0 %v9239
  %9694 = vmatpush1.msra.mxu0 %v9238
  %9695 = vmatprep.subr.mxu0 %v9223
  %9696 = vmatpush1.msra.mxu0 %v9222
  %9697 = vmatprep.subr.mxu0 %v9207
  %9698 = vmatpush1.msra.mxu0 %v9206
  %9699 = vmatprep.subr.mxu0 %v9191
  %9700 = vmatpush1.msra.mxu0 %v9190
  %9701 = vmatprep.subr.mxu0 %v9175
  %9702 = vmatpush1.msra.mxu0 %v9174
  %9703 = vmatprep.subr.mxu0 0.0
  %9704 = vmatpush2.msra.mxu0 0.0
  %9705 = vmatprep.subr.mxu0 0.0
  %9706 = vmatpush2.msra.mxu0 0.0
  %9707 = vmatprep.subr.mxu0 0.0
  %9708 = vmatpush2.msra.mxu0 0.0
  %9709 = vmatprep.subr.mxu0 0.0
  %9710 = vmatpush2.msra.mxu0 0.0
  %9711 = vmatprep.subr.mxu0 0.0
  %9712 = vmatpush2.msra.mxu0 0.0
  %9713 = vmatprep.subr.mxu0 0.0
  %9714 = vmatpush2.msra.mxu0 0.0
  %9715 = vmatprep.subr.mxu0 0.0
  %9716 = vmatpush2.msra.mxu0 0.0
  %9717 = vmatprep.subr.mxu0 0.0
  %9718 = vmatpush2.msra.mxu0 0.0
  %9719 = vmatprep.subr.mxu0 0.0
  %9720 = vmatpush2.msra.mxu0 0.0
  %9721 = vmatprep.subr.mxu0 0.0
  %9722 = vmatpush2.msra.mxu0 0.0
  %9723 = vmatprep.subr.mxu0 0.0
  %9724 = vmatpush2.msra.mxu0 0.0
  %9725 = vmatprep.subr.mxu0 0.0
  %9726 = vmatpush2.msra.mxu0 0.0
  %9727 = vmatprep.subr.mxu0 0.0
  %9728 = vmatpush2.msra.mxu0 0.0
  %9729 = vmatprep.subr.mxu0 0.0
  %9730 = vmatpush2.msra.mxu0 0.0
  %9731 = vmatprep.subr.mxu0 0.0
  %9732 = vmatpush2.msra.mxu0 0.0
  %9733 = vmatprep.subr.mxu0 0.0
  %9734 = vmatpush2.msra.mxu0 0.0
  %9735 = vmatprep.mubr.f32.mxu0 0.0
  %9736 = vmatmul.mubr.f32.gmra.mxu0 %v9243
  %v9737 = vpop.f32.mrf.mxu0
  %v9738 = vadd.f32 0.0, %v9737
  %v9739 = vpop.f32.mrf.mxu0
  %v9740 = vadd.f32 0.0, %v9739
  %9741 = vdwg.mxu0
  %9742 = vmatprep.subr.mxu0 0.0
  %9743 = vmatpush1.msra.mxu0 0.0
  %9744 = vmatprep.subr.mxu0 0.0
  %9745 = vmatpush1.msra.mxu0 0.0
  %9746 = vmatprep.subr.mxu0 0.0
  %9747 = vmatpush1.msra.mxu0 0.0
  %9748 = vmatprep.subr.mxu0 0.0
  %9749 = vmatpush1.msra.mxu0 0.0
  %9750 = vmatprep.subr.mxu0 0.0
  %9751 = vmatpush1.msra.mxu0 0.0
  %9752 = vmatprep.subr.mxu0 0.0
  %9753 = vmatpush1.msra.mxu0 0.0
  %9754 = vmatprep.subr.mxu0 0.0
  %9755 = vmatpush1.msra.mxu0 0.0
  %9756 = vmatprep.subr.mxu0 0.0
  %9757 = vmatpush1.msra.mxu0 0.0
  %9758 = vmatprep.subr.mxu0 0.0
  %9759 = vmatpush1.msra.mxu0 0.0
  %9760 = vmatprep.subr.mxu0 0.0
  %9761 = vmatpush1.msra.mxu0 0.0
  %9762 = vmatprep.subr.mxu0 0.0
  %9763 = vmatpush1.msra.mxu0 0.0
  %9764 = vmatprep.subr.mxu0 %v9241
  %9765 = vmatpush1.msra.mxu0 %v9240
  %9766 = vmatprep.subr.mxu0 %v9225
  %9767 = vmatpush1.msra.mxu0 %v9224
  %9768 = vmatprep.subr.mxu0 %v9209
  %9769 = vmatpush1.msra.mxu0 %v9208
  %9770 = vmatprep.subr.mxu0 %v9193
  %9771 = vmatpush1.msra.mxu0 %v9192
  %9772 = vmatprep.subr.mxu0 %v9177
  %9773 = vmatpush1.msra.mxu0 %v9176
  %9774 = vmatprep.subr.mxu0 0.0
  %9775 = vmatpush2.msra.mxu0 0.0
  %9776 = vmatprep.subr.mxu0 0.0
  %9777 = vmatpush2.msra.mxu0 0.0
  %9778 = vmatprep.subr.mxu0 0.0
  %9779 = vmatpush2.msra.mxu0 0.0
  %9780 = vmatprep.subr.mxu0 0.0
  %9781 = vmatpush2.msra.mxu0 0.0
  %9782 = vmatprep.subr.mxu0 0.0
  %9783 = vmatpush2.msra.mxu0 0.0
  %9784 = vmatprep.subr.mxu0 0.0
  %9785 = vmatpush2.msra.mxu0 0.0
  %9786 = vmatprep.subr.mxu0 0.0
  %9787 = vmatpush2.msra.mxu0 0.0
  %9788 = vmatprep.subr.mxu0 0.0
  %9789 = vmatpush2.msra.mxu0 0.0
  %9790 = vmatprep.subr.mxu0 0.0
  %9791 = vmatpush2.msra.mxu0 0.0
  %9792 = vmatprep.subr.mxu0 0.0
  %9793 = vmatpush2.msra.mxu0 0.0
  %9794 = vmatprep.subr.mxu0 0.0
  %9795 = vmatpush2.msra.mxu0 0.0
  %9796 = vmatprep.subr.mxu0 0.0
  %9797 = vmatpush2.msra.mxu0 0.0
  %9798 = vmatprep.subr.mxu0 0.0
  %9799 = vmatpush2.msra.mxu0 0.0
  %9800 = vmatprep.subr.mxu0 0.0
  %9801 = vmatpush2.msra.mxu0 0.0
  %9802 = vmatprep.subr.mxu0 0.0
  %9803 = vmatpush2.msra.mxu0 0.0
  %9804 = vmatprep.subr.mxu0 0.0
  %9805 = vmatpush2.msra.mxu0 0.0
  %9806 = vmatprep.mubr.f32.mxu0 0.0
  %9807 = vmatmul.mubr.f32.gmra.mxu0 %v9243
  %v9808 = vpop.f32.mrf.mxu0
  %v9809 = vadd.f32 0.0, %v9808
  %v9810 = vpop.f32.mrf.mxu0
  %v9811 = vadd.f32 0.0, %v9810
  %9812 = vdwg.mxu0
  %v9813 = vmax.f32 %v9312, 0.0
  %v9814 = vmax.f32 %v9314, 0.0
  %v9815 = vmax.f32 %v9383, 0.0
  %v9816 = vmax.f32 %v9385, 0.0
  %v9817 = vmax.f32 %v9454, 0.0
  %v9818 = vmax.f32 %v9456, 0.0
  %v9819 = vmax.f32 %v9525, 0.0
  %v9820 = vmax.f32 %v9527, 0.0
  %v9821 = vmax.f32 %v9596, 0.0
  %v9822 = vmax.f32 %v9598, 0.0
  %v9823 = vmax.f32 %v9667, 0.0
  %v9824 = vmax.f32 %v9669, 0.0
  %v9825 = vmax.f32 %v9738, 0.0
  %v9826 = vmax.f32 %v9740, 0.0
  %v9827 = vmax.f32 %v9809, 0.0
  %v9828 = vmax.f32 %v9811, 0.0
  %v9829 = vmax.f32 %v9813, %v9817
  %v9830 = vmax.f32 %v9814, %v9818
  %v9831 = vmax.f32 %v9815, %v9819
  %v9832 = vmax.f32 %v9816, %v9820
  %v9833 = vmax.f32 %v9829, %v9821
  %v9834 = vmax.f32 %v9830, %v9822
  %v9835 = vmax.f32 %v9831, %v9823
  %v9836 = vmax.f32 %v9832, %v9824
  %v9837 = vmax.f32 %v9833, %v9825
  %v9838 = vmax.f32 %v9834, %v9826
  %v9839 = vmax.f32 %v9835, %v9827
  %v9840 = vmax.f32 %v9836, %v9828
  %v9841 = vmax.f32 %v9837, %v9838
  %v9842 = vmax.f32 %v9839, %v9840
  %v9843 = vmax.f32 %v9841, %v9842
  %9844 = vmax.xlane.f32.xlu0 %v9843
  %v9845 = vpop.xlane.xlu0 %9844
  %v9846 = vsub.f32 %v9813, %v9845
  %v9847 = vsub.f32 %v9814, %v9845
  %v9848 = vsub.f32 %v9815, %v9845
  %v9849 = vsub.f32 %v9816, %v9845
  %v9850 = vsub.f32 %v9817, %v9845
  %v9851 = vsub.f32 %v9818, %v9845
  %v9852 = vsub.f32 %v9819, %v9845
  %v9853 = vsub.f32 %v9820, %v9845
  %v9854 = vsub.f32 %v9821, %v9845
  %v9855 = vsub.f32 %v9822, %v9845
  %v9856 = vsub.f32 %v9823, %v9845
  %v9857 = vsub.f32 %v9824, %v9845
  %v9858 = vsub.f32 %v9825, %v9845
  %v9859 = vsub.f32 %v9826, %v9845
  %v9860 = vsub.f32 %v9827, %v9845
  %v9861 = vsub.f32 %v9828, %v9845
  %v9862 = vmul.f32 %v9846, 1.442695
  %v9863 = vpow.pop %v9862
  %v9864 = vmul.f32 %v9847, 1.442695
  %v9865 = vpow.pop %v9864
  %v9866 = vmul.f32 %v9848, 1.442695
  %v9867 = vpow.pop %v9866
  %v9868 = vmul.f32 %v9849, 1.442695
  %v9869 = vpow.pop %v9868
  %v9870 = vmul.f32 %v9850, 1.442695
  %v9871 = vpow.pop %v9870
  %v9872 = vmul.f32 %v9851, 1.442695
  %v9873 = vpow.pop %v9872
  %v9874 = vmul.f32 %v9852, 1.442695
  %v9875 = vpow.pop %v9874
  %v9876 = vmul.f32 %v9853, 1.442695
  %v9877 = vpow.pop %v9876
  %v9878 = vmul.f32 %v9854, 1.442695
  %v9879 = vpow.pop %v9878
  %v9880 = vmul.f32 %v9855, 1.442695
  %v9881 = vpow.pop %v9880
  %v9882 = vmul.f32 %v9856, 1.442695
  %v9883 = vpow.pop %v9882
  %v9884 = vmul.f32 %v9857, 1.442695
  %v9885 = vpow.pop %v9884
  %v9886 = vmul.f32 %v9858, 1.442695
  %v9887 = vpow.pop %v9886
  %v9888 = vmul.f32 %v9859, 1.442695
  %v9889 = vpow.pop %v9888
  %v9890 = vmul.f32 %v9860, 1.442695
  %v9891 = vpow.pop %v9890
  %v9892 = vmul.f32 %v9861, 1.442695
  %v9893 = vpow.pop %v9892
  %v9894 = vld [vmem:[%s3] sm:$0xff]
  %v9895 = vld [vmem:[%s3 + $0x8] sm:$0xff]
  %v9896 = vld [vmem:[%s3 + $0x10] sm:$0xff]
  %v9897 = vld [vmem:[%s3 + $0x18] sm:$0xff]
  %v9898 = vld [vmem:[%s3 + $0x20] sm:$0xff]
  %v9899 = vld [vmem:[%s3 + $0x28] sm:$0xff]
  %v9900 = vld [vmem:[%s3 + $0x30] sm:$0xff]
  %v9901 = vld [vmem:[%s3 + $0x38] sm:$0xff]
  %v9902 = vld [vmem:[%s3 + $0x40] sm:$0xff]
  %v9903 = vld [vmem:[%s3 + $0x48] sm:$0xff]
  %v9904 = vld [vmem:[%s3 + $0x50] sm:$0xff]
  %v9905 = vld [vmem:[%s3 + $0x58] sm:$0xff]
  %v9906 = vld [vmem:[%s3 + $0x60] sm:$0xff]
  %v9907 = vld [vmem:[%s3 + $0x68] sm:$0xff]
  %v9908 = vld [vmem:[%s3 + $0x70] sm:$0xff]
  %v9909 = vld [vmem:[%s3 + $0x78] sm:$0xff]
  %v9910 = vld [vmem:[%s3 + $0x80] sm:$0xff]
  %v9911 = vld [vmem:[%s3 + $0x88] sm:$0xff]
  %v9912 = vld [vmem:[%s3 + $0x90] sm:$0xff]
  %v9913 = vld [vmem:[%s3 + $0x98] sm:$0xff]
  %v9914 = vld [vmem:[%s3 + $0xa0] sm:$0xff]
  %v9915 = vld [vmem:[%s3 + $0xa8] sm:$0xff]
  %v9916 = vld [vmem:[%s3 + $0xb0] sm:$0xff]
  %v9917 = vld [vmem:[%s3 + $0xb8] sm:$0xff]
  %v9918 = vld [vmem:[%s3 + $0xc0] sm:$0xff]
  %v9919 = vld [vmem:[%s3 + $0xc8] sm:$0xff]
  %v9920 = vld [vmem:[%s3 + $0xd0] sm:$0xff]
  %v9921 = vld [vmem:[%s3 + $0xd8] sm:$0xff]
  %v9922 = vld [vmem:[%s3 + $0xe0] sm:$0xff]
  %v9923 = vld [vmem:[%s3 + $0xe8] sm:$0xff]
  %v9924 = vld [vmem:[%s3 + $0xf0] sm:$0xff]
  %v9925 = vld [vmem:[%s3 + $0xf8] sm:$0xff]
  %v9926 = vld [vmem:[%s3 + $0x100] sm:$0xff]
  %v9927 = vld [vmem:[%s3 + $0x108] sm:$0xff]
  %v9928 = vld [vmem:[%s3 + $0x110] sm:$0xff]
  %v9929 = vld [vmem:[%s3 + $0x118] sm:$0xff]
  %v9930 = vld [vmem:[%s3 + $0x120] sm:$0xff]
  %v9931 = vld [vmem:[%s3 + $0x128] sm:$0xff]
  %v9932 = vld [vmem:[%s3 + $0x130] sm:$0xff]
  %v9933 = vld [vmem:[%s3 + $0x138] sm:$0xff]
  %v9934 = vld [vmem:[%s3 + $0x140] sm:$0xff]
  %v9935 = vld [vmem:[%s3 + $0x148] sm:$0xff]
  %v9936 = vld [vmem:[%s3 + $0x150] sm:$0xff]
  %v9937 = vld [vmem:[%s3 + $0x158] sm:$0xff]
  %v9938 = vld [vmem:[%s3 + $0x160] sm:$0xff]
  %v9939 = vld [vmem:[%s3 + $0x168] sm:$0xff]
  %v9940 = vld [vmem:[%s3 + $0x170] sm:$0xff]
  %v9941 = vld [vmem:[%s3 + $0x178] sm:$0xff]
  %v9942 = vld [vmem:[%s3 + $0x180] sm:$0xff]
  %v9943 = vld [vmem:[%s3 + $0x188] sm:$0xff]
  %v9944 = vld [vmem:[%s3 + $0x190] sm:$0xff]
  %v9945 = vld [vmem:[%s3 + $0x198] sm:$0xff]
  %v9946 = vld [vmem:[%s3 + $0x1a0] sm:$0xff]
  %v9947 = vld [vmem:[%s3 + $0x1a8] sm:$0xff]
  %v9948 = vld [vmem:[%s3 + $0x1b0] sm:$0xff]
  %v9949 = vld [vmem:[%s3 + $0x1b8] sm:$0xff]
  %v9950 = vld [vmem:[%s3 + $0x1c0] sm:$0xff]
  %v9951 = vld [vmem:[%s3 + $0x1c8] sm:$0xff]
  %v9952 = vld [vmem:[%s3 + $0x1d0] sm:$0xff]
  %v9953 = vld [vmem:[%s3 + $0x1d8] sm:$0xff]
  %v9954 = vld [vmem:[%s3 + $0x1e0] sm:$0xff]
  %v9955 = vld [vmem:[%s3 + $0x1e8] sm:$0xff]
  %v9956 = vld [vmem:[%s3 + $0x1f0] sm:$0xff]
  %v9957 = vld [vmem:[%s3 + $0x1f8] sm:$0xff]
  %v9958 = vld [vmem:[%s3 + $0x200] sm:$0xff]
  %v9959 = vld [vmem:[%s3 + $0x208] sm:$0xff]
  %v9960 = vld [vmem:[%s3 + $0x210] sm:$0xff]
  %v9961 = vld [vmem:[%s3 + $0x218] sm:$0xff]
  %v9962 = vld [vmem:[%s3 + $0x220] sm:$0xff]
  %v9963 = vld [vmem:[%s3 + $0x228] sm:$0xff]
  %v9964 = vld [vmem:[%s3 + $0x230] sm:$0xff]
  %v9965 = vld [vmem:[%s3 + $0x238] sm:$0xff]
  %v9966 = vld [vmem:[%s3 + $0x240] sm:$0xff]
  %v9967 = vld [vmem:[%s3 + $0x248] sm:$0xff]
  %v9968 = vld [vmem:[%s3 + $0x250] sm:$0xff]
  %v9969 = vld [vmem:[%s3 + $0x258] sm:$0xff]
  %v9970 = vld [vmem:[%s3 + $0x260] sm:$0xff]
  %v9971 = vld [vmem:[%s3 + $0x268] sm:$0xff]
  %v9972 = vld [vmem:[%s3 + $0x270] sm:$0xff]
  %v9973 = vld [vmem:[%s3 + $0x278] sm:$0xff]
  %v9974 = vld [vmem:[%s3 + $0x280] sm:$0xff]
  %v9975 = vld [vmem:[%s3 + $0x288] sm:$0xff]
  %v9976 = vld [vmem:[%s3 + $0x290] sm:$0xff]
  %v9977 = vld [vmem:[%s3 + $0x298] sm:$0xff]
  %v9978 = vld [vmem:[%s3 + $0x2a0] sm:$0xff]
  %v9979 = vld [vmem:[%s3 + $0x2a8] sm:$0xff]
  %v9980 = vld [vmem:[%s3 + $0x2b0] sm:$0xff]
  %v9981 = vld [vmem:[%s3 + $0x2b8] sm:$0xff]
  %v9982 = vld [vmem:[%s3 + $0x2c0] sm:$0xff]
  %v9983 = vld [vmem:[%s3 + $0x2c8] sm:$0xff]
  %v9984 = vld [vmem:[%s3 + $0x2d0] sm:$0xff]
  %v9985 = vld [vmem:[%s3 + $0x2d8] sm:$0xff]
  %v9986 = vld [vmem:[%s3 + $0x2e0] sm:$0xff]
  %v9987 = vld [vmem:[%s3 + $0x2e8] sm:$0xff]
  %v9988 = vld [vmem:[%s3 + $0x2f0] sm:$0xff]
  %v9989 = vld [vmem:[%s3 + $0x2f8] sm:$0xff]
  %v9990 = vld [vmem:[%s3 + $0x300] sm:$0xff]
  %v9991 = vld [vmem:[%s3 + $0x308] sm:$0xff]
  %v9992 = vld [vmem:[%s3 + $0x310] sm:$0xff]
  %v9993 = vld [vmem:[%s3 + $0x318] sm:$0xff]
  %v9994 = vld [vmem:[%s3 + $0x320] sm:$0xff]
  %v9995 = vld [vmem:[%s3 + $0x328] sm:$0xff]
  %v9996 = vld [vmem:[%s3 + $0x330] sm:$0xff]
  %v9997 = vld [vmem:[%s3 + $0x338] sm:$0xff]
  %v9998 = vld [vmem:[%s3 + $0x340] sm:$0xff]
  %v9999 = vld [vmem:[%s3 + $0x348] sm:$0xff]
  %v10000 = vld [vmem:[%s3 + $0x350] sm:$0xff]
  %v10001 = vld [vmem:[%s3 + $0x358] sm:$0xff]
  %v10002 = vld [vmem:[%s3 + $0x360] sm:$0xff]
  %v10003 = vld [vmem:[%s3 + $0x368] sm:$0xff]
  %v10004 = vld [vmem:[%s3 + $0x370] sm:$0xff]
  %v10005 = vld [vmem:[%s3 + $0x378] sm:$0xff]
  %v10006 = vld [vmem:[%s3 + $0x380] sm:$0xff]
  %v10007 = vld [vmem:[%s3 + $0x388] sm:$0xff]
  %v10008 = vld [vmem:[%s3 + $0x390] sm:$0xff]
  %v10009 = vld [vmem:[%s3 + $0x398] sm:$0xff]
  %v10010 = vld [vmem:[%s3 + $0x3a0] sm:$0xff]
  %v10011 = vld [vmem:[%s3 + $0x3a8] sm:$0xff]
  %v10012 = vld [vmem:[%s3 + $0x3b0] sm:$0xff]
  %v10013 = vld [vmem:[%s3 + $0x3b8] sm:$0xff]
  %v10014 = vld [vmem:[%s3 + $0x3c0] sm:$0xff]
  %v10015 = vld [vmem:[%s3 + $0x3c8] sm:$0xff]
  %v10016 = vld [vmem:[%s3 + $0x3d0] sm:$0xff]
  %v10017 = vld [vmem:[%s3 + $0x3d8] sm:$0xff]
  %v10018 = vld [vmem:[%s3 + $0x3e0] sm:$0xff]
  %v10019 = vld [vmem:[%s3 + $0x3e8] sm:$0xff]
  %v10020 = vld [vmem:[%s3 + $0x3f0] sm:$0xff]
  %v10021 = vld [vmem:[%s3 + $0x3f8] sm:$0xff]
  %v10022 = vld [vmem:[%s3 + $0x400] sm:$0xff]
  %v10023 = vld [vmem:[%s3 + $0x408] sm:$0xff]
  %v10024 = vld [vmem:[%s3 + $0x410] sm:$0xff]
  %v10025 = vld [vmem:[%s3 + $0x418] sm:$0xff]
  %v10026 = vld [vmem:[%s3 + $0x420] sm:$0xff]
  %v10027 = vld [vmem:[%s3 + $0x428] sm:$0xff]
  %v10028 = vld [vmem:[%s3 + $0x430] sm:$0xff]
  %v10029 = vld [vmem:[%s3 + $0x438] sm:$0xff]
  %v10030 = vld [vmem:[%s3 + $0x440] sm:$0xff]
  %v10031 = vld [vmem:[%s3 + $0x448] sm:$0xff]
  %v10032 = vld [vmem:[%s3 + $0x450] sm:$0xff]
  %v10033 = vld [vmem:[%s3 + $0x458] sm:$0xff]
  %v10034 = vld [vmem:[%s3 + $0x460] sm:$0xff]
  %v10035 = vld [vmem:[%s3 + $0x468] sm:$0xff]
  %v10036 = vld [vmem:[%s3 + $0x470] sm:$0xff]
  %v10037 = vld [vmem:[%s3 + $0x478] sm:$0xff]
  %v10038 = vld [vmem:[%s3 + $0x480] sm:$0xff]
  %v10039 = vld [vmem:[%s3 + $0x488] sm:$0xff]
  %v10040 = vld [vmem:[%s3 + $0x490] sm:$0xff]
  %v10041 = vld [vmem:[%s3 + $0x498] sm:$0xff]
  %v10042 = vld [vmem:[%s3 + $0x4a0] sm:$0xff]
  %v10043 = vld [vmem:[%s3 + $0x4a8] sm:$0xff]
  %v10044 = vld [vmem:[%s3 + $0x4b0] sm:$0xff]
  %v10045 = vld [vmem:[%s3 + $0x4b8] sm:$0xff]
  %v10046 = vld [vmem:[%s3 + $0x4c0] sm:$0xff]
  %v10047 = vld [vmem:[%s3 + $0x4c8] sm:$0xff]
  %v10048 = vld [vmem:[%s3 + $0x4d0] sm:$0xff]
  %v10049 = vld [vmem:[%s3 + $0x4d8] sm:$0xff]
  %v10050 = vld [vmem:[%s3 + $0x4e0] sm:$0xff]
  %v10051 = vld [vmem:[%s3 + $0x4e8] sm:$0xff]
  %v10052 = vld [vmem:[%s3 + $0x4f0] sm:$0xff]
  %v10053 = vld [vmem:[%s3 + $0x4f8] sm:$0xff]
  %v10054 = vld [vmem:[%s3 + $0x500] sm:$0xff]
  %v10055 = vld [vmem:[%s3 + $0x508] sm:$0xff]
  %v10056 = vld [vmem:[%s3 + $0x510] sm:$0xff]
  %v10057 = vld [vmem:[%s3 + $0x518] sm:$0xff]
  %v10058 = vld [vmem:[%s3 + $0x520] sm:$0xff]
  %v10059 = vld [vmem:[%s3 + $0x528] sm:$0xff]
  %v10060 = vld [vmem:[%s3 + $0x530] sm:$0xff]
  %v10061 = vld [vmem:[%s3 + $0x538] sm:$0xff]
  %v10062 = vld [vmem:[%s3 + $0x540] sm:$0xff]
  %v10063 = vld [vmem:[%s3 + $0x548] sm:$0xff]
  %v10064 = vld [vmem:[%s3 + $0x550] sm:$0xff]
  %v10065 = vld [vmem:[%s3 + $0x558] sm:$0xff]
  %v10066 = vld [vmem:[%s3 + $0x560] sm:$0xff]
  %v10067 = vld [vmem:[%s3 + $0x568] sm:$0xff]
  %v10068 = vld [vmem:[%s3 + $0x570] sm:$0xff]
  %v10069 = vld [vmem:[%s3 + $0x578] sm:$0xff]
  %v10070 = vld [vmem:[%s3 + $0x580] sm:$0xff]
  %v10071 = vld [vmem:[%s3 + $0x588] sm:$0xff]
  %v10072 = vld [vmem:[%s3 + $0x590] sm:$0xff]
  %v10073 = vld [vmem:[%s3 + $0x598] sm:$0xff]
  %v10074 = vld [vmem:[%s3 + $0x5a0] sm:$0xff]
  %v10075 = vld [vmem:[%s3 + $0x5a8] sm:$0xff]
  %v10076 = vld [vmem:[%s3 + $0x5b0] sm:$0xff]
  %v10077 = vld [vmem:[%s3 + $0x5b8] sm:$0xff]
  %v10078 = vld [vmem:[%s3 + $0x5c0] sm:$0xff]
  %v10079 = vld [vmem:[%s3 + $0x5c8] sm:$0xff]
  %v10080 = vld [vmem:[%s3 + $0x5d0] sm:$0xff]
  %v10081 = vld [vmem:[%s3 + $0x5d8] sm:$0xff]
  %v10082 = vld [vmem:[%s3 + $0x5e0] sm:$0xff]
  %v10083 = vld [vmem:[%s3 + $0x5e8] sm:$0xff]
  %v10084 = vld [vmem:[%s3 + $0x5f0] sm:$0xff]
  %v10085 = vld [vmem:[%s3 + $0x5f8] sm:$0xff]
  %v10086 = vld [vmem:[%s3 + $0x600] sm:$0xff]
  %v10087 = vld [vmem:[%s3 + $0x608] sm:$0xff]
  %v10088 = vld [vmem:[%s3 + $0x610] sm:$0xff]
  %v10089 = vld [vmem:[%s3 + $0x618] sm:$0xff]
  %v10090 = vld [vmem:[%s3 + $0x620] sm:$0xff]
  %v10091 = vld [vmem:[%s3 + $0x628] sm:$0xff]
  %v10092 = vld [vmem:[%s3 + $0x630] sm:$0xff]
  %v10093 = vld [vmem:[%s3 + $0x638] sm:$0xff]
  %v10094 = vld [vmem:[%s3 + $0x640] sm:$0xff]
  %v10095 = vld [vmem:[%s3 + $0x648] sm:$0xff]
  %v10096 = vld [vmem:[%s3 + $0x650] sm:$0xff]
  %v10097 = vld [vmem:[%s3 + $0x658] sm:$0xff]
  %v10098 = vld [vmem:[%s3 + $0x660] sm:$0xff]
  %v10099 = vld [vmem:[%s3 + $0x668] sm:$0xff]
  %v10100 = vld [vmem:[%s3 + $0x670] sm:$0xff]
  %v10101 = vld [vmem:[%s3 + $0x678] sm:$0xff]
  %v10102 = vld [vmem:[%s3 + $0x680] sm:$0xff]
  %v10103 = vld [vmem:[%s3 + $0x688] sm:$0xff]
  %v10104 = vld [vmem:[%s3 + $0x690] sm:$0xff]
  %v10105 = vld [vmem:[%s3 + $0x698] sm:$0xff]
  %v10106 = vld [vmem:[%s3 + $0x6a0] sm:$0xff]
  %v10107 = vld [vmem:[%s3 + $0x6a8] sm:$0xff]
  %v10108 = vld [vmem:[%s3 + $0x6b0] sm:$0xff]
  %v10109 = vld [vmem:[%s3 + $0x6b8] sm:$0xff]
  %v10110 = vld [vmem:[%s3 + $0x6c0] sm:$0xff]
  %v10111 = vld [vmem:[%s3 + $0x6c8] sm:$0xff]
  %v10112 = vld [vmem:[%s3 + $0x6d0] sm:$0xff]
  %v10113 = vld [vmem:[%s3 + $0x6d8] sm:$0xff]
  %v10114 = vld [vmem:[%s3 + $0x6e0] sm:$0xff]
  %v10115 = vld [vmem:[%s3 + $0x6e8] sm:$0xff]
  %v10116 = vld [vmem:[%s3 + $0x6f0] sm:$0xff]
  %v10117 = vld [vmem:[%s3 + $0x6f8] sm:$0xff]
  %v10118 = vld [vmem:[%s3 + $0x700] sm:$0xff]
  %v10119 = vld [vmem:[%s3 + $0x708] sm:$0xff]
  %v10120 = vld [vmem:[%s3 + $0x710] sm:$0xff]
  %v10121 = vld [vmem:[%s3 + $0x718] sm:$0xff]
  %v10122 = vld [vmem:[%s3 + $0x720] sm:$0xff]
  %v10123 = vld [vmem:[%s3 + $0x728] sm:$0xff]
  %v10124 = vld [vmem:[%s3 + $0x730] sm:$0xff]
  %v10125 = vld [vmem:[%s3 + $0x738] sm:$0xff]
  %v10126 = vld [vmem:[%s3 + $0x740] sm:$0xff]
  %v10127 = vld [vmem:[%s3 + $0x748] sm:$0xff]
  %v10128 = vld [vmem:[%s3 + $0x750] sm:$0xff]
  %v10129 = vld [vmem:[%s3 + $0x758] sm:$0xff]
  %v10130 = vld [vmem:[%s3 + $0x760] sm:$0xff]
  %v10131 = vld [vmem:[%s3 + $0x768] sm:$0xff]
  %v10132 = vld [vmem:[%s3 + $0x770] sm:$0xff]
  %v10133 = vld [vmem:[%s3 + $0x778] sm:$0xff]
  %v10134 = vld [vmem:[%s3 + $0x780] sm:$0xff]
  %v10135 = vld [vmem:[%s3 + $0x788] sm:$0xff]
  %v10136 = vld [vmem:[%s3 + $0x790] sm:$0xff]
  %v10137 = vld [vmem:[%s3 + $0x798] sm:$0xff]
  %v10138 = vld [vmem:[%s3 + $0x7a0] sm:$0xff]
  %v10139 = vld [vmem:[%s3 + $0x7a8] sm:$0xff]
  %v10140 = vld [vmem:[%s3 + $0x7b0] sm:$0xff]
  %v10141 = vld [vmem:[%s3 + $0x7b8] sm:$0xff]
  %v10142 = vld [vmem:[%s3 + $0x7c0] sm:$0xff]
  %v10143 = vld [vmem:[%s3 + $0x7c8] sm:$0xff]
  %v10144 = vld [vmem:[%s3 + $0x7d0] sm:$0xff]
  %v10145 = vld [vmem:[%s3 + $0x7d8] sm:$0xff]
  %v10146 = vld [vmem:[%s3 + $0x7e0] sm:$0xff]
  %v10147 = vld [vmem:[%s3 + $0x7e8] sm:$0xff]
  %v10148 = vld [vmem:[%s3 + $0x7f0] sm:$0xff]
  %v10149 = vld [vmem:[%s3 + $0x7f8] sm:$0xff]
  %10150 = vmatprep.subr.mxu0 0.0
  %10151 = vmatpush1.msra.mxu0 %v9909
  %10152 = vmatprep.subr.mxu0 0.0
  %10153 = vmatpush1.msra.mxu0 %v9908
  %10154 = vmatprep.subr.mxu0 0.0
  %10155 = vmatpush1.msra.mxu0 %v9907
  %10156 = vmatprep.subr.mxu0 0.0
  %10157 = vmatpush1.msra.mxu0 %v9906
  %10158 = vmatprep.subr.mxu0 0.0
  %10159 = vmatpush1.msra.mxu0 %v9905
  %10160 = vmatprep.subr.mxu0 0.0
  %10161 = vmatpush1.msra.mxu0 %v9904
  %10162 = vmatprep.subr.mxu0 0.0
  %10163 = vmatpush1.msra.mxu0 %v9903
  %10164 = vmatprep.subr.mxu0 0.0
  %10165 = vmatpush1.msra.mxu0 %v9902
  %10166 = vmatprep.subr.mxu0 0.0
  %10167 = vmatpush1.msra.mxu0 %v9901
  %10168 = vmatprep.subr.mxu0 0.0
  %10169 = vmatpush1.msra.mxu0 %v9900
  %10170 = vmatprep.subr.mxu0 0.0
  %10171 = vmatpush1.msra.mxu0 %v9899
  %10172 = vmatprep.subr.mxu0 0.0
  %10173 = vmatpush1.msra.mxu0 %v9898
  %10174 = vmatprep.subr.mxu0 0.0
  %10175 = vmatpush1.msra.mxu0 %v9897
  %10176 = vmatprep.subr.mxu0 0.0
  %10177 = vmatpush1.msra.mxu0 %v9896
  %10178 = vmatprep.subr.mxu0 0.0
  %10179 = vmatpush1.msra.mxu0 %v9895
  %10180 = vmatprep.subr.mxu0 0.0
  %10181 = vmatpush1.msra.mxu0 %v9894
  %10182 = vmatprep.subr.mxu0 0.0
  %10183 = vmatpush2.msra.mxu0 %v9925
  %10184 = vmatprep.subr.mxu0 0.0
  %10185 = vmatpush2.msra.mxu0 %v9924
  %10186 = vmatprep.subr.mxu0 0.0
  %10187 = vmatpush2.msra.mxu0 %v9923
  %10188 = vmatprep.subr.mxu0 0.0
  %10189 = vmatpush2.msra.mxu0 %v9922
  %10190 = vmatprep.subr.mxu0 0.0
  %10191 = vmatpush2.msra.mxu0 %v9921
  %10192 = vmatprep.subr.mxu0 0.0
  %10193 = vmatpush2.msra.mxu0 %v9920
  %10194 = vmatprep.subr.mxu0 0.0
  %10195 = vmatpush2.msra.mxu0 %v9919
  %10196 = vmatprep.subr.mxu0 0.0
  %10197 = vmatpush2.msra.mxu0 %v9918
  %10198 = vmatprep.subr.mxu0 0.0
  %10199 = vmatpush2.msra.mxu0 %v9917
  %10200 = vmatprep.subr.mxu0 0.0
  %10201 = vmatpush2.msra.mxu0 %v9916
  %10202 = vmatprep.subr.mxu0 0.0
  %10203 = vmatpush2.msra.mxu0 %v9915
  %10204 = vmatprep.subr.mxu0 0.0
  %10205 = vmatpush2.msra.mxu0 %v9914
  %10206 = vmatprep.subr.mxu0 0.0
  %10207 = vmatpush2.msra.mxu0 %v9913
  %10208 = vmatprep.subr.mxu0 0.0
  %10209 = vmatpush2.msra.mxu0 %v9912
  %10210 = vmatprep.subr.mxu0 0.0
  %10211 = vmatpush2.msra.mxu0 %v9911
  %10212 = vmatprep.subr.mxu0 0.0
  %10213 = vmatpush2.msra.mxu0 %v9910
  %10214 = vmatprep.mubr.f32.mxu0 %v9865
  %10215 = vmatmul.mubr.f32.gmra.mxu0 %v9863
  %v10216 = vpop.f32.mrf.mxu0
  %v10217 = vadd.f32 0.0, %v10216
  %v10218 = vpop.f32.mrf.mxu0
  %10219 = vdwg.mxu0
  %10220 = vmatprep.subr.mxu0 0.0
  %10221 = vmatpush1.msra.mxu0 %v9941
  %10222 = vmatprep.subr.mxu0 0.0
  %10223 = vmatpush1.msra.mxu0 %v9940
  %10224 = vmatprep.subr.mxu0 0.0
  %10225 = vmatpush1.msra.mxu0 %v9939
  %10226 = vmatprep.subr.mxu0 0.0
  %10227 = vmatpush1.msra.mxu0 %v9938
  %10228 = vmatprep.subr.mxu0 0.0
  %10229 = vmatpush1.msra.mxu0 %v9937
  %10230 = vmatprep.subr.mxu0 0.0
  %10231 = vmatpush1.msra.mxu0 %v9936
  %10232 = vmatprep.subr.mxu0 0.0
  %10233 = vmatpush1.msra.mxu0 %v9935
  %10234 = vmatprep.subr.mxu0 0.0
  %10235 = vmatpush1.msra.mxu0 %v9934
  %10236 = vmatprep.subr.mxu0 0.0
  %10237 = vmatpush1.msra.mxu0 %v9933
  %10238 = vmatprep.subr.mxu0 0.0
  %10239 = vmatpush1.msra.mxu0 %v9932
  %10240 = vmatprep.subr.mxu0 0.0
  %10241 = vmatpush1.msra.mxu0 %v9931
  %10242 = vmatprep.subr.mxu0 0.0
  %10243 = vmatpush1.msra.mxu0 %v9930
  %10244 = vmatprep.subr.mxu0 0.0
  %10245 = vmatpush1.msra.mxu0 %v9929
  %10246 = vmatprep.subr.mxu0 0.0
  %10247 = vmatpush1.msra.mxu0 %v9928
  %10248 = vmatprep.subr.mxu0 0.0
  %10249 = vmatpush1.msra.mxu0 %v9927
  %10250 = vmatprep.subr.mxu0 0.0
  %10251 = vmatpush1.msra.mxu0 %v9926
  %10252 = vmatprep.subr.mxu0 0.0
  %10253 = vmatpush2.msra.mxu0 %v9957
  %10254 = vmatprep.subr.mxu0 0.0
  %10255 = vmatpush2.msra.mxu0 %v9956
  %10256 = vmatprep.subr.mxu0 0.0
  %10257 = vmatpush2.msra.mxu0 %v9955
  %10258 = vmatprep.subr.mxu0 0.0
  %10259 = vmatpush2.msra.mxu0 %v9954
  %10260 = vmatprep.subr.mxu0 0.0
  %10261 = vmatpush2.msra.mxu0 %v9953
  %10262 = vmatprep.subr.mxu0 0.0
  %10263 = vmatpush2.msra.mxu0 %v9952
  %10264 = vmatprep.subr.mxu0 0.0
  %10265 = vmatpush2.msra.mxu0 %v9951
  %10266 = vmatprep.subr.mxu0 0.0
  %10267 = vmatpush2.msra.mxu0 %v9950
  %10268 = vmatprep.subr.mxu0 0.0
  %10269 = vmatpush2.msra.mxu0 %v9949
  %10270 = vmatprep.subr.mxu0 0.0
  %10271 = vmatpush2.msra.mxu0 %v9948
  %10272 = vmatprep.subr.mxu0 0.0
  %10273 = vmatpush2.msra.mxu0 %v9947
  %10274 = vmatprep.subr.mxu0 0.0
  %10275 = vmatpush2.msra.mxu0 %v9946
  %10276 = vmatprep.subr.mxu0 0.0
  %10277 = vmatpush2.msra.mxu0 %v9945
  %10278 = vmatprep.subr.mxu0 0.0
  %10279 = vmatpush2.msra.mxu0 %v9944
  %10280 = vmatprep.subr.mxu0 0.0
  %10281 = vmatpush2.msra.mxu0 %v9943
  %10282 = vmatprep.subr.mxu0 0.0
  %10283 = vmatpush2.msra.mxu0 %v9942
  %10284 = vmatprep.mubr.f32.mxu0 %v9869
  %10285 = vmatmul.mubr.f32.gmra.mxu0 %v9867
  %v10286 = vpop.f32.mrf.mxu0
  %v10287 = vadd.f32 %v10217, %v10286
  %v10288 = vpop.f32.mrf.mxu0
  %10289 = vdwg.mxu0
  %10290 = vmatprep.subr.mxu0 0.0
  %10291 = vmatpush1.msra.mxu0 %v9973
  %10292 = vmatprep.subr.mxu0 0.0
  %10293 = vmatpush1.msra.mxu0 %v9972
  %10294 = vmatprep.subr.mxu0 0.0
  %10295 = vmatpush1.msra.mxu0 %v9971
  %10296 = vmatprep.subr.mxu0 0.0
  %10297 = vmatpush1.msra.mxu0 %v9970
  %10298 = vmatprep.subr.mxu0 0.0
  %10299 = vmatpush1.msra.mxu0 %v9969
  %10300 = vmatprep.subr.mxu0 0.0
  %10301 = vmatpush1.msra.mxu0 %v9968
  %10302 = vmatprep.subr.mxu0 0.0
  %10303 = vmatpush1.msra.mxu0 %v9967
  %10304 = vmatprep.subr.mxu0 0.0
  %10305 = vmatpush1.msra.mxu0 %v9966
  %10306 = vmatprep.subr.mxu0 0.0
  %10307 = vmatpush1.msra.mxu0 %v9965
  %10308 = vmatprep.subr.mxu0 0.0
  %10309 = vmatpush1.msra.mxu0 %v9964
  %10310 = vmatprep.subr.mxu0 0.0
  %10311 = vmatpush1.msra.mxu0 %v9963
  %10312 = vmatprep.subr.mxu0 0.0
  %10313 = vmatpush1.msra.mxu0 %v9962
  %10314 = vmatprep.subr.mxu0 0.0
  %10315 = vmatpush1.msra.mxu0 %v9961
  %10316 = vmatprep.subr.mxu0 0.0
  %10317 = vmatpush1.msra.mxu0 %v9960
  %10318 = vmatprep.subr.mxu0 0.0
  %10319 = vmatpush1.msra.mxu0 %v9959
  %10320 = vmatprep.subr.mxu0 0.0
  %10321 = vmatpush1.msra.mxu0 %v9958
  %10322 = vmatprep.subr.mxu0 0.0
  %10323 = vmatpush2.msra.mxu0 %v9989
  %10324 = vmatprep.subr.mxu0 0.0
  %10325 = vmatpush2.msra.mxu0 %v9988
  %10326 = vmatprep.subr.mxu0 0.0
  %10327 = vmatpush2.msra.mxu0 %v9987
  %10328 = vmatprep.subr.mxu0 0.0
  %10329 = vmatpush2.msra.mxu0 %v9986
  %10330 = vmatprep.subr.mxu0 0.0
  %10331 = vmatpush2.msra.mxu0 %v9985
  %10332 = vmatprep.subr.mxu0 0.0
  %10333 = vmatpush2.msra.mxu0 %v9984
  %10334 = vmatprep.subr.mxu0 0.0
  %10335 = vmatpush2.msra.mxu0 %v9983
  %10336 = vmatprep.subr.mxu0 0.0
  %10337 = vmatpush2.msra.mxu0 %v9982
  %10338 = vmatprep.subr.mxu0 0.0
  %10339 = vmatpush2.msra.mxu0 %v9981
  %10340 = vmatprep.subr.mxu0 0.0
  %10341 = vmatpush2.msra.mxu0 %v9980
  %10342 = vmatprep.subr.mxu0 0.0
  %10343 = vmatpush2.msra.mxu0 %v9979
  %10344 = vmatprep.subr.mxu0 0.0
  %10345 = vmatpush2.msra.mxu0 %v9978
  %10346 = vmatprep.subr.mxu0 0.0
  %10347 = vmatpush2.msra.mxu0 %v9977
  %10348 = vmatprep.subr.mxu0 0.0
  %10349 = vmatpush2.msra.mxu0 %v9976
  %10350 = vmatprep.subr.mxu0 0.0
  %10351 = vmatpush2.msra.mxu0 %v9975
  %10352 = vmatprep.subr.mxu0 0.0
  %10353 = vmatpush2.msra.mxu0 %v9974
  %10354 = vmatprep.mubr.f32.mxu0 %v9873
  %10355 = vmatmul.mubr.f32.gmra.mxu0 %v9871
  %v10356 = vpop.f32.mrf.mxu0
  %v10357 = vadd.f32 %v10287, %v10356
  %v10358 = vpop.f32.mrf.mxu0
  %10359 = vdwg.mxu0
  %10360 = vmatprep.subr.mxu0 0.0
  %10361 = vmatpush1.msra.mxu0 %v10005
  %10362 = vmatprep.subr.mxu0 0.0
  %10363 = vmatpush1.msra.mxu0 %v10004
  %10364 = vmatprep.subr.mxu0 0.0
  %10365 = vmatpush1.msra.mxu0 %v10003
  %10366 = vmatprep.subr.mxu0 0.0
  %10367 = vmatpush1.msra.mxu0 %v10002
  %10368 = vmatprep.subr.mxu0 0.0
  %10369 = vmatpush1.msra.mxu0 %v10001
  %10370 = vmatprep.subr.mxu0 0.0
  %10371 = vmatpush1.msra.mxu0 %v10000
  %10372 = vmatprep.subr.mxu0 0.0
  %10373 = vmatpush1.msra.mxu0 %v9999
  %10374 = vmatprep.subr.mxu0 0.0
  %10375 = vmatpush1.msra.mxu0 %v9998
  %10376 = vmatprep.subr.mxu0 0.0
  %10377 = vmatpush1.msra.mxu0 %v9997
  %10378 = vmatprep.subr.mxu0 0.0
  %10379 = vmatpush1.msra.mxu0 %v9996
  %10380 = vmatprep.subr.mxu0 0.0
  %10381 = vmatpush1.msra.mxu0 %v9995
  %10382 = vmatprep.subr.mxu0 0.0
  %10383 = vmatpush1.msra.mxu0 %v9994
  %10384 = vmatprep.subr.mxu0 0.0
  %10385 = vmatpush1.msra.mxu0 %v9993
  %10386 = vmatprep.subr.mxu0 0.0
  %10387 = vmatpush1.msra.mxu0 %v9992
  %10388 = vmatprep.subr.mxu0 0.0
  %10389 = vmatpush1.msra.mxu0 %v9991
  %10390 = vmatprep.subr.mxu0 0.0
  %10391 = vmatpush1.msra.mxu0 %v9990
  %10392 = vmatprep.subr.mxu0 0.0
  %10393 = vmatpush2.msra.mxu0 %v10021
  %10394 = vmatprep.subr.mxu0 0.0
  %10395 = vmatpush2.msra.mxu0 %v10020
  %10396 = vmatprep.subr.mxu0 0.0
  %10397 = vmatpush2.msra.mxu0 %v10019
  %10398 = vmatprep.subr.mxu0 0.0
  %10399 = vmatpush2.msra.mxu0 %v10018
  %10400 = vmatprep.subr.mxu0 0.0
  %10401 = vmatpush2.msra.mxu0 %v10017
  %10402 = vmatprep.subr.mxu0 0.0
  %10403 = vmatpush2.msra.mxu0 %v10016
  %10404 = vmatprep.subr.mxu0 0.0
  %10405 = vmatpush2.msra.mxu0 %v10015
  %10406 = vmatprep.subr.mxu0 0.0
  %10407 = vmatpush2.msra.mxu0 %v10014
  %10408 = vmatprep.subr.mxu0 0.0
  %10409 = vmatpush2.msra.mxu0 %v10013
  %10410 = vmatprep.subr.mxu0 0.0
  %10411 = vmatpush2.msra.mxu0 %v10012
  %10412 = vmatprep.subr.mxu0 0.0
  %10413 = vmatpush2.msra.mxu0 %v10011
  %10414 = vmatprep.subr.mxu0 0.0
  %10415 = vmatpush2.msra.mxu0 %v10010
  %10416 = vmatprep.subr.mxu0 0.0
  %10417 = vmatpush2.msra.mxu0 %v10009
  %10418 = vmatprep.subr.mxu0 0.0
  %10419 = vmatpush2.msra.mxu0 %v10008
  %10420 = vmatprep.subr.mxu0 0.0
  %10421 = vmatpush2.msra.mxu0 %v10007
  %10422 = vmatprep.subr.mxu0 0.0
  %10423 = vmatpush2.msra.mxu0 %v10006
  %10424 = vmatprep.mubr.f32.mxu0 %v9877
  %10425 = vmatmul.mubr.f32.gmra.mxu0 %v9875
  %v10426 = vpop.f32.mrf.mxu0
  %v10427 = vadd.f32 %v10357, %v10426
  %v10428 = vpop.f32.mrf.mxu0
  %10429 = vdwg.mxu0
  %10430 = vmatprep.subr.mxu0 0.0
  %10431 = vmatpush1.msra.mxu0 %v10037
  %10432 = vmatprep.subr.mxu0 0.0
  %10433 = vmatpush1.msra.mxu0 %v10036
  %10434 = vmatprep.subr.mxu0 0.0
  %10435 = vmatpush1.msra.mxu0 %v10035
  %10436 = vmatprep.subr.mxu0 0.0
  %10437 = vmatpush1.msra.mxu0 %v10034
  %10438 = vmatprep.subr.mxu0 0.0
  %10439 = vmatpush1.msra.mxu0 %v10033
  %10440 = vmatprep.subr.mxu0 0.0
  %10441 = vmatpush1.msra.mxu0 %v10032
  %10442 = vmatprep.subr.mxu0 0.0
  %10443 = vmatpush1.msra.mxu0 %v10031
  %10444 = vmatprep.subr.mxu0 0.0
  %10445 = vmatpush1.msra.mxu0 %v10030
  %10446 = vmatprep.subr.mxu0 0.0
  %10447 = vmatpush1.msra.mxu0 %v10029
  %10448 = vmatprep.subr.mxu0 0.0
  %10449 = vmatpush1.msra.mxu0 %v10028
  %10450 = vmatprep.subr.mxu0 0.0
  %10451 = vmatpush1.msra.mxu0 %v10027
  %10452 = vmatprep.subr.mxu0 0.0
  %10453 = vmatpush1.msra.mxu0 %v10026
  %10454 = vmatprep.subr.mxu0 0.0
  %10455 = vmatpush1.msra.mxu0 %v10025
  %10456 = vmatprep.subr.mxu0 0.0
  %10457 = vmatpush1.msra.mxu0 %v10024
  %10458 = vmatprep.subr.mxu0 0.0
  %10459 = vmatpush1.msra.mxu0 %v10023
  %10460 = vmatprep.subr.mxu0 0.0
  %10461 = vmatpush1.msra.mxu0 %v10022
  %10462 = vmatprep.subr.mxu0 0.0
  %10463 = vmatpush2.msra.mxu0 %v10053
  %10464 = vmatprep.subr.mxu0 0.0
  %10465 = vmatpush2.msra.mxu0 %v10052
  %10466 = vmatprep.subr.mxu0 0.0
  %10467 = vmatpush2.msra.mxu0 %v10051
  %10468 = vmatprep.subr.mxu0 0.0
  %10469 = vmatpush2.msra.mxu0 %v10050
  %10470 = vmatprep.subr.mxu0 0.0
  %10471 = vmatpush2.msra.mxu0 %v10049
  %10472 = vmatprep.subr.mxu0 0.0
  %10473 = vmatpush2.msra.mxu0 %v10048
  %10474 = vmatprep.subr.mxu0 0.0
  %10475 = vmatpush2.msra.mxu0 %v10047
  %10476 = vmatprep.subr.mxu0 0.0
  %10477 = vmatpush2.msra.mxu0 %v10046
  %10478 = vmatprep.subr.mxu0 0.0
  %10479 = vmatpush2.msra.mxu0 %v10045
  %10480 = vmatprep.subr.mxu0 0.0
  %10481 = vmatpush2.msra.mxu0 %v10044
  %10482 = vmatprep.subr.mxu0 0.0
  %10483 = vmatpush2.msra.mxu0 %v10043
  %10484 = vmatprep.subr.mxu0 0.0
  %10485 = vmatpush2.msra.mxu0 %v10042
  %10486 = vmatprep.subr.mxu0 0.0
  %10487 = vmatpush2.msra.mxu0 %v10041
  %10488 = vmatprep.subr.mxu0 0.0
  %10489 = vmatpush2.msra.mxu0 %v10040
  %10490 = vmatprep.subr.mxu0 0.0
  %10491 = vmatpush2.msra.mxu0 %v10039
  %10492 = vmatprep.subr.mxu0 0.0
  %10493 = vmatpush2.msra.mxu0 %v10038
  %10494 = vmatprep.mubr.f32.mxu0 %v9881
  %10495 = vmatmul.mubr.f32.gmra.mxu0 %v9879
  %v10496 = vpop.f32.mrf.mxu0
  %v10497 = vadd.f32 %v10427, %v10496
  %v10498 = vpop.f32.mrf.mxu0
  %10499 = vdwg.mxu0
  %10500 = vmatprep.subr.mxu0 0.0
  %10501 = vmatpush1.msra.mxu0 %v10069
  %10502 = vmatprep.subr.mxu0 0.0
  %10503 = vmatpush1.msra.mxu0 %v10068
  %10504 = vmatprep.subr.mxu0 0.0
  %10505 = vmatpush1.msra.mxu0 %v10067
  %10506 = vmatprep.subr.mxu0 0.0
  %10507 = vmatpush1.msra.mxu0 %v10066
  %10508 = vmatprep.subr.mxu0 0.0
  %10509 = vmatpush1.msra.mxu0 %v10065
  %10510 = vmatprep.subr.mxu0 0.0
  %10511 = vmatpush1.msra.mxu0 %v10064
  %10512 = vmatprep.subr.mxu0 0.0
  %10513 = vmatpush1.msra.mxu0 %v10063
  %10514 = vmatprep.subr.mxu0 0.0
  %10515 = vmatpush1.msra.mxu0 %v10062
  %10516 = vmatprep.subr.mxu0 0.0
  %10517 = vmatpush1.msra.mxu0 %v10061
  %10518 = vmatprep.subr.mxu0 0.0
  %10519 = vmatpush1.msra.mxu0 %v10060
  %10520 = vmatprep.subr.mxu0 0.0
  %10521 = vmatpush1.msra.mxu0 %v10059
  %10522 = vmatprep.subr.mxu0 0.0
  %10523 = vmatpush1.msra.mxu0 %v10058
  %10524 = vmatprep.subr.mxu0 0.0
  %10525 = vmatpush1.msra.mxu0 %v10057
  %10526 = vmatprep.subr.mxu0 0.0
  %10527 = vmatpush1.msra.mxu0 %v10056
  %10528 = vmatprep.subr.mxu0 0.0
  %10529 = vmatpush1.msra.mxu0 %v10055
  %10530 = vmatprep.subr.mxu0 0.0
  %10531 = vmatpush1.msra.mxu0 %v10054
  %10532 = vmatprep.subr.mxu0 0.0
  %10533 = vmatpush2.msra.mxu0 %v10085
  %10534 = vmatprep.subr.mxu0 0.0
  %10535 = vmatpush2.msra.mxu0 %v10084
  %10536 = vmatprep.subr.mxu0 0.0
  %10537 = vmatpush2.msra.mxu0 %v10083
  %10538 = vmatprep.subr.mxu0 0.0
  %10539 = vmatpush2.msra.mxu0 %v10082
  %10540 = vmatprep.subr.mxu0 0.0
  %10541 = vmatpush2.msra.mxu0 %v10081
  %10542 = vmatprep.subr.mxu0 0.0
  %10543 = vmatpush2.msra.mxu0 %v10080
  %10544 = vmatprep.subr.mxu0 0.0
  %10545 = vmatpush2.msra.mxu0 %v10079
  %10546 = vmatprep.subr.mxu0 0.0
  %10547 = vmatpush2.msra.mxu0 %v10078
  %10548 = vmatprep.subr.mxu0 0.0
  %10549 = vmatpush2.msra.mxu0 %v10077
  %10550 = vmatprep.subr.mxu0 0.0
  %10551 = vmatpush2.msra.mxu0 %v10076
  %10552 = vmatprep.subr.mxu0 0.0
  %10553 = vmatpush2.msra.mxu0 %v10075
  %10554 = vmatprep.subr.mxu0 0.0
  %10555 = vmatpush2.msra.mxu0 %v10074
  %10556 = vmatprep.subr.mxu0 0.0
  %10557 = vmatpush2.msra.mxu0 %v10073
  %10558 = vmatprep.subr.mxu0 0.0
  %10559 = vmatpush2.msra.mxu0 %v10072
  %10560 = vmatprep.subr.mxu0 0.0
  %10561 = vmatpush2.msra.mxu0 %v10071
  %10562 = vmatprep.subr.mxu0 0.0
  %10563 = vmatpush2.msra.mxu0 %v10070
  %10564 = vmatprep.mubr.f32.mxu0 %v9885
  %10565 = vmatmul.mubr.f32.gmra.mxu0 %v9883
  %v10566 = vpop.f32.mrf.mxu0
  %v10567 = vadd.f32 %v10497, %v10566
  %v10568 = vpop.f32.mrf.mxu0
  %10569 = vdwg.mxu0
  %10570 = vmatprep.subr.mxu0 0.0
  %10571 = vmatpush1.msra.mxu0 %v10101
  %10572 = vmatprep.subr.mxu0 0.0
  %10573 = vmatpush1.msra.mxu0 %v10100
  %10574 = vmatprep.subr.mxu0 0.0
  %10575 = vmatpush1.msra.mxu0 %v10099
  %10576 = vmatprep.subr.mxu0 0.0
  %10577 = vmatpush1.msra.mxu0 %v10098
  %10578 = vmatprep.subr.mxu0 0.0
  %10579 = vmatpush1.msra.mxu0 %v10097
  %10580 = vmatprep.subr.mxu0 0.0
  %10581 = vmatpush1.msra.mxu0 %v10096
  %10582 = vmatprep.subr.mxu0 0.0
  %10583 = vmatpush1.msra.mxu0 %v10095
  %10584 = vmatprep.subr.mxu0 0.0
  %10585 = vmatpush1.msra.mxu0 %v10094
  %10586 = vmatprep.subr.mxu0 0.0
  %10587 = vmatpush1.msra.mxu0 %v10093
  %10588 = vmatprep.subr.mxu0 0.0
  %10589 = vmatpush1.msra.mxu0 %v10092
  %10590 = vmatprep.subr.mxu0 0.0
  %10591 = vmatpush1.msra.mxu0 %v10091
  %10592 = vmatprep.subr.mxu0 0.0
  %10593 = vmatpush1.msra.mxu0 %v10090
  %10594 = vmatprep.subr.mxu0 0.0
  %10595 = vmatpush1.msra.mxu0 %v10089
  %10596 = vmatprep.subr.mxu0 0.0
  %10597 = vmatpush1.msra.mxu0 %v10088
  %10598 = vmatprep.subr.mxu0 0.0
  %10599 = vmatpush1.msra.mxu0 %v10087
  %10600 = vmatprep.subr.mxu0 0.0
  %10601 = vmatpush1.msra.mxu0 %v10086
  %10602 = vmatprep.subr.mxu0 0.0
  %10603 = vmatpush2.msra.mxu0 %v10117
  %10604 = vmatprep.subr.mxu0 0.0
  %10605 = vmatpush2.msra.mxu0 %v10116
  %10606 = vmatprep.subr.mxu0 0.0
  %10607 = vmatpush2.msra.mxu0 %v10115
  %10608 = vmatprep.subr.mxu0 0.0
  %10609 = vmatpush2.msra.mxu0 %v10114
  %10610 = vmatprep.subr.mxu0 0.0
  %10611 = vmatpush2.msra.mxu0 %v10113
  %10612 = vmatprep.subr.mxu0 0.0
  %10613 = vmatpush2.msra.mxu0 %v10112
  %10614 = vmatprep.subr.mxu0 0.0
  %10615 = vmatpush2.msra.mxu0 %v10111
  %10616 = vmatprep.subr.mxu0 0.0
  %10617 = vmatpush2.msra.mxu0 %v10110
  %10618 = vmatprep.subr.mxu0 0.0
  %10619 = vmatpush2.msra.mxu0 %v10109
  %10620 = vmatprep.subr.mxu0 0.0
  %10621 = vmatpush2.msra.mxu0 %v10108
  %10622 = vmatprep.subr.mxu0 0.0
  %10623 = vmatpush2.msra.mxu0 %v10107
  %10624 = vmatprep.subr.mxu0 0.0
  %10625 = vmatpush2.msra.mxu0 %v10106
  %10626 = vmatprep.subr.mxu0 0.0
  %10627 = vmatpush2.msra.mxu0 %v10105
  %10628 = vmatprep.subr.mxu0 0.0
  %10629 = vmatpush2.msra.mxu0 %v10104
  %10630 = vmatprep.subr.mxu0 0.0
  %10631 = vmatpush2.msra.mxu0 %v10103
  %10632 = vmatprep.subr.mxu0 0.0
  %10633 = vmatpush2.msra.mxu0 %v10102
  %10634 = vmatprep.mubr.f32.mxu0 %v9889
  %10635 = vmatmul.mubr.f32.gmra.mxu0 %v9887
  %v10636 = vpop.f32.mrf.mxu0
  %v10637 = vadd.f32 %v10567, %v10636
  %v10638 = vpop.f32.mrf.mxu0
  %10639 = vdwg.mxu0
  %10640 = vmatprep.subr.mxu0 0.0
  %10641 = vmatpush1.msra.mxu0 %v10133
  %10642 = vmatprep.subr.mxu0 0.0
  %10643 = vmatpush1.msra.mxu0 %v10132
  %10644 = vmatprep.subr.mxu0 0.0
  %10645 = vmatpush1.msra.mxu0 %v10131
  %10646 = vmatprep.subr.mxu0 0.0
  %10647 = vmatpush1.msra.mxu0 %v10130
  %10648 = vmatprep.subr.mxu0 0.0
  %10649 = vmatpush1.msra.mxu0 %v10129
  %10650 = vmatprep.subr.mxu0 0.0
  %10651 = vmatpush1.msra.mxu0 %v10128
  %10652 = vmatprep.subr.mxu0 0.0
  %10653 = vmatpush1.msra.mxu0 %v10127
  %10654 = vmatprep.subr.mxu0 0.0
  %10655 = vmatpush1.msra.mxu0 %v10126
  %10656 = vmatprep.subr.mxu0 0.0
  %10657 = vmatpush1.msra.mxu0 %v10125
  %10658 = vmatprep.subr.mxu0 0.0
  %10659 = vmatpush1.msra.mxu0 %v10124
  %10660 = vmatprep.subr.mxu0 0.0
  %10661 = vmatpush1.msra.mxu0 %v10123
  %10662 = vmatprep.subr.mxu0 0.0
  %10663 = vmatpush1.msra.mxu0 %v10122
  %10664 = vmatprep.subr.mxu0 0.0
  %10665 = vmatpush1.msra.mxu0 %v10121
  %10666 = vmatprep.subr.mxu0 0.0
  %10667 = vmatpush1.msra.mxu0 %v10120
  %10668 = vmatprep.subr.mxu0 0.0
  %10669 = vmatpush1.msra.mxu0 %v10119
  %10670 = vmatprep.subr.mxu0 0.0
  %10671 = vmatpush1.msra.mxu0 %v10118
  %10672 = vmatprep.subr.mxu0 0.0
  %10673 = vmatpush2.msra.mxu0 %v10149
  %10674 = vmatprep.subr.mxu0 0.0
  %10675 = vmatpush2.msra.mxu0 %v10148
  %10676 = vmatprep.subr.mxu0 0.0
  %10677 = vmatpush2.msra.mxu0 %v10147
  %10678 = vmatprep.subr.mxu0 0.0
  %10679 = vmatpush2.msra.mxu0 %v10146
  %10680 = vmatprep.subr.mxu0 0.0
  %10681 = vmatpush2.msra.mxu0 %v10145
  %10682 = vmatprep.subr.mxu0 0.0
  %10683 = vmatpush2.msra.mxu0 %v10144
  %10684 = vmatprep.subr.mxu0 0.0
  %10685 = vmatpush2.msra.mxu0 %v10143
  %10686 = vmatprep.subr.mxu0 0.0
  %10687 = vmatpush2.msra.mxu0 %v10142
  %10688 = vmatprep.subr.mxu0 0.0
  %10689 = vmatpush2.msra.mxu0 %v10141
  %10690 = vmatprep.subr.mxu0 0.0
  %10691 = vmatpush2.msra.mxu0 %v10140
  %10692 = vmatprep.subr.mxu0 0.0
  %10693 = vmatpush2.msra.mxu0 %v10139
  %10694 = vmatprep.subr.mxu0 0.0
  %10695 = vmatpush2.msra.mxu0 %v10138
  %10696 = vmatprep.subr.mxu0 0.0
  %10697 = vmatpush2.msra.mxu0 %v10137
  %10698 = vmatprep.subr.mxu0 0.0
  %10699 = vmatpush2.msra.mxu0 %v10136
  %10700 = vmatprep.subr.mxu0 0.0
  %10701 = vmatpush2.msra.mxu0 %v10135
  %10702 = vmatprep.subr.mxu0 0.0
  %10703 = vmatpush2.msra.mxu0 %v10134
  %10704 = vmatprep.mubr.f32.mxu0 %v9893
  %10705 = vmatmul.mubr.f32.gmra.mxu0 %v9891
  %v10706 = vpop.f32.mrf.mxu0
  %v10707 = vadd.f32 %v10637, %v10706
  %v10708 = vpop.f32.mrf.mxu0
  %10709 = vdwg.mxu0
  %v10710 = vrcp.pop %v10707
  %v10711 = vmul.f32 1.0, %v10710
  %10713 = vrot.lane.b32.xlu0 %v10711, 112
  %v10714 = vpop.permute.xlu0 %10713
  %v10716 = vmul.f32 %v10707, %v10714
  %10717 = vxpose.xlu0.b32.start [1/16] %v10716, 128
  %10718 = vxpose.xlu0.b32.cont [2/16] 0.0, 128
  %10719 = vxpose.xlu0.b32.cont [3/16] 0.0, 128
  %10720 = vxpose.xlu0.b32.cont [4/16] 0.0, 128
  %10721 = vxpose.xlu0.b32.cont [5/16] 0.0, 128
  %10722 = vxpose.xlu0.b32.cont [6/16] 0.0, 128
  %10723 = vxpose.xlu0.b32.cont [7/16] 0.0, 128
  %10724 = vxpose.xlu0.b32.cont [8/16] 0.0, 128
  %10725 = vxpose.xlu0.b32.cont [9/16] 0.0, 128
  %10726 = vxpose.xlu0.b32.cont [10/16] 0.0, 128
  %10727 = vxpose.xlu0.b32.cont [11/16] 0.0, 128
  %10728 = vxpose.xlu0.b32.cont [12/16] 0.0, 128
  %10729 = vxpose.xlu0.b32.cont [13/16] 0.0, 128
  %10730 = vxpose.xlu0.b32.cont [14/16] 0.0, 128
  %10731 = vxpose.xlu0.b32.cont [15/16] 0.0, 128
  %10732 = vxpose.xlu0.b32.end [16/16] 0.0, 128
  %v10733 = vpop.trf.xlu0
  %v10734 = vpop.trf.xlu0
  %v10735 = vpop.trf.xlu0
  %v10736 = vpop.trf.xlu0
  %v10737 = vpop.trf.xlu0
  %v10738 = vpop.trf.xlu0
  %v10739 = vpop.trf.xlu0
  %v10740 = vpop.trf.xlu0
  %v10741 = vpop.trf.xlu0
  %v10742 = vpop.trf.xlu0
  %v10743 = vpop.trf.xlu0
  %v10744 = vpop.trf.xlu0
  %v10745 = vpop.trf.xlu0
  %v10746 = vpop.trf.xlu0
  %v10747 = vpop.trf.xlu0
  %v10748 = vpop.trf.xlu0
  %10749 = vrot.lane.b32.xlu0 %v10711, 120
  %v10750 = vpop.permute.xlu0 %10749
  %v10752 = vmul.f32 %v10707, %v10750
  %10754 = vrot.lane.b32.xlu0 %v10752, 120
  %v10755 = vpop.permute.xlu0 %10754
  %10757 = vxpose.xlu0.b32.start [1/16] %v10755, 128
  %10758 = vxpose.xlu0.b32.cont [2/16] 0.0, 128
  %10759 = vxpose.xlu0.b32.cont [3/16] 0.0, 128
  %10760 = vxpose.xlu0.b32.cont [4/16] 0.0, 128
  %10761 = vxpose.xlu0.b32.cont [5/16] 0.0, 128
  %10762 = vxpose.xlu0.b32.cont [6/16] 0.0, 128
  %10763 = vxpose.xlu0.b32.cont [7/16] 0.0, 128
  %10764 = vxpose.xlu0.b32.cont [8/16] 0.0, 128
  %10765 = vxpose.xlu0.b32.cont [9/16] 0.0, 128
  %10766 = vxpose.xlu0.b32.cont [10/16] 0.0, 128
  %10767 = vxpose.xlu0.b32.cont [11/16] 0.0, 128
  %10768 = vxpose.xlu0.b32.cont [12/16] 0.0, 128
  %10769 = vxpose.xlu0.b32.cont [13/16] 0.0, 128
  %10770 = vxpose.xlu0.b32.cont [14/16] 0.0, 128
  %10771 = vxpose.xlu0.b32.cont [15/16] 0.0, 128
  %10772 = vxpose.xlu0.b32.end [16/16] 0.0, 128
  %v10773 = vpop.trf.xlu0
  %v10774 = vpop.trf.xlu0
  %v10775 = vpop.trf.xlu0
  %v10776 = vpop.trf.xlu0
  %v10777 = vpop.trf.xlu0
  %v10778 = vpop.trf.xlu0
  %v10779 = vpop.trf.xlu0
  %v10780 = vpop.trf.xlu0
  %v10781 = vpop.trf.xlu0
  %v10782 = vpop.trf.xlu0
  %v10783 = vpop.trf.xlu0
  %v10784 = vpop.trf.xlu0
  %v10785 = vpop.trf.xlu0
  %v10786 = vpop.trf.xlu0
  %v10787 = vpop.trf.xlu0
  %v10788 = vpop.trf.xlu0
  %v10789 = vld [vmem:[%s1] sm:$0xff]
  %v10790 = vld [vmem:[%s6] sm:$0xff]
  %v10791 = vld [vmem:[%s6 + $0x8] sm:$0xff]
  %vm10792 = vcmask 64512
  %v10794 = vsel %vm10792, %v10773, 0
  %10796 = vmatprep.subr.mxu0 0.0
  %10797 = vmatpush1.msra.mxu0 0.0
  %10798 = vmatprep.subr.mxu0 0.0
  %10799 = vmatpush1.msra.mxu0 0.0
  %10800 = vmatprep.subr.mxu0 0.0
  %10801 = vmatpush1.msra.mxu0 0.0
  %10802 = vmatprep.subr.mxu0 0.0
  %10803 = vmatpush1.msra.mxu0 0.0
  %10804 = vmatprep.subr.mxu0 0.0
  %10805 = vmatpush1.msra.mxu0 0.0
  %10806 = vmatprep.subr.mxu0 0.0
  %10807 = vmatpush1.msra.mxu0 0.0
  %10808 = vmatprep.subr.mxu0 0.0
  %10809 = vmatpush1.msra.mxu0 0.0
  %10810 = vmatprep.subr.mxu0 0.0
  %10811 = vmatpush1.msra.mxu0 0.0
  %10812 = vmatprep.subr.mxu0 0.0
  %10813 = vmatpush1.msra.mxu0 0.0
  %10814 = vmatprep.subr.mxu0 0.0
  %10815 = vmatpush1.msra.mxu0 0.0
  %10816 = vmatprep.subr.mxu0 0.0
  %10817 = vmatpush1.msra.mxu0 0.0
  %10818 = vmatprep.subr.mxu0 0.0
  %10819 = vmatpush1.msra.mxu0 0.0
  %10820 = vmatprep.subr.mxu0 0.0
  %10821 = vmatpush1.msra.mxu0 0.0
  %10822 = vmatprep.subr.mxu0 0.0
  %10823 = vmatpush1.msra.mxu0 0.0
  %10824 = vmatprep.subr.mxu0 0.0
  %10825 = vmatpush1.msra.mxu0 0.0
  %10826 = vmatprep.subr.mxu0 0.0
  %10827 = vmatpush1.msra.mxu0 %v10791
  %10828 = vmatprep.subr.mxu0 0.0
  %10829 = vmatpush2.msra.mxu0 0.0
  %10830 = vmatprep.subr.mxu0 0.0
  %10831 = vmatpush2.msra.mxu0 0.0
  %10832 = vmatprep.subr.mxu0 0.0
  %10833 = vmatpush2.msra.mxu0 0.0
  %10834 = vmatprep.subr.mxu0 0.0
  %10835 = vmatpush2.msra.mxu0 0.0
  %10836 = vmatprep.subr.mxu0 0.0
  %10837 = vmatpush2.msra.mxu0 0.0
  %10838 = vmatprep.subr.mxu0 0.0
  %10839 = vmatpush2.msra.mxu0 0.0
  %10840 = vmatprep.subr.mxu0 0.0
  %10841 = vmatpush2.msra.mxu0 0.0
  %10842 = vmatprep.subr.mxu0 0.0
  %10843 = vmatpush2.msra.mxu0 0.0
  %10844 = vmatprep.subr.mxu0 0.0
  %10845 = vmatpush2.msra.mxu0 0.0
  %10846 = vmatprep.subr.mxu0 0.0
  %10847 = vmatpush2.msra.mxu0 0.0
  %10848 = vmatprep.subr.mxu0 0.0
  %10849 = vmatpush2.msra.mxu0 0.0
  %10850 = vmatprep.subr.mxu0 0.0
  %10851 = vmatpush2.msra.mxu0 0.0
  %10852 = vmatprep.subr.mxu0 0.0
  %10853 = vmatpush2.msra.mxu0 0.0
  %10854 = vmatprep.subr.mxu0 0.0
  %10855 = vmatpush2.msra.mxu0 0.0
  %10856 = vmatprep.subr.mxu0 0.0
  %10857 = vmatpush2.msra.mxu0 0.0
  %10858 = vmatprep.subr.mxu0 0.0
  %10859 = vmatpush2.msra.mxu0 0.0
  %10860 = vmatprep.mubr.f32.mxu0 0.0
  %10861 = vmatmul.mubr.f32.gmra.mxu0 %v10794
  %v10862 = vpop.f32.mrf.mxu0
  %v10863 = vadd.f32 0.0, %v10862
  %v10864 = vpop.f32.mrf.mxu0
  %10865 = vdwg.mxu0
  %v10867 = vsel %vm10792, %v10733, 0
  %10869 = vmatprep.subr.mxu0 0.0
  %10870 = vmatpush1.msra.mxu0 0.0
  %10871 = vmatprep.subr.mxu0 0.0
  %10872 = vmatpush1.msra.mxu0 0.0
  %10873 = vmatprep.subr.mxu0 0.0
  %10874 = vmatpush1.msra.mxu0 0.0
  %10875 = vmatprep.subr.mxu0 0.0
  %10876 = vmatpush1.msra.mxu0 0.0
  %10877 = vmatprep.subr.mxu0 0.0
  %10878 = vmatpush1.msra.mxu0 0.0
  %10879 = vmatprep.subr.mxu0 0.0
  %10880 = vmatpush1.msra.mxu0 0.0
  %10881 = vmatprep.subr.mxu0 0.0
  %10882 = vmatpush1.msra.mxu0 0.0
  %10883 = vmatprep.subr.mxu0 0.0
  %10884 = vmatpush1.msra.mxu0 0.0
  %10885 = vmatprep.subr.mxu0 0.0
  %10886 = vmatpush1.msra.mxu0 0.0
  %10887 = vmatprep.subr.mxu0 0.0
  %10888 = vmatpush1.msra.mxu0 0.0
  %10889 = vmatprep.subr.mxu0 0.0
  %10890 = vmatpush1.msra.mxu0 0.0
  %10891 = vmatprep.subr.mxu0 0.0
  %10892 = vmatpush1.msra.mxu0 0.0
  %10893 = vmatprep.subr.mxu0 0.0
  %10894 = vmatpush1.msra.mxu0 0.0
  %10895 = vmatprep.subr.mxu0 0.0
  %10896 = vmatpush1.msra.mxu0 0.0
  %10897 = vmatprep.subr.mxu0 0.0
  %10898 = vmatpush1.msra.mxu0 0.0
  %10899 = vmatprep.subr.mxu0 0.0
  %10900 = vmatpush1.msra.mxu0 %v10790
  %10901 = vmatprep.subr.mxu0 0.0
  %10902 = vmatpush2.msra.mxu0 0.0
  %10903 = vmatprep.subr.mxu0 0.0
  %10904 = vmatpush2.msra.mxu0 0.0
  %10905 = vmatprep.subr.mxu0 0.0
  %10906 = vmatpush2.msra.mxu0 0.0
  %10907 = vmatprep.subr.mxu0 0.0
  %10908 = vmatpush2.msra.mxu0 0.0
  %10909 = vmatprep.subr.mxu0 0.0
  %10910 = vmatpush2.msra.mxu0 0.0
  %10911 = vmatprep.subr.mxu0 0.0
  %10912 = vmatpush2.msra.mxu0 0.0
  %10913 = vmatprep.subr.mxu0 0.0
  %10914 = vmatpush2.msra.mxu0 0.0
  %10915 = vmatprep.subr.mxu0 0.0
  %10916 = vmatpush2.msra.mxu0 0.0
  %10917 = vmatprep.subr.mxu0 0.0
  %10918 = vmatpush2.msra.mxu0 0.0
  %10919 = vmatprep.subr.mxu0 0.0
  %10920 = vmatpush2.msra.mxu0 0.0
  %10921 = vmatprep.subr.mxu0 0.0
  %10922 = vmatpush2.msra.mxu0 0.0
  %10923 = vmatprep.subr.mxu0 0.0
  %10924 = vmatpush2.msra.mxu0 0.0
  %10925 = vmatprep.subr.mxu0 0.0
  %10926 = vmatpush2.msra.mxu0 0.0
  %10927 = vmatprep.subr.mxu0 0.0
  %10928 = vmatpush2.msra.mxu0 0.0
  %10929 = vmatprep.subr.mxu0 0.0
  %10930 = vmatpush2.msra.mxu0 0.0
  %10931 = vmatprep.subr.mxu0 0.0
  %10932 = vmatpush2.msra.mxu0 0.0
  %10933 = vmatprep.mubr.f32.mxu0 0.0
  %10934 = vmatmul.mubr.f32.gmra.mxu0 %v10867
  %v10935 = vpop.f32.mrf.mxu0
  %v10936 = vadd.f32 %v10863, %v10935
  %v10937 = vpop.f32.mrf.mxu0
  %10938 = vdwg.mxu0
  %v10939 = vld [vmem:[%s6 + $0x10] sm:$0x3f]
  %vm10940 = vcmask 48128
  %v10942 = vsel %vm10940, %v10789, 0
  %vm10944 = vcmask 1045504
  %v10946 = vsel %vm10944, %v10939, 0
  %10948 = vmatprep.subr.mxu0 0.0
  %10949 = vmatpush1.msra.mxu0 0.0
  %10950 = vmatprep.subr.mxu0 0.0
  %10951 = vmatpush1.msra.mxu0 0.0
  %10952 = vmatprep.subr.mxu0 0.0
  %10953 = vmatpush1.msra.mxu0 0.0
  %10954 = vmatprep.subr.mxu0 0.0
  %10955 = vmatpush1.msra.mxu0 0.0
  %10956 = vmatprep.subr.mxu0 0.0
  %10957 = vmatpush1.msra.mxu0 0.0
  %10958 = vmatprep.subr.mxu0 0.0
  %10959 = vmatpush1.msra.mxu0 0.0
  %10960 = vmatprep.subr.mxu0 0.0
  %10961 = vmatpush1.msra.mxu0 0.0
  %10962 = vmatprep.subr.mxu0 0.0
  %10963 = vmatpush1.msra.mxu0 0.0
  %10964 = vmatprep.subr.mxu0 0.0
  %10965 = vmatpush1.msra.mxu0 0.0
  %10966 = vmatprep.subr.mxu0 0.0
  %10967 = vmatpush1.msra.mxu0 0.0
  %10968 = vmatprep.subr.mxu0 0.0
  %10969 = vmatpush1.msra.mxu0 0.0
  %10970 = vmatprep.subr.mxu0 0.0
  %10971 = vmatpush1.msra.mxu0 0.0
  %10972 = vmatprep.subr.mxu0 0.0
  %10973 = vmatpush1.msra.mxu0 0.0
  %10974 = vmatprep.subr.mxu0 0.0
  %10975 = vmatpush1.msra.mxu0 0.0
  %10976 = vmatprep.subr.mxu0 0.0
  %10977 = vmatpush1.msra.mxu0 0.0
  %10978 = vmatprep.subr.mxu0 0.0
  %10979 = vmatpush1.msra.mxu0 %v10946
  %10980 = vmatprep.subr.mxu0 0.0
  %10981 = vmatpush2.msra.mxu0 0.0
  %10982 = vmatprep.subr.mxu0 0.0
  %10983 = vmatpush2.msra.mxu0 0.0
  %10984 = vmatprep.subr.mxu0 0.0
  %10985 = vmatpush2.msra.mxu0 0.0
  %10986 = vmatprep.subr.mxu0 0.0
  %10987 = vmatpush2.msra.mxu0 0.0
  %10988 = vmatprep.subr.mxu0 0.0
  %10989 = vmatpush2.msra.mxu0 0.0
  %10990 = vmatprep.subr.mxu0 0.0
  %10991 = vmatpush2.msra.mxu0 0.0
  %10992 = vmatprep.subr.mxu0 0.0
  %10993 = vmatpush2.msra.mxu0 0.0
  %10994 = vmatprep.subr.mxu0 0.0
  %10995 = vmatpush2.msra.mxu0 0.0
  %10996 = vmatprep.subr.mxu0 0.0
  %10997 = vmatpush2.msra.mxu0 0.0
  %10998 = vmatprep.subr.mxu0 0.0
  %10999 = vmatpush2.msra.mxu0 0.0
  %11000 = vmatprep.subr.mxu0 0.0
  %11001 = vmatpush2.msra.mxu0 0.0
  %11002 = vmatprep.subr.mxu0 0.0
  %11003 = vmatpush2.msra.mxu0 0.0
  %11004 = vmatprep.subr.mxu0 0.0
  %11005 = vmatpush2.msra.mxu0 0.0
  %11006 = vmatprep.subr.mxu0 0.0
  %11007 = vmatpush2.msra.mxu0 0.0
  %11008 = vmatprep.subr.mxu0 0.0
  %11009 = vmatpush2.msra.mxu0 0.0
  %11010 = vmatprep.subr.mxu0 0.0
  %11011 = vmatpush2.msra.mxu0 0.0
  %11012 = vmatprep.mubr.f32.mxu0 0.0
  %11013 = vmatmul.mubr.f32.gmra.mxu0 %v10942
  %v11014 = vpop.f32.mrf.mxu0
  %v11015 = vadd.f32 0.0, %v11014
  %v11016 = vpop.f32.mrf.mxu0
  %11017 = vdwg.mxu0
  %v11018 = vadd.f32 %v10936, %v11015
  %v11019 = vmax.f32 %v11018, 0.0
  %v11020 = vld [vmem:[%s7] sm:$0xff]
  %v11021 = vld [vmem:[%s7 + $0x8] sm:$0xff]
  %v11022 = vld [vmem:[%s7 + $0x10] sm:$0xff]
  %v11023 = vld [vmem:[%s7 + $0x18] sm:$0xff]
  %v11024 = vld [vmem:[%s7 + $0x20] sm:$0x1]
  %v11025 = vlaneseq
  %v11026 = vshrl.u32 %v11025, 7
  %v11027 = vsub.s32 0, %v11026
  %v11028 = vrot.slane %v11024, %v11027
  %vm11029 = vcmask 261120
  %v11031 = vsel %vm11029, %v11019, 0
  %11033 = vmatprep.subr.mxu0 0.0
  %11034 = vmatpush1.msra.mxu0 0.0
  %11035 = vmatprep.subr.mxu0 0.0
  %11036 = vmatpush1.msra.mxu0 0.0
  %11037 = vmatprep.subr.mxu0 0.0
  %11038 = vmatpush1.msra.mxu0 0.0
  %11039 = vmatprep.subr.mxu0 0.0
  %11040 = vmatpush1.msra.mxu0 0.0
  %11041 = vmatprep.subr.mxu0 0.0
  %11042 = vmatpush1.msra.mxu0 0.0
  %11043 = vmatprep.subr.mxu0 0.0
  %11044 = vmatpush1.msra.mxu0 0.0
  %11045 = vmatprep.subr.mxu0 0.0
  %11046 = vmatpush1.msra.mxu0 0.0
  %11047 = vmatprep.subr.mxu0 0.0
  %11048 = vmatpush1.msra.mxu0 0.0
  %11049 = vmatprep.subr.mxu0 0.0
  %11050 = vmatpush1.msra.mxu0 0.0
  %11051 = vmatprep.subr.mxu0 0.0
  %11052 = vmatpush1.msra.mxu0 0.0
  %11053 = vmatprep.subr.mxu0 0.0
  %11054 = vmatpush1.msra.mxu0 0.0
  %11055 = vmatprep.subr.mxu0 0.0
  %11056 = vmatpush1.msra.mxu0 0.0
  %11057 = vmatprep.subr.mxu0 0.0
  %11058 = vmatpush1.msra.mxu0 %v11023
  %11059 = vmatprep.subr.mxu0 0.0
  %11060 = vmatpush1.msra.mxu0 %v11022
  %11061 = vmatprep.subr.mxu0 0.0
  %11062 = vmatpush1.msra.mxu0 %v11021
  %11063 = vmatprep.subr.mxu0 0.0
  %11064 = vmatpush1.msra.mxu0 %v11020
  %11065 = vmatprep.subr.mxu0 0.0
  %11066 = vmatpush2.msra.mxu0 0.0
  %11067 = vmatprep.subr.mxu0 0.0
  %11068 = vmatpush2.msra.mxu0 0.0
  %11069 = vmatprep.subr.mxu0 0.0
  %11070 = vmatpush2.msra.mxu0 0.0
  %11071 = vmatprep.subr.mxu0 0.0
  %11072 = vmatpush2.msra.mxu0 0.0
  %11073 = vmatprep.subr.mxu0 0.0
  %11074 = vmatpush2.msra.mxu0 0.0
  %11075 = vmatprep.subr.mxu0 0.0
  %11076 = vmatpush2.msra.mxu0 0.0
  %11077 = vmatprep.subr.mxu0 0.0
  %11078 = vmatpush2.msra.mxu0 0.0
  %11079 = vmatprep.subr.mxu0 0.0
  %11080 = vmatpush2.msra.mxu0 0.0
  %11081 = vmatprep.subr.mxu0 0.0
  %11082 = vmatpush2.msra.mxu0 0.0
  %11083 = vmatprep.subr.mxu0 0.0
  %11084 = vmatpush2.msra.mxu0 0.0
  %11085 = vmatprep.subr.mxu0 0.0
  %11086 = vmatpush2.msra.mxu0 0.0
  %11087 = vmatprep.subr.mxu0 0.0
  %11088 = vmatpush2.msra.mxu0 0.0
  %11089 = vmatprep.subr.mxu0 0.0
  %11090 = vmatpush2.msra.mxu0 0.0
  %11091 = vmatprep.subr.mxu0 0.0
  %11092 = vmatpush2.msra.mxu0 0.0
  %11093 = vmatprep.subr.mxu0 0.0
  %11094 = vmatpush2.msra.mxu0 0.0
  %11095 = vmatprep.subr.mxu0 0.0
  %11096 = vmatpush2.msra.mxu0 0.0
  %11097 = vmatprep.mubr.f32.mxu0 0.0
  %11098 = vmatmul.mubr.f32.gmra.mxu0 %v11031
  %v11099 = vpop.f32.mrf.mxu0
  %v11100 = vadd.f32 %v11028, %v11099
  %v11101 = vpop.f32.mrf.mxu0
  %11102 = vdwg.mxu0
  %v11103 = vmax.f32 %v11100, 0.0
  %v11104 = vld [vmem:[%s8] sm:$0xff]
  %v11105 = vld [vmem:[%s8 + $0x8] sm:$0xff]
  %v11106 = vld [vmem:[%s8 + $0x10] sm:$0xff]
  %v11107 = vld [vmem:[%s8 + $0x18] sm:$0xff]
  %v11108 = vld [vmem:[%s8 + $0x20] sm:$0x1]
  %v11109 = vlaneseq
  %v11110 = vshrl.u32 %v11109, 7
  %v11111 = vsub.s32 0, %v11110
  %v11112 = vrot.slane %v11108, %v11111
  %v11114 = vsel %vm11029, %v11103, 0
  %11116 = vmatprep.subr.mxu0 0.0
  %11117 = vmatpush1.msra.mxu0 0.0
  %11118 = vmatprep.subr.mxu0 0.0
  %11119 = vmatpush1.msra.mxu0 0.0
  %11120 = vmatprep.subr.mxu0 0.0
  %11121 = vmatpush1.msra.mxu0 0.0
  %11122 = vmatprep.subr.mxu0 0.0
  %11123 = vmatpush1.msra.mxu0 0.0
  %11124 = vmatprep.subr.mxu0 0.0
  %11125 = vmatpush1.msra.mxu0 0.0
  %11126 = vmatprep.subr.mxu0 0.0
  %11127 = vmatpush1.msra.mxu0 0.0
  %11128 = vmatprep.subr.mxu0 0.0
  %11129 = vmatpush1.msra.mxu0 0.0
  %11130 = vmatprep.subr.mxu0 0.0
  %11131 = vmatpush1.msra.mxu0 0.0
  %11132 = vmatprep.subr.mxu0 0.0
  %11133 = vmatpush1.msra.mxu0 0.0
  %11134 = vmatprep.subr.mxu0 0.0
  %11135 = vmatpush1.msra.mxu0 0.0
  %11136 = vmatprep.subr.mxu0 0.0
  %11137 = vmatpush1.msra.mxu0 0.0
  %11138 = vmatprep.subr.mxu0 0.0
  %11139 = vmatpush1.msra.mxu0 0.0
  %11140 = vmatprep.subr.mxu0 0.0
  %11141 = vmatpush1.msra.mxu0 %v11107
  %11142 = vmatprep.subr.mxu0 0.0
  %11143 = vmatpush1.msra.mxu0 %v11106
  %11144 = vmatprep.subr.mxu0 0.0
  %11145 = vmatpush1.msra.mxu0 %v11105
  %11146 = vmatprep.subr.mxu0 0.0
  %11147 = vmatpush1.msra.mxu0 %v11104
  %11148 = vmatprep.subr.mxu0 0.0
  %11149 = vmatpush2.msra.mxu0 0.0
  %11150 = vmatprep.subr.mxu0 0.0
  %11151 = vmatpush2.msra.mxu0 0.0
  %11152 = vmatprep.subr.mxu0 0.0
  %11153 = vmatpush2.msra.mxu0 0.0
  %11154 = vmatprep.subr.mxu0 0.0
  %11155 = vmatpush2.msra.mxu0 0.0
  %11156 = vmatprep.subr.mxu0 0.0
  %11157 = vmatpush2.msra.mxu0 0.0
  %11158 = vmatprep.subr.mxu0 0.0
  %11159 = vmatpush2.msra.mxu0 0.0
  %11160 = vmatprep.subr.mxu0 0.0
  %11161 = vmatpush2.msra.mxu0 0.0
  %11162 = vmatprep.subr.mxu0 0.0
  %11163 = vmatpush2.msra.mxu0 0.0
  %11164 = vmatprep.subr.mxu0 0.0
  %11165 = vmatpush2.msra.mxu0 0.0
  %11166 = vmatprep.subr.mxu0 0.0
  %11167 = vmatpush2.msra.mxu0 0.0
  %11168 = vmatprep.subr.mxu0 0.0
  %11169 = vmatpush2.msra.mxu0 0.0
  %11170 = vmatprep.subr.mxu0 0.0
  %11171 = vmatpush2.msra.mxu0 0.0
  %11172 = vmatprep.subr.mxu0 0.0
  %11173 = vmatpush2.msra.mxu0 0.0
  %11174 = vmatprep.subr.mxu0 0.0
  %11175 = vmatpush2.msra.mxu0 0.0
  %11176 = vmatprep.subr.mxu0 0.0
  %11177 = vmatpush2.msra.mxu0 0.0
  %11178 = vmatprep.subr.mxu0 0.0
  %11179 = vmatpush2.msra.mxu0 0.0
  %11180 = vmatprep.mubr.f32.mxu0 0.0
  %11181 = vmatmul.mubr.f32.gmra.mxu0 %v11114
  %v11182 = vpop.f32.mrf.mxu0
  %v11183 = vadd.f32 %v11112, %v11182
  %v11184 = vpop.f32.mrf.mxu0
  %11185 = vdwg.mxu0
  %vm11186 = vcmask 97280
  %11187 = vst.msk [vmem:[%s9] sm:$0xff] %vm11186, %v11183
  // Predicated region
  $region38: #{encoder_forward.1} parent=0 // pred_check
    _
  $region39: #{encoder_forward.1} parent=0 // pred_check_branch
    %11189 = sbr.rel (0) target = $region41
  $region40: #{encoder_forward.1} parent=0 // pred_region
    _
  $region41: #{encoder_forward.1} parent=0 // pred_fallthru
    _
  // Predicated region
  $region42: #{encoder_forward.1} parent=0 // pred_check
    _
  $region43: #{encoder_forward.1} parent=0 // pred_check_branch
    %11191 = sbr.rel (0) target = $region45
  $region44: #{encoder_forward.1} parent=0 // pred_region
    _
  $region45: #{encoder_forward.1} parent=0 // pred_fallthru
    _

</llo_original>
